<compile_context>
chip_gen: v7x
topology: tpu7x:2x2x1
jax: 0.10.0
libtpu: 0.0.40
codegen_flags: <defaults>
</compile_context>

<pallas_src>
import jax
import jax.numpy as jnp
from jax import lax
from jax.experimental import pallas as pl
from jax.experimental.pallas import tpu as pltpu

_EPS = 1e-5
_PARALLEL_1D = pltpu.CompilerParams(dimension_semantics=("parallel",))
_PARALLEL_2D = pltpu.CompilerParams(dimension_semantics=("parallel", "parallel"))


def _round_up(x, m):
    return (x + m - 1) // m * m


def _row_tiling(m, max_tile):
    """(padded row count, tile rows); rows padded to a multiple of 16 (bf16
    sublane packing) for small M, or to a multiple of max_tile when tiled."""
    if m <= max_tile:
        t = _round_up(m, 16)
        return t, t
    return _round_up(m, max_tile), max_tile


# ---------------------------------------------------------------------------
# Pallas kernels
# ---------------------------------------------------------------------------
def _phase_matmul_stats_kernel(p_ref, w_ref, y_ref, s_ref, q_ref):
    # bf16 x bf16 -> f32 on the MXU.  Per-(phase, tile) column sum / sumsq are
    # taken from the f32 accumulator (cross-tile BN reduction finished in the
    # wrapper); y itself is stored in bf16.
    y = jnp.dot(p_ref[0], w_ref[0], preferred_element_type=jnp.float32)
    y_ref[0] = y.astype(y_ref.dtype)
    s_ref[...] = jnp.sum(y, axis=0, keepdims=True)[None, None]
    q_ref[...] = jnp.sum(y * y, axis=0, keepdims=True)[None, None]


def _phase_matmul_tanh_kernel(p_ref, w_ref, o_ref):
    y = jnp.dot(p_ref[0], w_ref[0], preferred_element_type=jnp.float32)
    o_ref[0] = jnp.tanh(y).astype(o_ref.dtype)


def _affine_relu_kernel(y_ref, s_ref, b_ref, o_ref):
    # Folded BatchNorm (per-channel scale/shift) + ReLU; bf16 in, bf16 out.
    y = y_ref[...].astype(jnp.float32)
    o_ref[...] = jnp.maximum(y * s_ref[...] + b_ref[...], 0.0).astype(o_ref.dtype)


# ---------------------------------------------------------------------------
# pallas_call wrappers (phase x row-tile grids)
# ---------------------------------------------------------------------------
def _phase_matmul_stats(patches, wmats, *, max_tile):
    """(P, M, K) bf16 @ (P, K, C) bf16 -> y (P, M_pad, C) bf16, col_sum, col_sumsq."""
    p_, m, k = patches.shape
    c = wmats.shape[2]
    m_pad, tile = _row_tiling(m, max_tile)
    if m_pad != m:
        patches = jnp.pad(patches, ((0, 0), (0, m_pad - m), (0, 0)))
    n_tiles = m_pad // tile
    y, s, q = pl.pallas_call(
        _phase_matmul_stats_kernel,
        grid=(p_, n_tiles),
        in_specs=[
            pl.BlockSpec((1, tile, k), lambda p, i: (p, i, 0)),
            pl.BlockSpec((1, k, c), lambda p, i: (p, 0, 0)),
        ],
        out_specs=(
            pl.BlockSpec((1, tile, c), lambda p, i: (p, i, 0)),
            pl.BlockSpec((1, 1, 1, c), lambda p, i: (p, i, 0, 0)),
            pl.BlockSpec((1, 1, 1, c), lambda p, i: (p, i, 0, 0)),
        ),
        out_shape=(
            jax.ShapeDtypeStruct((p_, m_pad, c), jnp.bfloat16),
            jax.ShapeDtypeStruct((p_, n_tiles, 1, c), jnp.float32),
            jax.ShapeDtypeStruct((p_, n_tiles, 1, c), jnp.float32),
        ),
        compiler_params=_PARALLEL_2D,
    )(patches, wmats)
    # Zero-padded rows / taps / phases contribute 0 to the sums -> stats exact.
    return y, jnp.sum(s, axis=(0, 1, 2)), jnp.sum(q, axis=(0, 1, 2))


def _phase_matmul_tanh(patches, wmats, *, max_tile):
    p_, m, k = patches.shape
    c = wmats.shape[2]
    m_pad, tile = _row_tiling(m, max_tile)
    if m_pad != m:
        patches = jnp.pad(patches, ((0, 0), (0, m_pad - m), (0, 0)))
    return pl.pallas_call(
        _phase_matmul_tanh_kernel,
        grid=(p_, m_pad // tile),
        in_specs=[
            pl.BlockSpec((1, tile, k), lambda p, i: (p, i, 0)),
            pl.BlockSpec((1, k, c), lambda p, i: (p, 0, 0)),
        ],
        out_specs=pl.BlockSpec((1, tile, c), lambda p, i: (p, i, 0)),
        out_shape=jax.ShapeDtypeStruct((p_, m_pad, c), jnp.float32),
        compiler_params=_PARALLEL_2D,
    )(patches, wmats)


def _affine_relu(y2d, scale, shift, *, max_tile=1024):
    m, c = y2d.shape
    m_pad, tile = _row_tiling(m, max_tile)
    if m_pad != m:
        y2d = jnp.pad(y2d, ((0, m_pad - m), (0, 0)))
    out = pl.pallas_call(
        _affine_relu_kernel,
        grid=(m_pad // tile,),
        in_specs=[
            pl.BlockSpec((tile, c), lambda i: (i, 0)),
            pl.BlockSpec((1, c), lambda i: (0, 0)),
            pl.BlockSpec((1, c), lambda i: (0, 0)),
        ],
        out_specs=pl.BlockSpec((tile, c), lambda i: (i, 0)),
        out_shape=jax.ShapeDtypeStruct((m_pad, c), jnp.bfloat16),
        compiler_params=_PARALLEL_1D,
    )(y2d, scale.reshape(1, c), shift.reshape(1, c))
    return out[:m]


# ---------------------------------------------------------------------------
# ConvTranspose2d via sub-pixel phase decomposition (no zero-dilated taps)
# ---------------------------------------------------------------------------
def _phase_plan(k, stride, padding, size_in):
    """For each output phase ph (= out_idx % stride): the number of output
    positions and the (kernel tap a, input offset d) pairs with nonzero
    contribution:  out[q*stride+ph] += x[q+d] * W[..., k-1-a, ...]."""
    size_out = (size_in - 1) * stride - 2 * padding + k
    zpad = k - 1 - padding
    phases, lo, hi = [], 0, 0
    for ph in range(stride):
        n_out = len(range(ph, size_out, stride))
        taps = []
        for a in range(k):
            if (ph + a - zpad) % stride == 0:
                d = (ph + a - zpad) // stride
                taps.append((a, d))
                lo = max(lo, -d)
                hi = max(hi, (n_out - 1) + d - (size_in - 1))
        phases.append((ph, n_out, taps))
    return size_out, phases, lo, hi


def _build_phase_patches(x_nhwc, w, *, stride, padding, cout_pad):
    """Stacked per-phase patch matrix (P, M, K) and weight matrix (P, K, C_pad),
    zero-padded to a common spatial extent / tap count so one pallas_call covers
    every phase.  Zero pads provably contribute nothing to outputs or stats."""
    # TODO(synk): for very large batches, do the per-tap im2col inside the kernel
    # (tap grid axis + VMEM accumulator) to avoid this XLA patch materialization.
    n, h, w_in, c = x_nhwc.shape
    cin, cout, kh, kw = w.shape
    assert kh == kw and cin == c
    k = kh
    hout, h_phases, hlo, hhi = _phase_plan(k, stride, padding, h)
    wout, w_phases, wlo, whi = _phase_plan(k, stride, padding, w_in)
    n_h_max = max(nh for _, nh, _ in h_phases)
    n_w_max = max(nw for _, nw, _ in w_phases)
    t_max = max(len(ht) for _, _, ht in h_phases) * max(len(wt) for _, _, wt in w_phases)
    xpad = jnp.pad(x_nhwc, ((0, 0), (hlo, hhi), (wlo, whi), (0, 0)))
    wq = w.astype(jnp.bfloat16)
    patch_list, wmat_list = [], []
    for ph, n_h, htaps in h_phases:
        for pw, n_w, wtaps in w_phases:
            windows, wrows = [], []
            for ah, dh in htaps:
                for aw, dw in wtaps:
                    win = xpad[:, dh + hlo:dh + hlo + n_h, dw + wlo:dw + wlo + n_w, :]
                    if n_h != n_h_max or n_w != n_w_max:
                        win = jnp.pad(win, ((0, 0), (0, n_h_max - n_h),
                                            (0, n_w_max - n_w), (0, 0)))
                    windows.append(win)
                    wrows.append(wq[:, :, k - 1 - ah, k - 1 - aw])   # (Cin, Cout)
            t = len(windows)
            patches = jnp.stack(windows, axis=3).reshape(n * n_h_max * n_w_max, t * cin)
            wmat = jnp.stack(wrows, axis=0).reshape(t * cin, cout)
            if t < t_max:                                   # common K across phases
                patches = jnp.pad(patches, ((0, 0), (0, (t_max - t) * cin)))
                wmat = jnp.pad(wmat, ((0, (t_max - t) * cin), (0, 0)))
            if cout_pad > cout:                              # lane-dense output cols
                wmat = jnp.pad(wmat, ((0, 0), (0, cout_pad - cout)))
            patch_list.append(patches)
            wmat_list.append(wmat)
    return (jnp.stack(patch_list, axis=0), jnp.stack(wmat_list, axis=0),
            (hout, wout, n_h_max, n_w_max))


def _interleave_phases(y, n, stride, n_h_max, n_w_max, hout, wout):
    """(P, M_pad, C) phase-major -> (N, hout, wout, C) interleaved NHWC."""
    c = y.shape[-1]
    m_real = n * n_h_max * n_w_max
    y = y[:, :m_real].reshape(stride, stride, n, n_h_max, n_w_max, c)
    y = jnp.transpose(y, (2, 3, 0, 4, 1, 5)).reshape(
        n, n_h_max * stride, n_w_max * stride, c)
    return y[:, :hout, :wout, :]


def _convt_bn_relu(x_nhwc, w, gamma, beta, *, stride, padding, cout_pad=None,
                   max_tile=1024):
    cin, cout, kh, kw = w.shape
    c_pad = cout_pad if cout_pad is not None else cout
    n = x_nhwc.shape[0]
    patches, wmats, (hout, wout, n_h_max, n_w_max) = _build_phase_patches(
        x_nhwc, w, stride=stride, padding=padding, cout_pad=c_pad)
    y, s_tot, q_tot = _phase_matmul_stats(patches, wmats, max_tile=max_tile)

    m_total = n * hout * wout
    mean = s_tot / m_total
    var = jnp.maximum(q_tot / m_total - mean * mean, 0.0)   # biased batch variance
    g = jnp.pad(gamma, (0, c_pad - cout))
    b = jnp.pad(beta, (0, c_pad - cout))
    scale = g * lax.rsqrt(var + _EPS)
    shift = b - mean * scale

    p_, m_pad, _ = y.shape
    act = _affine_relu(y.reshape(p_ * m_pad, c_pad), scale, shift, max_tile=max_tile)
    act = act.reshape(p_, m_pad, c_pad)
    # Channel padding (if any) is kept: padded channels are exactly 0 and keep
    # the next layer's K lane-aligned (no activation slice/copy).
    return _interleave_phases(act, n, stride, n_h_max, n_w_max, hout, wout)


def _convt_tanh(x_nhwc, w, *, stride, padding, cout_pad, max_tile=1024):
    cin, cout, kh, kw = w.shape
    n = x_nhwc.shape[0]
    patches, wmats, (hout, wout, n_h_max, n_w_max) = _build_phase_patches(
        x_nhwc, w, stride=stride, padding=padding, cout_pad=cout_pad)
    out = _phase_matmul_tanh(patches, wmats, max_tile=max_tile)   # (P, M_pad, C_pad) f32
    out = _interleave_phases(out, n, stride, n_h_max, n_w_max, hout, wout)
    return out[..., :cout]


def _dense_convt_bn_relu(x2d_bf16, w, gamma, beta):
    """Layer 1: ConvTranspose2d on a 1x1 input == dense (N,Cin) @ (Cin, k*k*Cout)."""
    cin, cout, kh, kw = w.shape
    n = x2d_bf16.shape[0]
    # columns ordered (h, w, c): out[n,h,w,c] = sum_ci x[n,ci] * W[ci,c,h,w]
    wmat = jnp.transpose(w, (0, 2, 3, 1)).reshape(cin, kh * kw * cout).astype(jnp.bfloat16)
    y, s_col, q_col = _phase_matmul_stats(x2d_bf16[None], wmat[None], max_tile=256)
    s_tot = jnp.sum(s_col.reshape(kh * kw, cout), axis=0)
    q_tot = jnp.sum(q_col.reshape(kh * kw, cout), axis=0)
    m_total = n * kh * kw
    mean = s_tot / m_total
    var = jnp.maximum(q_tot / m_total - mean * mean, 0.0)
    scale = gamma * lax.rsqrt(var + _EPS)
    shift = beta - mean * scale
    m_pad = y.shape[1]
    act = _affine_relu(y.reshape(m_pad * kh * kw, cout), scale, shift)
    return act[: n * kh * kw].reshape(n, kh, kw, cout)


# ---------------------------------------------------------------------------
# Parameters (mirrors weights_init: Conv ~ N(0,.02), BN weight ~ N(1,.02), bias 0)
# ---------------------------------------------------------------------------
def init_params(key, latent_size=16, n_channels=1):
    ks = jax.random.split(key, 7)
    std = 0.02
    return {
        "w1": std * jax.random.normal(ks[0], (latent_size, 256, 4, 4), jnp.float32),
        "w2": std * jax.random.normal(ks[1], (256, 128, 3, 3), jnp.float32),
        "w3": std * jax.random.normal(ks[2], (128, 64, 4, 4), jnp.float32),
        "w4": std * jax.random.normal(ks[3], (64, n_channels, 4, 4), jnp.float32),
        "g1": 1.0 + std * jax.random.normal(ks[4], (256,), jnp.float32),
        "b1": jnp.zeros((256,), jnp.float32),
        "g2": 1.0 + std * jax.random.normal(ks[5], (128,), jnp.float32),
        "b2": jnp.zeros((128,), jnp.float32),
        "g3": 1.0 + std * jax.random.normal(ks[6], (64,), jnp.float32),
        "b3": jnp.zeros((64,), jnp.float32),
    }


@jax.jit
def cnn_generator_forward(x_nchw, params):
    n, latent = x_nchw.shape[0], x_nchw.shape[1]
    x2d = x_nchw.reshape(n, latent).astype(jnp.bfloat16)
    a = _dense_convt_bn_relu(x2d, params["w1"], params["g1"], params["b1"])               # (N, 4, 4,256)
    a = _convt_bn_relu(a, params["w2"], params["g2"], params["b2"], stride=2, padding=1)  # (N, 7, 7,128)
    a = _convt_bn_relu(a, params["w3"], params["g3"], params["b3"], stride=2, padding=1,
                       cout_pad=128)                                                      # (N,14,14,128) ch 64..127 = 0
    w4 = params["w4"]
    w4p = jnp.pad(w4, ((0, 128 - w4.shape[0]), (0, 0), (0, 0), (0, 0)))                  # Cin pad 64 -> 128 (zero rows)
    out = _convt_tanh(a, w4p, stride=2, padding=1, cout_pad=128)                          # (N,28,28,nc)
    return jnp.transpose(out, (0, 3, 1, 2))  # NCHW


# ---------------------------------------------------------------------------
# Pure-JAX f32 reference (PyTorch ConvTranspose2d / BatchNorm training semantics)
# ---------------------------------------------------------------------------
def _torch_convt_ref(x, w, stride, padding):
    k = w.shape[2]
    rhs = jnp.transpose(w[:, :, ::-1, ::-1], (1, 0, 2, 3))   # (Cout, Cin, kH, kW)
    return lax.conv_general_dilated(
        x, rhs, window_strides=(1, 1),
        padding=[(k - 1 - padding,) * 2] * 2,
        lhs_dilation=(stride, stride),
        dimension_numbers=("NCHW", "OIHW", "NCHW"),
        precision=lax.Precision.HIGHEST)


def _bn_relu_ref(y, g, b):
    mean = jnp.mean(y, axis=(0, 2, 3), keepdims=True)
    var = jnp.mean(jnp.square(y - mean), axis=(0, 2, 3), keepdims=True)
    yh = (y - mean) * lax.rsqrt(var + _EPS)
    return jnp.maximum(yh * g.reshape(1, -1, 1, 1) + b.reshape(1, -1, 1, 1), 0.0)


@jax.jit
def _reference_forward(x, params):
    y = _bn_relu_ref(_torch_convt_ref(x, params["w1"], 1, 0), params["g1"], params["b1"])
    y = _bn_relu_ref(_torch_convt_ref(y, params["w2"], 2, 1), params["g2"], params["b2"])
    y = _bn_relu_ref(_torch_convt_ref(y, params["w3"], 2, 1), params["g3"], params["b3"])
    return jnp.tanh(_torch_convt_ref(y, params["w4"], 2, 1))


if __name__ == "__main__":
    batch, latent_size, n_channels = 2, 16, 1

    key = jax.random.PRNGKey(0)
    k_params, k_x = jax.random.split(key)
    params = init_params(k_params, latent_size=latent_size, n_channels=n_channels)
    x = jax.random.normal(k_x, (batch, latent_size, 1, 1), jnp.float32)  # NCHW latent

    out = jax.block_until_ready(cnn_generator_forward(x, params))
    assert out.shape == (batch, n_channels, 28, 28), out.shape
    assert bool(jnp.all(jnp.isfinite(out)))
    assert bool(jnp.all(jnp.abs(out) <= 1.0 + 1e-6))  # tanh range

    ref = jax.block_until_ready(_reference_forward(x, params))
    max_err = float(jnp.max(jnp.abs(out - ref)))
    assert max_err < 1e-1, f"mismatch vs f32 reference: {max_err}"

    print("KERNEL_OK")
</pallas_src>

<mosaic_0001>
module attributes {stable_mosaic.version = 11 : i64} {
  func.func @_phase_matmul_stats_kernel(%arg0: i32, %arg1: i32, %arg2: memref<1x16x16xbf16, #tpu.memory_space<vmem>>, %arg3: memref<1x16x4096xbf16, #tpu.memory_space<vmem>>, %arg4: memref<1x16x4096xbf16, #tpu.memory_space<vmem>>, %arg5: memref<1x1x1x4096xf32, #tpu.memory_space<vmem>>, %arg6: memref<1x1x1x4096xf32, #tpu.memory_space<vmem>>) attributes {dimension_semantics = [#tpu.dimension_semantics<parallel>, #tpu.dimension_semantics<parallel>], iteration_bounds = array<i64: 1, 1>, scalar_prefetch = 0 : i64, scratch_operands = 0 : i64, tpu.core_type = #tpu.core_type<tc>, window_params = [{transform_indices = @transform_0, window_bounds = array<i64: 1, 16, 16>}, {transform_indices = @transform_1, window_bounds = array<i64: 1, 16, 4096>}, {transform_indices = @transform_2, window_bounds = array<i64: 1, 16, 4096>}, {transform_indices = @transform_3, window_bounds = array<i64: 1, 1, 1, 4096>}, {transform_indices = @transform_4, window_bounds = array<i64: 1, 1, 1, 4096>}]} {
    %c0 = arith.constant 0 : index
    %c0_0 = arith.constant 0 : index
    %c0_1 = arith.constant 0 : index
    %0 = vector.load %arg2[%c0, %c0_0, %c0_1] : memref<1x16x16xbf16, #tpu.memory_space<vmem>>, vector<1x16x16xbf16>
    %1 = vector.shape_cast %0 : vector<1x16x16xbf16> to vector<16x16xbf16>
    %c0_2 = arith.constant 0 : index
    %c0_3 = arith.constant 0 : index
    %c0_4 = arith.constant 0 : index
    %2 = vector.load %arg3[%c0_2, %c0_3, %c0_4] : memref<1x16x4096xbf16, #tpu.memory_space<vmem>>, vector<1x16x4096xbf16>
    %3 = vector.shape_cast %2 : vector<1x16x4096xbf16> to vector<16x4096xbf16>
    %cst = arith.constant dense<0.000000e+00> : vector<16x4096xf32>
    %4 = tpu.matmul %1, %3, %cst {dimension_numbers = #tpu.dot_dimension_numbers<[1], [0], [0], [1], [0, 0, 1, 1], [], []>} : vector<16x16xbf16>, vector<16x4096xbf16>, vector<16x4096xf32> -> vector<16x4096xf32>
    %5 = arith.truncf %4 : vector<16x4096xf32> to vector<16x4096xbf16>
    %c0_5 = arith.constant 0 : index
    %c0_6 = arith.constant 0 : index
    %c0_7 = arith.constant 0 : index
    %6 = vector.load %arg4[%c0_5, %c0_6, %c0_7] : memref<1x16x4096xbf16, #tpu.memory_space<vmem>>, vector<1x16x4096xbf16>
    %7 = vector.shape_cast %6 : vector<1x16x4096xbf16> to vector<16x4096xbf16>
    %8 = vector.shape_cast %5 : vector<16x4096xbf16> to vector<1x16x4096xbf16>
    tpu.vector_store %arg4[%c0_5, %c0_6, %c0_7], %8 {strides = array<i32>} : memref<1x16x4096xbf16, #tpu.memory_space<vmem>>, vector<1x16x4096xbf16>,
    %cst_8 = arith.constant dense<0.000000e+00> : vector<4096xf32>
    %9 = vector.multi_reduction <add>, %4, %cst_8 [0] : vector<16x4096xf32> to vector<4096xf32>
    %10 = vector.shape_cast %9 : vector<4096xf32> to vector<1x4096xf32>
    %11 = vector.shape_cast %10 : vector<1x4096xf32> to vector<1x1x1x4096xf32>
    %c0_9 = arith.constant 0 : index
    %c0_10 = arith.constant 0 : index
    %c0_11 = arith.constant 0 : index
    %c0_12 = arith.constant 0 : index
    %12 = vector.load %arg5[%c0_9, %c0_10, %c0_11, %c0_12] : memref<1x1x1x4096xf32, #tpu.memory_space<vmem>>, vector<1x1x1x4096xf32>
    tpu.vector_store %arg5[%c0_9, %c0_10, %c0_11, %c0_12], %11 {strides = array<i32>} : memref<1x1x1x4096xf32, #tpu.memory_space<vmem>>, vector<1x1x1x4096xf32>,
    %13 = arith.mulf %4, %4 : vector<16x4096xf32>
    %cst_13 = arith.constant dense<0.000000e+00> : vector<4096xf32>
    %14 = vector.multi_reduction <add>, %13, %cst_13 [0] : vector<16x4096xf32> to vector<4096xf32>
    %15 = vector.shape_cast %14 : vector<4096xf32> to vector<1x4096xf32>
    %16 = vector.shape_cast %15 : vector<1x4096xf32> to vector<1x1x1x4096xf32>
    %c0_14 = arith.constant 0 : index
    %c0_15 = arith.constant 0 : index
    %c0_16 = arith.constant 0 : index
    %c0_17 = arith.constant 0 : index
    %17 = vector.load %arg6[%c0_14, %c0_15, %c0_16, %c0_17] : memref<1x1x1x4096xf32, #tpu.memory_space<vmem>>, vector<1x1x1x4096xf32>
    tpu.vector_store %arg6[%c0_14, %c0_15, %c0_16, %c0_17], %16 {strides = array<i32>} : memref<1x1x1x4096xf32, #tpu.memory_space<vmem>>, vector<1x1x1x4096xf32>,
    return
  }
  func.func @transform_0(%arg0: i32, %arg1: i32) -> (i32, i32, i32) {
    %c0_i32 = arith.constant 0 : i32
    %c0_i32_0 = arith.constant 0 : i32
    return %arg0, %arg1, %c0_i32 : i32, i32, i32
  }
  func.func @transform_1(%arg0: i32, %arg1: i32) -> (i32, i32, i32) {
    %c0_i32 = arith.constant 0 : i32
    %c0_i32_0 = arith.constant 0 : i32
    %c0_i32_1 = arith.constant 0 : i32
    return %arg0, %c0_i32, %c0_i32_0 : i32, i32, i32
  }
  func.func @transform_2(%arg0: i32, %arg1: i32) -> (i32, i32, i32) {
    %c0_i32 = arith.constant 0 : i32
    %c0_i32_0 = arith.constant 0 : i32
    return %arg0, %arg1, %c0_i32 : i32, i32, i32
  }
  func.func @transform_3(%arg0: i32, %arg1: i32) -> (i32, i32, i32, i32) {
    %c0_i32 = arith.constant 0 : i32
    %c0_i32_0 = arith.constant 0 : i32
    %c0_i32_1 = arith.constant 0 : i32
    return %arg0, %arg1, %c0_i32, %c0_i32_0 : i32, i32, i32, i32
  }
  func.func @transform_4(%arg0: i32, %arg1: i32) -> (i32, i32, i32, i32) {
    %c0_i32 = arith.constant 0 : i32
    %c0_i32_0 = arith.constant 0 : i32
    %c0_i32_1 = arith.constant 0 : i32
    return %arg0, %arg1, %c0_i32, %c0_i32_0 : i32, i32, i32, i32
  }
}

module attributes {stable_mosaic.version = 11 : i64} {
  func.func @_affine_relu_kernel(%arg0: i32, %arg1: memref<256x256xbf16, #tpu.memory_space<vmem>>, %arg2: memref<1x256xf32, #tpu.memory_space<vmem>>, %arg3: memref<1x256xf32, #tpu.memory_space<vmem>>, %arg4: memref<256x256xbf16, #tpu.memory_space<vmem>>) attributes {dimension_semantics = [#tpu.dimension_semantics<parallel>], iteration_bounds = array<i64: 1>, scalar_prefetch = 0 : i64, scratch_operands = 0 : i64, tpu.core_type = #tpu.core_type<tc>, window_params = [{transform_indices = @transform_0, window_bounds = array<i64: 256, 256>}, {pipeline_mode = #tpu.pipeline_mode<synchronous>, transform_indices = @transform_1, window_bounds = array<i64: 1, 256>}, {pipeline_mode = #tpu.pipeline_mode<synchronous>, transform_indices = @transform_2, window_bounds = array<i64: 1, 256>}, {transform_indices = @transform_3, window_bounds = array<i64: 256, 256>}]} {
    %c0 = arith.constant 0 : index
    %c0_0 = arith.constant 0 : index
    %0 = vector.load %arg1[%c0, %c0_0] : memref<256x256xbf16, #tpu.memory_space<vmem>>, vector<256x256xbf16>
    %1 = arith.extf %0 : vector<256x256xbf16> to vector<256x256xf32>
    %c0_1 = arith.constant 0 : index
    %c0_2 = arith.constant 0 : index
    %2 = vector.load %arg2[%c0_1, %c0_2] : memref<1x256xf32, #tpu.memory_space<vmem>>, vector<1x256xf32>
    %3 = vector.broadcast %2 : vector<1x256xf32> to vector<256x256xf32>
    %4 = arith.mulf %1, %3 : vector<256x256xf32>
    %c0_3 = arith.constant 0 : index
    %c0_4 = arith.constant 0 : index
    %5 = vector.load %arg3[%c0_3, %c0_4] : memref<1x256xf32, #tpu.memory_space<vmem>>, vector<1x256xf32>
    %6 = vector.broadcast %5 : vector<1x256xf32> to vector<256x256xf32>
    %7 = arith.addf %4, %6 : vector<256x256xf32>
    %cst = arith.constant 0.000000e+00 : f32
    %8 = vector.broadcast %cst : f32 to vector<256x256xf32>
    %9 = arith.maximumf %7, %8 : vector<256x256xf32>
    %10 = arith.truncf %9 : vector<256x256xf32> to vector<256x256xbf16>
    %c0_5 = arith.constant 0 : index
    %c0_6 = arith.constant 0 : index
    %11 = vector.load %arg4[%c0_5, %c0_6] : memref<256x256xbf16, #tpu.memory_space<vmem>>, vector<256x256xbf16>
    tpu.vector_store %arg4[%c0_5, %c0_6], %10 {strides = array<i32>} : memref<256x256xbf16, #tpu.memory_space<vmem>>, vector<256x256xbf16>,
    return
  }
  func.func @transform_0(%arg0: i32) -> (i32, i32) {
    %c0_i32 = arith.constant 0 : i32
    %c0_i32_0 = arith.constant 0 : i32
    return %arg0, %c0_i32 : i32, i32
  }
  func.func @transform_1(%arg0: i32) -> (i32, i32) {
    %c0_i32 = arith.constant 0 : i32
    %c0_i32_0 = arith.constant 0 : i32
    %c0_i32_1 = arith.constant 0 : i32
    return %c0_i32, %c0_i32_0 : i32, i32
  }
  func.func @transform_2(%arg0: i32) -> (i32, i32) {
    %c0_i32 = arith.constant 0 : i32
    %c0_i32_0 = arith.constant 0 : i32
    %c0_i32_1 = arith.constant 0 : i32
    return %c0_i32, %c0_i32_0 : i32, i32
  }
  func.func @transform_3(%arg0: i32) -> (i32, i32) {
    %c0_i32 = arith.constant 0 : i32
    %c0_i32_0 = arith.constant 0 : i32
    return %arg0, %c0_i32 : i32, i32
  }
}

module attributes {stable_mosaic.version = 11 : i64} {
  func.func @_affine_relu_kernel(%arg0: i32, %arg1: memref<128x128xbf16, #tpu.memory_space<vmem>>, %arg2: memref<1x128xf32, #tpu.memory_space<vmem>>, %arg3: memref<1x128xf32, #tpu.memory_space<vmem>>, %arg4: memref<128x128xbf16, #tpu.memory_space<vmem>>) attributes {dimension_semantics = [#tpu.dimension_semantics<parallel>], iteration_bounds = array<i64: 1>, scalar_prefetch = 0 : i64, scratch_operands = 0 : i64, tpu.core_type = #tpu.core_type<tc>, window_params = [{transform_indices = @transform_0, window_bounds = array<i64: 128, 128>}, {pipeline_mode = #tpu.pipeline_mode<synchronous>, transform_indices = @transform_1, window_bounds = array<i64: 1, 128>}, {pipeline_mode = #tpu.pipeline_mode<synchronous>, transform_indices = @transform_2, window_bounds = array<i64: 1, 128>}, {transform_indices = @transform_3, window_bounds = array<i64: 128, 128>}]} {
    %c0 = arith.constant 0 : index
    %c0_0 = arith.constant 0 : index
    %0 = vector.load %arg1[%c0, %c0_0] : memref<128x128xbf16, #tpu.memory_space<vmem>>, vector<128x128xbf16>
    %1 = arith.extf %0 : vector<128x128xbf16> to vector<128x128xf32>
    %c0_1 = arith.constant 0 : index
    %c0_2 = arith.constant 0 : index
    %2 = vector.load %arg2[%c0_1, %c0_2] : memref<1x128xf32, #tpu.memory_space<vmem>>, vector<1x128xf32>
    %3 = vector.broadcast %2 : vector<1x128xf32> to vector<128x128xf32>
    %4 = arith.mulf %1, %3 : vector<128x128xf32>
    %c0_3 = arith.constant 0 : index
    %c0_4 = arith.constant 0 : index
    %5 = vector.load %arg3[%c0_3, %c0_4] : memref<1x128xf32, #tpu.memory_space<vmem>>, vector<1x128xf32>
    %6 = vector.broadcast %5 : vector<1x128xf32> to vector<128x128xf32>
    %7 = arith.addf %4, %6 : vector<128x128xf32>
    %cst = arith.constant 0.000000e+00 : f32
    %8 = vector.broadcast %cst : f32 to vector<128x128xf32>
    %9 = arith.maximumf %7, %8 : vector<128x128xf32>
    %10 = arith.truncf %9 : vector<128x128xf32> to vector<128x128xbf16>
    %c0_5 = arith.constant 0 : index
    %c0_6 = arith.constant 0 : index
    %11 = vector.load %arg4[%c0_5, %c0_6] : memref<128x128xbf16, #tpu.memory_space<vmem>>, vector<128x128xbf16>
    tpu.vector_store %arg4[%c0_5, %c0_6], %10 {strides = array<i32>} : memref<128x128xbf16, #tpu.memory_space<vmem>>, vector<128x128xbf16>,
    return
  }
  func.func @transform_0(%arg0: i32) -> (i32, i32) {
    %c0_i32 = arith.constant 0 : i32
    %c0_i32_0 = arith.constant 0 : i32
    return %arg0, %c0_i32 : i32, i32
  }
  func.func @transform_1(%arg0: i32) -> (i32, i32) {
    %c0_i32 = arith.constant 0 : i32
    %c0_i32_0 = arith.constant 0 : i32
    %c0_i32_1 = arith.constant 0 : i32
    return %c0_i32, %c0_i32_0 : i32, i32
  }
  func.func @transform_2(%arg0: i32) -> (i32, i32) {
    %c0_i32 = arith.constant 0 : i32
    %c0_i32_0 = arith.constant 0 : i32
    %c0_i32_1 = arith.constant 0 : i32
    return %c0_i32, %c0_i32_0 : i32, i32
  }
  func.func @transform_3(%arg0: i32) -> (i32, i32) {
    %c0_i32 = arith.constant 0 : i32
    %c0_i32_0 = arith.constant 0 : i32
    return %arg0, %c0_i32 : i32, i32
  }
}

module attributes {stable_mosaic.version = 11 : i64} {
  func.func @_phase_matmul_stats_kernel(%arg0: i32, %arg1: i32, %arg2: memref<1x32x1024xbf16, #tpu.memory_space<vmem>>, %arg3: memref<1x1024x128xbf16, #tpu.memory_space<vmem>>, %arg4: memref<1x32x128xbf16, #tpu.memory_space<vmem>>, %arg5: memref<1x1x1x128xf32, #tpu.memory_space<vmem>>, %arg6: memref<1x1x1x128xf32, #tpu.memory_space<vmem>>) attributes {dimension_semantics = [#tpu.dimension_semantics<parallel>, #tpu.dimension_semantics<parallel>], iteration_bounds = array<i64: 4, 1>, scalar_prefetch = 0 : i64, scratch_operands = 0 : i64, tpu.core_type = #tpu.core_type<tc>, window_params = [{transform_indices = @transform_0, window_bounds = array<i64: 1, 32, 1024>}, {transform_indices = @transform_1, window_bounds = array<i64: 1, 1024, 128>}, {transform_indices = @transform_2, window_bounds = array<i64: 1, 32, 128>}, {transform_indices = @transform_3, window_bounds = array<i64: 1, 1, 1, 128>}, {transform_indices = @transform_4, window_bounds = array<i64: 1, 1, 1, 128>}]} {
    %c0 = arith.constant 0 : index
    %c0_0 = arith.constant 0 : index
    %c0_1 = arith.constant 0 : index
    %0 = vector.load %arg2[%c0, %c0_0, %c0_1] : memref<1x32x1024xbf16, #tpu.memory_space<vmem>>, vector<1x32x1024xbf16>
    %1 = vector.shape_cast %0 : vector<1x32x1024xbf16> to vector<32x1024xbf16>
    %c0_2 = arith.constant 0 : index
    %c0_3 = arith.constant 0 : index
    %c0_4 = arith.constant 0 : index
    %2 = vector.load %arg3[%c0_2, %c0_3, %c0_4] : memref<1x1024x128xbf16, #tpu.memory_space<vmem>>, vector<1x1024x128xbf16>
    %3 = vector.shape_cast %2 : vector<1x1024x128xbf16> to vector<1024x128xbf16>
    %cst = arith.constant dense<0.000000e+00> : vector<32x128xf32>
    %4 = tpu.matmul %1, %3, %cst {dimension_numbers = #tpu.dot_dimension_numbers<[1], [0], [0], [1], [0, 0, 1, 1], [], []>} : vector<32x1024xbf16>, vector<1024x128xbf16>, vector<32x128xf32> -> vector<32x128xf32>
    %5 = arith.truncf %4 : vector<32x128xf32> to vector<32x128xbf16>
    %c0_5 = arith.constant 0 : index
    %c0_6 = arith.constant 0 : index
    %c0_7 = arith.constant 0 : index
    %6 = vector.load %arg4[%c0_5, %c0_6, %c0_7] : memref<1x32x128xbf16, #tpu.memory_space<vmem>>, vector<1x32x128xbf16>
    %7 = vector.shape_cast %6 : vector<1x32x128xbf16> to vector<32x128xbf16>
    %8 = vector.shape_cast %5 : vector<32x128xbf16> to vector<1x32x128xbf16>
    tpu.vector_store %arg4[%c0_5, %c0_6, %c0_7], %8 {strides = array<i32>} : memref<1x32x128xbf16, #tpu.memory_space<vmem>>, vector<1x32x128xbf16>,
    %cst_8 = arith.constant dense<0.000000e+00> : vector<128xf32>
    %9 = vector.multi_reduction <add>, %4, %cst_8 [0] : vector<32x128xf32> to vector<128xf32>
    %10 = vector.shape_cast %9 : vector<128xf32> to vector<1x128xf32>
    %11 = vector.shape_cast %10 : vector<1x128xf32> to vector<1x1x1x128xf32>
    %c0_9 = arith.constant 0 : index
    %c0_10 = arith.constant 0 : index
    %c0_11 = arith.constant 0 : index
    %c0_12 = arith.constant 0 : index
    %12 = vector.load %arg5[%c0_9, %c0_10, %c0_11, %c0_12] : memref<1x1x1x128xf32, #tpu.memory_space<vmem>>, vector<1x1x1x128xf32>
    tpu.vector_store %arg5[%c0_9, %c0_10, %c0_11, %c0_12], %11 {strides = array<i32>} : memref<1x1x1x128xf32, #tpu.memory_space<vmem>>, vector<1x1x1x128xf32>,
    %13 = arith.mulf %4, %4 : vector<32x128xf32>
    %cst_13 = arith.constant dense<0.000000e+00> : vector<128xf32>
    %14 = vector.multi_reduction <add>, %13, %cst_13 [0] : vector<32x128xf32> to vector<128xf32>
    %15 = vector.shape_cast %14 : vector<128xf32> to vector<1x128xf32>
    %16 = vector.shape_cast %15 : vector<1x128xf32> to vector<1x1x1x128xf32>
    %c0_14 = arith.constant 0 : index
    %c0_15 = arith.constant 0 : index
    %c0_16 = arith.constant 0 : index
    %c0_17 = arith.constant 0 : index
    %17 = vector.load %arg6[%c0_14, %c0_15, %c0_16, %c0_17] : memref<1x1x1x128xf32, #tpu.memory_space<vmem>>, vector<1x1x1x128xf32>
    tpu.vector_store %arg6[%c0_14, %c0_15, %c0_16, %c0_17], %16 {strides = array<i32>} : memref<1x1x1x128xf32, #tpu.memory_space<vmem>>, vector<1x1x1x128xf32>,
    return
  }
  func.func @transform_0(%arg0: i32, %arg1: i32) -> (i32, i32, i32) {
    %c0_i32 = arith.constant 0 : i32
    %c0_i32_0 = arith.constant 0 : i32
    return %arg0, %arg1, %c0_i32 : i32, i32, i32
  }
  func.func @transform_1(%arg0: i32, %arg1: i32) -> (i32, i32, i32) {
    %c0_i32 = arith.constant 0 : i32
    %c0_i32_0 = arith.constant 0 : i32
    %c0_i32_1 = arith.constant 0 : i32
    return %arg0, %c0_i32, %c0_i32_0 : i32, i32, i32
  }
  func.func @transform_2(%arg0: i32, %arg1: i32) -> (i32, i32, i32) {
    %c0_i32 = arith.constant 0 : i32
    %c0_i32_0 = arith.constant 0 : i32
    return %arg0, %arg1, %c0_i32 : i32, i32, i32
  }
  func.func @transform_3(%arg0: i32, %arg1: i32) -> (i32, i32, i32, i32) {
    %c0_i32 = arith.constant 0 : i32
    %c0_i32_0 = arith.constant 0 : i32
    %c0_i32_1 = arith.constant 0 : i32
    return %arg0, %arg1, %c0_i32, %c0_i32_0 : i32, i32, i32, i32
  }
  func.func @transform_4(%arg0: i32, %arg1: i32) -> (i32, i32, i32, i32) {
    %c0_i32 = arith.constant 0 : i32
    %c0_i32_0 = arith.constant 0 : i32
    %c0_i32_1 = arith.constant 0 : i32
    return %arg0, %arg1, %c0_i32, %c0_i32_0 : i32, i32, i32, i32
  }
}

module attributes {stable_mosaic.version = 11 : i64} {
  func.func @_phase_matmul_stats_kernel(%arg0: i32, %arg1: i32, %arg2: memref<1x112x512xbf16, #tpu.memory_space<vmem>>, %arg3: memref<1x512x128xbf16, #tpu.memory_space<vmem>>, %arg4: memref<1x112x128xbf16, #tpu.memory_space<vmem>>, %arg5: memref<1x1x1x128xf32, #tpu.memory_space<vmem>>, %arg6: memref<1x1x1x128xf32, #tpu.memory_space<vmem>>) attributes {dimension_semantics = [#tpu.dimension_semantics<parallel>, #tpu.dimension_semantics<parallel>], iteration_bounds = array<i64: 4, 1>, scalar_prefetch = 0 : i64, scratch_operands = 0 : i64, tpu.core_type = #tpu.core_type<tc>, window_params = [{transform_indices = @transform_0, window_bounds = array<i64: 1, 112, 512>}, {transform_indices = @transform_1, window_bounds = array<i64: 1, 512, 128>}, {transform_indices = @transform_2, window_bounds = array<i64: 1, 112, 128>}, {transform_indices = @transform_3, window_bounds = array<i64: 1, 1, 1, 128>}, {transform_indices = @transform_4, window_bounds = array<i64: 1, 1, 1, 128>}]} {
    %c0 = arith.constant 0 : index
    %c0_0 = arith.constant 0 : index
    %c0_1 = arith.constant 0 : index
    %0 = vector.load %arg2[%c0, %c0_0, %c0_1] : memref<1x112x512xbf16, #tpu.memory_space<vmem>>, vector<1x112x512xbf16>
    %1 = vector.shape_cast %0 : vector<1x112x512xbf16> to vector<112x512xbf16>
    %c0_2 = arith.constant 0 : index
    %c0_3 = arith.constant 0 : index
    %c0_4 = arith.constant 0 : index
    %2 = vector.load %arg3[%c0_2, %c0_3, %c0_4] : memref<1x512x128xbf16, #tpu.memory_space<vmem>>, vector<1x512x128xbf16>
    %3 = vector.shape_cast %2 : vector<1x512x128xbf16> to vector<512x128xbf16>
    %cst = arith.constant dense<0.000000e+00> : vector<112x128xf32>
    %4 = tpu.matmul %1, %3, %cst {dimension_numbers = #tpu.dot_dimension_numbers<[1], [0], [0], [1], [0, 0, 1, 1], [], []>} : vector<112x512xbf16>, vector<512x128xbf16>, vector<112x128xf32> -> vector<112x128xf32>
    %5 = arith.truncf %4 : vector<112x128xf32> to vector<112x128xbf16>
    %c0_5 = arith.constant 0 : index
    %c0_6 = arith.constant 0 : index
    %c0_7 = arith.constant 0 : index
    %6 = vector.load %arg4[%c0_5, %c0_6, %c0_7] : memref<1x112x128xbf16, #tpu.memory_space<vmem>>, vector<1x112x128xbf16>
    %7 = vector.shape_cast %6 : vector<1x112x128xbf16> to vector<112x128xbf16>
    %8 = vector.shape_cast %5 : vector<112x128xbf16> to vector<1x112x128xbf16>
    tpu.vector_store %arg4[%c0_5, %c0_6, %c0_7], %8 {strides = array<i32>} : memref<1x112x128xbf16, #tpu.memory_space<vmem>>, vector<1x112x128xbf16>,
    %cst_8 = arith.constant dense<0.000000e+00> : vector<128xf32>
    %9 = vector.multi_reduction <add>, %4, %cst_8 [0] : vector<112x128xf32> to vector<128xf32>
    %10 = vector.shape_cast %9 : vector<128xf32> to vector<1x128xf32>
    %11 = vector.shape_cast %10 : vector<1x128xf32> to vector<1x1x1x128xf32>
    %c0_9 = arith.constant 0 : index
    %c0_10 = arith.constant 0 : index
    %c0_11 = arith.constant 0 : index
    %c0_12 = arith.constant 0 : index
    %12 = vector.load %arg5[%c0_9, %c0_10, %c0_11, %c0_12] : memref<1x1x1x128xf32, #tpu.memory_space<vmem>>, vector<1x1x1x128xf32>
    tpu.vector_store %arg5[%c0_9, %c0_10, %c0_11, %c0_12], %11 {strides = array<i32>} : memref<1x1x1x128xf32, #tpu.memory_space<vmem>>, vector<1x1x1x128xf32>,
    %13 = arith.mulf %4, %4 : vector<112x128xf32>
    %cst_13 = arith.constant dense<0.000000e+00> : vector<128xf32>
    %14 = vector.multi_reduction <add>, %13, %cst_13 [0] : vector<112x128xf32> to vector<128xf32>
    %15 = vector.shape_cast %14 : vector<128xf32> to vector<1x128xf32>
    %16 = vector.shape_cast %15 : vector<1x128xf32> to vector<1x1x1x128xf32>
    %c0_14 = arith.constant 0 : index
    %c0_15 = arith.constant 0 : index
    %c0_16 = arith.constant 0 : index
    %c0_17 = arith.constant 0 : index
    %17 = vector.load %arg6[%c0_14, %c0_15, %c0_16, %c0_17] : memref<1x1x1x128xf32, #tpu.memory_space<vmem>>, vector<1x1x1x128xf32>
    tpu.vector_store %arg6[%c0_14, %c0_15, %c0_16, %c0_17], %16 {strides = array<i32>} : memref<1x1x1x128xf32, #tpu.memory_space<vmem>>, vector<1x1x1x128xf32>,
    return
  }
  func.func @transform_0(%arg0: i32, %arg1: i32) -> (i32, i32, i32) {
    %c0_i32 = arith.constant 0 : i32
    %c0_i32_0 = arith.constant 0 : i32
    return %arg0, %arg1, %c0_i32 : i32, i32, i32
  }
  func.func @transform_1(%arg0: i32, %arg1: i32) -> (i32, i32, i32) {
    %c0_i32 = arith.constant 0 : i32
    %c0_i32_0 = arith.constant 0 : i32
    %c0_i32_1 = arith.constant 0 : i32
    return %arg0, %c0_i32, %c0_i32_0 : i32, i32, i32
  }
  func.func @transform_2(%arg0: i32, %arg1: i32) -> (i32, i32, i32) {
    %c0_i32 = arith.constant 0 : i32
    %c0_i32_0 = arith.constant 0 : i32
    return %arg0, %arg1, %c0_i32 : i32, i32, i32
  }
  func.func @transform_3(%arg0: i32, %arg1: i32) -> (i32, i32, i32, i32) {
    %c0_i32 = arith.constant 0 : i32
    %c0_i32_0 = arith.constant 0 : i32
    %c0_i32_1 = arith.constant 0 : i32
    return %arg0, %arg1, %c0_i32, %c0_i32_0 : i32, i32, i32, i32
  }
  func.func @transform_4(%arg0: i32, %arg1: i32) -> (i32, i32, i32, i32) {
    %c0_i32 = arith.constant 0 : i32
    %c0_i32_0 = arith.constant 0 : i32
    %c0_i32_1 = arith.constant 0 : i32
    return %arg0, %arg1, %c0_i32, %c0_i32_0 : i32, i32, i32, i32
  }
}

module attributes {stable_mosaic.version = 11 : i64} {
  func.func @_affine_relu_kernel(%arg0: i32, %arg1: memref<448x128xbf16, #tpu.memory_space<vmem>>, %arg2: memref<1x128xf32, #tpu.memory_space<vmem>>, %arg3: memref<1x128xf32, #tpu.memory_space<vmem>>, %arg4: memref<448x128xbf16, #tpu.memory_space<vmem>>) attributes {dimension_semantics = [#tpu.dimension_semantics<parallel>], iteration_bounds = array<i64: 1>, scalar_prefetch = 0 : i64, scratch_operands = 0 : i64, tpu.core_type = #tpu.core_type<tc>, window_params = [{transform_indices = @transform_0, window_bounds = array<i64: 448, 128>}, {pipeline_mode = #tpu.pipeline_mode<synchronous>, transform_indices = @transform_1, window_bounds = array<i64: 1, 128>}, {pipeline_mode = #tpu.pipeline_mode<synchronous>, transform_indices = @transform_2, window_bounds = array<i64: 1, 128>}, {transform_indices = @transform_3, window_bounds = array<i64: 448, 128>}]} {
    %c0 = arith.constant 0 : index
    %c0_0 = arith.constant 0 : index
    %0 = vector.load %arg1[%c0, %c0_0] : memref<448x128xbf16, #tpu.memory_space<vmem>>, vector<448x128xbf16>
    %1 = arith.extf %0 : vector<448x128xbf16> to vector<448x128xf32>
    %c0_1 = arith.constant 0 : index
    %c0_2 = arith.constant 0 : index
    %2 = vector.load %arg2[%c0_1, %c0_2] : memref<1x128xf32, #tpu.memory_space<vmem>>, vector<1x128xf32>
    %3 = vector.broadcast %2 : vector<1x128xf32> to vector<448x128xf32>
    %4 = arith.mulf %1, %3 : vector<448x128xf32>
    %c0_3 = arith.constant 0 : index
    %c0_4 = arith.constant 0 : index
    %5 = vector.load %arg3[%c0_3, %c0_4] : memref<1x128xf32, #tpu.memory_space<vmem>>, vector<1x128xf32>
    %6 = vector.broadcast %5 : vector<1x128xf32> to vector<448x128xf32>
    %7 = arith.addf %4, %6 : vector<448x128xf32>
    %cst = arith.constant 0.000000e+00 : f32
    %8 = vector.broadcast %cst : f32 to vector<448x128xf32>
    %9 = arith.maximumf %7, %8 : vector<448x128xf32>
    %10 = arith.truncf %9 : vector<448x128xf32> to vector<448x128xbf16>
    %c0_5 = arith.constant 0 : index
    %c0_6 = arith.constant 0 : index
    %11 = vector.load %arg4[%c0_5, %c0_6] : memref<448x128xbf16, #tpu.memory_space<vmem>>, vector<448x128xbf16>
    tpu.vector_store %arg4[%c0_5, %c0_6], %10 {strides = array<i32>} : memref<448x128xbf16, #tpu.memory_space<vmem>>, vector<448x128xbf16>,
    return
  }
  func.func @transform_0(%arg0: i32) -> (i32, i32) {
    %c0_i32 = arith.constant 0 : i32
    %c0_i32_0 = arith.constant 0 : i32
    return %arg0, %c0_i32 : i32, i32
  }
  func.func @transform_1(%arg0: i32) -> (i32, i32) {
    %c0_i32 = arith.constant 0 : i32
    %c0_i32_0 = arith.constant 0 : i32
    %c0_i32_1 = arith.constant 0 : i32
    return %c0_i32, %c0_i32_0 : i32, i32
  }
  func.func @transform_2(%arg0: i32) -> (i32, i32) {
    %c0_i32 = arith.constant 0 : i32
    %c0_i32_0 = arith.constant 0 : i32
    %c0_i32_1 = arith.constant 0 : i32
    return %c0_i32, %c0_i32_0 : i32, i32
  }
  func.func @transform_3(%arg0: i32) -> (i32, i32) {
    %c0_i32 = arith.constant 0 : i32
    %c0_i32_0 = arith.constant 0 : i32
    return %arg0, %c0_i32 : i32, i32
  }
}

module attributes {stable_mosaic.version = 11 : i64} {
  func.func @_phase_matmul_tanh_kernel(%arg0: i32, %arg1: i32, %arg2: memref<1x400x512xbf16, #tpu.memory_space<vmem>>, %arg3: memref<1x512x128xbf16, #tpu.memory_space<vmem>>, %arg4: memref<1x400x128xf32, #tpu.memory_space<vmem>>) attributes {dimension_semantics = [#tpu.dimension_semantics<parallel>, #tpu.dimension_semantics<parallel>], iteration_bounds = array<i64: 4, 1>, scalar_prefetch = 0 : i64, scratch_operands = 0 : i64, tpu.core_type = #tpu.core_type<tc>, window_params = [{transform_indices = @transform_0, window_bounds = array<i64: 1, 400, 512>}, {transform_indices = @transform_1, window_bounds = array<i64: 1, 512, 128>}, {transform_indices = @transform_2, window_bounds = array<i64: 1, 400, 128>}]} {
    %c0 = arith.constant 0 : index
    %c0_0 = arith.constant 0 : index
    %c0_1 = arith.constant 0 : index
    %0 = vector.load %arg2[%c0, %c0_0, %c0_1] : memref<1x400x512xbf16, #tpu.memory_space<vmem>>, vector<1x400x512xbf16>
    %1 = vector.shape_cast %0 : vector<1x400x512xbf16> to vector<400x512xbf16>
    %c0_2 = arith.constant 0 : index
    %c0_3 = arith.constant 0 : index
    %c0_4 = arith.constant 0 : index
    %2 = vector.load %arg3[%c0_2, %c0_3, %c0_4] : memref<1x512x128xbf16, #tpu.memory_space<vmem>>, vector<1x512x128xbf16>
    %3 = vector.shape_cast %2 : vector<1x512x128xbf16> to vector<512x128xbf16>
    %cst = arith.constant dense<0.000000e+00> : vector<400x128xf32>
    %4 = tpu.matmul %1, %3, %cst {dimension_numbers = #tpu.dot_dimension_numbers<[1], [0], [0], [1], [0, 0, 1, 1], [], []>} : vector<400x512xbf16>, vector<512x128xbf16>, vector<400x128xf32> -> vector<400x128xf32>
    %5 = math.tanh %4 : vector<400x128xf32>
    %c0_5 = arith.constant 0 : index
    %c0_6 = arith.constant 0 : index
    %c0_7 = arith.constant 0 : index
    %6 = vector.load %arg4[%c0_5, %c0_6, %c0_7] : memref<1x400x128xf32, #tpu.memory_space<vmem>>, vector<1x400x128xf32>
    %7 = vector.shape_cast %6 : vector<1x400x128xf32> to vector<400x128xf32>
    %8 = vector.shape_cast %5 : vector<400x128xf32> to vector<1x400x128xf32>
    tpu.vector_store %arg4[%c0_5, %c0_6, %c0_7], %8 {strides = array<i32>} : memref<1x400x128xf32, #tpu.memory_space<vmem>>, vector<1x400x128xf32>,
    return
  }
  func.func @transform_0(%arg0: i32, %arg1: i32) -> (i32, i32, i32) {
    %c0_i32 = arith.constant 0 : i32
    %c0_i32_0 = arith.constant 0 : i32
    return %arg0, %arg1, %c0_i32 : i32, i32, i32
  }
  func.func @transform_1(%arg0: i32, %arg1: i32) -> (i32, i32, i32) {
    %c0_i32 = arith.constant 0 : i32
    %c0_i32_0 = arith.constant 0 : i32
    %c0_i32_1 = arith.constant 0 : i32
    return %arg0, %c0_i32, %c0_i32_0 : i32, i32, i32
  }
  func.func @transform_2(%arg0: i32, %arg1: i32) -> (i32, i32, i32) {
    %c0_i32 = arith.constant 0 : i32
    %c0_i32_0 = arith.constant 0 : i32
    return %arg0, %arg1, %c0_i32 : i32, i32, i32
  }
}

</mosaic_0001>

<llo_original>
// kernel: cnn_generator_forward.8
$region0: #{cnn_generator_forward.8}
  #allocation0 [shape = 'u32[]', space=smem, size = 0x4, offset = 0x4, fixed_abs, tag = 'smem constant byte address 0x4 - core index']
  #allocation1 [shape = 'u32[144,128]{1,0:T(1,128)}', space=vmem, size = 0x12000, scoped, tag = 'internal scratch']
  %s0 = inlined_call_operand.vmem [shape: bf16[256,256], index: 0, kind: input, shape index: {}]
  %s1 = inlined_call_operand.vmem [shape: f32[1,256], index: 1, kind: input, shape index: {}]
  %s2 = inlined_call_operand.vmem [shape: f32[1,256], index: 2, kind: input, shape index: {}]
  %s3 = inlined_call_operand.vmem [shape: bf16[256,256], index: 3, kind: output, shape index: {}]
  %s4 = sld [smem:[#allocation0]]
  $region22: #{cnn_generator_forward.8} parent=0
    _
  %s6 = ssub.s32 1, %s4
  %s7 = scalar_select 0, %s6, %s4
  // Predicated region
  $region2: #{cnn_generator_forward.8} parent=0 // pred_check
    _
  $region3: #{cnn_generator_forward.8} parent=0 // pred_check_branch
    %9 = sbr.rel (0) target = $region5
  $region4: #{cnn_generator_forward.8} parent=0 // pred_region
    _
  $region5: #{cnn_generator_forward.8} parent=0 // pred_fallthru
    _
  // Predicated region
  $region6: #{cnn_generator_forward.8} parent=0 // pred_check
    _
  $region7: #{cnn_generator_forward.8} parent=0 // pred_check_branch
    %11 = sbr.rel (0) target = $region9
  $region8: #{cnn_generator_forward.8} parent=0 // pred_region
    _
  $region9: #{cnn_generator_forward.8} parent=0 // pred_fallthru
    _
  // Predicated region
  $region10: #{cnn_generator_forward.8} parent=0 // pred_check
    _
  $region11: #{cnn_generator_forward.8} parent=0 // pred_check_branch
    %13 = sbr.rel (0) target = $region13
  $region12: #{cnn_generator_forward.8} parent=0 // pred_region
    _
  $region13: #{cnn_generator_forward.8} parent=0 // pred_fallthru
    _
  %v14 = vld [vmem:[%s0] sm:$0xff]
  %v15 = vld [vmem:[%s0 + $0x8] sm:$0xff]
  %v16 = vld [vmem:[%s0 + $0x10] sm:$0xff]
  %v17 = vld [vmem:[%s0 + $0x18] sm:$0xff]
  %v18 = vld [vmem:[%s0 + $0x20] sm:$0xff]
  %v19 = vld [vmem:[%s0 + $0x28] sm:$0xff]
  %v20 = vld [vmem:[%s0 + $0x30] sm:$0xff]
  %v21 = vld [vmem:[%s0 + $0x38] sm:$0xff]
  %v22 = vld [vmem:[%s0 + $0x40] sm:$0xff]
  %v23 = vld [vmem:[%s0 + $0x48] sm:$0xff]
  %v24 = vld [vmem:[%s0 + $0x50] sm:$0xff]
  %v25 = vld [vmem:[%s0 + $0x58] sm:$0xff]
  %v26 = vld [vmem:[%s0 + $0x60] sm:$0xff]
  %v27 = vld [vmem:[%s0 + $0x68] sm:$0xff]
  %v28 = vld [vmem:[%s0 + $0x70] sm:$0xff]
  %v29 = vld [vmem:[%s0 + $0x78] sm:$0xff]
  %v30 = vld [vmem:[%s0 + $0x80] sm:$0xff]
  %v31 = vld [vmem:[%s0 + $0x88] sm:$0xff]
  %v32 = vld [vmem:[%s0 + $0x90] sm:$0xff]
  %v33 = vld [vmem:[%s0 + $0x98] sm:$0xff]
  %v34 = vld [vmem:[%s0 + $0xa0] sm:$0xff]
  %v35 = vld [vmem:[%s0 + $0xa8] sm:$0xff]
  %v36 = vld [vmem:[%s0 + $0xb0] sm:$0xff]
  %v37 = vld [vmem:[%s0 + $0xb8] sm:$0xff]
  %v38 = vld [vmem:[%s0 + $0xc0] sm:$0xff]
  %v39 = vld [vmem:[%s0 + $0xc8] sm:$0xff]
  %v40 = vld [vmem:[%s0 + $0xd0] sm:$0xff]
  %v41 = vld [vmem:[%s0 + $0xd8] sm:$0xff]
  %v42 = vld [vmem:[%s0 + $0xe0] sm:$0xff]
  %v43 = vld [vmem:[%s0 + $0xe8] sm:$0xff]
  %v44 = vld [vmem:[%s0 + $0xf0] sm:$0xff]
  %v45 = vld [vmem:[%s0 + $0xf8] sm:$0xff]
  %v46 = vunpack.c.l.bf16 %v14
  %v47 = vunpack.c.h.bf16 %v14
  %v48 = vunpack.c.l.bf16 %v15
  %v49 = vunpack.c.h.bf16 %v15
  %v50 = vunpack.c.l.bf16 %v16
  %v51 = vunpack.c.h.bf16 %v16
  %v52 = vunpack.c.l.bf16 %v17
  %v53 = vunpack.c.h.bf16 %v17
  %v54 = vunpack.c.l.bf16 %v18
  %v55 = vunpack.c.h.bf16 %v18
  %v56 = vunpack.c.l.bf16 %v19
  %v57 = vunpack.c.h.bf16 %v19
  %v58 = vunpack.c.l.bf16 %v20
  %v59 = vunpack.c.h.bf16 %v20
  %v60 = vunpack.c.l.bf16 %v21
  %v61 = vunpack.c.h.bf16 %v21
  %v62 = vunpack.c.l.bf16 %v22
  %v63 = vunpack.c.h.bf16 %v22
  %v64 = vunpack.c.l.bf16 %v23
  %v65 = vunpack.c.h.bf16 %v23
  %v66 = vunpack.c.l.bf16 %v24
  %v67 = vunpack.c.h.bf16 %v24
  %v68 = vunpack.c.l.bf16 %v25
  %v69 = vunpack.c.h.bf16 %v25
  %v70 = vunpack.c.l.bf16 %v26
  %v71 = vunpack.c.h.bf16 %v26
  %v72 = vunpack.c.l.bf16 %v27
  %v73 = vunpack.c.h.bf16 %v27
  %v74 = vunpack.c.l.bf16 %v28
  %v75 = vunpack.c.h.bf16 %v28
  %v76 = vunpack.c.l.bf16 %v29
  %v77 = vunpack.c.h.bf16 %v29
  %v78 = vunpack.c.l.bf16 %v30
  %v79 = vunpack.c.h.bf16 %v30
  %v80 = vunpack.c.l.bf16 %v31
  %v81 = vunpack.c.h.bf16 %v31
  %v82 = vunpack.c.l.bf16 %v32
  %v83 = vunpack.c.h.bf16 %v32
  %v84 = vunpack.c.l.bf16 %v33
  %v85 = vunpack.c.h.bf16 %v33
  %v86 = vunpack.c.l.bf16 %v34
  %v87 = vunpack.c.h.bf16 %v34
  %v88 = vunpack.c.l.bf16 %v35
  %v89 = vunpack.c.h.bf16 %v35
  %v90 = vunpack.c.l.bf16 %v36
  %v91 = vunpack.c.h.bf16 %v36
  %v92 = vunpack.c.l.bf16 %v37
  %v93 = vunpack.c.h.bf16 %v37
  %v94 = vunpack.c.l.bf16 %v38
  %v95 = vunpack.c.h.bf16 %v38
  %v96 = vunpack.c.l.bf16 %v39
  %v97 = vunpack.c.h.bf16 %v39
  %v98 = vunpack.c.l.bf16 %v40
  %v99 = vunpack.c.h.bf16 %v40
  %v100 = vunpack.c.l.bf16 %v41
  %v101 = vunpack.c.h.bf16 %v41
  %v102 = vunpack.c.l.bf16 %v42
  %v103 = vunpack.c.h.bf16 %v42
  %v104 = vunpack.c.l.bf16 %v43
  %v105 = vunpack.c.h.bf16 %v43
  %v106 = vunpack.c.l.bf16 %v44
  %v107 = vunpack.c.h.bf16 %v44
  %v108 = vunpack.c.l.bf16 %v45
  %v109 = vunpack.c.h.bf16 %v45
  %v110 = vld [vmem:[%s1] sm:$0x3]
  %v112 = vlaneseq
  %v113 = vshrl.u32 %v112, 7
  %v114 = vsub.s32 0, %v113
  %v115 = vrot.slane %v110, %v114
  %v116 = vlaneseq
  %v117 = vshrl.u32 %v116, 7
  %v118 = vsub.s32 1, %v117
  %v119 = vrot.slane %v110, %v118
  %v122 = vmul.f32 %v46, %v115
  %v123 = vmul.f32 %v47, %v119
  %v124 = vmul.f32 %v48, %v115
  %v125 = vmul.f32 %v49, %v119
  %v126 = vmul.f32 %v50, %v115
  %v127 = vmul.f32 %v51, %v119
  %v128 = vmul.f32 %v52, %v115
  %v129 = vmul.f32 %v53, %v119
  %v130 = vmul.f32 %v54, %v115
  %v131 = vmul.f32 %v55, %v119
  %v132 = vmul.f32 %v56, %v115
  %v133 = vmul.f32 %v57, %v119
  %v134 = vmul.f32 %v58, %v115
  %v135 = vmul.f32 %v59, %v119
  %v136 = vmul.f32 %v60, %v115
  %v137 = vmul.f32 %v61, %v119
  %v138 = vmul.f32 %v62, %v115
  %v139 = vmul.f32 %v63, %v119
  %v140 = vmul.f32 %v64, %v115
  %v141 = vmul.f32 %v65, %v119
  %v142 = vmul.f32 %v66, %v115
  %v143 = vmul.f32 %v67, %v119
  %v144 = vmul.f32 %v68, %v115
  %v145 = vmul.f32 %v69, %v119
  %v146 = vmul.f32 %v70, %v115
  %v147 = vmul.f32 %v71, %v119
  %v148 = vmul.f32 %v72, %v115
  %v149 = vmul.f32 %v73, %v119
  %v150 = vmul.f32 %v74, %v115
  %v151 = vmul.f32 %v75, %v119
  %v152 = vmul.f32 %v76, %v115
  %v153 = vmul.f32 %v77, %v119
  %v154 = vmul.f32 %v78, %v115
  %v155 = vmul.f32 %v79, %v119
  %v156 = vmul.f32 %v80, %v115
  %v157 = vmul.f32 %v81, %v119
  %v158 = vmul.f32 %v82, %v115
  %v159 = vmul.f32 %v83, %v119
  %v160 = vmul.f32 %v84, %v115
  %v161 = vmul.f32 %v85, %v119
  %v162 = vmul.f32 %v86, %v115
  %v163 = vmul.f32 %v87, %v119
  %v164 = vmul.f32 %v88, %v115
  %v165 = vmul.f32 %v89, %v119
  %v166 = vmul.f32 %v90, %v115
  %v167 = vmul.f32 %v91, %v119
  %v168 = vmul.f32 %v92, %v115
  %v169 = vmul.f32 %v93, %v119
  %v170 = vmul.f32 %v94, %v115
  %v171 = vmul.f32 %v95, %v119
  %v172 = vmul.f32 %v96, %v115
  %v173 = vmul.f32 %v97, %v119
  %v174 = vmul.f32 %v98, %v115
  %v175 = vmul.f32 %v99, %v119
  %v176 = vmul.f32 %v100, %v115
  %v177 = vmul.f32 %v101, %v119
  %v178 = vmul.f32 %v102, %v115
  %v179 = vmul.f32 %v103, %v119
  %v180 = vmul.f32 %v104, %v115
  %v181 = vmul.f32 %v105, %v119
  %v182 = vmul.f32 %v106, %v115
  %v183 = vmul.f32 %v107, %v119
  %v184 = vmul.f32 %v108, %v115
  %v185 = vmul.f32 %v109, %v119
  %v186 = vld [vmem:[%s2] sm:$0x3]
  %v188 = vlaneseq
  %v189 = vshrl.u32 %v188, 7
  %v190 = vsub.s32 0, %v189
  %v191 = vrot.slane %v186, %v190
  %v192 = vlaneseq
  %v193 = vshrl.u32 %v192, 7
  %v194 = vsub.s32 1, %v193
  %v195 = vrot.slane %v186, %v194
  %v198 = vadd.f32 %v122, %v191
  %v199 = vadd.f32 %v123, %v195
  %v200 = vadd.f32 %v124, %v191
  %v201 = vadd.f32 %v125, %v195
  %v202 = vadd.f32 %v126, %v191
  %v203 = vadd.f32 %v127, %v195
  %v204 = vadd.f32 %v128, %v191
  %v205 = vadd.f32 %v129, %v195
  %v206 = vadd.f32 %v130, %v191
  %v207 = vadd.f32 %v131, %v195
  %v208 = vadd.f32 %v132, %v191
  %v209 = vadd.f32 %v133, %v195
  %v210 = vadd.f32 %v134, %v191
  %v211 = vadd.f32 %v135, %v195
  %v212 = vadd.f32 %v136, %v191
  %v213 = vadd.f32 %v137, %v195
  %v214 = vadd.f32 %v138, %v191
  %v215 = vadd.f32 %v139, %v195
  %v216 = vadd.f32 %v140, %v191
  %v217 = vadd.f32 %v141, %v195
  %v218 = vadd.f32 %v142, %v191
  %v219 = vadd.f32 %v143, %v195
  %v220 = vadd.f32 %v144, %v191
  %v221 = vadd.f32 %v145, %v195
  %v222 = vadd.f32 %v146, %v191
  %v223 = vadd.f32 %v147, %v195
  %v224 = vadd.f32 %v148, %v191
  %v225 = vadd.f32 %v149, %v195
  %v226 = vadd.f32 %v150, %v191
  %v227 = vadd.f32 %v151, %v195
  %v228 = vadd.f32 %v152, %v191
  %v229 = vadd.f32 %v153, %v195
  %v230 = vadd.f32 %v154, %v191
  %v231 = vadd.f32 %v155, %v195
  %v232 = vadd.f32 %v156, %v191
  %v233 = vadd.f32 %v157, %v195
  %v234 = vadd.f32 %v158, %v191
  %v235 = vadd.f32 %v159, %v195
  %v236 = vadd.f32 %v160, %v191
  %v237 = vadd.f32 %v161, %v195
  %v238 = vadd.f32 %v162, %v191
  %v239 = vadd.f32 %v163, %v195
  %v240 = vadd.f32 %v164, %v191
  %v241 = vadd.f32 %v165, %v195
  %v242 = vadd.f32 %v166, %v191
  %v243 = vadd.f32 %v167, %v195
  %v244 = vadd.f32 %v168, %v191
  %v245 = vadd.f32 %v169, %v195
  %v246 = vadd.f32 %v170, %v191
  %v247 = vadd.f32 %v171, %v195
  %v248 = vadd.f32 %v172, %v191
  %v249 = vadd.f32 %v173, %v195
  %v250 = vadd.f32 %v174, %v191
  %v251 = vadd.f32 %v175, %v195
  %v252 = vadd.f32 %v176, %v191
  %v253 = vadd.f32 %v177, %v195
  %v254 = vadd.f32 %v178, %v191
  %v255 = vadd.f32 %v179, %v195
  %v256 = vadd.f32 %v180, %v191
  %v257 = vadd.f32 %v181, %v195
  %v258 = vadd.f32 %v182, %v191
  %v259 = vadd.f32 %v183, %v195
  %v260 = vadd.f32 %v184, %v191
  %v261 = vadd.f32 %v185, %v195
  %v262 = vmax.f32 %v198, 0.0
  %v263 = vmax.f32 %v199, 0.0
  %v264 = vmax.f32 %v200, 0.0
  %v265 = vmax.f32 %v201, 0.0
  %v266 = vmax.f32 %v202, 0.0
  %v267 = vmax.f32 %v203, 0.0
  %v268 = vmax.f32 %v204, 0.0
  %v269 = vmax.f32 %v205, 0.0
  %v270 = vmax.f32 %v206, 0.0
  %v271 = vmax.f32 %v207, 0.0
  %v272 = vmax.f32 %v208, 0.0
  %v273 = vmax.f32 %v209, 0.0
  %v274 = vmax.f32 %v210, 0.0
  %v275 = vmax.f32 %v211, 0.0
  %v276 = vmax.f32 %v212, 0.0
  %v277 = vmax.f32 %v213, 0.0
  %v278 = vmax.f32 %v214, 0.0
  %v279 = vmax.f32 %v215, 0.0
  %v280 = vmax.f32 %v216, 0.0
  %v281 = vmax.f32 %v217, 0.0
  %v282 = vmax.f32 %v218, 0.0
  %v283 = vmax.f32 %v219, 0.0
  %v284 = vmax.f32 %v220, 0.0
  %v285 = vmax.f32 %v221, 0.0
  %v286 = vmax.f32 %v222, 0.0
  %v287 = vmax.f32 %v223, 0.0
  %v288 = vmax.f32 %v224, 0.0
  %v289 = vmax.f32 %v225, 0.0
  %v290 = vmax.f32 %v226, 0.0
  %v291 = vmax.f32 %v227, 0.0
  %v292 = vmax.f32 %v228, 0.0
  %v293 = vmax.f32 %v229, 0.0
  %v294 = vmax.f32 %v230, 0.0
  %v295 = vmax.f32 %v231, 0.0
  %v296 = vmax.f32 %v232, 0.0
  %v297 = vmax.f32 %v233, 0.0
  %v298 = vmax.f32 %v234, 0.0
  %v299 = vmax.f32 %v235, 0.0
  %v300 = vmax.f32 %v236, 0.0
  %v301 = vmax.f32 %v237, 0.0
  %v302 = vmax.f32 %v238, 0.0
  %v303 = vmax.f32 %v239, 0.0
  %v304 = vmax.f32 %v240, 0.0
  %v305 = vmax.f32 %v241, 0.0
  %v306 = vmax.f32 %v242, 0.0
  %v307 = vmax.f32 %v243, 0.0
  %v308 = vmax.f32 %v244, 0.0
  %v309 = vmax.f32 %v245, 0.0
  %v310 = vmax.f32 %v246, 0.0
  %v311 = vmax.f32 %v247, 0.0
  %v312 = vmax.f32 %v248, 0.0
  %v313 = vmax.f32 %v249, 0.0
  %v314 = vmax.f32 %v250, 0.0
  %v315 = vmax.f32 %v251, 0.0
  %v316 = vmax.f32 %v252, 0.0
  %v317 = vmax.f32 %v253, 0.0
  %v318 = vmax.f32 %v254, 0.0
  %v319 = vmax.f32 %v255, 0.0
  %v320 = vmax.f32 %v256, 0.0
  %v321 = vmax.f32 %v257, 0.0
  %v322 = vmax.f32 %v258, 0.0
  %v323 = vmax.f32 %v259, 0.0
  %v324 = vmax.f32 %v260, 0.0
  %v325 = vmax.f32 %v261, 0.0
  %v326 = vpack.c.bf16 %v264, %v262
  %v327 = vpack.c.bf16 %v265, %v263
  %v328 = vpack.c.bf16 %v268, %v266
  %v329 = vpack.c.bf16 %v269, %v267
  %v330 = vpack.c.bf16 %v272, %v270
  %v331 = vpack.c.bf16 %v273, %v271
  %v332 = vpack.c.bf16 %v276, %v274
  %v333 = vpack.c.bf16 %v277, %v275
  %v334 = vpack.c.bf16 %v280, %v278
  %v335 = vpack.c.bf16 %v281, %v279
  %v336 = vpack.c.bf16 %v284, %v282
  %v337 = vpack.c.bf16 %v285, %v283
  %v338 = vpack.c.bf16 %v288, %v286
  %v339 = vpack.c.bf16 %v289, %v287
  %v340 = vpack.c.bf16 %v292, %v290
  %v341 = vpack.c.bf16 %v293, %v291
  %v342 = vpack.c.bf16 %v296, %v294
  %v343 = vpack.c.bf16 %v297, %v295
  %v344 = vpack.c.bf16 %v300, %v298
  %v345 = vpack.c.bf16 %v301, %v299
  %v346 = vpack.c.bf16 %v304, %v302
  %v347 = vpack.c.bf16 %v305, %v303
  %v348 = vpack.c.bf16 %v308, %v306
  %v349 = vpack.c.bf16 %v309, %v307
  %v350 = vpack.c.bf16 %v312, %v310
  %v351 = vpack.c.bf16 %v313, %v311
  %v352 = vpack.c.bf16 %v316, %v314
  %v353 = vpack.c.bf16 %v317, %v315
  %v354 = vpack.c.bf16 %v320, %v318
  %v355 = vpack.c.bf16 %v321, %v319
  %v356 = vpack.c.bf16 %v324, %v322
  %v357 = vpack.c.bf16 %v325, %v323
  %v390 = vunpack.c.l.b16 %v326
  %v391 = vunpack.c.l.b16 %v327
  %v392 = vunpack.c.h.b16 %v326
  %v393 = vunpack.c.h.b16 %v327
  %v394 = vunpack.c.l.b16 %v328
  %v395 = vunpack.c.l.b16 %v329
  %v396 = vunpack.c.h.b16 %v328
  %v397 = vunpack.c.h.b16 %v329
  %v398 = vunpack.c.l.b16 %v330
  %v399 = vunpack.c.l.b16 %v331
  %v400 = vunpack.c.h.b16 %v330
  %v401 = vunpack.c.h.b16 %v331
  %v402 = vunpack.c.l.b16 %v332
  %v403 = vunpack.c.l.b16 %v333
  %v404 = vunpack.c.h.b16 %v332
  %v405 = vunpack.c.h.b16 %v333
  %v406 = vunpack.c.l.b16 %v334
  %v407 = vunpack.c.l.b16 %v335
  %v408 = vunpack.c.h.b16 %v334
  %v409 = vunpack.c.h.b16 %v335
  %v410 = vunpack.c.l.b16 %v336
  %v411 = vunpack.c.l.b16 %v337
  %v412 = vunpack.c.h.b16 %v336
  %v413 = vunpack.c.h.b16 %v337
  %v414 = vunpack.c.l.b16 %v338
  %v415 = vunpack.c.l.b16 %v339
  %v416 = vunpack.c.h.b16 %v338
  %v417 = vunpack.c.h.b16 %v339
  %v418 = vunpack.c.l.b16 %v340
  %v419 = vunpack.c.l.b16 %v341
  %v420 = vunpack.c.h.b16 %v340
  %v421 = vunpack.c.h.b16 %v341
  %v422 = vunpack.c.l.b16 %v342
  %v423 = vunpack.c.l.b16 %v343
  %v424 = vunpack.c.h.b16 %v342
  %v425 = vunpack.c.h.b16 %v343
  %v426 = vunpack.c.l.b16 %v344
  %v427 = vunpack.c.l.b16 %v345
  %v428 = vunpack.c.h.b16 %v344
  %v429 = vunpack.c.h.b16 %v345
  %v430 = vunpack.c.l.b16 %v346
  %v431 = vunpack.c.l.b16 %v347
  %v432 = vunpack.c.h.b16 %v346
  %v433 = vunpack.c.h.b16 %v347
  %v434 = vunpack.c.l.b16 %v348
  %v435 = vunpack.c.l.b16 %v349
  %v436 = vunpack.c.h.b16 %v348
  %v437 = vunpack.c.h.b16 %v349
  %v438 = vunpack.c.l.b16 %v350
  %v439 = vunpack.c.l.b16 %v351
  %v440 = vunpack.c.h.b16 %v350
  %v441 = vunpack.c.h.b16 %v351
  %v442 = vunpack.c.l.b16 %v352
  %v443 = vunpack.c.l.b16 %v353
  %v444 = vunpack.c.h.b16 %v352
  %v445 = vunpack.c.h.b16 %v353
  %v446 = vunpack.c.l.b16 %v354
  %v447 = vunpack.c.l.b16 %v355
  %v448 = vunpack.c.h.b16 %v354
  %v449 = vunpack.c.h.b16 %v355
  %v450 = vunpack.c.l.b16 %v356
  %v451 = vunpack.c.l.b16 %v357
  %v452 = vunpack.c.h.b16 %v356
  %v453 = vunpack.c.h.b16 %v357
  %v454 = vpack.c.b16 %v391, %v390
  %v455 = vpack.c.b16 %v393, %v392
  %v456 = vpack.c.b16 %v395, %v394
  %v457 = vpack.c.b16 %v397, %v396
  %v458 = vpack.c.b16 %v399, %v398
  %v459 = vpack.c.b16 %v401, %v400
  %v460 = vpack.c.b16 %v403, %v402
  %v461 = vpack.c.b16 %v405, %v404
  %v462 = vpack.c.b16 %v407, %v406
  %v463 = vpack.c.b16 %v409, %v408
  %v464 = vpack.c.b16 %v411, %v410
  %v465 = vpack.c.b16 %v413, %v412
  %v466 = vpack.c.b16 %v415, %v414
  %v467 = vpack.c.b16 %v417, %v416
  %v468 = vpack.c.b16 %v419, %v418
  %v469 = vpack.c.b16 %v421, %v420
  %v470 = vpack.c.b16 %v423, %v422
  %v471 = vpack.c.b16 %v425, %v424
  %v472 = vpack.c.b16 %v427, %v426
  %v473 = vpack.c.b16 %v429, %v428
  %v474 = vpack.c.b16 %v431, %v430
  %v475 = vpack.c.b16 %v433, %v432
  %v476 = vpack.c.b16 %v435, %v434
  %v477 = vpack.c.b16 %v437, %v436
  %v478 = vpack.c.b16 %v439, %v438
  %v479 = vpack.c.b16 %v441, %v440
  %v480 = vpack.c.b16 %v443, %v442
  %v481 = vpack.c.b16 %v445, %v444
  %v482 = vpack.c.b16 %v447, %v446
  %v483 = vpack.c.b16 %v449, %v448
  %v484 = vpack.c.b16 %v451, %v450
  %v485 = vpack.c.b16 %v453, %v452
  %518 = vst [vmem:[%s3] sm:$0xff] %v454
  %519 = vst [vmem:[%s3 + $0x8] sm:$0xff] %v455
  %520 = vst [vmem:[%s3 + $0x10] sm:$0xff] %v456
  %521 = vst [vmem:[%s3 + $0x18] sm:$0xff] %v457
  %522 = vst [vmem:[%s3 + $0x20] sm:$0xff] %v458
  %523 = vst [vmem:[%s3 + $0x28] sm:$0xff] %v459
  %524 = vst [vmem:[%s3 + $0x30] sm:$0xff] %v460
  %525 = vst [vmem:[%s3 + $0x38] sm:$0xff] %v461
  %526 = vst [vmem:[%s3 + $0x40] sm:$0xff] %v462
  %527 = vst [vmem:[%s3 + $0x48] sm:$0xff] %v463
  %528 = vst [vmem:[%s3 + $0x50] sm:$0xff] %v464
  %529 = vst [vmem:[%s3 + $0x58] sm:$0xff] %v465
  %530 = vst [vmem:[%s3 + $0x60] sm:$0xff] %v466
  %531 = vst [vmem:[%s3 + $0x68] sm:$0xff] %v467
  %532 = vst [vmem:[%s3 + $0x70] sm:$0xff] %v468
  %533 = vst [vmem:[%s3 + $0x78] sm:$0xff] %v469
  %534 = vst [vmem:[%s3 + $0x80] sm:$0xff] %v470
  %535 = vst [vmem:[%s3 + $0x88] sm:$0xff] %v471
  %536 = vst [vmem:[%s3 + $0x90] sm:$0xff] %v472
  %537 = vst [vmem:[%s3 + $0x98] sm:$0xff] %v473
  %538 = vst [vmem:[%s3 + $0xa0] sm:$0xff] %v474
  %539 = vst [vmem:[%s3 + $0xa8] sm:$0xff] %v475
  %540 = vst [vmem:[%s3 + $0xb0] sm:$0xff] %v476
  %541 = vst [vmem:[%s3 + $0xb8] sm:$0xff] %v477
  %542 = vst [vmem:[%s3 + $0xc0] sm:$0xff] %v478
  %543 = vst [vmem:[%s3 + $0xc8] sm:$0xff] %v479
  %544 = vst [vmem:[%s3 + $0xd0] sm:$0xff] %v480
  %545 = vst [vmem:[%s3 + $0xd8] sm:$0xff] %v481
  %546 = vst [vmem:[%s3 + $0xe0] sm:$0xff] %v482
  %547 = vst [vmem:[%s3 + $0xe8] sm:$0xff] %v483
  %548 = vst [vmem:[%s3 + $0xf0] sm:$0xff] %v484
  %549 = vst [vmem:[%s3 + $0xf8] sm:$0xff] %v485
  // Predicated region
  $region14: #{cnn_generator_forward.8} parent=0 // pred_check
    _
  $region15: #{cnn_generator_forward.8} parent=0 // pred_check_branch
    %551 = sbr.rel (0) target = $region17
  $region16: #{cnn_generator_forward.8} parent=0 // pred_region
    _
  $region17: #{cnn_generator_forward.8} parent=0 // pred_fallthru
    _
  // Predicated region
  $region18: #{cnn_generator_forward.8} parent=0 // pred_check
    _
  $region19: #{cnn_generator_forward.8} parent=0 // pred_check_branch
    %553 = sbr.rel (0) target = $region21
  $region20: #{cnn_generator_forward.8} parent=0 // pred_region
    _
  $region21: #{cnn_generator_forward.8} parent=0 // pred_fallthru
    _

// kernel: cnn_generator_forward.7
$region0: #{cnn_generator_forward.7}
  #allocation0 [shape = 'u32[]', space=smem, size = 0x4, offset = 0x4, fixed_abs, tag = 'smem constant byte address 0x4 - core index']
  #allocation1 [shape = 'u32[144,128]{1,0:T(1,128)}', space=vmem, size = 0x12000, scoped, tag = 'internal scratch']
  %s0 = inlined_call_operand.vmem [shape: bf16[1,16,16], index: 0, kind: input, shape index: {}]
  %s1 = inlined_call_operand.vmem [shape: bf16[1,16,4096], index: 1, kind: input, shape index: {}]
  %s2 = inlined_call_operand.vmem [shape: bf16[1,16,4096], index: 2, kind: output, shape index: {0}]
  %s3 = inlined_call_operand.vmem [shape: f32[1,1,1,4096], index: 3, kind: output, shape index: {1}]
  %s4 = inlined_call_operand.vmem [shape: f32[1,1,1,4096], index: 4, kind: output, shape index: {2}]
  %5 = xla_tuple %s2, %s3, %s4
  %s6 = sld [smem:[#allocation0]]
  $region34: #{cnn_generator_forward.7} parent=0
    _
  %s8 = ssub.s32 1, %s6
  %s9 = scalar_select 0, %s8, %s6
  // Predicated region
  $region2: #{cnn_generator_forward.7} parent=0 // pred_check
    _
  $region3: #{cnn_generator_forward.7} parent=0 // pred_check_branch
    %11 = sbr.rel (0) target = $region5
  $region4: #{cnn_generator_forward.7} parent=0 // pred_region
    _
  $region5: #{cnn_generator_forward.7} parent=0 // pred_fallthru
    _
  // Predicated region
  $region6: #{cnn_generator_forward.7} parent=0 // pred_check
    _
  $region7: #{cnn_generator_forward.7} parent=0 // pred_check_branch
    %13 = sbr.rel (0) target = $region9
  $region8: #{cnn_generator_forward.7} parent=0 // pred_region
    _
  $region9: #{cnn_generator_forward.7} parent=0 // pred_fallthru
    _
  %v15 = vld [vmem:[%s0] sm:$0xf]
  %v16 = vld [vmem:[%s0 + $0x4] sm:$0xf]
  %v17 = vld [vmem:[%s1] sm:$0xff]
  %v18 = vld [vmem:[%s1 + $0x8] sm:$0xff]
  %v19 = vld [vmem:[%s1 + $0x10] sm:$0xff]
  %v20 = vld [vmem:[%s1 + $0x18] sm:$0xff]
  %v21 = vld [vmem:[%s1 + $0x20] sm:$0xff]
  %v22 = vld [vmem:[%s1 + $0x28] sm:$0xff]
  %v23 = vld [vmem:[%s1 + $0x30] sm:$0xff]
  %v24 = vld [vmem:[%s1 + $0x38] sm:$0xff]
  %v25 = vld [vmem:[%s1 + $0x40] sm:$0xff]
  %v26 = vld [vmem:[%s1 + $0x48] sm:$0xff]
  %v27 = vld [vmem:[%s1 + $0x50] sm:$0xff]
  %v28 = vld [vmem:[%s1 + $0x58] sm:$0xff]
  %v29 = vld [vmem:[%s1 + $0x60] sm:$0xff]
  %v30 = vld [vmem:[%s1 + $0x68] sm:$0xff]
  %v31 = vld [vmem:[%s1 + $0x70] sm:$0xff]
  %v32 = vld [vmem:[%s1 + $0x78] sm:$0xff]
  %v33 = vld [vmem:[%s1 + $0x80] sm:$0xff]
  %v34 = vld [vmem:[%s1 + $0x88] sm:$0xff]
  %v35 = vld [vmem:[%s1 + $0x90] sm:$0xff]
  %v36 = vld [vmem:[%s1 + $0x98] sm:$0xff]
  %v37 = vld [vmem:[%s1 + $0xa0] sm:$0xff]
  %v38 = vld [vmem:[%s1 + $0xa8] sm:$0xff]
  %v39 = vld [vmem:[%s1 + $0xb0] sm:$0xff]
  %v40 = vld [vmem:[%s1 + $0xb8] sm:$0xff]
  %v41 = vld [vmem:[%s1 + $0xc0] sm:$0xff]
  %v42 = vld [vmem:[%s1 + $0xc8] sm:$0xff]
  %v43 = vld [vmem:[%s1 + $0xd0] sm:$0xff]
  %v44 = vld [vmem:[%s1 + $0xd8] sm:$0xff]
  %v45 = vld [vmem:[%s1 + $0xe0] sm:$0xff]
  %v46 = vld [vmem:[%s1 + $0xe8] sm:$0xff]
  %v47 = vld [vmem:[%s1 + $0xf0] sm:$0xff]
  %v48 = vld [vmem:[%s1 + $0xf8] sm:$0xff]
  %v51 = vunpack.c.l.b16 %v15
  %v52 = vunpack.c.l.b16 %v16
  %v53 = vpack.c.b16 %v52, %v51
  %v86 = vunpack.c.l.b16 %v17
  %v87 = vunpack.c.h.b16 %v17
  %v88 = vunpack.c.l.b16 %v18
  %v89 = vunpack.c.h.b16 %v18
  %v90 = vunpack.c.l.b16 %v19
  %v91 = vunpack.c.h.b16 %v19
  %v92 = vunpack.c.l.b16 %v20
  %v93 = vunpack.c.h.b16 %v20
  %v94 = vunpack.c.l.b16 %v21
  %v95 = vunpack.c.h.b16 %v21
  %v96 = vunpack.c.l.b16 %v22
  %v97 = vunpack.c.h.b16 %v22
  %v98 = vunpack.c.l.b16 %v23
  %v99 = vunpack.c.h.b16 %v23
  %v100 = vunpack.c.l.b16 %v24
  %v101 = vunpack.c.h.b16 %v24
  %v102 = vunpack.c.l.b16 %v25
  %v103 = vunpack.c.h.b16 %v25
  %v104 = vunpack.c.l.b16 %v26
  %v105 = vunpack.c.h.b16 %v26
  %v106 = vunpack.c.l.b16 %v27
  %v107 = vunpack.c.h.b16 %v27
  %v108 = vunpack.c.l.b16 %v28
  %v109 = vunpack.c.h.b16 %v28
  %v110 = vunpack.c.l.b16 %v29
  %v111 = vunpack.c.h.b16 %v29
  %v112 = vunpack.c.l.b16 %v30
  %v113 = vunpack.c.h.b16 %v30
  %v114 = vunpack.c.l.b16 %v31
  %v115 = vunpack.c.h.b16 %v31
  %v116 = vunpack.c.l.b16 %v32
  %v117 = vunpack.c.h.b16 %v32
  %v118 = vunpack.c.l.b16 %v33
  %v119 = vunpack.c.h.b16 %v33
  %v120 = vunpack.c.l.b16 %v34
  %v121 = vunpack.c.h.b16 %v34
  %v122 = vunpack.c.l.b16 %v35
  %v123 = vunpack.c.h.b16 %v35
  %v124 = vunpack.c.l.b16 %v36
  %v125 = vunpack.c.h.b16 %v36
  %v126 = vunpack.c.l.b16 %v37
  %v127 = vunpack.c.h.b16 %v37
  %v128 = vunpack.c.l.b16 %v38
  %v129 = vunpack.c.h.b16 %v38
  %v130 = vunpack.c.l.b16 %v39
  %v131 = vunpack.c.h.b16 %v39
  %v132 = vunpack.c.l.b16 %v40
  %v133 = vunpack.c.h.b16 %v40
  %v134 = vunpack.c.l.b16 %v41
  %v135 = vunpack.c.h.b16 %v41
  %v136 = vunpack.c.l.b16 %v42
  %v137 = vunpack.c.h.b16 %v42
  %v138 = vunpack.c.l.b16 %v43
  %v139 = vunpack.c.h.b16 %v43
  %v140 = vunpack.c.l.b16 %v44
  %v141 = vunpack.c.h.b16 %v44
  %v142 = vunpack.c.l.b16 %v45
  %v143 = vunpack.c.h.b16 %v45
  %v144 = vunpack.c.l.b16 %v46
  %v145 = vunpack.c.h.b16 %v46
  %v146 = vunpack.c.l.b16 %v47
  %v147 = vunpack.c.h.b16 %v47
  %v148 = vunpack.c.l.b16 %v48
  %v149 = vunpack.c.h.b16 %v48
  %v150 = vpack.c.b16 %v118, %v86
  %v151 = vpack.c.b16 %v119, %v87
  %v152 = vpack.c.b16 %v120, %v88
  %v153 = vpack.c.b16 %v121, %v89
  %v154 = vpack.c.b16 %v122, %v90
  %v155 = vpack.c.b16 %v123, %v91
  %v156 = vpack.c.b16 %v124, %v92
  %v157 = vpack.c.b16 %v125, %v93
  %v158 = vpack.c.b16 %v126, %v94
  %v159 = vpack.c.b16 %v127, %v95
  %v160 = vpack.c.b16 %v128, %v96
  %v161 = vpack.c.b16 %v129, %v97
  %v162 = vpack.c.b16 %v130, %v98
  %v163 = vpack.c.b16 %v131, %v99
  %v164 = vpack.c.b16 %v132, %v100
  %v165 = vpack.c.b16 %v133, %v101
  %v166 = vpack.c.b16 %v134, %v102
  %v167 = vpack.c.b16 %v135, %v103
  %v168 = vpack.c.b16 %v136, %v104
  %v169 = vpack.c.b16 %v137, %v105
  %v170 = vpack.c.b16 %v138, %v106
  %v171 = vpack.c.b16 %v139, %v107
  %v172 = vpack.c.b16 %v140, %v108
  %v173 = vpack.c.b16 %v141, %v109
  %v174 = vpack.c.b16 %v142, %v110
  %v175 = vpack.c.b16 %v143, %v111
  %v176 = vpack.c.b16 %v144, %v112
  %v177 = vpack.c.b16 %v145, %v113
  %v178 = vpack.c.b16 %v146, %v114
  %v179 = vpack.c.b16 %v147, %v115
  %v180 = vpack.c.b16 %v148, %v116
  %v181 = vpack.c.b16 %v149, %v117
  %vm214 = vcmask 130048
  %v216 = vsel %vm214, %v53, 0
  %218 = vmatprep.subr.bf16.mxu0 %v151
  %219 = vmatpush1.bf16.msra.mxu0 %v150
  %220 = vmatprep.subr.bf16.mxu0 0
  %221 = vmatpush1.bf16.msra.mxu0 0
  %222 = vmatprep.subr.bf16.mxu0 0
  %223 = vmatpush1.bf16.msra.mxu0 0
  %224 = vmatprep.subr.bf16.mxu0 0
  %225 = vmatpush1.bf16.msra.mxu0 0
  %226 = vmatprep.subr.bf16.mxu0 0
  %227 = vmatpush1.bf16.msra.mxu0 0
  %228 = vmatprep.subr.bf16.mxu0 0
  %229 = vmatpush1.bf16.msra.mxu0 0
  %230 = vmatprep.subr.bf16.mxu0 0
  %231 = vmatpush1.bf16.msra.mxu0 0
  %232 = vmatprep.subr.bf16.mxu0 0
  %233 = vmatpush1.bf16.msra.mxu0 0
  %234 = vmatprep.subr.bf16.mxu0 0
  %235 = vmatpush1.bf16.msra.mxu0 0
  %236 = vmatprep.subr.bf16.mxu0 0
  %237 = vmatpush1.bf16.msra.mxu0 0
  %238 = vmatprep.subr.bf16.mxu0 0
  %239 = vmatpush1.bf16.msra.mxu0 0
  %240 = vmatprep.subr.bf16.mxu0 0
  %241 = vmatpush1.bf16.msra.mxu0 0
  %242 = vmatprep.subr.bf16.mxu0 0
  %243 = vmatpush1.bf16.msra.mxu0 0
  %244 = vmatprep.subr.bf16.mxu0 0
  %245 = vmatpush1.bf16.msra.mxu0 0
  %246 = vmatprep.subr.bf16.mxu0 0
  %247 = vmatpush1.bf16.msra.mxu0 0
  %248 = vmatprep.subr.bf16.mxu0 0
  %249 = vmatpush1.bf16.msra.mxu0 0
  %250 = vmatprep.mubr.bf16.mxu0 0
  %251 = vmatmul.mubr.bf16.gmra.mrb[0].mxu0 %v216
  %v252 = vpop.f32.mrb[0].mxu0
  %v253 = vadd.f32 0.0, %v252
  %v254 = vpop.f32.mrb[0].mxu0
  %v255 = vadd.f32 0.0, %v254
  %v256 = vpop.f32.mrb[0].mxu0
  %v257 = vadd.f32 0.0, %v256
  %v258 = vpop.f32.mrb[0].mxu0
  %v259 = vadd.f32 0.0, %v258
  %260 = vdwg.mxu0
  %261 = vmatprep.subr.bf16.mxu0 %v153
  %262 = vmatpush1.bf16.msra.mxu0 %v152
  %263 = vmatprep.subr.bf16.mxu0 0
  %264 = vmatpush1.bf16.msra.mxu0 0
  %265 = vmatprep.subr.bf16.mxu0 0
  %266 = vmatpush1.bf16.msra.mxu0 0
  %267 = vmatprep.subr.bf16.mxu0 0
  %268 = vmatpush1.bf16.msra.mxu0 0
  %269 = vmatprep.subr.bf16.mxu0 0
  %270 = vmatpush1.bf16.msra.mxu0 0
  %271 = vmatprep.subr.bf16.mxu0 0
  %272 = vmatpush1.bf16.msra.mxu0 0
  %273 = vmatprep.subr.bf16.mxu0 0
  %274 = vmatpush1.bf16.msra.mxu0 0
  %275 = vmatprep.subr.bf16.mxu0 0
  %276 = vmatpush1.bf16.msra.mxu0 0
  %277 = vmatprep.subr.bf16.mxu0 0
  %278 = vmatpush1.bf16.msra.mxu0 0
  %279 = vmatprep.subr.bf16.mxu0 0
  %280 = vmatpush1.bf16.msra.mxu0 0
  %281 = vmatprep.subr.bf16.mxu0 0
  %282 = vmatpush1.bf16.msra.mxu0 0
  %283 = vmatprep.subr.bf16.mxu0 0
  %284 = vmatpush1.bf16.msra.mxu0 0
  %285 = vmatprep.subr.bf16.mxu0 0
  %286 = vmatpush1.bf16.msra.mxu0 0
  %287 = vmatprep.subr.bf16.mxu0 0
  %288 = vmatpush1.bf16.msra.mxu0 0
  %289 = vmatprep.subr.bf16.mxu0 0
  %290 = vmatpush1.bf16.msra.mxu0 0
  %291 = vmatprep.subr.bf16.mxu0 0
  %292 = vmatpush1.bf16.msra.mxu0 0
  %293 = vmatprep.mubr.bf16.mxu0 0
  %294 = vmatmul.mubr.bf16.gmra.mrb[0].mxu0 %v216
  %v295 = vpop.f32.mrb[0].mxu0
  %v296 = vadd.f32 0.0, %v295
  %v297 = vpop.f32.mrb[0].mxu0
  %v298 = vadd.f32 0.0, %v297
  %v299 = vpop.f32.mrb[0].mxu0
  %v300 = vadd.f32 0.0, %v299
  %v301 = vpop.f32.mrb[0].mxu0
  %v302 = vadd.f32 0.0, %v301
  %303 = vdwg.mxu0
  %304 = vmatprep.subr.bf16.mxu0 %v155
  %305 = vmatpush1.bf16.msra.mxu0 %v154
  %306 = vmatprep.subr.bf16.mxu0 0
  %307 = vmatpush1.bf16.msra.mxu0 0
  %308 = vmatprep.subr.bf16.mxu0 0
  %309 = vmatpush1.bf16.msra.mxu0 0
  %310 = vmatprep.subr.bf16.mxu0 0
  %311 = vmatpush1.bf16.msra.mxu0 0
  %312 = vmatprep.subr.bf16.mxu0 0
  %313 = vmatpush1.bf16.msra.mxu0 0
  %314 = vmatprep.subr.bf16.mxu0 0
  %315 = vmatpush1.bf16.msra.mxu0 0
  %316 = vmatprep.subr.bf16.mxu0 0
  %317 = vmatpush1.bf16.msra.mxu0 0
  %318 = vmatprep.subr.bf16.mxu0 0
  %319 = vmatpush1.bf16.msra.mxu0 0
  %320 = vmatprep.subr.bf16.mxu0 0
  %321 = vmatpush1.bf16.msra.mxu0 0
  %322 = vmatprep.subr.bf16.mxu0 0
  %323 = vmatpush1.bf16.msra.mxu0 0
  %324 = vmatprep.subr.bf16.mxu0 0
  %325 = vmatpush1.bf16.msra.mxu0 0
  %326 = vmatprep.subr.bf16.mxu0 0
  %327 = vmatpush1.bf16.msra.mxu0 0
  %328 = vmatprep.subr.bf16.mxu0 0
  %329 = vmatpush1.bf16.msra.mxu0 0
  %330 = vmatprep.subr.bf16.mxu0 0
  %331 = vmatpush1.bf16.msra.mxu0 0
  %332 = vmatprep.subr.bf16.mxu0 0
  %333 = vmatpush1.bf16.msra.mxu0 0
  %334 = vmatprep.subr.bf16.mxu0 0
  %335 = vmatpush1.bf16.msra.mxu0 0
  %336 = vmatprep.mubr.bf16.mxu0 0
  %337 = vmatmul.mubr.bf16.gmra.mrb[0].mxu0 %v216
  %v338 = vpop.f32.mrb[0].mxu0
  %v339 = vadd.f32 0.0, %v338
  %v340 = vpop.f32.mrb[0].mxu0
  %v341 = vadd.f32 0.0, %v340
  %v342 = vpop.f32.mrb[0].mxu0
  %v343 = vadd.f32 0.0, %v342
  %v344 = vpop.f32.mrb[0].mxu0
  %v345 = vadd.f32 0.0, %v344
  %346 = vdwg.mxu0
  %347 = vmatprep.subr.bf16.mxu0 %v157
  %348 = vmatpush1.bf16.msra.mxu0 %v156
  %349 = vmatprep.subr.bf16.mxu0 0
  %350 = vmatpush1.bf16.msra.mxu0 0
  %351 = vmatprep.subr.bf16.mxu0 0
  %352 = vmatpush1.bf16.msra.mxu0 0
  %353 = vmatprep.subr.bf16.mxu0 0
  %354 = vmatpush1.bf16.msra.mxu0 0
  %355 = vmatprep.subr.bf16.mxu0 0
  %356 = vmatpush1.bf16.msra.mxu0 0
  %357 = vmatprep.subr.bf16.mxu0 0
  %358 = vmatpush1.bf16.msra.mxu0 0
  %359 = vmatprep.subr.bf16.mxu0 0
  %360 = vmatpush1.bf16.msra.mxu0 0
  %361 = vmatprep.subr.bf16.mxu0 0
  %362 = vmatpush1.bf16.msra.mxu0 0
  %363 = vmatprep.subr.bf16.mxu0 0
  %364 = vmatpush1.bf16.msra.mxu0 0
  %365 = vmatprep.subr.bf16.mxu0 0
  %366 = vmatpush1.bf16.msra.mxu0 0
  %367 = vmatprep.subr.bf16.mxu0 0
  %368 = vmatpush1.bf16.msra.mxu0 0
  %369 = vmatprep.subr.bf16.mxu0 0
  %370 = vmatpush1.bf16.msra.mxu0 0
  %371 = vmatprep.subr.bf16.mxu0 0
  %372 = vmatpush1.bf16.msra.mxu0 0
  %373 = vmatprep.subr.bf16.mxu0 0
  %374 = vmatpush1.bf16.msra.mxu0 0
  %375 = vmatprep.subr.bf16.mxu0 0
  %376 = vmatpush1.bf16.msra.mxu0 0
  %377 = vmatprep.subr.bf16.mxu0 0
  %378 = vmatpush1.bf16.msra.mxu0 0
  %379 = vmatprep.mubr.bf16.mxu0 0
  %380 = vmatmul.mubr.bf16.gmra.mrb[0].mxu0 %v216
  %v381 = vpop.f32.mrb[0].mxu0
  %v382 = vadd.f32 0.0, %v381
  %v383 = vpop.f32.mrb[0].mxu0
  %v384 = vadd.f32 0.0, %v383
  %v385 = vpop.f32.mrb[0].mxu0
  %v386 = vadd.f32 0.0, %v385
  %v387 = vpop.f32.mrb[0].mxu0
  %v388 = vadd.f32 0.0, %v387
  %389 = vdwg.mxu0
  %390 = vmatprep.subr.bf16.mxu0 %v159
  %391 = vmatpush1.bf16.msra.mxu0 %v158
  %392 = vmatprep.subr.bf16.mxu0 0
  %393 = vmatpush1.bf16.msra.mxu0 0
  %394 = vmatprep.subr.bf16.mxu0 0
  %395 = vmatpush1.bf16.msra.mxu0 0
  %396 = vmatprep.subr.bf16.mxu0 0
  %397 = vmatpush1.bf16.msra.mxu0 0
  %398 = vmatprep.subr.bf16.mxu0 0
  %399 = vmatpush1.bf16.msra.mxu0 0
  %400 = vmatprep.subr.bf16.mxu0 0
  %401 = vmatpush1.bf16.msra.mxu0 0
  %402 = vmatprep.subr.bf16.mxu0 0
  %403 = vmatpush1.bf16.msra.mxu0 0
  %404 = vmatprep.subr.bf16.mxu0 0
  %405 = vmatpush1.bf16.msra.mxu0 0
  %406 = vmatprep.subr.bf16.mxu0 0
  %407 = vmatpush1.bf16.msra.mxu0 0
  %408 = vmatprep.subr.bf16.mxu0 0
  %409 = vmatpush1.bf16.msra.mxu0 0
  %410 = vmatprep.subr.bf16.mxu0 0
  %411 = vmatpush1.bf16.msra.mxu0 0
  %412 = vmatprep.subr.bf16.mxu0 0
  %413 = vmatpush1.bf16.msra.mxu0 0
  %414 = vmatprep.subr.bf16.mxu0 0
  %415 = vmatpush1.bf16.msra.mxu0 0
  %416 = vmatprep.subr.bf16.mxu0 0
  %417 = vmatpush1.bf16.msra.mxu0 0
  %418 = vmatprep.subr.bf16.mxu0 0
  %419 = vmatpush1.bf16.msra.mxu0 0
  %420 = vmatprep.subr.bf16.mxu0 0
  %421 = vmatpush1.bf16.msra.mxu0 0
  %422 = vmatprep.mubr.bf16.mxu0 0
  %423 = vmatmul.mubr.bf16.gmra.mrb[0].mxu0 %v216
  %v424 = vpop.f32.mrb[0].mxu0
  %v425 = vadd.f32 0.0, %v424
  %v426 = vpop.f32.mrb[0].mxu0
  %v427 = vadd.f32 0.0, %v426
  %v428 = vpop.f32.mrb[0].mxu0
  %v429 = vadd.f32 0.0, %v428
  %v430 = vpop.f32.mrb[0].mxu0
  %v431 = vadd.f32 0.0, %v430
  %432 = vdwg.mxu0
  %433 = vmatprep.subr.bf16.mxu0 %v161
  %434 = vmatpush1.bf16.msra.mxu0 %v160
  %435 = vmatprep.subr.bf16.mxu0 0
  %436 = vmatpush1.bf16.msra.mxu0 0
  %437 = vmatprep.subr.bf16.mxu0 0
  %438 = vmatpush1.bf16.msra.mxu0 0
  %439 = vmatprep.subr.bf16.mxu0 0
  %440 = vmatpush1.bf16.msra.mxu0 0
  %441 = vmatprep.subr.bf16.mxu0 0
  %442 = vmatpush1.bf16.msra.mxu0 0
  %443 = vmatprep.subr.bf16.mxu0 0
  %444 = vmatpush1.bf16.msra.mxu0 0
  %445 = vmatprep.subr.bf16.mxu0 0
  %446 = vmatpush1.bf16.msra.mxu0 0
  %447 = vmatprep.subr.bf16.mxu0 0
  %448 = vmatpush1.bf16.msra.mxu0 0
  %449 = vmatprep.subr.bf16.mxu0 0
  %450 = vmatpush1.bf16.msra.mxu0 0
  %451 = vmatprep.subr.bf16.mxu0 0
  %452 = vmatpush1.bf16.msra.mxu0 0
  %453 = vmatprep.subr.bf16.mxu0 0
  %454 = vmatpush1.bf16.msra.mxu0 0
  %455 = vmatprep.subr.bf16.mxu0 0
  %456 = vmatpush1.bf16.msra.mxu0 0
  %457 = vmatprep.subr.bf16.mxu0 0
  %458 = vmatpush1.bf16.msra.mxu0 0
  %459 = vmatprep.subr.bf16.mxu0 0
  %460 = vmatpush1.bf16.msra.mxu0 0
  %461 = vmatprep.subr.bf16.mxu0 0
  %462 = vmatpush1.bf16.msra.mxu0 0
  %463 = vmatprep.subr.bf16.mxu0 0
  %464 = vmatpush1.bf16.msra.mxu0 0
  %465 = vmatprep.mubr.bf16.mxu0 0
  %466 = vmatmul.mubr.bf16.gmra.mrb[0].mxu0 %v216
  %v467 = vpop.f32.mrb[0].mxu0
  %v468 = vadd.f32 0.0, %v467
  %v469 = vpop.f32.mrb[0].mxu0
  %v470 = vadd.f32 0.0, %v469
  %v471 = vpop.f32.mrb[0].mxu0
  %v472 = vadd.f32 0.0, %v471
  %v473 = vpop.f32.mrb[0].mxu0
  %v474 = vadd.f32 0.0, %v473
  %475 = vdwg.mxu0
  %476 = vmatprep.subr.bf16.mxu0 %v163
  %477 = vmatpush1.bf16.msra.mxu0 %v162
  %478 = vmatprep.subr.bf16.mxu0 0
  %479 = vmatpush1.bf16.msra.mxu0 0
  %480 = vmatprep.subr.bf16.mxu0 0
  %481 = vmatpush1.bf16.msra.mxu0 0
  %482 = vmatprep.subr.bf16.mxu0 0
  %483 = vmatpush1.bf16.msra.mxu0 0
  %484 = vmatprep.subr.bf16.mxu0 0
  %485 = vmatpush1.bf16.msra.mxu0 0
  %486 = vmatprep.subr.bf16.mxu0 0
  %487 = vmatpush1.bf16.msra.mxu0 0
  %488 = vmatprep.subr.bf16.mxu0 0
  %489 = vmatpush1.bf16.msra.mxu0 0
  %490 = vmatprep.subr.bf16.mxu0 0
  %491 = vmatpush1.bf16.msra.mxu0 0
  %492 = vmatprep.subr.bf16.mxu0 0
  %493 = vmatpush1.bf16.msra.mxu0 0
  %494 = vmatprep.subr.bf16.mxu0 0
  %495 = vmatpush1.bf16.msra.mxu0 0
  %496 = vmatprep.subr.bf16.mxu0 0
  %497 = vmatpush1.bf16.msra.mxu0 0
  %498 = vmatprep.subr.bf16.mxu0 0
  %499 = vmatpush1.bf16.msra.mxu0 0
  %500 = vmatprep.subr.bf16.mxu0 0
  %501 = vmatpush1.bf16.msra.mxu0 0
  %502 = vmatprep.subr.bf16.mxu0 0
  %503 = vmatpush1.bf16.msra.mxu0 0
  %504 = vmatprep.subr.bf16.mxu0 0
  %505 = vmatpush1.bf16.msra.mxu0 0
  %506 = vmatprep.subr.bf16.mxu0 0
  %507 = vmatpush1.bf16.msra.mxu0 0
  %508 = vmatprep.mubr.bf16.mxu0 0
  %509 = vmatmul.mubr.bf16.gmra.mrb[0].mxu0 %v216
  %v510 = vpop.f32.mrb[0].mxu0
  %v511 = vadd.f32 0.0, %v510
  %v512 = vpop.f32.mrb[0].mxu0
  %v513 = vadd.f32 0.0, %v512
  %v514 = vpop.f32.mrb[0].mxu0
  %v515 = vadd.f32 0.0, %v514
  %v516 = vpop.f32.mrb[0].mxu0
  %v517 = vadd.f32 0.0, %v516
  %518 = vdwg.mxu0
  %519 = vmatprep.subr.bf16.mxu0 %v165
  %520 = vmatpush1.bf16.msra.mxu0 %v164
  %521 = vmatprep.subr.bf16.mxu0 0
  %522 = vmatpush1.bf16.msra.mxu0 0
  %523 = vmatprep.subr.bf16.mxu0 0
  %524 = vmatpush1.bf16.msra.mxu0 0
  %525 = vmatprep.subr.bf16.mxu0 0
  %526 = vmatpush1.bf16.msra.mxu0 0
  %527 = vmatprep.subr.bf16.mxu0 0
  %528 = vmatpush1.bf16.msra.mxu0 0
  %529 = vmatprep.subr.bf16.mxu0 0
  %530 = vmatpush1.bf16.msra.mxu0 0
  %531 = vmatprep.subr.bf16.mxu0 0
  %532 = vmatpush1.bf16.msra.mxu0 0
  %533 = vmatprep.subr.bf16.mxu0 0
  %534 = vmatpush1.bf16.msra.mxu0 0
  %535 = vmatprep.subr.bf16.mxu0 0
  %536 = vmatpush1.bf16.msra.mxu0 0
  %537 = vmatprep.subr.bf16.mxu0 0
  %538 = vmatpush1.bf16.msra.mxu0 0
  %539 = vmatprep.subr.bf16.mxu0 0
  %540 = vmatpush1.bf16.msra.mxu0 0
  %541 = vmatprep.subr.bf16.mxu0 0
  %542 = vmatpush1.bf16.msra.mxu0 0
  %543 = vmatprep.subr.bf16.mxu0 0
  %544 = vmatpush1.bf16.msra.mxu0 0
  %545 = vmatprep.subr.bf16.mxu0 0
  %546 = vmatpush1.bf16.msra.mxu0 0
  %547 = vmatprep.subr.bf16.mxu0 0
  %548 = vmatpush1.bf16.msra.mxu0 0
  %549 = vmatprep.subr.bf16.mxu0 0
  %550 = vmatpush1.bf16.msra.mxu0 0
  %551 = vmatprep.mubr.bf16.mxu0 0
  %552 = vmatmul.mubr.bf16.gmra.mrb[0].mxu0 %v216
  %v553 = vpop.f32.mrb[0].mxu0
  %v554 = vadd.f32 0.0, %v553
  %v555 = vpop.f32.mrb[0].mxu0
  %v556 = vadd.f32 0.0, %v555
  %v557 = vpop.f32.mrb[0].mxu0
  %v558 = vadd.f32 0.0, %v557
  %v559 = vpop.f32.mrb[0].mxu0
  %v560 = vadd.f32 0.0, %v559
  %561 = vdwg.mxu0
  %562 = vmatprep.subr.bf16.mxu0 %v167
  %563 = vmatpush1.bf16.msra.mxu0 %v166
  %564 = vmatprep.subr.bf16.mxu0 0
  %565 = vmatpush1.bf16.msra.mxu0 0
  %566 = vmatprep.subr.bf16.mxu0 0
  %567 = vmatpush1.bf16.msra.mxu0 0
  %568 = vmatprep.subr.bf16.mxu0 0
  %569 = vmatpush1.bf16.msra.mxu0 0
  %570 = vmatprep.subr.bf16.mxu0 0
  %571 = vmatpush1.bf16.msra.mxu0 0
  %572 = vmatprep.subr.bf16.mxu0 0
  %573 = vmatpush1.bf16.msra.mxu0 0
  %574 = vmatprep.subr.bf16.mxu0 0
  %575 = vmatpush1.bf16.msra.mxu0 0
  %576 = vmatprep.subr.bf16.mxu0 0
  %577 = vmatpush1.bf16.msra.mxu0 0
  %578 = vmatprep.subr.bf16.mxu0 0
  %579 = vmatpush1.bf16.msra.mxu0 0
  %580 = vmatprep.subr.bf16.mxu0 0
  %581 = vmatpush1.bf16.msra.mxu0 0
  %582 = vmatprep.subr.bf16.mxu0 0
  %583 = vmatpush1.bf16.msra.mxu0 0
  %584 = vmatprep.subr.bf16.mxu0 0
  %585 = vmatpush1.bf16.msra.mxu0 0
  %586 = vmatprep.subr.bf16.mxu0 0
  %587 = vmatpush1.bf16.msra.mxu0 0
  %588 = vmatprep.subr.bf16.mxu0 0
  %589 = vmatpush1.bf16.msra.mxu0 0
  %590 = vmatprep.subr.bf16.mxu0 0
  %591 = vmatpush1.bf16.msra.mxu0 0
  %592 = vmatprep.subr.bf16.mxu0 0
  %593 = vmatpush1.bf16.msra.mxu0 0
  %594 = vmatprep.mubr.bf16.mxu0 0
  %595 = vmatmul.mubr.bf16.gmra.mrb[0].mxu0 %v216
  %v596 = vpop.f32.mrb[0].mxu0
  %v597 = vadd.f32 0.0, %v596
  %v598 = vpop.f32.mrb[0].mxu0
  %v599 = vadd.f32 0.0, %v598
  %v600 = vpop.f32.mrb[0].mxu0
  %v601 = vadd.f32 0.0, %v600
  %v602 = vpop.f32.mrb[0].mxu0
  %v603 = vadd.f32 0.0, %v602
  %604 = vdwg.mxu0
  %605 = vmatprep.subr.bf16.mxu0 %v169
  %606 = vmatpush1.bf16.msra.mxu0 %v168
  %607 = vmatprep.subr.bf16.mxu0 0
  %608 = vmatpush1.bf16.msra.mxu0 0
  %609 = vmatprep.subr.bf16.mxu0 0
  %610 = vmatpush1.bf16.msra.mxu0 0
  %611 = vmatprep.subr.bf16.mxu0 0
  %612 = vmatpush1.bf16.msra.mxu0 0
  %613 = vmatprep.subr.bf16.mxu0 0
  %614 = vmatpush1.bf16.msra.mxu0 0
  %615 = vmatprep.subr.bf16.mxu0 0
  %616 = vmatpush1.bf16.msra.mxu0 0
  %617 = vmatprep.subr.bf16.mxu0 0
  %618 = vmatpush1.bf16.msra.mxu0 0
  %619 = vmatprep.subr.bf16.mxu0 0
  %620 = vmatpush1.bf16.msra.mxu0 0
  %621 = vmatprep.subr.bf16.mxu0 0
  %622 = vmatpush1.bf16.msra.mxu0 0
  %623 = vmatprep.subr.bf16.mxu0 0
  %624 = vmatpush1.bf16.msra.mxu0 0
  %625 = vmatprep.subr.bf16.mxu0 0
  %626 = vmatpush1.bf16.msra.mxu0 0
  %627 = vmatprep.subr.bf16.mxu0 0
  %628 = vmatpush1.bf16.msra.mxu0 0
  %629 = vmatprep.subr.bf16.mxu0 0
  %630 = vmatpush1.bf16.msra.mxu0 0
  %631 = vmatprep.subr.bf16.mxu0 0
  %632 = vmatpush1.bf16.msra.mxu0 0
  %633 = vmatprep.subr.bf16.mxu0 0
  %634 = vmatpush1.bf16.msra.mxu0 0
  %635 = vmatprep.subr.bf16.mxu0 0
  %636 = vmatpush1.bf16.msra.mxu0 0
  %637 = vmatprep.mubr.bf16.mxu0 0
  %638 = vmatmul.mubr.bf16.gmra.mrb[0].mxu0 %v216
  %v639 = vpop.f32.mrb[0].mxu0
  %v640 = vadd.f32 0.0, %v639
  %v641 = vpop.f32.mrb[0].mxu0
  %v642 = vadd.f32 0.0, %v641
  %v643 = vpop.f32.mrb[0].mxu0
  %v644 = vadd.f32 0.0, %v643
  %v645 = vpop.f32.mrb[0].mxu0
  %v646 = vadd.f32 0.0, %v645
  %647 = vdwg.mxu0
  %648 = vmatprep.subr.bf16.mxu0 %v171
  %649 = vmatpush1.bf16.msra.mxu0 %v170
  %650 = vmatprep.subr.bf16.mxu0 0
  %651 = vmatpush1.bf16.msra.mxu0 0
  %652 = vmatprep.subr.bf16.mxu0 0
  %653 = vmatpush1.bf16.msra.mxu0 0
  %654 = vmatprep.subr.bf16.mxu0 0
  %655 = vmatpush1.bf16.msra.mxu0 0
  %656 = vmatprep.subr.bf16.mxu0 0
  %657 = vmatpush1.bf16.msra.mxu0 0
  %658 = vmatprep.subr.bf16.mxu0 0
  %659 = vmatpush1.bf16.msra.mxu0 0
  %660 = vmatprep.subr.bf16.mxu0 0
  %661 = vmatpush1.bf16.msra.mxu0 0
  %662 = vmatprep.subr.bf16.mxu0 0
  %663 = vmatpush1.bf16.msra.mxu0 0
  %664 = vmatprep.subr.bf16.mxu0 0
  %665 = vmatpush1.bf16.msra.mxu0 0
  %666 = vmatprep.subr.bf16.mxu0 0
  %667 = vmatpush1.bf16.msra.mxu0 0
  %668 = vmatprep.subr.bf16.mxu0 0
  %669 = vmatpush1.bf16.msra.mxu0 0
  %670 = vmatprep.subr.bf16.mxu0 0
  %671 = vmatpush1.bf16.msra.mxu0 0
  %672 = vmatprep.subr.bf16.mxu0 0
  %673 = vmatpush1.bf16.msra.mxu0 0
  %674 = vmatprep.subr.bf16.mxu0 0
  %675 = vmatpush1.bf16.msra.mxu0 0
  %676 = vmatprep.subr.bf16.mxu0 0
  %677 = vmatpush1.bf16.msra.mxu0 0
  %678 = vmatprep.subr.bf16.mxu0 0
  %679 = vmatpush1.bf16.msra.mxu0 0
  %680 = vmatprep.mubr.bf16.mxu0 0
  %681 = vmatmul.mubr.bf16.gmra.mrb[0].mxu0 %v216
  %v682 = vpop.f32.mrb[0].mxu0
  %v683 = vadd.f32 0.0, %v682
  %v684 = vpop.f32.mrb[0].mxu0
  %v685 = vadd.f32 0.0, %v684
  %v686 = vpop.f32.mrb[0].mxu0
  %v687 = vadd.f32 0.0, %v686
  %v688 = vpop.f32.mrb[0].mxu0
  %v689 = vadd.f32 0.0, %v688
  %690 = vdwg.mxu0
  %691 = vmatprep.subr.bf16.mxu0 %v173
  %692 = vmatpush1.bf16.msra.mxu0 %v172
  %693 = vmatprep.subr.bf16.mxu0 0
  %694 = vmatpush1.bf16.msra.mxu0 0
  %695 = vmatprep.subr.bf16.mxu0 0
  %696 = vmatpush1.bf16.msra.mxu0 0
  %697 = vmatprep.subr.bf16.mxu0 0
  %698 = vmatpush1.bf16.msra.mxu0 0
  %699 = vmatprep.subr.bf16.mxu0 0
  %700 = vmatpush1.bf16.msra.mxu0 0
  %701 = vmatprep.subr.bf16.mxu0 0
  %702 = vmatpush1.bf16.msra.mxu0 0
  %703 = vmatprep.subr.bf16.mxu0 0
  %704 = vmatpush1.bf16.msra.mxu0 0
  %705 = vmatprep.subr.bf16.mxu0 0
  %706 = vmatpush1.bf16.msra.mxu0 0
  %707 = vmatprep.subr.bf16.mxu0 0
  %708 = vmatpush1.bf16.msra.mxu0 0
  %709 = vmatprep.subr.bf16.mxu0 0
  %710 = vmatpush1.bf16.msra.mxu0 0
  %711 = vmatprep.subr.bf16.mxu0 0
  %712 = vmatpush1.bf16.msra.mxu0 0
  %713 = vmatprep.subr.bf16.mxu0 0
  %714 = vmatpush1.bf16.msra.mxu0 0
  %715 = vmatprep.subr.bf16.mxu0 0
  %716 = vmatpush1.bf16.msra.mxu0 0
  %717 = vmatprep.subr.bf16.mxu0 0
  %718 = vmatpush1.bf16.msra.mxu0 0
  %719 = vmatprep.subr.bf16.mxu0 0
  %720 = vmatpush1.bf16.msra.mxu0 0
  %721 = vmatprep.subr.bf16.mxu0 0
  %722 = vmatpush1.bf16.msra.mxu0 0
  %723 = vmatprep.mubr.bf16.mxu0 0
  %724 = vmatmul.mubr.bf16.gmra.mrb[0].mxu0 %v216
  %v725 = vpop.f32.mrb[0].mxu0
  %v726 = vadd.f32 0.0, %v725
  %v727 = vpop.f32.mrb[0].mxu0
  %v728 = vadd.f32 0.0, %v727
  %v729 = vpop.f32.mrb[0].mxu0
  %v730 = vadd.f32 0.0, %v729
  %v731 = vpop.f32.mrb[0].mxu0
  %v732 = vadd.f32 0.0, %v731
  %733 = vdwg.mxu0
  %734 = vmatprep.subr.bf16.mxu0 %v175
  %735 = vmatpush1.bf16.msra.mxu0 %v174
  %736 = vmatprep.subr.bf16.mxu0 0
  %737 = vmatpush1.bf16.msra.mxu0 0
  %738 = vmatprep.subr.bf16.mxu0 0
  %739 = vmatpush1.bf16.msra.mxu0 0
  %740 = vmatprep.subr.bf16.mxu0 0
  %741 = vmatpush1.bf16.msra.mxu0 0
  %742 = vmatprep.subr.bf16.mxu0 0
  %743 = vmatpush1.bf16.msra.mxu0 0
  %744 = vmatprep.subr.bf16.mxu0 0
  %745 = vmatpush1.bf16.msra.mxu0 0
  %746 = vmatprep.subr.bf16.mxu0 0
  %747 = vmatpush1.bf16.msra.mxu0 0
  %748 = vmatprep.subr.bf16.mxu0 0
  %749 = vmatpush1.bf16.msra.mxu0 0
  %750 = vmatprep.subr.bf16.mxu0 0
  %751 = vmatpush1.bf16.msra.mxu0 0
  %752 = vmatprep.subr.bf16.mxu0 0
  %753 = vmatpush1.bf16.msra.mxu0 0
  %754 = vmatprep.subr.bf16.mxu0 0
  %755 = vmatpush1.bf16.msra.mxu0 0
  %756 = vmatprep.subr.bf16.mxu0 0
  %757 = vmatpush1.bf16.msra.mxu0 0
  %758 = vmatprep.subr.bf16.mxu0 0
  %759 = vmatpush1.bf16.msra.mxu0 0
  %760 = vmatprep.subr.bf16.mxu0 0
  %761 = vmatpush1.bf16.msra.mxu0 0
  %762 = vmatprep.subr.bf16.mxu0 0
  %763 = vmatpush1.bf16.msra.mxu0 0
  %764 = vmatprep.subr.bf16.mxu0 0
  %765 = vmatpush1.bf16.msra.mxu0 0
  %766 = vmatprep.mubr.bf16.mxu0 0
  %767 = vmatmul.mubr.bf16.gmra.mrb[0].mxu0 %v216
  %v768 = vpop.f32.mrb[0].mxu0
  %v769 = vadd.f32 0.0, %v768
  %v770 = vpop.f32.mrb[0].mxu0
  %v771 = vadd.f32 0.0, %v770
  %v772 = vpop.f32.mrb[0].mxu0
  %v773 = vadd.f32 0.0, %v772
  %v774 = vpop.f32.mrb[0].mxu0
  %v775 = vadd.f32 0.0, %v774
  %776 = vdwg.mxu0
  %777 = vmatprep.subr.bf16.mxu0 %v177
  %778 = vmatpush1.bf16.msra.mxu0 %v176
  %779 = vmatprep.subr.bf16.mxu0 0
  %780 = vmatpush1.bf16.msra.mxu0 0
  %781 = vmatprep.subr.bf16.mxu0 0
  %782 = vmatpush1.bf16.msra.mxu0 0
  %783 = vmatprep.subr.bf16.mxu0 0
  %784 = vmatpush1.bf16.msra.mxu0 0
  %785 = vmatprep.subr.bf16.mxu0 0
  %786 = vmatpush1.bf16.msra.mxu0 0
  %787 = vmatprep.subr.bf16.mxu0 0
  %788 = vmatpush1.bf16.msra.mxu0 0
  %789 = vmatprep.subr.bf16.mxu0 0
  %790 = vmatpush1.bf16.msra.mxu0 0
  %791 = vmatprep.subr.bf16.mxu0 0
  %792 = vmatpush1.bf16.msra.mxu0 0
  %793 = vmatprep.subr.bf16.mxu0 0
  %794 = vmatpush1.bf16.msra.mxu0 0
  %795 = vmatprep.subr.bf16.mxu0 0
  %796 = vmatpush1.bf16.msra.mxu0 0
  %797 = vmatprep.subr.bf16.mxu0 0
  %798 = vmatpush1.bf16.msra.mxu0 0
  %799 = vmatprep.subr.bf16.mxu0 0
  %800 = vmatpush1.bf16.msra.mxu0 0
  %801 = vmatprep.subr.bf16.mxu0 0
  %802 = vmatpush1.bf16.msra.mxu0 0
  %803 = vmatprep.subr.bf16.mxu0 0
  %804 = vmatpush1.bf16.msra.mxu0 0
  %805 = vmatprep.subr.bf16.mxu0 0
  %806 = vmatpush1.bf16.msra.mxu0 0
  %807 = vmatprep.subr.bf16.mxu0 0
  %808 = vmatpush1.bf16.msra.mxu0 0
  %809 = vmatprep.mubr.bf16.mxu0 0
  %810 = vmatmul.mubr.bf16.gmra.mrb[0].mxu0 %v216
  %v811 = vpop.f32.mrb[0].mxu0
  %v812 = vadd.f32 0.0, %v811
  %v813 = vpop.f32.mrb[0].mxu0
  %v814 = vadd.f32 0.0, %v813
  %v815 = vpop.f32.mrb[0].mxu0
  %v816 = vadd.f32 0.0, %v815
  %v817 = vpop.f32.mrb[0].mxu0
  %v818 = vadd.f32 0.0, %v817
  %819 = vdwg.mxu0
  %820 = vmatprep.subr.bf16.mxu0 %v179
  %821 = vmatpush1.bf16.msra.mxu0 %v178
  %822 = vmatprep.subr.bf16.mxu0 0
  %823 = vmatpush1.bf16.msra.mxu0 0
  %824 = vmatprep.subr.bf16.mxu0 0
  %825 = vmatpush1.bf16.msra.mxu0 0
  %826 = vmatprep.subr.bf16.mxu0 0
  %827 = vmatpush1.bf16.msra.mxu0 0
  %828 = vmatprep.subr.bf16.mxu0 0
  %829 = vmatpush1.bf16.msra.mxu0 0
  %830 = vmatprep.subr.bf16.mxu0 0
  %831 = vmatpush1.bf16.msra.mxu0 0
  %832 = vmatprep.subr.bf16.mxu0 0
  %833 = vmatpush1.bf16.msra.mxu0 0
  %834 = vmatprep.subr.bf16.mxu0 0
  %835 = vmatpush1.bf16.msra.mxu0 0
  %836 = vmatprep.subr.bf16.mxu0 0
  %837 = vmatpush1.bf16.msra.mxu0 0
  %838 = vmatprep.subr.bf16.mxu0 0
  %839 = vmatpush1.bf16.msra.mxu0 0
  %840 = vmatprep.subr.bf16.mxu0 0
  %841 = vmatpush1.bf16.msra.mxu0 0
  %842 = vmatprep.subr.bf16.mxu0 0
  %843 = vmatpush1.bf16.msra.mxu0 0
  %844 = vmatprep.subr.bf16.mxu0 0
  %845 = vmatpush1.bf16.msra.mxu0 0
  %846 = vmatprep.subr.bf16.mxu0 0
  %847 = vmatpush1.bf16.msra.mxu0 0
  %848 = vmatprep.subr.bf16.mxu0 0
  %849 = vmatpush1.bf16.msra.mxu0 0
  %850 = vmatprep.subr.bf16.mxu0 0
  %851 = vmatpush1.bf16.msra.mxu0 0
  %852 = vmatprep.mubr.bf16.mxu0 0
  %853 = vmatmul.mubr.bf16.gmra.mrb[0].mxu0 %v216
  %v854 = vpop.f32.mrb[0].mxu0
  %v855 = vadd.f32 0.0, %v854
  %v856 = vpop.f32.mrb[0].mxu0
  %v857 = vadd.f32 0.0, %v856
  %v858 = vpop.f32.mrb[0].mxu0
  %v859 = vadd.f32 0.0, %v858
  %v860 = vpop.f32.mrb[0].mxu0
  %v861 = vadd.f32 0.0, %v860
  %862 = vdwg.mxu0
  %863 = vmatprep.subr.bf16.mxu0 %v181
  %864 = vmatpush1.bf16.msra.mxu0 %v180
  %865 = vmatprep.subr.bf16.mxu0 0
  %866 = vmatpush1.bf16.msra.mxu0 0
  %867 = vmatprep.subr.bf16.mxu0 0
  %868 = vmatpush1.bf16.msra.mxu0 0
  %869 = vmatprep.subr.bf16.mxu0 0
  %870 = vmatpush1.bf16.msra.mxu0 0
  %871 = vmatprep.subr.bf16.mxu0 0
  %872 = vmatpush1.bf16.msra.mxu0 0
  %873 = vmatprep.subr.bf16.mxu0 0
  %874 = vmatpush1.bf16.msra.mxu0 0
  %875 = vmatprep.subr.bf16.mxu0 0
  %876 = vmatpush1.bf16.msra.mxu0 0
  %877 = vmatprep.subr.bf16.mxu0 0
  %878 = vmatpush1.bf16.msra.mxu0 0
  %879 = vmatprep.subr.bf16.mxu0 0
  %880 = vmatpush1.bf16.msra.mxu0 0
  %881 = vmatprep.subr.bf16.mxu0 0
  %882 = vmatpush1.bf16.msra.mxu0 0
  %883 = vmatprep.subr.bf16.mxu0 0
  %884 = vmatpush1.bf16.msra.mxu0 0
  %885 = vmatprep.subr.bf16.mxu0 0
  %886 = vmatpush1.bf16.msra.mxu0 0
  %887 = vmatprep.subr.bf16.mxu0 0
  %888 = vmatpush1.bf16.msra.mxu0 0
  %889 = vmatprep.subr.bf16.mxu0 0
  %890 = vmatpush1.bf16.msra.mxu0 0
  %891 = vmatprep.subr.bf16.mxu0 0
  %892 = vmatpush1.bf16.msra.mxu0 0
  %893 = vmatprep.subr.bf16.mxu0 0
  %894 = vmatpush1.bf16.msra.mxu0 0
  %895 = vmatprep.mubr.bf16.mxu0 0
  %896 = vmatmul.mubr.bf16.gmra.mrb[0].mxu0 %v216
  %v897 = vpop.f32.mrb[0].mxu0
  %v898 = vadd.f32 0.0, %v897
  %v899 = vpop.f32.mrb[0].mxu0
  %v900 = vadd.f32 0.0, %v899
  %v901 = vpop.f32.mrb[0].mxu0
  %v902 = vadd.f32 0.0, %v901
  %v903 = vpop.f32.mrb[0].mxu0
  %v904 = vadd.f32 0.0, %v903
  %905 = vdwg.mxu0
  %v906 = vpack.c.bf16 %v257, %v253
  %v907 = vpack.c.bf16 %v259, %v255
  %v908 = vpack.c.bf16 %v300, %v296
  %v909 = vpack.c.bf16 %v302, %v298
  %v910 = vpack.c.bf16 %v343, %v339
  %v911 = vpack.c.bf16 %v345, %v341
  %v912 = vpack.c.bf16 %v386, %v382
  %v913 = vpack.c.bf16 %v388, %v384
  %v914 = vpack.c.bf16 %v429, %v425
  %v915 = vpack.c.bf16 %v431, %v427
  %v916 = vpack.c.bf16 %v472, %v468
  %v917 = vpack.c.bf16 %v474, %v470
  %v918 = vpack.c.bf16 %v515, %v511
  %v919 = vpack.c.bf16 %v517, %v513
  %v920 = vpack.c.bf16 %v558, %v554
  %v921 = vpack.c.bf16 %v560, %v556
  %v922 = vpack.c.bf16 %v601, %v597
  %v923 = vpack.c.bf16 %v603, %v599
  %v924 = vpack.c.bf16 %v644, %v640
  %v925 = vpack.c.bf16 %v646, %v642
  %v926 = vpack.c.bf16 %v687, %v683
  %v927 = vpack.c.bf16 %v689, %v685
  %v928 = vpack.c.bf16 %v730, %v726
  %v929 = vpack.c.bf16 %v732, %v728
  %v930 = vpack.c.bf16 %v773, %v769
  %v931 = vpack.c.bf16 %v775, %v771
  %v932 = vpack.c.bf16 %v816, %v812
  %v933 = vpack.c.bf16 %v818, %v814
  %v934 = vpack.c.bf16 %v859, %v855
  %v935 = vpack.c.bf16 %v861, %v857
  %v936 = vpack.c.bf16 %v902, %v898
  %v937 = vpack.c.bf16 %v904, %v900
  %v970 = vunpack.c.l.b16 %v906
  %v971 = vunpack.c.l.b16 %v907
  %v972 = vunpack.c.l.b16 %v908
  %v973 = vunpack.c.l.b16 %v909
  %v974 = vunpack.c.l.b16 %v910
  %v975 = vunpack.c.l.b16 %v911
  %v976 = vunpack.c.l.b16 %v912
  %v977 = vunpack.c.l.b16 %v913
  %v978 = vunpack.c.l.b16 %v914
  %v979 = vunpack.c.l.b16 %v915
  %v980 = vunpack.c.l.b16 %v916
  %v981 = vunpack.c.l.b16 %v917
  %v982 = vunpack.c.l.b16 %v918
  %v983 = vunpack.c.l.b16 %v919
  %v984 = vunpack.c.l.b16 %v920
  %v985 = vunpack.c.l.b16 %v921
  %v986 = vunpack.c.l.b16 %v922
  %v987 = vunpack.c.l.b16 %v923
  %v988 = vunpack.c.l.b16 %v924
  %v989 = vunpack.c.l.b16 %v925
  %v990 = vunpack.c.l.b16 %v926
  %v991 = vunpack.c.l.b16 %v927
  %v992 = vunpack.c.l.b16 %v928
  %v993 = vunpack.c.l.b16 %v929
  %v994 = vunpack.c.l.b16 %v930
  %v995 = vunpack.c.l.b16 %v931
  %v996 = vunpack.c.l.b16 %v932
  %v997 = vunpack.c.l.b16 %v933
  %v998 = vunpack.c.l.b16 %v934
  %v999 = vunpack.c.l.b16 %v935
  %v1000 = vunpack.c.l.b16 %v936
  %v1001 = vunpack.c.l.b16 %v937
  %v1002 = vunpack.c.h.b16 %v906
  %v1003 = vunpack.c.h.b16 %v907
  %v1004 = vunpack.c.h.b16 %v908
  %v1005 = vunpack.c.h.b16 %v909
  %v1006 = vunpack.c.h.b16 %v910
  %v1007 = vunpack.c.h.b16 %v911
  %v1008 = vunpack.c.h.b16 %v912
  %v1009 = vunpack.c.h.b16 %v913
  %v1010 = vunpack.c.h.b16 %v914
  %v1011 = vunpack.c.h.b16 %v915
  %v1012 = vunpack.c.h.b16 %v916
  %v1013 = vunpack.c.h.b16 %v917
  %v1014 = vunpack.c.h.b16 %v918
  %v1015 = vunpack.c.h.b16 %v919
  %v1016 = vunpack.c.h.b16 %v920
  %v1017 = vunpack.c.h.b16 %v921
  %v1018 = vunpack.c.h.b16 %v922
  %v1019 = vunpack.c.h.b16 %v923
  %v1020 = vunpack.c.h.b16 %v924
  %v1021 = vunpack.c.h.b16 %v925
  %v1022 = vunpack.c.h.b16 %v926
  %v1023 = vunpack.c.h.b16 %v927
  %v1024 = vunpack.c.h.b16 %v928
  %v1025 = vunpack.c.h.b16 %v929
  %v1026 = vunpack.c.h.b16 %v930
  %v1027 = vunpack.c.h.b16 %v931
  %v1028 = vunpack.c.h.b16 %v932
  %v1029 = vunpack.c.h.b16 %v933
  %v1030 = vunpack.c.h.b16 %v934
  %v1031 = vunpack.c.h.b16 %v935
  %v1032 = vunpack.c.h.b16 %v936
  %v1033 = vunpack.c.h.b16 %v937
  %v1034 = vpack.c.b16 %v971, %v970
  %v1035 = vpack.c.b16 %v973, %v972
  %v1036 = vpack.c.b16 %v975, %v974
  %v1037 = vpack.c.b16 %v977, %v976
  %v1038 = vpack.c.b16 %v979, %v978
  %v1039 = vpack.c.b16 %v981, %v980
  %v1040 = vpack.c.b16 %v983, %v982
  %v1041 = vpack.c.b16 %v985, %v984
  %v1042 = vpack.c.b16 %v987, %v986
  %v1043 = vpack.c.b16 %v989, %v988
  %v1044 = vpack.c.b16 %v991, %v990
  %v1045 = vpack.c.b16 %v993, %v992
  %v1046 = vpack.c.b16 %v995, %v994
  %v1047 = vpack.c.b16 %v997, %v996
  %v1048 = vpack.c.b16 %v999, %v998
  %v1049 = vpack.c.b16 %v1001, %v1000
  %v1050 = vpack.c.b16 %v1003, %v1002
  %v1051 = vpack.c.b16 %v1005, %v1004
  %v1052 = vpack.c.b16 %v1007, %v1006
  %v1053 = vpack.c.b16 %v1009, %v1008
  %v1054 = vpack.c.b16 %v1011, %v1010
  %v1055 = vpack.c.b16 %v1013, %v1012
  %v1056 = vpack.c.b16 %v1015, %v1014
  %v1057 = vpack.c.b16 %v1017, %v1016
  %v1058 = vpack.c.b16 %v1019, %v1018
  %v1059 = vpack.c.b16 %v1021, %v1020
  %v1060 = vpack.c.b16 %v1023, %v1022
  %v1061 = vpack.c.b16 %v1025, %v1024
  %v1062 = vpack.c.b16 %v1027, %v1026
  %v1063 = vpack.c.b16 %v1029, %v1028
  %v1064 = vpack.c.b16 %v1031, %v1030
  %v1065 = vpack.c.b16 %v1033, %v1032
  %1098 = vst [vmem:[%s2] sm:$0xff] %v1034
  %1099 = vst [vmem:[%s2 + $0x8] sm:$0xff] %v1035
  %1100 = vst [vmem:[%s2 + $0x10] sm:$0xff] %v1036
  %1101 = vst [vmem:[%s2 + $0x18] sm:$0xff] %v1037
  %1102 = vst [vmem:[%s2 + $0x20] sm:$0xff] %v1038
  %1103 = vst [vmem:[%s2 + $0x28] sm:$0xff] %v1039
  %1104 = vst [vmem:[%s2 + $0x30] sm:$0xff] %v1040
  %1105 = vst [vmem:[%s2 + $0x38] sm:$0xff] %v1041
  %1106 = vst [vmem:[%s2 + $0x40] sm:$0xff] %v1042
  %1107 = vst [vmem:[%s2 + $0x48] sm:$0xff] %v1043
  %1108 = vst [vmem:[%s2 + $0x50] sm:$0xff] %v1044
  %1109 = vst [vmem:[%s2 + $0x58] sm:$0xff] %v1045
  %1110 = vst [vmem:[%s2 + $0x60] sm:$0xff] %v1046
  %1111 = vst [vmem:[%s2 + $0x68] sm:$0xff] %v1047
  %1112 = vst [vmem:[%s2 + $0x70] sm:$0xff] %v1048
  %1113 = vst [vmem:[%s2 + $0x78] sm:$0xff] %v1049
  %1114 = vst [vmem:[%s2 + $0x80] sm:$0xff] %v1050
  %1115 = vst [vmem:[%s2 + $0x88] sm:$0xff] %v1051
  %1116 = vst [vmem:[%s2 + $0x90] sm:$0xff] %v1052
  %1117 = vst [vmem:[%s2 + $0x98] sm:$0xff] %v1053
  %1118 = vst [vmem:[%s2 + $0xa0] sm:$0xff] %v1054
  %1119 = vst [vmem:[%s2 + $0xa8] sm:$0xff] %v1055
  %1120 = vst [vmem:[%s2 + $0xb0] sm:$0xff] %v1056
  %1121 = vst [vmem:[%s2 + $0xb8] sm:$0xff] %v1057
  %1122 = vst [vmem:[%s2 + $0xc0] sm:$0xff] %v1058
  %1123 = vst [vmem:[%s2 + $0xc8] sm:$0xff] %v1059
  %1124 = vst [vmem:[%s2 + $0xd0] sm:$0xff] %v1060
  %1125 = vst [vmem:[%s2 + $0xd8] sm:$0xff] %v1061
  %1126 = vst [vmem:[%s2 + $0xe0] sm:$0xff] %v1062
  %1127 = vst [vmem:[%s2 + $0xe8] sm:$0xff] %v1063
  %1128 = vst [vmem:[%s2 + $0xf0] sm:$0xff] %v1064
  %1129 = vst [vmem:[%s2 + $0xf8] sm:$0xff] %v1065
  %v1130 = vadd.f32 %v253, %v257
  %v1131 = vrot.slane %v1130, 4
  %v1132 = vadd.f32 %v1130, %v1131
  %v1133 = vrot.slane %v1132, 2
  %v1134 = vadd.f32 %v1132, %v1133
  %v1135 = vrot.slane %v1134, 1
  %v1136 = vadd.f32 %v1134, %v1135
  %v1137 = vadd.f32 %v255, %v259
  %v1138 = vrot.slane %v1137, 4
  %v1139 = vadd.f32 %v1137, %v1138
  %v1140 = vrot.slane %v1139, 2
  %v1141 = vadd.f32 %v1139, %v1140
  %v1142 = vrot.slane %v1141, 1
  %v1143 = vadd.f32 %v1141, %v1142
  %v1144 = vadd.f32 %v296, %v300
  %v1145 = vrot.slane %v1144, 4
  %v1146 = vadd.f32 %v1144, %v1145
  %v1147 = vrot.slane %v1146, 2
  %v1148 = vadd.f32 %v1146, %v1147
  %v1149 = vrot.slane %v1148, 1
  %v1150 = vadd.f32 %v1148, %v1149
  %v1151 = vadd.f32 %v298, %v302
  %v1152 = vrot.slane %v1151, 4
  %v1153 = vadd.f32 %v1151, %v1152
  %v1154 = vrot.slane %v1153, 2
  %v1155 = vadd.f32 %v1153, %v1154
  %v1156 = vrot.slane %v1155, 1
  %v1157 = vadd.f32 %v1155, %v1156
  %v1158 = vadd.f32 %v339, %v343
  %v1159 = vrot.slane %v1158, 4
  %v1160 = vadd.f32 %v1158, %v1159
  %v1161 = vrot.slane %v1160, 2
  %v1162 = vadd.f32 %v1160, %v1161
  %v1163 = vrot.slane %v1162, 1
  %v1164 = vadd.f32 %v1162, %v1163
  %v1165 = vadd.f32 %v341, %v345
  %v1166 = vrot.slane %v1165, 4
  %v1167 = vadd.f32 %v1165, %v1166
  %v1168 = vrot.slane %v1167, 2
  %v1169 = vadd.f32 %v1167, %v1168
  %v1170 = vrot.slane %v1169, 1
  %v1171 = vadd.f32 %v1169, %v1170
  %v1172 = vadd.f32 %v382, %v386
  %v1173 = vrot.slane %v1172, 4
  %v1174 = vadd.f32 %v1172, %v1173
  %v1175 = vrot.slane %v1174, 2
  %v1176 = vadd.f32 %v1174, %v1175
  %v1177 = vrot.slane %v1176, 1
  %v1178 = vadd.f32 %v1176, %v1177
  %v1179 = vadd.f32 %v384, %v388
  %v1180 = vrot.slane %v1179, 4
  %v1181 = vadd.f32 %v1179, %v1180
  %v1182 = vrot.slane %v1181, 2
  %v1183 = vadd.f32 %v1181, %v1182
  %v1184 = vrot.slane %v1183, 1
  %v1185 = vadd.f32 %v1183, %v1184
  %v1186 = vadd.f32 %v425, %v429
  %v1187 = vrot.slane %v1186, 4
  %v1188 = vadd.f32 %v1186, %v1187
  %v1189 = vrot.slane %v1188, 2
  %v1190 = vadd.f32 %v1188, %v1189
  %v1191 = vrot.slane %v1190, 1
  %v1192 = vadd.f32 %v1190, %v1191
  %v1193 = vadd.f32 %v427, %v431
  %v1194 = vrot.slane %v1193, 4
  %v1195 = vadd.f32 %v1193, %v1194
  %v1196 = vrot.slane %v1195, 2
  %v1197 = vadd.f32 %v1195, %v1196
  %v1198 = vrot.slane %v1197, 1
  %v1199 = vadd.f32 %v1197, %v1198
  %v1200 = vadd.f32 %v468, %v472
  %v1201 = vrot.slane %v1200, 4
  %v1202 = vadd.f32 %v1200, %v1201
  %v1203 = vrot.slane %v1202, 2
  %v1204 = vadd.f32 %v1202, %v1203
  %v1205 = vrot.slane %v1204, 1
  %v1206 = vadd.f32 %v1204, %v1205
  %v1207 = vadd.f32 %v470, %v474
  %v1208 = vrot.slane %v1207, 4
  %v1209 = vadd.f32 %v1207, %v1208
  %v1210 = vrot.slane %v1209, 2
  %v1211 = vadd.f32 %v1209, %v1210
  %v1212 = vrot.slane %v1211, 1
  %v1213 = vadd.f32 %v1211, %v1212
  %v1214 = vadd.f32 %v511, %v515
  %v1215 = vrot.slane %v1214, 4
  %v1216 = vadd.f32 %v1214, %v1215
  %v1217 = vrot.slane %v1216, 2
  %v1218 = vadd.f32 %v1216, %v1217
  %v1219 = vrot.slane %v1218, 1
  %v1220 = vadd.f32 %v1218, %v1219
  %v1221 = vadd.f32 %v513, %v517
  %v1222 = vrot.slane %v1221, 4
  %v1223 = vadd.f32 %v1221, %v1222
  %v1224 = vrot.slane %v1223, 2
  %v1225 = vadd.f32 %v1223, %v1224
  %v1226 = vrot.slane %v1225, 1
  %v1227 = vadd.f32 %v1225, %v1226
  %v1228 = vadd.f32 %v554, %v558
  %v1229 = vrot.slane %v1228, 4
  %v1230 = vadd.f32 %v1228, %v1229
  %v1231 = vrot.slane %v1230, 2
  %v1232 = vadd.f32 %v1230, %v1231
  %v1233 = vrot.slane %v1232, 1
  %v1234 = vadd.f32 %v1232, %v1233
  %v1235 = vadd.f32 %v556, %v560
  %v1236 = vrot.slane %v1235, 4
  %v1237 = vadd.f32 %v1235, %v1236
  %v1238 = vrot.slane %v1237, 2
  %v1239 = vadd.f32 %v1237, %v1238
  %v1240 = vrot.slane %v1239, 1
  %v1241 = vadd.f32 %v1239, %v1240
  %v1242 = vadd.f32 %v597, %v601
  %v1243 = vrot.slane %v1242, 4
  %v1244 = vadd.f32 %v1242, %v1243
  %v1245 = vrot.slane %v1244, 2
  %v1246 = vadd.f32 %v1244, %v1245
  %v1247 = vrot.slane %v1246, 1
  %v1248 = vadd.f32 %v1246, %v1247
  %v1249 = vadd.f32 %v599, %v603
  %v1250 = vrot.slane %v1249, 4
  %v1251 = vadd.f32 %v1249, %v1250
  %v1252 = vrot.slane %v1251, 2
  %v1253 = vadd.f32 %v1251, %v1252
  %v1254 = vrot.slane %v1253, 1
  %v1255 = vadd.f32 %v1253, %v1254
  %v1256 = vadd.f32 %v640, %v644
  %v1257 = vrot.slane %v1256, 4
  %v1258 = vadd.f32 %v1256, %v1257
  %v1259 = vrot.slane %v1258, 2
  %v1260 = vadd.f32 %v1258, %v1259
  %v1261 = vrot.slane %v1260, 1
  %v1262 = vadd.f32 %v1260, %v1261
  %v1263 = vadd.f32 %v642, %v646
  %v1264 = vrot.slane %v1263, 4
  %v1265 = vadd.f32 %v1263, %v1264
  %v1266 = vrot.slane %v1265, 2
  %v1267 = vadd.f32 %v1265, %v1266
  %v1268 = vrot.slane %v1267, 1
  %v1269 = vadd.f32 %v1267, %v1268
  %v1270 = vadd.f32 %v683, %v687
  %v1271 = vrot.slane %v1270, 4
  %v1272 = vadd.f32 %v1270, %v1271
  %v1273 = vrot.slane %v1272, 2
  %v1274 = vadd.f32 %v1272, %v1273
  %v1275 = vrot.slane %v1274, 1
  %v1276 = vadd.f32 %v1274, %v1275
  %v1277 = vadd.f32 %v685, %v689
  %v1278 = vrot.slane %v1277, 4
  %v1279 = vadd.f32 %v1277, %v1278
  %v1280 = vrot.slane %v1279, 2
  %v1281 = vadd.f32 %v1279, %v1280
  %v1282 = vrot.slane %v1281, 1
  %v1283 = vadd.f32 %v1281, %v1282
  %v1284 = vadd.f32 %v726, %v730
  %v1285 = vrot.slane %v1284, 4
  %v1286 = vadd.f32 %v1284, %v1285
  %v1287 = vrot.slane %v1286, 2
  %v1288 = vadd.f32 %v1286, %v1287
  %v1289 = vrot.slane %v1288, 1
  %v1290 = vadd.f32 %v1288, %v1289
  %v1291 = vadd.f32 %v728, %v732
  %v1292 = vrot.slane %v1291, 4
  %v1293 = vadd.f32 %v1291, %v1292
  %v1294 = vrot.slane %v1293, 2
  %v1295 = vadd.f32 %v1293, %v1294
  %v1296 = vrot.slane %v1295, 1
  %v1297 = vadd.f32 %v1295, %v1296
  %v1298 = vadd.f32 %v769, %v773
  %v1299 = vrot.slane %v1298, 4
  %v1300 = vadd.f32 %v1298, %v1299
  %v1301 = vrot.slane %v1300, 2
  %v1302 = vadd.f32 %v1300, %v1301
  %v1303 = vrot.slane %v1302, 1
  %v1304 = vadd.f32 %v1302, %v1303
  %v1305 = vadd.f32 %v771, %v775
  %v1306 = vrot.slane %v1305, 4
  %v1307 = vadd.f32 %v1305, %v1306
  %v1308 = vrot.slane %v1307, 2
  %v1309 = vadd.f32 %v1307, %v1308
  %v1310 = vrot.slane %v1309, 1
  %v1311 = vadd.f32 %v1309, %v1310
  %v1312 = vadd.f32 %v812, %v816
  %v1313 = vrot.slane %v1312, 4
  %v1314 = vadd.f32 %v1312, %v1313
  %v1315 = vrot.slane %v1314, 2
  %v1316 = vadd.f32 %v1314, %v1315
  %v1317 = vrot.slane %v1316, 1
  %v1318 = vadd.f32 %v1316, %v1317
  %v1319 = vadd.f32 %v814, %v818
  %v1320 = vrot.slane %v1319, 4
  %v1321 = vadd.f32 %v1319, %v1320
  %v1322 = vrot.slane %v1321, 2
  %v1323 = vadd.f32 %v1321, %v1322
  %v1324 = vrot.slane %v1323, 1
  %v1325 = vadd.f32 %v1323, %v1324
  %v1326 = vadd.f32 %v855, %v859
  %v1327 = vrot.slane %v1326, 4
  %v1328 = vadd.f32 %v1326, %v1327
  %v1329 = vrot.slane %v1328, 2
  %v1330 = vadd.f32 %v1328, %v1329
  %v1331 = vrot.slane %v1330, 1
  %v1332 = vadd.f32 %v1330, %v1331
  %v1333 = vadd.f32 %v857, %v861
  %v1334 = vrot.slane %v1333, 4
  %v1335 = vadd.f32 %v1333, %v1334
  %v1336 = vrot.slane %v1335, 2
  %v1337 = vadd.f32 %v1335, %v1336
  %v1338 = vrot.slane %v1337, 1
  %v1339 = vadd.f32 %v1337, %v1338
  %v1340 = vadd.f32 %v898, %v902
  %v1341 = vrot.slane %v1340, 4
  %v1342 = vadd.f32 %v1340, %v1341
  %v1343 = vrot.slane %v1342, 2
  %v1344 = vadd.f32 %v1342, %v1343
  %v1345 = vrot.slane %v1344, 1
  %v1346 = vadd.f32 %v1344, %v1345
  %v1347 = vadd.f32 %v900, %v904
  %v1348 = vrot.slane %v1347, 4
  %v1349 = vadd.f32 %v1347, %v1348
  %v1350 = vrot.slane %v1349, 2
  %v1351 = vadd.f32 %v1349, %v1350
  %v1352 = vrot.slane %v1351, 1
  %v1353 = vadd.f32 %v1351, %v1352
  %v1386 = vcombine.low %v1136, %v1143
  %v1387 = vcombine.low %v1150, %v1157
  %v1388 = vcombine.low %v1164, %v1171
  %v1389 = vcombine.low %v1178, %v1185
  %v1391 = vunpack.c.l.s4 1966171168
  %v1392 = vunpack.c.0.s8 %v1391
  %v1393 = vlaneseq
  %v1394 = vshrl.u32 %v1393, 7
  %v1395 = vsub.s32 %v1392, %v1394
  %v1396 = vrot.slane %v1386, %v1395
  %v1398 = vunpack.c.l.s4 1966171168
  %v1399 = vunpack.c.0.s8 %v1398
  %v1400 = vlaneseq
  %v1401 = vshrl.u32 %v1400, 7
  %v1402 = vsub.s32 %v1399, %v1401
  %v1403 = vrot.slane %v1387, %v1402
  %v1405 = vunpack.c.l.s4 1966171168
  %v1406 = vunpack.c.0.s8 %v1405
  %v1407 = vlaneseq
  %v1408 = vshrl.u32 %v1407, 7
  %v1409 = vsub.s32 %v1406, %v1408
  %v1410 = vrot.slane %v1388, %v1409
  %v1412 = vunpack.c.l.s4 1966171168
  %v1413 = vunpack.c.0.s8 %v1412
  %v1414 = vlaneseq
  %v1415 = vshrl.u32 %v1414, 7
  %v1416 = vsub.s32 %v1413, %v1415
  %v1417 = vrot.slane %v1389, %v1416
  %v1418 = vcombine.low %v1396, %v1403
  %v1419 = vcombine.low %v1410, %v1417
  %v1421 = vunpack.c.l.s4 1966171168
  %v1422 = vunpack.c.0.s8 %v1421
  %v1423 = vlaneseq
  %v1424 = vshrl.u32 %v1423, 7
  %v1425 = vsub.s32 %v1422, %v1424
  %v1426 = vrot.slane %v1418, %v1425
  %v1428 = vunpack.c.l.s4 1966171168
  %v1429 = vunpack.c.0.s8 %v1428
  %v1430 = vlaneseq
  %v1431 = vshrl.u32 %v1430, 7
  %v1432 = vsub.s32 %v1429, %v1431
  %v1433 = vrot.slane %v1419, %v1432
  %v1434 = vcombine.low %v1426, %v1433
  %v1435 = vcombine.low %v1192, %v1199
  %v1436 = vcombine.low %v1206, %v1213
  %v1437 = vcombine.low %v1220, %v1227
  %v1438 = vcombine.low %v1234, %v1241
  %v1440 = vunpack.c.l.s4 1966171168
  %v1441 = vunpack.c.0.s8 %v1440
  %v1442 = vlaneseq
  %v1443 = vshrl.u32 %v1442, 7
  %v1444 = vsub.s32 %v1441, %v1443
  %v1445 = vrot.slane %v1435, %v1444
  %v1447 = vunpack.c.l.s4 1966171168
  %v1448 = vunpack.c.0.s8 %v1447
  %v1449 = vlaneseq
  %v1450 = vshrl.u32 %v1449, 7
  %v1451 = vsub.s32 %v1448, %v1450
  %v1452 = vrot.slane %v1436, %v1451
  %v1454 = vunpack.c.l.s4 1966171168
  %v1455 = vunpack.c.0.s8 %v1454
  %v1456 = vlaneseq
  %v1457 = vshrl.u32 %v1456, 7
  %v1458 = vsub.s32 %v1455, %v1457
  %v1459 = vrot.slane %v1437, %v1458
  %v1461 = vunpack.c.l.s4 1966171168
  %v1462 = vunpack.c.0.s8 %v1461
  %v1463 = vlaneseq
  %v1464 = vshrl.u32 %v1463, 7
  %v1465 = vsub.s32 %v1462, %v1464
  %v1466 = vrot.slane %v1438, %v1465
  %v1467 = vcombine.low %v1445, %v1452
  %v1468 = vcombine.low %v1459, %v1466
  %v1470 = vunpack.c.l.s4 1966171168
  %v1471 = vunpack.c.0.s8 %v1470
  %v1472 = vlaneseq
  %v1473 = vshrl.u32 %v1472, 7
  %v1474 = vsub.s32 %v1471, %v1473
  %v1475 = vrot.slane %v1467, %v1474
  %v1477 = vunpack.c.l.s4 1966171168
  %v1478 = vunpack.c.0.s8 %v1477
  %v1479 = vlaneseq
  %v1480 = vshrl.u32 %v1479, 7
  %v1481 = vsub.s32 %v1478, %v1480
  %v1482 = vrot.slane %v1468, %v1481
  %v1483 = vcombine.low %v1475, %v1482
  %v1484 = vcombine.low %v1248, %v1255
  %v1485 = vcombine.low %v1262, %v1269
  %v1486 = vcombine.low %v1276, %v1283
  %v1487 = vcombine.low %v1290, %v1297
  %v1489 = vunpack.c.l.s4 1966171168
  %v1490 = vunpack.c.0.s8 %v1489
  %v1491 = vlaneseq
  %v1492 = vshrl.u32 %v1491, 7
  %v1493 = vsub.s32 %v1490, %v1492
  %v1494 = vrot.slane %v1484, %v1493
  %v1496 = vunpack.c.l.s4 1966171168
  %v1497 = vunpack.c.0.s8 %v1496
  %v1498 = vlaneseq
  %v1499 = vshrl.u32 %v1498, 7
  %v1500 = vsub.s32 %v1497, %v1499
  %v1501 = vrot.slane %v1485, %v1500
  %v1503 = vunpack.c.l.s4 1966171168
  %v1504 = vunpack.c.0.s8 %v1503
  %v1505 = vlaneseq
  %v1506 = vshrl.u32 %v1505, 7
  %v1507 = vsub.s32 %v1504, %v1506
  %v1508 = vrot.slane %v1486, %v1507
  %v1510 = vunpack.c.l.s4 1966171168
  %v1511 = vunpack.c.0.s8 %v1510
  %v1512 = vlaneseq
  %v1513 = vshrl.u32 %v1512, 7
  %v1514 = vsub.s32 %v1511, %v1513
  %v1515 = vrot.slane %v1487, %v1514
  %v1516 = vcombine.low %v1494, %v1501
  %v1517 = vcombine.low %v1508, %v1515
  %v1519 = vunpack.c.l.s4 1966171168
  %v1520 = vunpack.c.0.s8 %v1519
  %v1521 = vlaneseq
  %v1522 = vshrl.u32 %v1521, 7
  %v1523 = vsub.s32 %v1520, %v1522
  %v1524 = vrot.slane %v1516, %v1523
  %v1526 = vunpack.c.l.s4 1966171168
  %v1527 = vunpack.c.0.s8 %v1526
  %v1528 = vlaneseq
  %v1529 = vshrl.u32 %v1528, 7
  %v1530 = vsub.s32 %v1527, %v1529
  %v1531 = vrot.slane %v1517, %v1530
  %v1532 = vcombine.low %v1524, %v1531
  %v1533 = vcombine.low %v1304, %v1311
  %v1534 = vcombine.low %v1318, %v1325
  %v1535 = vcombine.low %v1332, %v1339
  %v1536 = vcombine.low %v1346, %v1353
  %v1538 = vunpack.c.l.s4 1966171168
  %v1539 = vunpack.c.0.s8 %v1538
  %v1540 = vlaneseq
  %v1541 = vshrl.u32 %v1540, 7
  %v1542 = vsub.s32 %v1539, %v1541
  %v1543 = vrot.slane %v1533, %v1542
  %v1545 = vunpack.c.l.s4 1966171168
  %v1546 = vunpack.c.0.s8 %v1545
  %v1547 = vlaneseq
  %v1548 = vshrl.u32 %v1547, 7
  %v1549 = vsub.s32 %v1546, %v1548
  %v1550 = vrot.slane %v1534, %v1549
  %v1552 = vunpack.c.l.s4 1966171168
  %v1553 = vunpack.c.0.s8 %v1552
  %v1554 = vlaneseq
  %v1555 = vshrl.u32 %v1554, 7
  %v1556 = vsub.s32 %v1553, %v1555
  %v1557 = vrot.slane %v1535, %v1556
  %v1559 = vunpack.c.l.s4 1966171168
  %v1560 = vunpack.c.0.s8 %v1559
  %v1561 = vlaneseq
  %v1562 = vshrl.u32 %v1561, 7
  %v1563 = vsub.s32 %v1560, %v1562
  %v1564 = vrot.slane %v1536, %v1563
  %v1565 = vcombine.low %v1543, %v1550
  %v1566 = vcombine.low %v1557, %v1564
  %v1568 = vunpack.c.l.s4 1966171168
  %v1569 = vunpack.c.0.s8 %v1568
  %v1570 = vlaneseq
  %v1571 = vshrl.u32 %v1570, 7
  %v1572 = vsub.s32 %v1569, %v1571
  %v1573 = vrot.slane %v1565, %v1572
  %v1575 = vunpack.c.l.s4 1966171168
  %v1576 = vunpack.c.0.s8 %v1575
  %v1577 = vlaneseq
  %v1578 = vshrl.u32 %v1577, 7
  %v1579 = vsub.s32 %v1576, %v1578
  %v1580 = vrot.slane %v1566, %v1579
  %v1581 = vcombine.low %v1573, %v1580
  %1586 = vst [vmem:[%s3] sm:$0xff] %v1434
  %1587 = vst [vmem:[%s3 + $0x8] sm:$0xff] %v1483
  %1588 = vst [vmem:[%s3 + $0x10] sm:$0xff] %v1532
  %1589 = vst [vmem:[%s3 + $0x18] sm:$0xff] %v1581
  %v1590 = vmul.f32 %v253, %v253
  %v1591 = vmul.f32 %v255, %v255
  %v1592 = vmul.f32 %v296, %v296
  %v1593 = vmul.f32 %v298, %v298
  %v1594 = vmul.f32 %v339, %v339
  %v1595 = vmul.f32 %v341, %v341
  %v1596 = vmul.f32 %v382, %v382
  %v1597 = vmul.f32 %v384, %v384
  %v1598 = vmul.f32 %v425, %v425
  %v1599 = vmul.f32 %v427, %v427
  %v1600 = vmul.f32 %v468, %v468
  %v1601 = vmul.f32 %v470, %v470
  %v1602 = vmul.f32 %v511, %v511
  %v1603 = vmul.f32 %v513, %v513
  %v1604 = vmul.f32 %v554, %v554
  %v1605 = vmul.f32 %v556, %v556
  %v1606 = vmul.f32 %v597, %v597
  %v1607 = vmul.f32 %v599, %v599
  %v1608 = vmul.f32 %v640, %v640
  %v1609 = vmul.f32 %v642, %v642
  %v1610 = vmul.f32 %v683, %v683
  %v1611 = vmul.f32 %v685, %v685
  %v1612 = vmul.f32 %v726, %v726
  %v1613 = vmul.f32 %v728, %v728
  %v1614 = vmul.f32 %v769, %v769
  %v1615 = vmul.f32 %v771, %v771
  %v1616 = vmul.f32 %v812, %v812
  %v1617 = vmul.f32 %v814, %v814
  %v1618 = vmul.f32 %v855, %v855
  %v1619 = vmul.f32 %v857, %v857
  %v1620 = vmul.f32 %v898, %v898
  %v1621 = vmul.f32 %v900, %v900
  %v1622 = vmul.f32 %v257, %v257
  %v1623 = vmul.f32 %v259, %v259
  %v1624 = vmul.f32 %v300, %v300
  %v1625 = vmul.f32 %v302, %v302
  %v1626 = vmul.f32 %v343, %v343
  %v1627 = vmul.f32 %v345, %v345
  %v1628 = vmul.f32 %v386, %v386
  %v1629 = vmul.f32 %v388, %v388
  %v1630 = vmul.f32 %v429, %v429
  %v1631 = vmul.f32 %v431, %v431
  %v1632 = vmul.f32 %v472, %v472
  %v1633 = vmul.f32 %v474, %v474
  %v1634 = vmul.f32 %v515, %v515
  %v1635 = vmul.f32 %v517, %v517
  %v1636 = vmul.f32 %v558, %v558
  %v1637 = vmul.f32 %v560, %v560
  %v1638 = vmul.f32 %v601, %v601
  %v1639 = vmul.f32 %v603, %v603
  %v1640 = vmul.f32 %v644, %v644
  %v1641 = vmul.f32 %v646, %v646
  %v1642 = vmul.f32 %v687, %v687
  %v1643 = vmul.f32 %v689, %v689
  %v1644 = vmul.f32 %v730, %v730
  %v1645 = vmul.f32 %v732, %v732
  %v1646 = vmul.f32 %v773, %v773
  %v1647 = vmul.f32 %v775, %v775
  %v1648 = vmul.f32 %v816, %v816
  %v1649 = vmul.f32 %v818, %v818
  %v1650 = vmul.f32 %v859, %v859
  %v1651 = vmul.f32 %v861, %v861
  %v1652 = vmul.f32 %v902, %v902
  %v1653 = vmul.f32 %v904, %v904
  %v1654 = vadd.f32 %v1590, %v1622
  %v1655 = vrot.slane %v1654, 4
  %v1656 = vadd.f32 %v1654, %v1655
  %v1657 = vrot.slane %v1656, 2
  %v1658 = vadd.f32 %v1656, %v1657
  %v1659 = vrot.slane %v1658, 1
  %v1660 = vadd.f32 %v1658, %v1659
  %v1661 = vadd.f32 %v1591, %v1623
  %v1662 = vrot.slane %v1661, 4
  %v1663 = vadd.f32 %v1661, %v1662
  %v1664 = vrot.slane %v1663, 2
  %v1665 = vadd.f32 %v1663, %v1664
  %v1666 = vrot.slane %v1665, 1
  %v1667 = vadd.f32 %v1665, %v1666
  %v1668 = vadd.f32 %v1592, %v1624
  %v1669 = vrot.slane %v1668, 4
  %v1670 = vadd.f32 %v1668, %v1669
  %v1671 = vrot.slane %v1670, 2
  %v1672 = vadd.f32 %v1670, %v1671
  %v1673 = vrot.slane %v1672, 1
  %v1674 = vadd.f32 %v1672, %v1673
  %v1675 = vadd.f32 %v1593, %v1625
  %v1676 = vrot.slane %v1675, 4
  %v1677 = vadd.f32 %v1675, %v1676
  %v1678 = vrot.slane %v1677, 2
  %v1679 = vadd.f32 %v1677, %v1678
  %v1680 = vrot.slane %v1679, 1
  %v1681 = vadd.f32 %v1679, %v1680
  %v1682 = vadd.f32 %v1594, %v1626
  %v1683 = vrot.slane %v1682, 4
  %v1684 = vadd.f32 %v1682, %v1683
  %v1685 = vrot.slane %v1684, 2
  %v1686 = vadd.f32 %v1684, %v1685
  %v1687 = vrot.slane %v1686, 1
  %v1688 = vadd.f32 %v1686, %v1687
  %v1689 = vadd.f32 %v1595, %v1627
  %v1690 = vrot.slane %v1689, 4
  %v1691 = vadd.f32 %v1689, %v1690
  %v1692 = vrot.slane %v1691, 2
  %v1693 = vadd.f32 %v1691, %v1692
  %v1694 = vrot.slane %v1693, 1
  %v1695 = vadd.f32 %v1693, %v1694
  %v1696 = vadd.f32 %v1596, %v1628
  %v1697 = vrot.slane %v1696, 4
  %v1698 = vadd.f32 %v1696, %v1697
  %v1699 = vrot.slane %v1698, 2
  %v1700 = vadd.f32 %v1698, %v1699
  %v1701 = vrot.slane %v1700, 1
  %v1702 = vadd.f32 %v1700, %v1701
  %v1703 = vadd.f32 %v1597, %v1629
  %v1704 = vrot.slane %v1703, 4
  %v1705 = vadd.f32 %v1703, %v1704
  %v1706 = vrot.slane %v1705, 2
  %v1707 = vadd.f32 %v1705, %v1706
  %v1708 = vrot.slane %v1707, 1
  %v1709 = vadd.f32 %v1707, %v1708
  %v1710 = vadd.f32 %v1598, %v1630
  %v1711 = vrot.slane %v1710, 4
  %v1712 = vadd.f32 %v1710, %v1711
  %v1713 = vrot.slane %v1712, 2
  %v1714 = vadd.f32 %v1712, %v1713
  %v1715 = vrot.slane %v1714, 1
  %v1716 = vadd.f32 %v1714, %v1715
  %v1717 = vadd.f32 %v1599, %v1631
  %v1718 = vrot.slane %v1717, 4
  %v1719 = vadd.f32 %v1717, %v1718
  %v1720 = vrot.slane %v1719, 2
  %v1721 = vadd.f32 %v1719, %v1720
  %v1722 = vrot.slane %v1721, 1
  %v1723 = vadd.f32 %v1721, %v1722
  %v1724 = vadd.f32 %v1600, %v1632
  %v1725 = vrot.slane %v1724, 4
  %v1726 = vadd.f32 %v1724, %v1725
  %v1727 = vrot.slane %v1726, 2
  %v1728 = vadd.f32 %v1726, %v1727
  %v1729 = vrot.slane %v1728, 1
  %v1730 = vadd.f32 %v1728, %v1729
  %v1731 = vadd.f32 %v1601, %v1633
  %v1732 = vrot.slane %v1731, 4
  %v1733 = vadd.f32 %v1731, %v1732
  %v1734 = vrot.slane %v1733, 2
  %v1735 = vadd.f32 %v1733, %v1734
  %v1736 = vrot.slane %v1735, 1
  %v1737 = vadd.f32 %v1735, %v1736
  %v1738 = vadd.f32 %v1602, %v1634
  %v1739 = vrot.slane %v1738, 4
  %v1740 = vadd.f32 %v1738, %v1739
  %v1741 = vrot.slane %v1740, 2
  %v1742 = vadd.f32 %v1740, %v1741
  %v1743 = vrot.slane %v1742, 1
  %v1744 = vadd.f32 %v1742, %v1743
  %v1745 = vadd.f32 %v1603, %v1635
  %v1746 = vrot.slane %v1745, 4
  %v1747 = vadd.f32 %v1745, %v1746
  %v1748 = vrot.slane %v1747, 2
  %v1749 = vadd.f32 %v1747, %v1748
  %v1750 = vrot.slane %v1749, 1
  %v1751 = vadd.f32 %v1749, %v1750
  %v1752 = vadd.f32 %v1604, %v1636
  %v1753 = vrot.slane %v1752, 4
  %v1754 = vadd.f32 %v1752, %v1753
  %v1755 = vrot.slane %v1754, 2
  %v1756 = vadd.f32 %v1754, %v1755
  %v1757 = vrot.slane %v1756, 1
  %v1758 = vadd.f32 %v1756, %v1757
  %v1759 = vadd.f32 %v1605, %v1637
  %v1760 = vrot.slane %v1759, 4
  %v1761 = vadd.f32 %v1759, %v1760
  %v1762 = vrot.slane %v1761, 2
  %v1763 = vadd.f32 %v1761, %v1762
  %v1764 = vrot.slane %v1763, 1
  %v1765 = vadd.f32 %v1763, %v1764
  %v1766 = vadd.f32 %v1606, %v1638
  %v1767 = vrot.slane %v1766, 4
  %v1768 = vadd.f32 %v1766, %v1767
  %v1769 = vrot.slane %v1768, 2
  %v1770 = vadd.f32 %v1768, %v1769
  %v1771 = vrot.slane %v1770, 1
  %v1772 = vadd.f32 %v1770, %v1771
  %v1773 = vadd.f32 %v1607, %v1639
  %v1774 = vrot.slane %v1773, 4
  %v1775 = vadd.f32 %v1773, %v1774
  %v1776 = vrot.slane %v1775, 2
  %v1777 = vadd.f32 %v1775, %v1776
  %v1778 = vrot.slane %v1777, 1
  %v1779 = vadd.f32 %v1777, %v1778
  %v1780 = vadd.f32 %v1608, %v1640
  %v1781 = vrot.slane %v1780, 4
  %v1782 = vadd.f32 %v1780, %v1781
  %v1783 = vrot.slane %v1782, 2
  %v1784 = vadd.f32 %v1782, %v1783
  %v1785 = vrot.slane %v1784, 1
  %v1786 = vadd.f32 %v1784, %v1785
  %v1787 = vadd.f32 %v1609, %v1641
  %v1788 = vrot.slane %v1787, 4
  %v1789 = vadd.f32 %v1787, %v1788
  %v1790 = vrot.slane %v1789, 2
  %v1791 = vadd.f32 %v1789, %v1790
  %v1792 = vrot.slane %v1791, 1
  %v1793 = vadd.f32 %v1791, %v1792
  %v1794 = vadd.f32 %v1610, %v1642
  %v1795 = vrot.slane %v1794, 4
  %v1796 = vadd.f32 %v1794, %v1795
  %v1797 = vrot.slane %v1796, 2
  %v1798 = vadd.f32 %v1796, %v1797
  %v1799 = vrot.slane %v1798, 1
  %v1800 = vadd.f32 %v1798, %v1799
  %v1801 = vadd.f32 %v1611, %v1643
  %v1802 = vrot.slane %v1801, 4
  %v1803 = vadd.f32 %v1801, %v1802
  %v1804 = vrot.slane %v1803, 2
  %v1805 = vadd.f32 %v1803, %v1804
  %v1806 = vrot.slane %v1805, 1
  %v1807 = vadd.f32 %v1805, %v1806
  %v1808 = vadd.f32 %v1612, %v1644
  %v1809 = vrot.slane %v1808, 4
  %v1810 = vadd.f32 %v1808, %v1809
  %v1811 = vrot.slane %v1810, 2
  %v1812 = vadd.f32 %v1810, %v1811
  %v1813 = vrot.slane %v1812, 1
  %v1814 = vadd.f32 %v1812, %v1813
  %v1815 = vadd.f32 %v1613, %v1645
  %v1816 = vrot.slane %v1815, 4
  %v1817 = vadd.f32 %v1815, %v1816
  %v1818 = vrot.slane %v1817, 2
  %v1819 = vadd.f32 %v1817, %v1818
  %v1820 = vrot.slane %v1819, 1
  %v1821 = vadd.f32 %v1819, %v1820
  %v1822 = vadd.f32 %v1614, %v1646
  %v1823 = vrot.slane %v1822, 4
  %v1824 = vadd.f32 %v1822, %v1823
  %v1825 = vrot.slane %v1824, 2
  %v1826 = vadd.f32 %v1824, %v1825
  %v1827 = vrot.slane %v1826, 1
  %v1828 = vadd.f32 %v1826, %v1827
  %v1829 = vadd.f32 %v1615, %v1647
  %v1830 = vrot.slane %v1829, 4
  %v1831 = vadd.f32 %v1829, %v1830
  %v1832 = vrot.slane %v1831, 2
  %v1833 = vadd.f32 %v1831, %v1832
  %v1834 = vrot.slane %v1833, 1
  %v1835 = vadd.f32 %v1833, %v1834
  %v1836 = vadd.f32 %v1616, %v1648
  %v1837 = vrot.slane %v1836, 4
  %v1838 = vadd.f32 %v1836, %v1837
  %v1839 = vrot.slane %v1838, 2
  %v1840 = vadd.f32 %v1838, %v1839
  %v1841 = vrot.slane %v1840, 1
  %v1842 = vadd.f32 %v1840, %v1841
  %v1843 = vadd.f32 %v1617, %v1649
  %v1844 = vrot.slane %v1843, 4
  %v1845 = vadd.f32 %v1843, %v1844
  %v1846 = vrot.slane %v1845, 2
  %v1847 = vadd.f32 %v1845, %v1846
  %v1848 = vrot.slane %v1847, 1
  %v1849 = vadd.f32 %v1847, %v1848
  %v1850 = vadd.f32 %v1618, %v1650
  %v1851 = vrot.slane %v1850, 4
  %v1852 = vadd.f32 %v1850, %v1851
  %v1853 = vrot.slane %v1852, 2
  %v1854 = vadd.f32 %v1852, %v1853
  %v1855 = vrot.slane %v1854, 1
  %v1856 = vadd.f32 %v1854, %v1855
  %v1857 = vadd.f32 %v1619, %v1651
  %v1858 = vrot.slane %v1857, 4
  %v1859 = vadd.f32 %v1857, %v1858
  %v1860 = vrot.slane %v1859, 2
  %v1861 = vadd.f32 %v1859, %v1860
  %v1862 = vrot.slane %v1861, 1
  %v1863 = vadd.f32 %v1861, %v1862
  %v1864 = vadd.f32 %v1620, %v1652
  %v1865 = vrot.slane %v1864, 4
  %v1866 = vadd.f32 %v1864, %v1865
  %v1867 = vrot.slane %v1866, 2
  %v1868 = vadd.f32 %v1866, %v1867
  %v1869 = vrot.slane %v1868, 1
  %v1870 = vadd.f32 %v1868, %v1869
  %v1871 = vadd.f32 %v1621, %v1653
  %v1872 = vrot.slane %v1871, 4
  %v1873 = vadd.f32 %v1871, %v1872
  %v1874 = vrot.slane %v1873, 2
  %v1875 = vadd.f32 %v1873, %v1874
  %v1876 = vrot.slane %v1875, 1
  %v1877 = vadd.f32 %v1875, %v1876
  %v1910 = vcombine.low %v1660, %v1667
  %v1911 = vcombine.low %v1674, %v1681
  %v1912 = vcombine.low %v1688, %v1695
  %v1913 = vcombine.low %v1702, %v1709
  %v1915 = vunpack.c.l.s4 1966171168
  %v1916 = vunpack.c.0.s8 %v1915
  %v1917 = vlaneseq
  %v1918 = vshrl.u32 %v1917, 7
  %v1919 = vsub.s32 %v1916, %v1918
  %v1920 = vrot.slane %v1910, %v1919
  %v1922 = vunpack.c.l.s4 1966171168
  %v1923 = vunpack.c.0.s8 %v1922
  %v1924 = vlaneseq
  %v1925 = vshrl.u32 %v1924, 7
  %v1926 = vsub.s32 %v1923, %v1925
  %v1927 = vrot.slane %v1911, %v1926
  %v1929 = vunpack.c.l.s4 1966171168
  %v1930 = vunpack.c.0.s8 %v1929
  %v1931 = vlaneseq
  %v1932 = vshrl.u32 %v1931, 7
  %v1933 = vsub.s32 %v1930, %v1932
  %v1934 = vrot.slane %v1912, %v1933
  %v1936 = vunpack.c.l.s4 1966171168
  %v1937 = vunpack.c.0.s8 %v1936
  %v1938 = vlaneseq
  %v1939 = vshrl.u32 %v1938, 7
  %v1940 = vsub.s32 %v1937, %v1939
  %v1941 = vrot.slane %v1913, %v1940
  %v1942 = vcombine.low %v1920, %v1927
  %v1943 = vcombine.low %v1934, %v1941
  %v1945 = vunpack.c.l.s4 1966171168
  %v1946 = vunpack.c.0.s8 %v1945
  %v1947 = vlaneseq
  %v1948 = vshrl.u32 %v1947, 7
  %v1949 = vsub.s32 %v1946, %v1948
  %v1950 = vrot.slane %v1942, %v1949
  %v1952 = vunpack.c.l.s4 1966171168
  %v1953 = vunpack.c.0.s8 %v1952
  %v1954 = vlaneseq
  %v1955 = vshrl.u32 %v1954, 7
  %v1956 = vsub.s32 %v1953, %v1955
  %v1957 = vrot.slane %v1943, %v1956
  %v1958 = vcombine.low %v1950, %v1957
  %v1959 = vcombine.low %v1716, %v1723
  %v1960 = vcombine.low %v1730, %v1737
  %v1961 = vcombine.low %v1744, %v1751
  %v1962 = vcombine.low %v1758, %v1765
  %v1964 = vunpack.c.l.s4 1966171168
  %v1965 = vunpack.c.0.s8 %v1964
  %v1966 = vlaneseq
  %v1967 = vshrl.u32 %v1966, 7
  %v1968 = vsub.s32 %v1965, %v1967
  %v1969 = vrot.slane %v1959, %v1968
  %v1971 = vunpack.c.l.s4 1966171168
  %v1972 = vunpack.c.0.s8 %v1971
  %v1973 = vlaneseq
  %v1974 = vshrl.u32 %v1973, 7
  %v1975 = vsub.s32 %v1972, %v1974
  %v1976 = vrot.slane %v1960, %v1975
  %v1978 = vunpack.c.l.s4 1966171168
  %v1979 = vunpack.c.0.s8 %v1978
  %v1980 = vlaneseq
  %v1981 = vshrl.u32 %v1980, 7
  %v1982 = vsub.s32 %v1979, %v1981
  %v1983 = vrot.slane %v1961, %v1982
  %v1985 = vunpack.c.l.s4 1966171168
  %v1986 = vunpack.c.0.s8 %v1985
  %v1987 = vlaneseq
  %v1988 = vshrl.u32 %v1987, 7
  %v1989 = vsub.s32 %v1986, %v1988
  %v1990 = vrot.slane %v1962, %v1989
  %v1991 = vcombine.low %v1969, %v1976
  %v1992 = vcombine.low %v1983, %v1990
  %v1994 = vunpack.c.l.s4 1966171168
  %v1995 = vunpack.c.0.s8 %v1994
  %v1996 = vlaneseq
  %v1997 = vshrl.u32 %v1996, 7
  %v1998 = vsub.s32 %v1995, %v1997
  %v1999 = vrot.slane %v1991, %v1998
  %v2001 = vunpack.c.l.s4 1966171168
  %v2002 = vunpack.c.0.s8 %v2001
  %v2003 = vlaneseq
  %v2004 = vshrl.u32 %v2003, 7
  %v2005 = vsub.s32 %v2002, %v2004
  %v2006 = vrot.slane %v1992, %v2005
  %v2007 = vcombine.low %v1999, %v2006
  %v2008 = vcombine.low %v1772, %v1779
  %v2009 = vcombine.low %v1786, %v1793
  %v2010 = vcombine.low %v1800, %v1807
  %v2011 = vcombine.low %v1814, %v1821
  %v2013 = vunpack.c.l.s4 1966171168
  %v2014 = vunpack.c.0.s8 %v2013
  %v2015 = vlaneseq
  %v2016 = vshrl.u32 %v2015, 7
  %v2017 = vsub.s32 %v2014, %v2016
  %v2018 = vrot.slane %v2008, %v2017
  %v2020 = vunpack.c.l.s4 1966171168
  %v2021 = vunpack.c.0.s8 %v2020
  %v2022 = vlaneseq
  %v2023 = vshrl.u32 %v2022, 7
  %v2024 = vsub.s32 %v2021, %v2023
  %v2025 = vrot.slane %v2009, %v2024
  %v2027 = vunpack.c.l.s4 1966171168
  %v2028 = vunpack.c.0.s8 %v2027
  %v2029 = vlaneseq
  %v2030 = vshrl.u32 %v2029, 7
  %v2031 = vsub.s32 %v2028, %v2030
  %v2032 = vrot.slane %v2010, %v2031
  %v2034 = vunpack.c.l.s4 1966171168
  %v2035 = vunpack.c.0.s8 %v2034
  %v2036 = vlaneseq
  %v2037 = vshrl.u32 %v2036, 7
  %v2038 = vsub.s32 %v2035, %v2037
  %v2039 = vrot.slane %v2011, %v2038
  %v2040 = vcombine.low %v2018, %v2025
  %v2041 = vcombine.low %v2032, %v2039
  %v2043 = vunpack.c.l.s4 1966171168
  %v2044 = vunpack.c.0.s8 %v2043
  %v2045 = vlaneseq
  %v2046 = vshrl.u32 %v2045, 7
  %v2047 = vsub.s32 %v2044, %v2046
  %v2048 = vrot.slane %v2040, %v2047
  %v2050 = vunpack.c.l.s4 1966171168
  %v2051 = vunpack.c.0.s8 %v2050
  %v2052 = vlaneseq
  %v2053 = vshrl.u32 %v2052, 7
  %v2054 = vsub.s32 %v2051, %v2053
  %v2055 = vrot.slane %v2041, %v2054
  %v2056 = vcombine.low %v2048, %v2055
  %v2057 = vcombine.low %v1828, %v1835
  %v2058 = vcombine.low %v1842, %v1849
  %v2059 = vcombine.low %v1856, %v1863
  %v2060 = vcombine.low %v1870, %v1877
  %v2062 = vunpack.c.l.s4 1966171168
  %v2063 = vunpack.c.0.s8 %v2062
  %v2064 = vlaneseq
  %v2065 = vshrl.u32 %v2064, 7
  %v2066 = vsub.s32 %v2063, %v2065
  %v2067 = vrot.slane %v2057, %v2066
  %v2069 = vunpack.c.l.s4 1966171168
  %v2070 = vunpack.c.0.s8 %v2069
  %v2071 = vlaneseq
  %v2072 = vshrl.u32 %v2071, 7
  %v2073 = vsub.s32 %v2070, %v2072
  %v2074 = vrot.slane %v2058, %v2073
  %v2076 = vunpack.c.l.s4 1966171168
  %v2077 = vunpack.c.0.s8 %v2076
  %v2078 = vlaneseq
  %v2079 = vshrl.u32 %v2078, 7
  %v2080 = vsub.s32 %v2077, %v2079
  %v2081 = vrot.slane %v2059, %v2080
  %v2083 = vunpack.c.l.s4 1966171168
  %v2084 = vunpack.c.0.s8 %v2083
  %v2085 = vlaneseq
  %v2086 = vshrl.u32 %v2085, 7
  %v2087 = vsub.s32 %v2084, %v2086
  %v2088 = vrot.slane %v2060, %v2087
  %v2089 = vcombine.low %v2067, %v2074
  %v2090 = vcombine.low %v2081, %v2088
  %v2092 = vunpack.c.l.s4 1966171168
  %v2093 = vunpack.c.0.s8 %v2092
  %v2094 = vlaneseq
  %v2095 = vshrl.u32 %v2094, 7
  %v2096 = vsub.s32 %v2093, %v2095
  %v2097 = vrot.slane %v2089, %v2096
  %v2099 = vunpack.c.l.s4 1966171168
  %v2100 = vunpack.c.0.s8 %v2099
  %v2101 = vlaneseq
  %v2102 = vshrl.u32 %v2101, 7
  %v2103 = vsub.s32 %v2100, %v2102
  %v2104 = vrot.slane %v2090, %v2103
  %v2105 = vcombine.low %v2097, %v2104
  %2110 = vst [vmem:[%s4] sm:$0xff] %v1958
  %2111 = vst [vmem:[%s4 + $0x8] sm:$0xff] %v2007
  %2112 = vst [vmem:[%s4 + $0x10] sm:$0xff] %v2056
  %2113 = vst [vmem:[%s4 + $0x18] sm:$0xff] %v2105
  // Predicated region
  $region10: #{cnn_generator_forward.7} parent=0 // pred_check
    _
  $region11: #{cnn_generator_forward.7} parent=0 // pred_check_branch
    %2115 = sbr.rel (0) target = $region13
  $region12: #{cnn_generator_forward.7} parent=0 // pred_region
    _
  $region13: #{cnn_generator_forward.7} parent=0 // pred_fallthru
    _
  // Predicated region
  $region14: #{cnn_generator_forward.7} parent=0 // pred_check
    _
  $region15: #{cnn_generator_forward.7} parent=0 // pred_check_branch
    %2117 = sbr.rel (0) target = $region17
  $region16: #{cnn_generator_forward.7} parent=0 // pred_region
    _
  $region17: #{cnn_generator_forward.7} parent=0 // pred_fallthru
    _
  // Predicated region
  $region18: #{cnn_generator_forward.7} parent=0 // pred_check
    _
  $region19: #{cnn_generator_forward.7} parent=0 // pred_check_branch
    %2119 = sbr.rel (0) target = $region21
  $region20: #{cnn_generator_forward.7} parent=0 // pred_region
    _
  $region21: #{cnn_generator_forward.7} parent=0 // pred_fallthru
    _
  // Predicated region
  $region22: #{cnn_generator_forward.7} parent=0 // pred_check
    _
  $region23: #{cnn_generator_forward.7} parent=0 // pred_check_branch
    %2121 = sbr.rel (0) target = $region25
  $region24: #{cnn_generator_forward.7} parent=0 // pred_region
    _
  $region25: #{cnn_generator_forward.7} parent=0 // pred_fallthru
    _
  // Predicated region
  $region26: #{cnn_generator_forward.7} parent=0 // pred_check
    _
  $region27: #{cnn_generator_forward.7} parent=0 // pred_check_branch
    %2123 = sbr.rel (0) target = $region29
  $region28: #{cnn_generator_forward.7} parent=0 // pred_region
    _
  $region29: #{cnn_generator_forward.7} parent=0 // pred_fallthru
    _
  // Predicated region
  $region30: #{cnn_generator_forward.7} parent=0 // pred_check
    _
  $region31: #{cnn_generator_forward.7} parent=0 // pred_check_branch
    %2125 = sbr.rel (0) target = $region33
  $region32: #{cnn_generator_forward.7} parent=0 // pred_region
    _
  $region33: #{cnn_generator_forward.7} parent=0 // pred_fallthru
    _

// kernel: cnn_generator_forward.10
$region0: #{cnn_generator_forward.10}
  #allocation0 [shape = 'u32[]', space=smem, size = 0x4, offset = 0x4, fixed_abs, tag = 'smem constant byte address 0x4 - core index']
  #allocation1 [shape = 'u32[144,128]{1,0:T(1,128)}', space=vmem, size = 0x12000, scoped, tag = 'internal scratch']
  %s0 = inlined_call_operand.vmem [shape: bf16[128,128], index: 0, kind: input, shape index: {}]
  %s1 = inlined_call_operand.vmem [shape: f32[1,128], index: 1, kind: input, shape index: {}]
  %s2 = inlined_call_operand.vmem [shape: f32[1,128], index: 2, kind: input, shape index: {}]
  %s3 = inlined_call_operand.vmem [shape: bf16[128,128], index: 3, kind: output, shape index: {}]
  %s4 = sld [smem:[#allocation0]]
  $region22: #{cnn_generator_forward.10} parent=0
    _
  %s6 = ssub.s32 1, %s4
  %s7 = scalar_select 0, %s6, %s4
  // Predicated region
  $region2: #{cnn_generator_forward.10} parent=0 // pred_check
    _
  $region3: #{cnn_generator_forward.10} parent=0 // pred_check_branch
    %9 = sbr.rel (0) target = $region5
  $region4: #{cnn_generator_forward.10} parent=0 // pred_region
    _
  $region5: #{cnn_generator_forward.10} parent=0 // pred_fallthru
    _
  // Predicated region
  $region6: #{cnn_generator_forward.10} parent=0 // pred_check
    _
  $region7: #{cnn_generator_forward.10} parent=0 // pred_check_branch
    %11 = sbr.rel (0) target = $region9
  $region8: #{cnn_generator_forward.10} parent=0 // pred_region
    _
  $region9: #{cnn_generator_forward.10} parent=0 // pred_fallthru
    _
  // Predicated region
  $region10: #{cnn_generator_forward.10} parent=0 // pred_check
    _
  $region11: #{cnn_generator_forward.10} parent=0 // pred_check_branch
    %13 = sbr.rel (0) target = $region13
  $region12: #{cnn_generator_forward.10} parent=0 // pred_region
    _
  $region13: #{cnn_generator_forward.10} parent=0 // pred_fallthru
    _
  %v14 = vld [vmem:[%s0] sm:$0xf]
  %v15 = vld [vmem:[%s0 + $0x4] sm:$0xf]
  %v16 = vld [vmem:[%s0 + $0x8] sm:$0xf]
  %v17 = vld [vmem:[%s0 + $0xc] sm:$0xf]
  %v18 = vld [vmem:[%s0 + $0x10] sm:$0xf]
  %v19 = vld [vmem:[%s0 + $0x14] sm:$0xf]
  %v20 = vld [vmem:[%s0 + $0x18] sm:$0xf]
  %v21 = vld [vmem:[%s0 + $0x1c] sm:$0xf]
  %v22 = vld [vmem:[%s0 + $0x20] sm:$0xf]
  %v23 = vld [vmem:[%s0 + $0x24] sm:$0xf]
  %v24 = vld [vmem:[%s0 + $0x28] sm:$0xf]
  %v25 = vld [vmem:[%s0 + $0x2c] sm:$0xf]
  %v26 = vld [vmem:[%s0 + $0x30] sm:$0xf]
  %v27 = vld [vmem:[%s0 + $0x34] sm:$0xf]
  %v28 = vld [vmem:[%s0 + $0x38] sm:$0xf]
  %v29 = vld [vmem:[%s0 + $0x3c] sm:$0xf]
  %v30 = vunpack.c.l.bf16 %v14
  %v31 = vunpack.c.l.bf16 %v15
  %v32 = vunpack.c.l.bf16 %v16
  %v33 = vunpack.c.l.bf16 %v17
  %v34 = vunpack.c.l.bf16 %v18
  %v35 = vunpack.c.l.bf16 %v19
  %v36 = vunpack.c.l.bf16 %v20
  %v37 = vunpack.c.l.bf16 %v21
  %v38 = vunpack.c.l.bf16 %v22
  %v39 = vunpack.c.l.bf16 %v23
  %v40 = vunpack.c.l.bf16 %v24
  %v41 = vunpack.c.l.bf16 %v25
  %v42 = vunpack.c.l.bf16 %v26
  %v43 = vunpack.c.l.bf16 %v27
  %v44 = vunpack.c.l.bf16 %v28
  %v45 = vunpack.c.l.bf16 %v29
  %v46 = vld [vmem:[%s1] sm:$0x1]
  %v48 = vlaneseq
  %v49 = vshrl.u32 %v48, 7
  %v50 = vsub.s32 0, %v49
  %v51 = vrot.slane %v46, %v50
  %v53 = vmul.f32 %v30, %v51
  %v54 = vmul.f32 %v31, %v51
  %v55 = vmul.f32 %v32, %v51
  %v56 = vmul.f32 %v33, %v51
  %v57 = vmul.f32 %v34, %v51
  %v58 = vmul.f32 %v35, %v51
  %v59 = vmul.f32 %v36, %v51
  %v60 = vmul.f32 %v37, %v51
  %v61 = vmul.f32 %v38, %v51
  %v62 = vmul.f32 %v39, %v51
  %v63 = vmul.f32 %v40, %v51
  %v64 = vmul.f32 %v41, %v51
  %v65 = vmul.f32 %v42, %v51
  %v66 = vmul.f32 %v43, %v51
  %v67 = vmul.f32 %v44, %v51
  %v68 = vmul.f32 %v45, %v51
  %v69 = vld [vmem:[%s2] sm:$0x1]
  %v71 = vlaneseq
  %v72 = vshrl.u32 %v71, 7
  %v73 = vsub.s32 0, %v72
  %v74 = vrot.slane %v69, %v73
  %v76 = vadd.f32 %v53, %v74
  %v77 = vadd.f32 %v54, %v74
  %v78 = vadd.f32 %v55, %v74
  %v79 = vadd.f32 %v56, %v74
  %v80 = vadd.f32 %v57, %v74
  %v81 = vadd.f32 %v58, %v74
  %v82 = vadd.f32 %v59, %v74
  %v83 = vadd.f32 %v60, %v74
  %v84 = vadd.f32 %v61, %v74
  %v85 = vadd.f32 %v62, %v74
  %v86 = vadd.f32 %v63, %v74
  %v87 = vadd.f32 %v64, %v74
  %v88 = vadd.f32 %v65, %v74
  %v89 = vadd.f32 %v66, %v74
  %v90 = vadd.f32 %v67, %v74
  %v91 = vadd.f32 %v68, %v74
  %v92 = vmax.f32 %v76, 0.0
  %v93 = vmax.f32 %v77, 0.0
  %v94 = vmax.f32 %v78, 0.0
  %v95 = vmax.f32 %v79, 0.0
  %v96 = vmax.f32 %v80, 0.0
  %v97 = vmax.f32 %v81, 0.0
  %v98 = vmax.f32 %v82, 0.0
  %v99 = vmax.f32 %v83, 0.0
  %v100 = vmax.f32 %v84, 0.0
  %v101 = vmax.f32 %v85, 0.0
  %v102 = vmax.f32 %v86, 0.0
  %v103 = vmax.f32 %v87, 0.0
  %v104 = vmax.f32 %v88, 0.0
  %v105 = vmax.f32 %v89, 0.0
  %v106 = vmax.f32 %v90, 0.0
  %v107 = vmax.f32 %v91, 0.0
  %v108 = vpack.c.bf16 %v93, %v92
  %v109 = vpack.c.bf16 %v95, %v94
  %v110 = vpack.c.bf16 %v97, %v96
  %v111 = vpack.c.bf16 %v99, %v98
  %v112 = vpack.c.bf16 %v101, %v100
  %v113 = vpack.c.bf16 %v103, %v102
  %v114 = vpack.c.bf16 %v105, %v104
  %v115 = vpack.c.bf16 %v107, %v106
  %v124 = vunpack.c.l.b16 %v108
  %v125 = vunpack.c.h.b16 %v108
  %v126 = vunpack.c.l.b16 %v109
  %v127 = vunpack.c.h.b16 %v109
  %v128 = vunpack.c.l.b16 %v110
  %v129 = vunpack.c.h.b16 %v110
  %v130 = vunpack.c.l.b16 %v111
  %v131 = vunpack.c.h.b16 %v111
  %v132 = vunpack.c.l.b16 %v112
  %v133 = vunpack.c.h.b16 %v112
  %v134 = vunpack.c.l.b16 %v113
  %v135 = vunpack.c.h.b16 %v113
  %v136 = vunpack.c.l.b16 %v114
  %v137 = vunpack.c.h.b16 %v114
  %v138 = vunpack.c.l.b16 %v115
  %v139 = vunpack.c.h.b16 %v115
  %v140 = vpack.c.b16 %v124, %v124
  %v141 = vpack.c.b16 %v125, %v125
  %v142 = vpack.c.b16 %v126, %v126
  %v143 = vpack.c.b16 %v127, %v127
  %v144 = vpack.c.b16 %v128, %v128
  %v145 = vpack.c.b16 %v129, %v129
  %v146 = vpack.c.b16 %v130, %v130
  %v147 = vpack.c.b16 %v131, %v131
  %v148 = vpack.c.b16 %v132, %v132
  %v149 = vpack.c.b16 %v133, %v133
  %v150 = vpack.c.b16 %v134, %v134
  %v151 = vpack.c.b16 %v135, %v135
  %v152 = vpack.c.b16 %v136, %v136
  %v153 = vpack.c.b16 %v137, %v137
  %v154 = vpack.c.b16 %v138, %v138
  %v155 = vpack.c.b16 %v139, %v139
  %172 = vst [vmem:[%s3] sm:$0xf] %v140
  %173 = vst [vmem:[%s3 + $0x4] sm:$0xf] %v141
  %174 = vst [vmem:[%s3 + $0x8] sm:$0xf] %v142
  %175 = vst [vmem:[%s3 + $0xc] sm:$0xf] %v143
  %176 = vst [vmem:[%s3 + $0x10] sm:$0xf] %v144
  %177 = vst [vmem:[%s3 + $0x14] sm:$0xf] %v145
  %178 = vst [vmem:[%s3 + $0x18] sm:$0xf] %v146
  %179 = vst [vmem:[%s3 + $0x1c] sm:$0xf] %v147
  %180 = vst [vmem:[%s3 + $0x20] sm:$0xf] %v148
  %181 = vst [vmem:[%s3 + $0x24] sm:$0xf] %v149
  %182 = vst [vmem:[%s3 + $0x28] sm:$0xf] %v150
  %183 = vst [vmem:[%s3 + $0x2c] sm:$0xf] %v151
  %184 = vst [vmem:[%s3 + $0x30] sm:$0xf] %v152
  %185 = vst [vmem:[%s3 + $0x34] sm:$0xf] %v153
  %186 = vst [vmem:[%s3 + $0x38] sm:$0xf] %v154
  %187 = vst [vmem:[%s3 + $0x3c] sm:$0xf] %v155
  // Predicated region
  $region14: #{cnn_generator_forward.10} parent=0 // pred_check
    _
  $region15: #{cnn_generator_forward.10} parent=0 // pred_check_branch
    %189 = sbr.rel (0) target = $region17
  $region16: #{cnn_generator_forward.10} parent=0 // pred_region
    _
  $region17: #{cnn_generator_forward.10} parent=0 // pred_fallthru
    _
  // Predicated region
  $region18: #{cnn_generator_forward.10} parent=0 // pred_check
    _
  $region19: #{cnn_generator_forward.10} parent=0 // pred_check_branch
    %191 = sbr.rel (0) target = $region21
  $region20: #{cnn_generator_forward.10} parent=0 // pred_region
    _
  $region21: #{cnn_generator_forward.10} parent=0 // pred_fallthru
    _

// kernel: cnn_generator_forward.9
$region0: #{cnn_generator_forward.9}
  #allocation0 [shape = 'u32[]', space=smem, size = 0x4, offset = 0x4, fixed_abs, tag = 'smem constant byte address 0x4 - core index']
  #allocation1 [shape = 'u32[144,128]{1,0:T(1,128)}', space=vmem, size = 0x12000, scoped, tag = 'internal scratch']
  %s0 = inlined_call_operand.vmem [shape: bf16[4,32,1024], index: 0, kind: input, shape index: {}]
  %s1 = inlined_call_operand.vmem [shape: bf16[4,1024,128], index: 1, kind: input, shape index: {}]
  %s2 = inlined_call_operand.vmem [shape: bf16[4,32,128], index: 2, kind: output, shape index: {0}]
  %s3 = inlined_call_operand.vmem [shape: f32[4,1,1,128], index: 3, kind: output, shape index: {1}]
  %s4 = inlined_call_operand.vmem [shape: f32[4,1,1,128], index: 4, kind: output, shape index: {2}]
  %5 = xla_tuple %s2, %s3, %s4
  %s6 = sld [smem:[#allocation0]]
  $region57: #{cnn_generator_forward.9} parent=0
    _
  %s8 = ssub.s32 1, %s6
  %s9 = scalar_select 0, %s8, %s6
  loop: start=0, step=1, limit=6
  $region2: #{cnn_generator_forward.9} parent=0 // loop_pre_header
    _
  $region3: #{cnn_generator_forward.9} parent=0 // loop_header
    %s11 = sphi 0, %s15
    %p12 = scmp.ge.s32.totalorder %s11, 6
    %s18 = sphi 0, %s30
    %s19 = sphi 0, %s26
    %s20 = sphi 0, %s18
    %s21 = sphi 0, %s19
    %s22 = sphi 0, %s20
    %s23 = sphi 0, %s21
    %s35 = sphi 0, %s37
    %s38 = sphi 0, %s35
    %s39 = sphi 0, %s38
    %s55 = sphi 0, %s39
    %s61 = sphi 0, %s63
    %s64 = sphi 0, %s61
    %s65 = sphi 0, %s64
    %s81 = sphi 0, %s65
    %s89 = sphi 0, %s91
    %s92 = sphi 0, %s89
    %s93 = sphi 0, %s92
    %s109 = sphi 0, %s93
    %s117 = sphi 0, %s119
    %s120 = sphi 0, %s117
    %s121 = sphi 0, %s120
    %s137 = sphi 0, %s121
    %s145 = sphi 0, %s147
    %s148 = sphi 0, %s145
    %s149 = sphi 0, %s148
    %s165 = sphi 0, %s149
  $region4: #{cnn_generator_forward.9} parent=0 // loop_header_branch
    %14 = sbr.rel (%p12) target = $region8
  $region5: #{cnn_generator_forward.9} parent=0 // loop_body
    %s16 = ssub.s32 %s11, 1
    %s17 = ssub.s32 %s11, 2
    %s24 = sadd.s32 1, %s19
    %p25 = scmp.ge.s32.totalorder %s24, 1
    %s26 = scalar_select %p25, 0, %s24
    %s27 = sadd.s32 1, %s18
    %s28 = scalar_select %p25, %s27, %s18
    %p29 = scmp.ge.s32.totalorder %s28, 4
    %s30 = scalar_select %p29, 0, %s28
    %s31 = ssub.s32 %s18, %s30
    %s32 = ssub.s32 %s19, %s26
    %s33 = sor.u32 %s31, %s32
    %p34 = scmp.eq.s32.totalorder %s33, 0
    %s36 = sadd.s32 %s35, 1
    %s37 = scalar_select %p34, %s35, %s36
    %p40 = pneg %p34
    %p41 = scmp.eq.s32.totalorder %s11, 3
    %p42 = por %p40, %p41
    %p43 = scmp.ne.s32.totalorder %s35, %s38
    %p44 = scmp.eq.s32.totalorder %s11, 0
    %p45 = por %p43, %p44
    %p46 = scmp.ne.s32.totalorder %s35, %s38
    %p47 = scmp.eq.s32.totalorder %s16, 3
    %p48 = por %p46, %p47
    %p49 = scmp.ne.s32.totalorder %s38, %s39
    %p50 = scmp.eq.s32.totalorder %s16, 0
    %p51 = por %p49, %p50
    %p52 = scmp.ne.s32.totalorder %s38, %s39
    %p53 = scmp.eq.s32.totalorder %s17, 3
    %p54 = por %p52, %p53
    %p56 = scmp.ne.s32.totalorder %s39, %s55
    %p57 = scmp.eq.s32.totalorder %s17, 0
    %p58 = por %p56, %p57
    %s59 = ssub.s32 %s18, %s30
    %p60 = scmp.eq.s32.totalorder %s59, 0
    %s62 = sadd.s32 %s61, 1
    %s63 = scalar_select %p60, %s61, %s62
    %p66 = pneg %p60
    %p67 = scmp.eq.s32.totalorder %s11, 3
    %p68 = por %p66, %p67
    %p69 = scmp.ne.s32.totalorder %s61, %s64
    %p70 = scmp.eq.s32.totalorder %s11, 0
    %p71 = por %p69, %p70
    %p72 = scmp.ne.s32.totalorder %s61, %s64
    %p73 = scmp.eq.s32.totalorder %s16, 3
    %p74 = por %p72, %p73
    %p75 = scmp.ne.s32.totalorder %s64, %s65
    %p76 = scmp.eq.s32.totalorder %s16, 0
    %p77 = por %p75, %p76
    %p78 = scmp.ne.s32.totalorder %s64, %s65
    %p79 = scmp.eq.s32.totalorder %s17, 3
    %p80 = por %p78, %p79
    %p82 = scmp.ne.s32.totalorder %s65, %s81
    %p83 = scmp.eq.s32.totalorder %s17, 0
    %p84 = por %p82, %p83
    %s85 = ssub.s32 %s18, %s30
    %s86 = ssub.s32 %s19, %s26
    %s87 = sor.u32 %s85, %s86
    %p88 = scmp.eq.s32.totalorder %s87, 0
    %s90 = sadd.s32 %s89, 1
    %s91 = scalar_select %p88, %s89, %s90
    %p94 = pneg %p88
    %p95 = scmp.eq.s32.totalorder %s11, 3
    %p96 = por %p94, %p95
    %p97 = scmp.ne.s32.totalorder %s89, %s92
    %p98 = scmp.eq.s32.totalorder %s11, 0
    %p99 = por %p97, %p98
    %p100 = scmp.ne.s32.totalorder %s89, %s92
    %p101 = scmp.eq.s32.totalorder %s16, 3
    %p102 = por %p100, %p101
    %p103 = scmp.ne.s32.totalorder %s92, %s93
    %p104 = scmp.eq.s32.totalorder %s16, 0
    %p105 = por %p103, %p104
    %p106 = scmp.ne.s32.totalorder %s92, %s93
    %p107 = scmp.eq.s32.totalorder %s17, 3
    %p108 = por %p106, %p107
    %p110 = scmp.ne.s32.totalorder %s93, %s109
    %p111 = scmp.eq.s32.totalorder %s17, 0
    %p112 = por %p110, %p111
    %s113 = ssub.s32 %s18, %s30
    %s114 = ssub.s32 %s19, %s26
    %s115 = sor.u32 %s113, %s114
    %p116 = scmp.eq.s32.totalorder %s115, 0
    %s118 = sadd.s32 %s117, 1
    %s119 = scalar_select %p116, %s117, %s118
    %p122 = pneg %p116
    %p123 = scmp.eq.s32.totalorder %s11, 3
    %p124 = por %p122, %p123
    %p125 = scmp.ne.s32.totalorder %s117, %s120
    %p126 = scmp.eq.s32.totalorder %s11, 0
    %p127 = por %p125, %p126
    %p128 = scmp.ne.s32.totalorder %s117, %s120
    %p129 = scmp.eq.s32.totalorder %s16, 3
    %p130 = por %p128, %p129
    %p131 = scmp.ne.s32.totalorder %s120, %s121
    %p132 = scmp.eq.s32.totalorder %s16, 0
    %p133 = por %p131, %p132
    %p134 = scmp.ne.s32.totalorder %s120, %s121
    %p135 = scmp.eq.s32.totalorder %s17, 3
    %p136 = por %p134, %p135
    %p138 = scmp.ne.s32.totalorder %s121, %s137
    %p139 = scmp.eq.s32.totalorder %s17, 0
    %p140 = por %p138, %p139
    %s141 = ssub.s32 %s18, %s30
    %s142 = ssub.s32 %s19, %s26
    %s143 = sor.u32 %s141, %s142
    %p144 = scmp.eq.s32.totalorder %s143, 0
    %s146 = sadd.s32 %s145, 1
    %s147 = scalar_select %p144, %s145, %s146
    %p150 = pneg %p144
    %p151 = scmp.eq.s32.totalorder %s11, 3
    %p152 = por %p150, %p151
    %p153 = scmp.ne.s32.totalorder %s145, %s148
    %p154 = scmp.eq.s32.totalorder %s11, 0
    %p155 = por %p153, %p154
    %p156 = scmp.ne.s32.totalorder %s145, %s148
    %p157 = scmp.eq.s32.totalorder %s16, 3
    %p158 = por %p156, %p157
    %p159 = scmp.ne.s32.totalorder %s148, %s149
    %p160 = scmp.eq.s32.totalorder %s16, 0
    %p161 = por %p159, %p160
    %p162 = scmp.ne.s32.totalorder %s148, %s149
    %p163 = scmp.eq.s32.totalorder %s17, 3
    %p164 = por %p162, %p163
    %p166 = scmp.ne.s32.totalorder %s149, %s165
    %p167 = scmp.eq.s32.totalorder %s17, 0
    %p168 = por %p166, %p167
    %p169 = scmp.le.s32.totalorder 1, %s11
    %p170 = scmp.lt.s32.totalorder %s11, 5
    %p171 = pnand %p169, %p170
    %p172 = pneg %p171
    // Predicated region
    $region9: #{cnn_generator_forward.9} parent=5 // pred_check
      _
    $region10: #{cnn_generator_forward.9} parent=5 // pred_check_branch
      %174 = sbr.rel (%p171) target = $region12
    $region11: #{cnn_generator_forward.9} parent=5 // pred_region
      %s175 = ssub.s32 %s11, 1
    $region12: #{cnn_generator_forward.9} parent=5 // pred_fallthru
      _
    %p176 = scmp.lt.s32.totalorder %s11, 4
    // Predicated region
    $region13: #{cnn_generator_forward.9} parent=5 // pred_check
      %p177 = pneg %p176
    $region14: #{cnn_generator_forward.9} parent=5 // pred_check_branch
      %179 = sbr.rel (%p177) target = $region16
    $region15: #{cnn_generator_forward.9} parent=5 // pred_region
      // Predicated region
      $region17: #{cnn_generator_forward.9} parent=15 // pred_check
        %p180 = pneg %p45
      $region18: #{cnn_generator_forward.9} parent=15 // pred_check_branch
        %182 = sbr.rel (%p180) target = $region20
      $region19: #{cnn_generator_forward.9} parent=15 // pred_region
        %s183 = smul.u32 4, %s19
        %p184 = scmp.lt.s32.totalorder %s18, 3
        %s185 = scalar_select %p184, %s18, 3
        %p186 = scmp.lt.s32.totalorder %s183, 3
        %s187 = scalar_select %p186, %s183, 3
        %s188 = smul.addr %s187, 8
        %s189 = smul.addr %s185, 32
        %s190 = sadd.s32 %s188, %s189
        %s191 = smul.addr %s190, 4
        %s192 = scalar_lea.vmem %s0, %s191
        %s193 = smul.u32 4, %s19
      $region20: #{cnn_generator_forward.9} parent=15 // pred_fallthru
        _
      // Predicated region
      $region21: #{cnn_generator_forward.9} parent=15 // pred_check
        %p194 = pneg %p71
      $region22: #{cnn_generator_forward.9} parent=15 // pred_check_branch
        %196 = sbr.rel (%p194) target = $region24
      $region23: #{cnn_generator_forward.9} parent=15 // pred_region
        %p197 = scmp.lt.s32.totalorder %s18, 3
        %s198 = scalar_select %p197, %s18, 3
        %s199 = smul.addr %s198, 128
        %s200 = smul.addr %s199, 4
        %s201 = scalar_lea.vmem %s1, %s200
      $region24: #{cnn_generator_forward.9} parent=15 // pred_fallthru
        _
    $region16: #{cnn_generator_forward.9} parent=5 // pred_fallthru
      _
    %p202 = scmp.le.s32.totalorder 1, %s11
    %p203 = scmp.lt.s32.totalorder %s11, 5
    %p204 = pnand %p202, %p203
    %p205 = pneg %p204
    // Predicated region
    $region25: #{cnn_generator_forward.9} parent=5 // pred_check
      _
    $region26: #{cnn_generator_forward.9} parent=5 // pred_check_branch
      %207 = sbr.rel (%p204) target = $region28
    $region27: #{cnn_generator_forward.9} parent=5 // pred_region
      %s208 = ssub.s32 %s11, 1
      %s209 = smul.u32 4, %s21
      %p210 = scmp.lt.s32.totalorder %s20, 3
      %s211 = scalar_select %p210, %s20, 3
      %p212 = scmp.lt.s32.totalorder %s209, 3
      %s213 = scalar_select %p212, %s209, 3
      %s214 = smul.addr %s213, 8
      %s215 = smul.addr %s211, 32
      %s216 = sadd.s32 %s214, %s215
      %s217 = smul.addr %s216, 4
      %s218 = scalar_lea.vmem %s0, %s217
      %p219 = pneg %p51
      %p220 = pneg %p48
      %p221 = scmp.lt.s32.totalorder %s20, 3
      %s222 = scalar_select %p221, %s20, 3
      %s223 = smul.addr %s222, 128
      %s224 = smul.addr %s223, 4
      %s225 = scalar_lea.vmem %s1, %s224
      %p226 = pneg %p77
      %p227 = pneg %p74
      %p228 = pneg %p105
      %p229 = pneg %p102
      %s230 = smul.u32 4, %s21
      %p231 = scmp.lt.s32.totalorder %s20, 3
      %s232 = scalar_select %p231, %s20, 3
      %p233 = scmp.lt.s32.totalorder %s230, 3
      %s234 = scalar_select %p233, %s230, 3
      %s235 = smul.addr %s232, 4
      %s236 = sadd.s32 %s234, %s235
      %s237 = smul.addr %s236, 4
      %s238 = scalar_lea.vmem %s2, %s237
      %p239 = pneg %p133
      %p240 = pneg %p130
      %p241 = scmp.lt.s32.totalorder %s20, 3
      %s242 = scalar_select %p241, %s20, 3
      %p243 = scmp.lt.s32.totalorder %s21, 0
      %s244 = scalar_select %p243, %s21, 0
      %s245 = sadd.s32 %s244, %s242
      %s246 = scalar_lea.vmem %s3, %s245
      %p247 = pneg %p161
      %p248 = pneg %p158
      %p249 = scmp.lt.s32.totalorder %s20, 3
      %s250 = scalar_select %p249, %s20, 3
      %p251 = scmp.lt.s32.totalorder %s21, 0
      %s252 = scalar_select %p251, %s21, 0
      %s253 = sadd.s32 %s252, %s250
      %s254 = scalar_lea.vmem %s4, %s253
      %s255 = smul.u32 4, %s21
      %p256 = scmp.lt.s32.totalorder %s20, 3
      %s257 = scalar_select %p256, %s20, 3
      %p258 = scmp.lt.s32.totalorder %s255, 3
      %s259 = scalar_select %p258, %s255, 3
      %s260 = smul.addr %s259, 8
      %s261 = smul.addr %s257, 32
      %s262 = sadd.s32 %s260, %s261
      %s263 = smul.addr %s262, 4
      %s264 = scalar_lea.vmem %s0, %s263
      %s265 = smul.u32 4, %s21
      %p266 = scmp.lt.s32.totalorder %s20, 3
      %s267 = scalar_select %p266, %s20, 3
      %s268 = smul.addr %s267, 128
      %s269 = smul.addr %s268, 4
      %s270 = scalar_lea.vmem %s1, %s269
      %s271 = smul.u32 4, %s21
      %p272 = scmp.lt.s32.totalorder %s20, 3
      %s273 = scalar_select %p272, %s20, 3
      %p274 = scmp.lt.s32.totalorder %s271, 3
      %s275 = scalar_select %p274, %s271, 3
      %s276 = smul.addr %s273, 4
      %s277 = sadd.s32 %s275, %s276
      %s278 = smul.addr %s277, 4
      %s279 = scalar_lea.vmem %s2, %s278
      %s280 = smul.u32 4, %s21
      %p281 = scmp.lt.s32.totalorder %s20, 3
      %s282 = scalar_select %p281, %s20, 3
      %p283 = scmp.lt.s32.totalorder %s21, 0
      %s284 = scalar_select %p283, %s21, 0
      %s285 = sadd.s32 %s284, %s282
      %s286 = scalar_lea.vmem %s3, %s285
      %p287 = scmp.lt.s32.totalorder %s20, 3
      %s288 = scalar_select %p287, %s20, 3
      %p289 = scmp.lt.s32.totalorder %s21, 0
      %s290 = scalar_select %p289, %s21, 0
      %s291 = sadd.s32 %s290, %s288
      %s292 = scalar_lea.vmem %s4, %s291
      %v294 = vld [vmem:[%s264] sm:$0xff]
      %v295 = vld [vmem:[%s264 + $0x8] sm:$0xff]
      %v296 = vld [vmem:[%s264 + $0x10] sm:$0xff]
      %v297 = vld [vmem:[%s264 + $0x18] sm:$0xff]
      %v298 = vld [vmem:[%s264 + $0x20] sm:$0xff]
      %v299 = vld [vmem:[%s264 + $0x28] sm:$0xff]
      %v300 = vld [vmem:[%s264 + $0x30] sm:$0xff]
      %v301 = vld [vmem:[%s264 + $0x38] sm:$0xff]
      %v302 = vld [vmem:[%s264 + $0x40] sm:$0xff]
      %v303 = vld [vmem:[%s264 + $0x48] sm:$0xff]
      %v304 = vld [vmem:[%s264 + $0x50] sm:$0xff]
      %v305 = vld [vmem:[%s264 + $0x58] sm:$0xff]
      %v306 = vld [vmem:[%s264 + $0x60] sm:$0xff]
      %v307 = vld [vmem:[%s264 + $0x68] sm:$0xff]
      %v308 = vld [vmem:[%s264 + $0x70] sm:$0xff]
      %v309 = vld [vmem:[%s264 + $0x78] sm:$0xff]
      %v310 = vld [vmem:[%s270] sm:$0xf]
      %v311 = vld [vmem:[%s270 + $0x4] sm:$0xf]
      %v312 = vld [vmem:[%s270 + $0x8] sm:$0xf]
      %v313 = vld [vmem:[%s270 + $0xc] sm:$0xf]
      %v314 = vld [vmem:[%s270 + $0x10] sm:$0xf]
      %v315 = vld [vmem:[%s270 + $0x14] sm:$0xf]
      %v316 = vld [vmem:[%s270 + $0x18] sm:$0xf]
      %v317 = vld [vmem:[%s270 + $0x1c] sm:$0xf]
      %v318 = vld [vmem:[%s270 + $0x20] sm:$0xf]
      %v319 = vld [vmem:[%s270 + $0x24] sm:$0xf]
      %v320 = vld [vmem:[%s270 + $0x28] sm:$0xf]
      %v321 = vld [vmem:[%s270 + $0x2c] sm:$0xf]
      %v322 = vld [vmem:[%s270 + $0x30] sm:$0xf]
      %v323 = vld [vmem:[%s270 + $0x34] sm:$0xf]
      %v324 = vld [vmem:[%s270 + $0x38] sm:$0xf]
      %v325 = vld [vmem:[%s270 + $0x3c] sm:$0xf]
      %v326 = vld [vmem:[%s270 + $0x40] sm:$0xf]
      %v327 = vld [vmem:[%s270 + $0x44] sm:$0xf]
      %v328 = vld [vmem:[%s270 + $0x48] sm:$0xf]
      %v329 = vld [vmem:[%s270 + $0x4c] sm:$0xf]
      %v330 = vld [vmem:[%s270 + $0x50] sm:$0xf]
      %v331 = vld [vmem:[%s270 + $0x54] sm:$0xf]
      %v332 = vld [vmem:[%s270 + $0x58] sm:$0xf]
      %v333 = vld [vmem:[%s270 + $0x5c] sm:$0xf]
      %v334 = vld [vmem:[%s270 + $0x60] sm:$0xf]
      %v335 = vld [vmem:[%s270 + $0x64] sm:$0xf]
      %v336 = vld [vmem:[%s270 + $0x68] sm:$0xf]
      %v337 = vld [vmem:[%s270 + $0x6c] sm:$0xf]
      %v338 = vld [vmem:[%s270 + $0x70] sm:$0xf]
      %v339 = vld [vmem:[%s270 + $0x74] sm:$0xf]
      %v340 = vld [vmem:[%s270 + $0x78] sm:$0xf]
      %v341 = vld [vmem:[%s270 + $0x7c] sm:$0xf]
      %v342 = vld [vmem:[%s270 + $0x80] sm:$0xf]
      %v343 = vld [vmem:[%s270 + $0x84] sm:$0xf]
      %v344 = vld [vmem:[%s270 + $0x88] sm:$0xf]
      %v345 = vld [vmem:[%s270 + $0x8c] sm:$0xf]
      %v346 = vld [vmem:[%s270 + $0x90] sm:$0xf]
      %v347 = vld [vmem:[%s270 + $0x94] sm:$0xf]
      %v348 = vld [vmem:[%s270 + $0x98] sm:$0xf]
      %v349 = vld [vmem:[%s270 + $0x9c] sm:$0xf]
      %v350 = vld [vmem:[%s270 + $0xa0] sm:$0xf]
      %v351 = vld [vmem:[%s270 + $0xa4] sm:$0xf]
      %v352 = vld [vmem:[%s270 + $0xa8] sm:$0xf]
      %v353 = vld [vmem:[%s270 + $0xac] sm:$0xf]
      %v354 = vld [vmem:[%s270 + $0xb0] sm:$0xf]
      %v355 = vld [vmem:[%s270 + $0xb4] sm:$0xf]
      %v356 = vld [vmem:[%s270 + $0xb8] sm:$0xf]
      %v357 = vld [vmem:[%s270 + $0xbc] sm:$0xf]
      %v358 = vld [vmem:[%s270 + $0xc0] sm:$0xf]
      %v359 = vld [vmem:[%s270 + $0xc4] sm:$0xf]
      %v360 = vld [vmem:[%s270 + $0xc8] sm:$0xf]
      %v361 = vld [vmem:[%s270 + $0xcc] sm:$0xf]
      %v362 = vld [vmem:[%s270 + $0xd0] sm:$0xf]
      %v363 = vld [vmem:[%s270 + $0xd4] sm:$0xf]
      %v364 = vld [vmem:[%s270 + $0xd8] sm:$0xf]
      %v365 = vld [vmem:[%s270 + $0xdc] sm:$0xf]
      %v366 = vld [vmem:[%s270 + $0xe0] sm:$0xf]
      %v367 = vld [vmem:[%s270 + $0xe4] sm:$0xf]
      %v368 = vld [vmem:[%s270 + $0xe8] sm:$0xf]
      %v369 = vld [vmem:[%s270 + $0xec] sm:$0xf]
      %v370 = vld [vmem:[%s270 + $0xf0] sm:$0xf]
      %v371 = vld [vmem:[%s270 + $0xf4] sm:$0xf]
      %v372 = vld [vmem:[%s270 + $0xf8] sm:$0xf]
      %v373 = vld [vmem:[%s270 + $0xfc] sm:$0xf]
      %v374 = vld [vmem:[%s270 + $0x100] sm:$0xf]
      %v375 = vld [vmem:[%s270 + $0x104] sm:$0xf]
      %v376 = vld [vmem:[%s270 + $0x108] sm:$0xf]
      %v377 = vld [vmem:[%s270 + $0x10c] sm:$0xf]
      %v378 = vld [vmem:[%s270 + $0x110] sm:$0xf]
      %v379 = vld [vmem:[%s270 + $0x114] sm:$0xf]
      %v380 = vld [vmem:[%s270 + $0x118] sm:$0xf]
      %v381 = vld [vmem:[%s270 + $0x11c] sm:$0xf]
      %v382 = vld [vmem:[%s270 + $0x120] sm:$0xf]
      %v383 = vld [vmem:[%s270 + $0x124] sm:$0xf]
      %v384 = vld [vmem:[%s270 + $0x128] sm:$0xf]
      %v385 = vld [vmem:[%s270 + $0x12c] sm:$0xf]
      %v386 = vld [vmem:[%s270 + $0x130] sm:$0xf]
      %v387 = vld [vmem:[%s270 + $0x134] sm:$0xf]
      %v388 = vld [vmem:[%s270 + $0x138] sm:$0xf]
      %v389 = vld [vmem:[%s270 + $0x13c] sm:$0xf]
      %v390 = vld [vmem:[%s270 + $0x140] sm:$0xf]
      %v391 = vld [vmem:[%s270 + $0x144] sm:$0xf]
      %v392 = vld [vmem:[%s270 + $0x148] sm:$0xf]
      %v393 = vld [vmem:[%s270 + $0x14c] sm:$0xf]
      %v394 = vld [vmem:[%s270 + $0x150] sm:$0xf]
      %v395 = vld [vmem:[%s270 + $0x154] sm:$0xf]
      %v396 = vld [vmem:[%s270 + $0x158] sm:$0xf]
      %v397 = vld [vmem:[%s270 + $0x15c] sm:$0xf]
      %v398 = vld [vmem:[%s270 + $0x160] sm:$0xf]
      %v399 = vld [vmem:[%s270 + $0x164] sm:$0xf]
      %v400 = vld [vmem:[%s270 + $0x168] sm:$0xf]
      %v401 = vld [vmem:[%s270 + $0x16c] sm:$0xf]
      %v402 = vld [vmem:[%s270 + $0x170] sm:$0xf]
      %v403 = vld [vmem:[%s270 + $0x174] sm:$0xf]
      %v404 = vld [vmem:[%s270 + $0x178] sm:$0xf]
      %v405 = vld [vmem:[%s270 + $0x17c] sm:$0xf]
      %v406 = vld [vmem:[%s270 + $0x180] sm:$0xf]
      %v407 = vld [vmem:[%s270 + $0x184] sm:$0xf]
      %v408 = vld [vmem:[%s270 + $0x188] sm:$0xf]
      %v409 = vld [vmem:[%s270 + $0x18c] sm:$0xf]
      %v410 = vld [vmem:[%s270 + $0x190] sm:$0xf]
      %v411 = vld [vmem:[%s270 + $0x194] sm:$0xf]
      %v412 = vld [vmem:[%s270 + $0x198] sm:$0xf]
      %v413 = vld [vmem:[%s270 + $0x19c] sm:$0xf]
      %v414 = vld [vmem:[%s270 + $0x1a0] sm:$0xf]
      %v415 = vld [vmem:[%s270 + $0x1a4] sm:$0xf]
      %v416 = vld [vmem:[%s270 + $0x1a8] sm:$0xf]
      %v417 = vld [vmem:[%s270 + $0x1ac] sm:$0xf]
      %v418 = vld [vmem:[%s270 + $0x1b0] sm:$0xf]
      %v419 = vld [vmem:[%s270 + $0x1b4] sm:$0xf]
      %v420 = vld [vmem:[%s270 + $0x1b8] sm:$0xf]
      %v421 = vld [vmem:[%s270 + $0x1bc] sm:$0xf]
      %v422 = vld [vmem:[%s270 + $0x1c0] sm:$0xf]
      %v423 = vld [vmem:[%s270 + $0x1c4] sm:$0xf]
      %v424 = vld [vmem:[%s270 + $0x1c8] sm:$0xf]
      %v425 = vld [vmem:[%s270 + $0x1cc] sm:$0xf]
      %v426 = vld [vmem:[%s270 + $0x1d0] sm:$0xf]
      %v427 = vld [vmem:[%s270 + $0x1d4] sm:$0xf]
      %v428 = vld [vmem:[%s270 + $0x1d8] sm:$0xf]
      %v429 = vld [vmem:[%s270 + $0x1dc] sm:$0xf]
      %v430 = vld [vmem:[%s270 + $0x1e0] sm:$0xf]
      %v431 = vld [vmem:[%s270 + $0x1e4] sm:$0xf]
      %v432 = vld [vmem:[%s270 + $0x1e8] sm:$0xf]
      %v433 = vld [vmem:[%s270 + $0x1ec] sm:$0xf]
      %v434 = vld [vmem:[%s270 + $0x1f0] sm:$0xf]
      %v435 = vld [vmem:[%s270 + $0x1f4] sm:$0xf]
      %v436 = vld [vmem:[%s270 + $0x1f8] sm:$0xf]
      %v437 = vld [vmem:[%s270 + $0x1fc] sm:$0xf]
      %v454 = vunpack.c.l.b16 %v294
      %v455 = vunpack.c.h.b16 %v294
      %v456 = vunpack.c.l.b16 %v295
      %v457 = vunpack.c.h.b16 %v295
      %v458 = vunpack.c.l.b16 %v296
      %v459 = vunpack.c.h.b16 %v296
      %v460 = vunpack.c.l.b16 %v297
      %v461 = vunpack.c.h.b16 %v297
      %v462 = vunpack.c.l.b16 %v298
      %v463 = vunpack.c.h.b16 %v298
      %v464 = vunpack.c.l.b16 %v299
      %v465 = vunpack.c.h.b16 %v299
      %v466 = vunpack.c.l.b16 %v300
      %v467 = vunpack.c.h.b16 %v300
      %v468 = vunpack.c.l.b16 %v301
      %v469 = vunpack.c.h.b16 %v301
      %v470 = vunpack.c.l.b16 %v302
      %v471 = vunpack.c.h.b16 %v302
      %v472 = vunpack.c.l.b16 %v303
      %v473 = vunpack.c.h.b16 %v303
      %v474 = vunpack.c.l.b16 %v304
      %v475 = vunpack.c.h.b16 %v304
      %v476 = vunpack.c.l.b16 %v305
      %v477 = vunpack.c.h.b16 %v305
      %v478 = vunpack.c.l.b16 %v306
      %v479 = vunpack.c.h.b16 %v306
      %v480 = vunpack.c.l.b16 %v307
      %v481 = vunpack.c.h.b16 %v307
      %v482 = vunpack.c.l.b16 %v308
      %v483 = vunpack.c.h.b16 %v308
      %v484 = vunpack.c.l.b16 %v309
      %v485 = vunpack.c.h.b16 %v309
      %v486 = vpack.c.b16 %v462, %v454
      %v487 = vpack.c.b16 %v463, %v455
      %v488 = vpack.c.b16 %v464, %v456
      %v489 = vpack.c.b16 %v465, %v457
      %v490 = vpack.c.b16 %v466, %v458
      %v491 = vpack.c.b16 %v467, %v459
      %v492 = vpack.c.b16 %v468, %v460
      %v493 = vpack.c.b16 %v469, %v461
      %v494 = vpack.c.b16 %v478, %v470
      %v495 = vpack.c.b16 %v479, %v471
      %v496 = vpack.c.b16 %v480, %v472
      %v497 = vpack.c.b16 %v481, %v473
      %v498 = vpack.c.b16 %v482, %v474
      %v499 = vpack.c.b16 %v483, %v475
      %v500 = vpack.c.b16 %v484, %v476
      %v501 = vpack.c.b16 %v485, %v477
      %v646 = vunpack.c.l.b16 %v310
      %v647 = vunpack.c.l.b16 %v311
      %v648 = vunpack.c.l.b16 %v312
      %v649 = vunpack.c.l.b16 %v313
      %v650 = vunpack.c.l.b16 %v314
      %v651 = vunpack.c.l.b16 %v315
      %v652 = vunpack.c.l.b16 %v316
      %v653 = vunpack.c.l.b16 %v317
      %v654 = vunpack.c.l.b16 %v318
      %v655 = vunpack.c.l.b16 %v319
      %v656 = vunpack.c.l.b16 %v320
      %v657 = vunpack.c.l.b16 %v321
      %v658 = vunpack.c.l.b16 %v322
      %v659 = vunpack.c.l.b16 %v323
      %v660 = vunpack.c.l.b16 %v324
      %v661 = vunpack.c.l.b16 %v325
      %v662 = vunpack.c.l.b16 %v326
      %v663 = vunpack.c.l.b16 %v327
      %v664 = vunpack.c.l.b16 %v328
      %v665 = vunpack.c.l.b16 %v329
      %v666 = vunpack.c.l.b16 %v330
      %v667 = vunpack.c.l.b16 %v331
      %v668 = vunpack.c.l.b16 %v332
      %v669 = vunpack.c.l.b16 %v333
      %v670 = vunpack.c.l.b16 %v334
      %v671 = vunpack.c.l.b16 %v335
      %v672 = vunpack.c.l.b16 %v336
      %v673 = vunpack.c.l.b16 %v337
      %v674 = vunpack.c.l.b16 %v338
      %v675 = vunpack.c.l.b16 %v339
      %v676 = vunpack.c.l.b16 %v340
      %v677 = vunpack.c.l.b16 %v341
      %v678 = vunpack.c.l.b16 %v342
      %v679 = vunpack.c.l.b16 %v343
      %v680 = vunpack.c.l.b16 %v344
      %v681 = vunpack.c.l.b16 %v345
      %v682 = vunpack.c.l.b16 %v346
      %v683 = vunpack.c.l.b16 %v347
      %v684 = vunpack.c.l.b16 %v348
      %v685 = vunpack.c.l.b16 %v349
      %v686 = vunpack.c.l.b16 %v350
      %v687 = vunpack.c.l.b16 %v351
      %v688 = vunpack.c.l.b16 %v352
      %v689 = vunpack.c.l.b16 %v353
      %v690 = vunpack.c.l.b16 %v354
      %v691 = vunpack.c.l.b16 %v355
      %v692 = vunpack.c.l.b16 %v356
      %v693 = vunpack.c.l.b16 %v357
      %v694 = vunpack.c.l.b16 %v358
      %v695 = vunpack.c.l.b16 %v359
      %v696 = vunpack.c.l.b16 %v360
      %v697 = vunpack.c.l.b16 %v361
      %v698 = vunpack.c.l.b16 %v362
      %v699 = vunpack.c.l.b16 %v363
      %v700 = vunpack.c.l.b16 %v364
      %v701 = vunpack.c.l.b16 %v365
      %v702 = vunpack.c.l.b16 %v366
      %v703 = vunpack.c.l.b16 %v367
      %v704 = vunpack.c.l.b16 %v368
      %v705 = vunpack.c.l.b16 %v369
      %v706 = vunpack.c.l.b16 %v370
      %v707 = vunpack.c.l.b16 %v371
      %v708 = vunpack.c.l.b16 %v372
      %v709 = vunpack.c.l.b16 %v373
      %v710 = vunpack.c.l.b16 %v374
      %v711 = vunpack.c.l.b16 %v375
      %v712 = vunpack.c.l.b16 %v376
      %v713 = vunpack.c.l.b16 %v377
      %v714 = vunpack.c.l.b16 %v378
      %v715 = vunpack.c.l.b16 %v379
      %v716 = vunpack.c.l.b16 %v380
      %v717 = vunpack.c.l.b16 %v381
      %v718 = vunpack.c.l.b16 %v382
      %v719 = vunpack.c.l.b16 %v383
      %v720 = vunpack.c.l.b16 %v384
      %v721 = vunpack.c.l.b16 %v385
      %v722 = vunpack.c.l.b16 %v386
      %v723 = vunpack.c.l.b16 %v387
      %v724 = vunpack.c.l.b16 %v388
      %v725 = vunpack.c.l.b16 %v389
      %v726 = vunpack.c.l.b16 %v390
      %v727 = vunpack.c.l.b16 %v391
      %v728 = vunpack.c.l.b16 %v392
      %v729 = vunpack.c.l.b16 %v393
      %v730 = vunpack.c.l.b16 %v394
      %v731 = vunpack.c.l.b16 %v395
      %v732 = vunpack.c.l.b16 %v396
      %v733 = vunpack.c.l.b16 %v397
      %v734 = vunpack.c.l.b16 %v398
      %v735 = vunpack.c.l.b16 %v399
      %v736 = vunpack.c.l.b16 %v400
      %v737 = vunpack.c.l.b16 %v401
      %v738 = vunpack.c.l.b16 %v402
      %v739 = vunpack.c.l.b16 %v403
      %v740 = vunpack.c.l.b16 %v404
      %v741 = vunpack.c.l.b16 %v405
      %v742 = vunpack.c.l.b16 %v406
      %v743 = vunpack.c.l.b16 %v407
      %v744 = vunpack.c.l.b16 %v408
      %v745 = vunpack.c.l.b16 %v409
      %v746 = vunpack.c.l.b16 %v410
      %v747 = vunpack.c.l.b16 %v411
      %v748 = vunpack.c.l.b16 %v412
      %v749 = vunpack.c.l.b16 %v413
      %v750 = vunpack.c.l.b16 %v414
      %v751 = vunpack.c.l.b16 %v415
      %v752 = vunpack.c.l.b16 %v416
      %v753 = vunpack.c.l.b16 %v417
      %v754 = vunpack.c.l.b16 %v418
      %v755 = vunpack.c.l.b16 %v419
      %v756 = vunpack.c.l.b16 %v420
      %v757 = vunpack.c.l.b16 %v421
      %v758 = vunpack.c.l.b16 %v422
      %v759 = vunpack.c.l.b16 %v423
      %v760 = vunpack.c.l.b16 %v424
      %v761 = vunpack.c.l.b16 %v425
      %v762 = vunpack.c.l.b16 %v426
      %v763 = vunpack.c.l.b16 %v427
      %v764 = vunpack.c.l.b16 %v428
      %v765 = vunpack.c.l.b16 %v429
      %v766 = vunpack.c.l.b16 %v430
      %v767 = vunpack.c.l.b16 %v431
      %v768 = vunpack.c.l.b16 %v432
      %v769 = vunpack.c.l.b16 %v433
      %v770 = vunpack.c.l.b16 %v434
      %v771 = vunpack.c.l.b16 %v435
      %v772 = vunpack.c.l.b16 %v436
      %v773 = vunpack.c.l.b16 %v437
      %v774 = vpack.c.b16 %v647, %v646
      %v775 = vpack.c.b16 %v649, %v648
      %v776 = vpack.c.b16 %v651, %v650
      %v777 = vpack.c.b16 %v653, %v652
      %v778 = vpack.c.b16 %v655, %v654
      %v779 = vpack.c.b16 %v657, %v656
      %v780 = vpack.c.b16 %v659, %v658
      %v781 = vpack.c.b16 %v661, %v660
      %v782 = vpack.c.b16 %v663, %v662
      %v783 = vpack.c.b16 %v665, %v664
      %v784 = vpack.c.b16 %v667, %v666
      %v785 = vpack.c.b16 %v669, %v668
      %v786 = vpack.c.b16 %v671, %v670
      %v787 = vpack.c.b16 %v673, %v672
      %v788 = vpack.c.b16 %v675, %v674
      %v789 = vpack.c.b16 %v677, %v676
      %v790 = vpack.c.b16 %v679, %v678
      %v791 = vpack.c.b16 %v681, %v680
      %v792 = vpack.c.b16 %v683, %v682
      %v793 = vpack.c.b16 %v685, %v684
      %v794 = vpack.c.b16 %v687, %v686
      %v795 = vpack.c.b16 %v689, %v688
      %v796 = vpack.c.b16 %v691, %v690
      %v797 = vpack.c.b16 %v693, %v692
      %v798 = vpack.c.b16 %v695, %v694
      %v799 = vpack.c.b16 %v697, %v696
      %v800 = vpack.c.b16 %v699, %v698
      %v801 = vpack.c.b16 %v701, %v700
      %v802 = vpack.c.b16 %v703, %v702
      %v803 = vpack.c.b16 %v705, %v704
      %v804 = vpack.c.b16 %v707, %v706
      %v805 = vpack.c.b16 %v709, %v708
      %v806 = vpack.c.b16 %v711, %v710
      %v807 = vpack.c.b16 %v713, %v712
      %v808 = vpack.c.b16 %v715, %v714
      %v809 = vpack.c.b16 %v717, %v716
      %v810 = vpack.c.b16 %v719, %v718
      %v811 = vpack.c.b16 %v721, %v720
      %v812 = vpack.c.b16 %v723, %v722
      %v813 = vpack.c.b16 %v725, %v724
      %v814 = vpack.c.b16 %v727, %v726
      %v815 = vpack.c.b16 %v729, %v728
      %v816 = vpack.c.b16 %v731, %v730
      %v817 = vpack.c.b16 %v733, %v732
      %v818 = vpack.c.b16 %v735, %v734
      %v819 = vpack.c.b16 %v737, %v736
      %v820 = vpack.c.b16 %v739, %v738
      %v821 = vpack.c.b16 %v741, %v740
      %v822 = vpack.c.b16 %v743, %v742
      %v823 = vpack.c.b16 %v745, %v744
      %v824 = vpack.c.b16 %v747, %v746
      %v825 = vpack.c.b16 %v749, %v748
      %v826 = vpack.c.b16 %v751, %v750
      %v827 = vpack.c.b16 %v753, %v752
      %v828 = vpack.c.b16 %v755, %v754
      %v829 = vpack.c.b16 %v757, %v756
      %v830 = vpack.c.b16 %v759, %v758
      %v831 = vpack.c.b16 %v761, %v760
      %v832 = vpack.c.b16 %v763, %v762
      %v833 = vpack.c.b16 %v765, %v764
      %v834 = vpack.c.b16 %v767, %v766
      %v835 = vpack.c.b16 %v769, %v768
      %v836 = vpack.c.b16 %v771, %v770
      %v837 = vpack.c.b16 %v773, %v772
      %902 = vmatprep.subr.bf16.mxu0 0
      %903 = vmatpush1.bf16.msra.mxu0 %v774
      %904 = vmatprep.subr.bf16.mxu0 0
      %905 = vmatpush1.bf16.msra.mxu0 %v775
      %906 = vmatprep.subr.bf16.mxu0 0
      %907 = vmatpush1.bf16.msra.mxu0 %v776
      %908 = vmatprep.subr.bf16.mxu0 0
      %909 = vmatpush1.bf16.msra.mxu0 %v777
      %910 = vmatprep.subr.bf16.mxu0 0
      %911 = vmatpush1.bf16.msra.mxu0 %v778
      %912 = vmatprep.subr.bf16.mxu0 0
      %913 = vmatpush1.bf16.msra.mxu0 %v779
      %914 = vmatprep.subr.bf16.mxu0 0
      %915 = vmatpush1.bf16.msra.mxu0 %v780
      %916 = vmatprep.subr.bf16.mxu0 0
      %917 = vmatpush1.bf16.msra.mxu0 %v781
      %918 = vmatprep.subr.bf16.mxu0 0
      %919 = vmatpush1.bf16.msra.mxu0 %v782
      %920 = vmatprep.subr.bf16.mxu0 0
      %921 = vmatpush1.bf16.msra.mxu0 %v783
      %922 = vmatprep.subr.bf16.mxu0 0
      %923 = vmatpush1.bf16.msra.mxu0 %v784
      %924 = vmatprep.subr.bf16.mxu0 0
      %925 = vmatpush1.bf16.msra.mxu0 %v785
      %926 = vmatprep.subr.bf16.mxu0 0
      %927 = vmatpush1.bf16.msra.mxu0 %v786
      %928 = vmatprep.subr.bf16.mxu0 0
      %929 = vmatpush1.bf16.msra.mxu0 %v787
      %930 = vmatprep.subr.bf16.mxu0 0
      %931 = vmatpush1.bf16.msra.mxu0 %v788
      %932 = vmatprep.subr.bf16.mxu0 0
      %933 = vmatpush1.bf16.msra.mxu0 %v789
      %934 = vmatprep.mubr.bf16.mxu0 %v487
      %935 = vmatmul.mubr.bf16.gmra.mrb[0].mxu0 %v486
      %v936 = vpop.f32.mrb[0].mxu0
      %v937 = vadd.f32 0.0, %v936
      %v938 = vpop.f32.mrb[0].mxu0
      %v939 = vpop.f32.mrb[0].mxu0
      %v940 = vadd.f32 0.0, %v939
      %v941 = vpop.f32.mrb[0].mxu0
      %942 = vmatprep.mubr.bf16.mxu0 %v495
      %943 = vmatmul.mubr.bf16.gmra.mrb[0].mxu0 %v494
      %v944 = vpop.f32.mrb[0].mxu0
      %v945 = vadd.f32 0.0, %v944
      %v946 = vpop.f32.mrb[0].mxu0
      %v947 = vpop.f32.mrb[0].mxu0
      %v948 = vadd.f32 0.0, %v947
      %v949 = vpop.f32.mrb[0].mxu0
      %950 = vdwg.mxu0
      %951 = vmatprep.subr.bf16.mxu0 0
      %952 = vmatpush1.bf16.msra.mxu0 %v790
      %953 = vmatprep.subr.bf16.mxu0 0
      %954 = vmatpush1.bf16.msra.mxu0 %v791
      %955 = vmatprep.subr.bf16.mxu0 0
      %956 = vmatpush1.bf16.msra.mxu0 %v792
      %957 = vmatprep.subr.bf16.mxu0 0
      %958 = vmatpush1.bf16.msra.mxu0 %v793
      %959 = vmatprep.subr.bf16.mxu0 0
      %960 = vmatpush1.bf16.msra.mxu0 %v794
      %961 = vmatprep.subr.bf16.mxu0 0
      %962 = vmatpush1.bf16.msra.mxu0 %v795
      %963 = vmatprep.subr.bf16.mxu0 0
      %964 = vmatpush1.bf16.msra.mxu0 %v796
      %965 = vmatprep.subr.bf16.mxu0 0
      %966 = vmatpush1.bf16.msra.mxu0 %v797
      %967 = vmatprep.subr.bf16.mxu0 0
      %968 = vmatpush1.bf16.msra.mxu0 %v798
      %969 = vmatprep.subr.bf16.mxu0 0
      %970 = vmatpush1.bf16.msra.mxu0 %v799
      %971 = vmatprep.subr.bf16.mxu0 0
      %972 = vmatpush1.bf16.msra.mxu0 %v800
      %973 = vmatprep.subr.bf16.mxu0 0
      %974 = vmatpush1.bf16.msra.mxu0 %v801
      %975 = vmatprep.subr.bf16.mxu0 0
      %976 = vmatpush1.bf16.msra.mxu0 %v802
      %977 = vmatprep.subr.bf16.mxu0 0
      %978 = vmatpush1.bf16.msra.mxu0 %v803
      %979 = vmatprep.subr.bf16.mxu0 0
      %980 = vmatpush1.bf16.msra.mxu0 %v804
      %981 = vmatprep.subr.bf16.mxu0 0
      %982 = vmatpush1.bf16.msra.mxu0 %v805
      %983 = vmatprep.mubr.bf16.mxu0 %v489
      %984 = vmatmul.mubr.bf16.gmra.mrb[0].mxu0 %v488
      %v985 = vpop.f32.mrb[0].mxu0
      %v986 = vadd.f32 %v937, %v985
      %v987 = vpop.f32.mrb[0].mxu0
      %v988 = vpop.f32.mrb[0].mxu0
      %v989 = vadd.f32 %v940, %v988
      %v990 = vpop.f32.mrb[0].mxu0
      %991 = vmatprep.mubr.bf16.mxu0 %v497
      %992 = vmatmul.mubr.bf16.gmra.mrb[0].mxu0 %v496
      %v993 = vpop.f32.mrb[0].mxu0
      %v994 = vadd.f32 %v945, %v993
      %v995 = vpop.f32.mrb[0].mxu0
      %v996 = vpop.f32.mrb[0].mxu0
      %v997 = vadd.f32 %v948, %v996
      %v998 = vpop.f32.mrb[0].mxu0
      %999 = vdwg.mxu0
      %1000 = vmatprep.subr.bf16.mxu0 0
      %1001 = vmatpush1.bf16.msra.mxu0 %v806
      %1002 = vmatprep.subr.bf16.mxu0 0
      %1003 = vmatpush1.bf16.msra.mxu0 %v807
      %1004 = vmatprep.subr.bf16.mxu0 0
      %1005 = vmatpush1.bf16.msra.mxu0 %v808
      %1006 = vmatprep.subr.bf16.mxu0 0
      %1007 = vmatpush1.bf16.msra.mxu0 %v809
      %1008 = vmatprep.subr.bf16.mxu0 0
      %1009 = vmatpush1.bf16.msra.mxu0 %v810
      %1010 = vmatprep.subr.bf16.mxu0 0
      %1011 = vmatpush1.bf16.msra.mxu0 %v811
      %1012 = vmatprep.subr.bf16.mxu0 0
      %1013 = vmatpush1.bf16.msra.mxu0 %v812
      %1014 = vmatprep.subr.bf16.mxu0 0
      %1015 = vmatpush1.bf16.msra.mxu0 %v813
      %1016 = vmatprep.subr.bf16.mxu0 0
      %1017 = vmatpush1.bf16.msra.mxu0 %v814
      %1018 = vmatprep.subr.bf16.mxu0 0
      %1019 = vmatpush1.bf16.msra.mxu0 %v815
      %1020 = vmatprep.subr.bf16.mxu0 0
      %1021 = vmatpush1.bf16.msra.mxu0 %v816
      %1022 = vmatprep.subr.bf16.mxu0 0
      %1023 = vmatpush1.bf16.msra.mxu0 %v817
      %1024 = vmatprep.subr.bf16.mxu0 0
      %1025 = vmatpush1.bf16.msra.mxu0 %v818
      %1026 = vmatprep.subr.bf16.mxu0 0
      %1027 = vmatpush1.bf16.msra.mxu0 %v819
      %1028 = vmatprep.subr.bf16.mxu0 0
      %1029 = vmatpush1.bf16.msra.mxu0 %v820
      %1030 = vmatprep.subr.bf16.mxu0 0
      %1031 = vmatpush1.bf16.msra.mxu0 %v821
      %1032 = vmatprep.mubr.bf16.mxu0 %v491
      %1033 = vmatmul.mubr.bf16.gmra.mrb[0].mxu0 %v490
      %v1034 = vpop.f32.mrb[0].mxu0
      %v1035 = vadd.f32 %v986, %v1034
      %v1036 = vpop.f32.mrb[0].mxu0
      %v1037 = vpop.f32.mrb[0].mxu0
      %v1038 = vadd.f32 %v989, %v1037
      %v1039 = vpop.f32.mrb[0].mxu0
      %1040 = vmatprep.mubr.bf16.mxu0 %v499
      %1041 = vmatmul.mubr.bf16.gmra.mrb[0].mxu0 %v498
      %v1042 = vpop.f32.mrb[0].mxu0
      %v1043 = vadd.f32 %v994, %v1042
      %v1044 = vpop.f32.mrb[0].mxu0
      %v1045 = vpop.f32.mrb[0].mxu0
      %v1046 = vadd.f32 %v997, %v1045
      %v1047 = vpop.f32.mrb[0].mxu0
      %1048 = vdwg.mxu0
      %1049 = vmatprep.subr.bf16.mxu0 0
      %1050 = vmatpush1.bf16.msra.mxu0 %v822
      %1051 = vmatprep.subr.bf16.mxu0 0
      %1052 = vmatpush1.bf16.msra.mxu0 %v823
      %1053 = vmatprep.subr.bf16.mxu0 0
      %1054 = vmatpush1.bf16.msra.mxu0 %v824
      %1055 = vmatprep.subr.bf16.mxu0 0
      %1056 = vmatpush1.bf16.msra.mxu0 %v825
      %1057 = vmatprep.subr.bf16.mxu0 0
      %1058 = vmatpush1.bf16.msra.mxu0 %v826
      %1059 = vmatprep.subr.bf16.mxu0 0
      %1060 = vmatpush1.bf16.msra.mxu0 %v827
      %1061 = vmatprep.subr.bf16.mxu0 0
      %1062 = vmatpush1.bf16.msra.mxu0 %v828
      %1063 = vmatprep.subr.bf16.mxu0 0
      %1064 = vmatpush1.bf16.msra.mxu0 %v829
      %1065 = vmatprep.subr.bf16.mxu0 0
      %1066 = vmatpush1.bf16.msra.mxu0 %v830
      %1067 = vmatprep.subr.bf16.mxu0 0
      %1068 = vmatpush1.bf16.msra.mxu0 %v831
      %1069 = vmatprep.subr.bf16.mxu0 0
      %1070 = vmatpush1.bf16.msra.mxu0 %v832
      %1071 = vmatprep.subr.bf16.mxu0 0
      %1072 = vmatpush1.bf16.msra.mxu0 %v833
      %1073 = vmatprep.subr.bf16.mxu0 0
      %1074 = vmatpush1.bf16.msra.mxu0 %v834
      %1075 = vmatprep.subr.bf16.mxu0 0
      %1076 = vmatpush1.bf16.msra.mxu0 %v835
      %1077 = vmatprep.subr.bf16.mxu0 0
      %1078 = vmatpush1.bf16.msra.mxu0 %v836
      %1079 = vmatprep.subr.bf16.mxu0 0
      %1080 = vmatpush1.bf16.msra.mxu0 %v837
      %1081 = vmatprep.mubr.bf16.mxu0 %v493
      %1082 = vmatmul.mubr.bf16.gmra.mrb[0].mxu0 %v492
      %v1083 = vpop.f32.mrb[0].mxu0
      %v1084 = vadd.f32 %v1035, %v1083
      %v1085 = vpop.f32.mrb[0].mxu0
      %v1086 = vpop.f32.mrb[0].mxu0
      %v1087 = vadd.f32 %v1038, %v1086
      %v1088 = vpop.f32.mrb[0].mxu0
      %1089 = vmatprep.mubr.bf16.mxu0 %v501
      %1090 = vmatmul.mubr.bf16.gmra.mrb[0].mxu0 %v500
      %v1091 = vpop.f32.mrb[0].mxu0
      %v1092 = vadd.f32 %v1043, %v1091
      %v1093 = vpop.f32.mrb[0].mxu0
      %v1094 = vpop.f32.mrb[0].mxu0
      %v1095 = vadd.f32 %v1046, %v1094
      %v1096 = vpop.f32.mrb[0].mxu0
      %1097 = vdwg.mxu0
      %v1098 = vpack.c.bf16 %v1087, %v1084
      %v1099 = vpack.c.bf16 %v1095, %v1092
      %v1102 = vunpack.c.l.b16 %v1098
      %v1103 = vunpack.c.h.b16 %v1098
      %v1104 = vunpack.c.l.b16 %v1099
      %v1105 = vunpack.c.h.b16 %v1099
      %v1106 = vpack.c.b16 %v1102, %v1102
      %v1107 = vpack.c.b16 %v1103, %v1103
      %v1108 = vpack.c.b16 %v1104, %v1104
      %v1109 = vpack.c.b16 %v1105, %v1105
      %1114 = vst [vmem:[%s279] sm:$0xf] %v1106
      %1115 = vst [vmem:[%s279 + $0x4] sm:$0xf] %v1107
      %1116 = vst [vmem:[%s279 + $0x8] sm:$0xf] %v1108
      %1117 = vst [vmem:[%s279 + $0xc] sm:$0xf] %v1109
      %v1118 = vadd.f32 %v1084, %v1087
      %v1119 = vadd.f32 %v1118, %v1092
      %v1120 = vadd.f32 %v1119, %v1095
      %v1121 = vrot.slane %v1120, 4
      %v1122 = vadd.f32 %v1120, %v1121
      %v1123 = vrot.slane %v1122, 2
      %v1124 = vadd.f32 %v1122, %v1123
      %v1125 = vrot.slane %v1124, 1
      %v1126 = vadd.f32 %v1124, %v1125
      %1127 = vst [vmem:[%s286] sm:$0x1] %v1126
      %v1128 = vmul.f32 %v1084, %v1084
      %v1129 = vmul.f32 %v1087, %v1087
      %v1130 = vmul.f32 %v1092, %v1092
      %v1131 = vmul.f32 %v1095, %v1095
      %v1132 = vadd.f32 %v1128, %v1129
      %v1133 = vadd.f32 %v1132, %v1130
      %v1134 = vadd.f32 %v1133, %v1131
      %v1135 = vrot.slane %v1134, 4
      %v1136 = vadd.f32 %v1134, %v1135
      %v1137 = vrot.slane %v1136, 2
      %v1138 = vadd.f32 %v1136, %v1137
      %v1139 = vrot.slane %v1138, 1
      %v1140 = vadd.f32 %v1138, %v1139
      %1141 = vst [vmem:[%s292] sm:$0x1] %v1140
      %s1142 = smul.u32 4, %s21
      %p1143 = scmp.lt.s32.totalorder %s20, 3
      %s1144 = scalar_select %p1143, %s20, 3
      %p1145 = scmp.lt.s32.totalorder %s1142, 3
      %s1146 = scalar_select %p1145, %s1142, 3
      %s1147 = smul.addr %s1144, 4
      %s1148 = sadd.s32 %s1146, %s1147
      %s1149 = smul.addr %s1148, 4
      %s1150 = scalar_lea.vmem %s2, %s1149
      %p1151 = scmp.lt.s32.totalorder %s20, 3
      %s1152 = scalar_select %p1151, %s20, 3
      %p1153 = scmp.lt.s32.totalorder %s21, 0
      %s1154 = scalar_select %p1153, %s21, 0
      %s1155 = sadd.s32 %s1154, %s1152
      %s1156 = scalar_lea.vmem %s3, %s1155
      %p1157 = scmp.lt.s32.totalorder %s20, 3
      %s1158 = scalar_select %p1157, %s20, 3
      %p1159 = scmp.lt.s32.totalorder %s21, 0
      %s1160 = scalar_select %p1159, %s21, 0
      %s1161 = sadd.s32 %s1160, %s1158
      %s1162 = scalar_lea.vmem %s4, %s1161
      // Predicated region
      $region29: #{cnn_generator_forward.9} parent=27 // pred_check
        %p1163 = pneg %p102
      $region30: #{cnn_generator_forward.9} parent=27 // pred_check_branch
        %1165 = sbr.rel (%p1163) target = $region32
      $region31: #{cnn_generator_forward.9} parent=27 // pred_region
        %s1166 = smul.u32 4, %s21
      $region32: #{cnn_generator_forward.9} parent=27 // pred_fallthru
        _
      // Predicated region
      $region33: #{cnn_generator_forward.9} parent=27 // pred_check
        %p1167 = pneg %p130
      $region34: #{cnn_generator_forward.9} parent=27 // pred_check_branch
        %1169 = sbr.rel (%p1167) target = $region36
      $region35: #{cnn_generator_forward.9} parent=27 // pred_region
        _
      $region36: #{cnn_generator_forward.9} parent=27 // pred_fallthru
        _
      // Predicated region
      $region37: #{cnn_generator_forward.9} parent=27 // pred_check
        %p1170 = pneg %p158
      $region38: #{cnn_generator_forward.9} parent=27 // pred_check_branch
        %1172 = sbr.rel (%p1170) target = $region40
      $region39: #{cnn_generator_forward.9} parent=27 // pred_region
        _
      $region40: #{cnn_generator_forward.9} parent=27 // pred_fallthru
        _
    $region28: #{cnn_generator_forward.9} parent=5 // pred_fallthru
      _
    %p1173 = scmp.le.s32.totalorder 2, %s11
    // Predicated region
    $region41: #{cnn_generator_forward.9} parent=5 // pred_check
      %p1174 = pneg %p1173
    $region42: #{cnn_generator_forward.9} parent=5 // pred_check_branch
      %1176 = sbr.rel (%p1174) target = $region44
    $region43: #{cnn_generator_forward.9} parent=5 // pred_region
      %s1177 = ssub.s32 %s11, 2
      // Predicated region
      $region45: #{cnn_generator_forward.9} parent=43 // pred_check
        %p1178 = pneg %p108
      $region46: #{cnn_generator_forward.9} parent=43 // pred_check_branch
        %1180 = sbr.rel (%p1178) target = $region48
      $region47: #{cnn_generator_forward.9} parent=43 // pred_region
        %s1181 = smul.u32 4, %s23
        %p1182 = scmp.lt.s32.totalorder %s22, 3
        %s1183 = scalar_select %p1182, %s22, 3
        %p1184 = scmp.lt.s32.totalorder %s1181, 3
        %s1185 = scalar_select %p1184, %s1181, 3
        %s1186 = smul.addr %s1183, 4
        %s1187 = sadd.s32 %s1185, %s1186
        %s1188 = smul.addr %s1187, 4
        %s1189 = scalar_lea.vmem %s2, %s1188
      $region48: #{cnn_generator_forward.9} parent=43 // pred_fallthru
        _
      // Predicated region
      $region49: #{cnn_generator_forward.9} parent=43 // pred_check
        %p1190 = pneg %p136
      $region50: #{cnn_generator_forward.9} parent=43 // pred_check_branch
        %1192 = sbr.rel (%p1190) target = $region52
      $region51: #{cnn_generator_forward.9} parent=43 // pred_region
        %p1193 = scmp.lt.s32.totalorder %s22, 3
        %s1194 = scalar_select %p1193, %s22, 3
        %p1195 = scmp.lt.s32.totalorder %s23, 0
        %s1196 = scalar_select %p1195, %s23, 0
        %s1197 = sadd.s32 %s1196, %s1194
        %s1198 = scalar_lea.vmem %s3, %s1197
      $region52: #{cnn_generator_forward.9} parent=43 // pred_fallthru
        _
      // Predicated region
      $region53: #{cnn_generator_forward.9} parent=43 // pred_check
        %p1199 = pneg %p164
      $region54: #{cnn_generator_forward.9} parent=43 // pred_check_branch
        %1201 = sbr.rel (%p1199) target = $region56
      $region55: #{cnn_generator_forward.9} parent=43 // pred_region
        %p1202 = scmp.lt.s32.totalorder %s22, 3
        %s1203 = scalar_select %p1202, %s22, 3
        %p1204 = scmp.lt.s32.totalorder %s23, 0
        %s1205 = scalar_select %p1204, %s23, 0
        %s1206 = sadd.s32 %s1205, %s1203
        %s1207 = scalar_lea.vmem %s4, %s1206
      $region56: #{cnn_generator_forward.9} parent=43 // pred_fallthru
        _
    $region44: #{cnn_generator_forward.9} parent=5 // pred_fallthru
      _
  $region6: #{cnn_generator_forward.9} parent=0 // loop_footer
    %s15 = sadd.s32 1, %s11
  $region7: #{cnn_generator_forward.9} parent=0 // loop_footer_branch
    %10 = sbr.rel target = $region3
  $region8: #{cnn_generator_forward.9} parent=0 // loop_exit
    _

// kernel: cnn_generator_forward.12
$region0: #{cnn_generator_forward.12}
  #allocation0 [shape = 'u32[]', space=smem, size = 0x4, offset = 0x4, fixed_abs, tag = 'smem constant byte address 0x4 - core index']
  #allocation1 [shape = 'u32[144,128]{1,0:T(1,128)}', space=vmem, size = 0x12000, scoped, tag = 'internal scratch']
  %s0 = inlined_call_operand.vmem [shape: bf16[448,128], index: 0, kind: input, shape index: {}]
  %s1 = inlined_call_operand.vmem [shape: f32[1,128], index: 1, kind: input, shape index: {}]
  %s2 = inlined_call_operand.vmem [shape: f32[1,128], index: 2, kind: input, shape index: {}]
  %s3 = inlined_call_operand.vmem [shape: bf16[448,128], index: 3, kind: output, shape index: {}]
  %s4 = sld [smem:[#allocation0]]
  $region22: #{cnn_generator_forward.12} parent=0
    _
  %s6 = ssub.s32 1, %s4
  %s7 = scalar_select 0, %s6, %s4
  // Predicated region
  $region2: #{cnn_generator_forward.12} parent=0 // pred_check
    _
  $region3: #{cnn_generator_forward.12} parent=0 // pred_check_branch
    %9 = sbr.rel (0) target = $region5
  $region4: #{cnn_generator_forward.12} parent=0 // pred_region
    _
  $region5: #{cnn_generator_forward.12} parent=0 // pred_fallthru
    _
  // Predicated region
  $region6: #{cnn_generator_forward.12} parent=0 // pred_check
    _
  $region7: #{cnn_generator_forward.12} parent=0 // pred_check_branch
    %11 = sbr.rel (0) target = $region9
  $region8: #{cnn_generator_forward.12} parent=0 // pred_region
    _
  $region9: #{cnn_generator_forward.12} parent=0 // pred_fallthru
    _
  // Predicated region
  $region10: #{cnn_generator_forward.12} parent=0 // pred_check
    _
  $region11: #{cnn_generator_forward.12} parent=0 // pred_check_branch
    %13 = sbr.rel (0) target = $region13
  $region12: #{cnn_generator_forward.12} parent=0 // pred_region
    _
  $region13: #{cnn_generator_forward.12} parent=0 // pred_fallthru
    _
  %v14 = vld [vmem:[%s0] sm:$0xf]
  %v15 = vld [vmem:[%s0 + $0x4] sm:$0xf]
  %v16 = vld [vmem:[%s0 + $0x8] sm:$0xf]
  %v17 = vld [vmem:[%s0 + $0xc] sm:$0xf]
  %v18 = vld [vmem:[%s0 + $0x10] sm:$0xf]
  %v19 = vld [vmem:[%s0 + $0x14] sm:$0xf]
  %v20 = vld [vmem:[%s0 + $0x18] sm:$0xf]
  %v21 = vld [vmem:[%s0 + $0x1c] sm:$0xf]
  %v22 = vld [vmem:[%s0 + $0x20] sm:$0xf]
  %v23 = vld [vmem:[%s0 + $0x24] sm:$0xf]
  %v24 = vld [vmem:[%s0 + $0x28] sm:$0xf]
  %v25 = vld [vmem:[%s0 + $0x2c] sm:$0xf]
  %v26 = vld [vmem:[%s0 + $0x30] sm:$0xf]
  %v27 = vld [vmem:[%s0 + $0x34] sm:$0xf]
  %v28 = vld [vmem:[%s0 + $0x38] sm:$0xf]
  %v29 = vld [vmem:[%s0 + $0x3c] sm:$0xf]
  %v30 = vld [vmem:[%s0 + $0x40] sm:$0xf]
  %v31 = vld [vmem:[%s0 + $0x44] sm:$0xf]
  %v32 = vld [vmem:[%s0 + $0x48] sm:$0xf]
  %v33 = vld [vmem:[%s0 + $0x4c] sm:$0xf]
  %v34 = vld [vmem:[%s0 + $0x50] sm:$0xf]
  %v35 = vld [vmem:[%s0 + $0x54] sm:$0xf]
  %v36 = vld [vmem:[%s0 + $0x58] sm:$0xf]
  %v37 = vld [vmem:[%s0 + $0x5c] sm:$0xf]
  %v38 = vld [vmem:[%s0 + $0x60] sm:$0xf]
  %v39 = vld [vmem:[%s0 + $0x64] sm:$0xf]
  %v40 = vld [vmem:[%s0 + $0x68] sm:$0xf]
  %v41 = vld [vmem:[%s0 + $0x6c] sm:$0xf]
  %v42 = vld [vmem:[%s0 + $0x70] sm:$0xf]
  %v43 = vld [vmem:[%s0 + $0x74] sm:$0xf]
  %v44 = vld [vmem:[%s0 + $0x78] sm:$0xf]
  %v45 = vld [vmem:[%s0 + $0x7c] sm:$0xf]
  %v46 = vld [vmem:[%s0 + $0x80] sm:$0xf]
  %v47 = vld [vmem:[%s0 + $0x84] sm:$0xf]
  %v48 = vld [vmem:[%s0 + $0x88] sm:$0xf]
  %v49 = vld [vmem:[%s0 + $0x8c] sm:$0xf]
  %v50 = vld [vmem:[%s0 + $0x90] sm:$0xf]
  %v51 = vld [vmem:[%s0 + $0x94] sm:$0xf]
  %v52 = vld [vmem:[%s0 + $0x98] sm:$0xf]
  %v53 = vld [vmem:[%s0 + $0x9c] sm:$0xf]
  %v54 = vld [vmem:[%s0 + $0xa0] sm:$0xf]
  %v55 = vld [vmem:[%s0 + $0xa4] sm:$0xf]
  %v56 = vld [vmem:[%s0 + $0xa8] sm:$0xf]
  %v57 = vld [vmem:[%s0 + $0xac] sm:$0xf]
  %v58 = vld [vmem:[%s0 + $0xb0] sm:$0xf]
  %v59 = vld [vmem:[%s0 + $0xb4] sm:$0xf]
  %v60 = vld [vmem:[%s0 + $0xb8] sm:$0xf]
  %v61 = vld [vmem:[%s0 + $0xbc] sm:$0xf]
  %v62 = vld [vmem:[%s0 + $0xc0] sm:$0xf]
  %v63 = vld [vmem:[%s0 + $0xc4] sm:$0xf]
  %v64 = vld [vmem:[%s0 + $0xc8] sm:$0xf]
  %v65 = vld [vmem:[%s0 + $0xcc] sm:$0xf]
  %v66 = vld [vmem:[%s0 + $0xd0] sm:$0xf]
  %v67 = vld [vmem:[%s0 + $0xd4] sm:$0xf]
  %v68 = vld [vmem:[%s0 + $0xd8] sm:$0xf]
  %v69 = vld [vmem:[%s0 + $0xdc] sm:$0xf]
  %v70 = vunpack.c.l.bf16 %v14
  %v71 = vunpack.c.l.bf16 %v15
  %v72 = vunpack.c.l.bf16 %v16
  %v73 = vunpack.c.l.bf16 %v17
  %v74 = vunpack.c.l.bf16 %v18
  %v75 = vunpack.c.l.bf16 %v19
  %v76 = vunpack.c.l.bf16 %v20
  %v77 = vunpack.c.l.bf16 %v21
  %v78 = vunpack.c.l.bf16 %v22
  %v79 = vunpack.c.l.bf16 %v23
  %v80 = vunpack.c.l.bf16 %v24
  %v81 = vunpack.c.l.bf16 %v25
  %v82 = vunpack.c.l.bf16 %v26
  %v83 = vunpack.c.l.bf16 %v27
  %v84 = vunpack.c.l.bf16 %v28
  %v85 = vunpack.c.l.bf16 %v29
  %v86 = vunpack.c.l.bf16 %v30
  %v87 = vunpack.c.l.bf16 %v31
  %v88 = vunpack.c.l.bf16 %v32
  %v89 = vunpack.c.l.bf16 %v33
  %v90 = vunpack.c.l.bf16 %v34
  %v91 = vunpack.c.l.bf16 %v35
  %v92 = vunpack.c.l.bf16 %v36
  %v93 = vunpack.c.l.bf16 %v37
  %v94 = vunpack.c.l.bf16 %v38
  %v95 = vunpack.c.l.bf16 %v39
  %v96 = vunpack.c.l.bf16 %v40
  %v97 = vunpack.c.l.bf16 %v41
  %v98 = vunpack.c.l.bf16 %v42
  %v99 = vunpack.c.l.bf16 %v43
  %v100 = vunpack.c.l.bf16 %v44
  %v101 = vunpack.c.l.bf16 %v45
  %v102 = vunpack.c.l.bf16 %v46
  %v103 = vunpack.c.l.bf16 %v47
  %v104 = vunpack.c.l.bf16 %v48
  %v105 = vunpack.c.l.bf16 %v49
  %v106 = vunpack.c.l.bf16 %v50
  %v107 = vunpack.c.l.bf16 %v51
  %v108 = vunpack.c.l.bf16 %v52
  %v109 = vunpack.c.l.bf16 %v53
  %v110 = vunpack.c.l.bf16 %v54
  %v111 = vunpack.c.l.bf16 %v55
  %v112 = vunpack.c.l.bf16 %v56
  %v113 = vunpack.c.l.bf16 %v57
  %v114 = vunpack.c.l.bf16 %v58
  %v115 = vunpack.c.l.bf16 %v59
  %v116 = vunpack.c.l.bf16 %v60
  %v117 = vunpack.c.l.bf16 %v61
  %v118 = vunpack.c.l.bf16 %v62
  %v119 = vunpack.c.l.bf16 %v63
  %v120 = vunpack.c.l.bf16 %v64
  %v121 = vunpack.c.l.bf16 %v65
  %v122 = vunpack.c.l.bf16 %v66
  %v123 = vunpack.c.l.bf16 %v67
  %v124 = vunpack.c.l.bf16 %v68
  %v125 = vunpack.c.l.bf16 %v69
  %v126 = vld [vmem:[%s1] sm:$0x1]
  %v128 = vlaneseq
  %v129 = vshrl.u32 %v128, 7
  %v130 = vsub.s32 0, %v129
  %v131 = vrot.slane %v126, %v130
  %v133 = vmul.f32 %v70, %v131
  %v134 = vmul.f32 %v71, %v131
  %v135 = vmul.f32 %v72, %v131
  %v136 = vmul.f32 %v73, %v131
  %v137 = vmul.f32 %v74, %v131
  %v138 = vmul.f32 %v75, %v131
  %v139 = vmul.f32 %v76, %v131
  %v140 = vmul.f32 %v77, %v131
  %v141 = vmul.f32 %v78, %v131
  %v142 = vmul.f32 %v79, %v131
  %v143 = vmul.f32 %v80, %v131
  %v144 = vmul.f32 %v81, %v131
  %v145 = vmul.f32 %v82, %v131
  %v146 = vmul.f32 %v83, %v131
  %v147 = vmul.f32 %v84, %v131
  %v148 = vmul.f32 %v85, %v131
  %v149 = vmul.f32 %v86, %v131
  %v150 = vmul.f32 %v87, %v131
  %v151 = vmul.f32 %v88, %v131
  %v152 = vmul.f32 %v89, %v131
  %v153 = vmul.f32 %v90, %v131
  %v154 = vmul.f32 %v91, %v131
  %v155 = vmul.f32 %v92, %v131
  %v156 = vmul.f32 %v93, %v131
  %v157 = vmul.f32 %v94, %v131
  %v158 = vmul.f32 %v95, %v131
  %v159 = vmul.f32 %v96, %v131
  %v160 = vmul.f32 %v97, %v131
  %v161 = vmul.f32 %v98, %v131
  %v162 = vmul.f32 %v99, %v131
  %v163 = vmul.f32 %v100, %v131
  %v164 = vmul.f32 %v101, %v131
  %v165 = vmul.f32 %v102, %v131
  %v166 = vmul.f32 %v103, %v131
  %v167 = vmul.f32 %v104, %v131
  %v168 = vmul.f32 %v105, %v131
  %v169 = vmul.f32 %v106, %v131
  %v170 = vmul.f32 %v107, %v131
  %v171 = vmul.f32 %v108, %v131
  %v172 = vmul.f32 %v109, %v131
  %v173 = vmul.f32 %v110, %v131
  %v174 = vmul.f32 %v111, %v131
  %v175 = vmul.f32 %v112, %v131
  %v176 = vmul.f32 %v113, %v131
  %v177 = vmul.f32 %v114, %v131
  %v178 = vmul.f32 %v115, %v131
  %v179 = vmul.f32 %v116, %v131
  %v180 = vmul.f32 %v117, %v131
  %v181 = vmul.f32 %v118, %v131
  %v182 = vmul.f32 %v119, %v131
  %v183 = vmul.f32 %v120, %v131
  %v184 = vmul.f32 %v121, %v131
  %v185 = vmul.f32 %v122, %v131
  %v186 = vmul.f32 %v123, %v131
  %v187 = vmul.f32 %v124, %v131
  %v188 = vmul.f32 %v125, %v131
  %v189 = vld [vmem:[%s2] sm:$0x1]
  %v191 = vlaneseq
  %v192 = vshrl.u32 %v191, 7
  %v193 = vsub.s32 0, %v192
  %v194 = vrot.slane %v189, %v193
  %v196 = vadd.f32 %v133, %v194
  %v197 = vadd.f32 %v134, %v194
  %v198 = vadd.f32 %v135, %v194
  %v199 = vadd.f32 %v136, %v194
  %v200 = vadd.f32 %v137, %v194
  %v201 = vadd.f32 %v138, %v194
  %v202 = vadd.f32 %v139, %v194
  %v203 = vadd.f32 %v140, %v194
  %v204 = vadd.f32 %v141, %v194
  %v205 = vadd.f32 %v142, %v194
  %v206 = vadd.f32 %v143, %v194
  %v207 = vadd.f32 %v144, %v194
  %v208 = vadd.f32 %v145, %v194
  %v209 = vadd.f32 %v146, %v194
  %v210 = vadd.f32 %v147, %v194
  %v211 = vadd.f32 %v148, %v194
  %v212 = vadd.f32 %v149, %v194
  %v213 = vadd.f32 %v150, %v194
  %v214 = vadd.f32 %v151, %v194
  %v215 = vadd.f32 %v152, %v194
  %v216 = vadd.f32 %v153, %v194
  %v217 = vadd.f32 %v154, %v194
  %v218 = vadd.f32 %v155, %v194
  %v219 = vadd.f32 %v156, %v194
  %v220 = vadd.f32 %v157, %v194
  %v221 = vadd.f32 %v158, %v194
  %v222 = vadd.f32 %v159, %v194
  %v223 = vadd.f32 %v160, %v194
  %v224 = vadd.f32 %v161, %v194
  %v225 = vadd.f32 %v162, %v194
  %v226 = vadd.f32 %v163, %v194
  %v227 = vadd.f32 %v164, %v194
  %v228 = vadd.f32 %v165, %v194
  %v229 = vadd.f32 %v166, %v194
  %v230 = vadd.f32 %v167, %v194
  %v231 = vadd.f32 %v168, %v194
  %v232 = vadd.f32 %v169, %v194
  %v233 = vadd.f32 %v170, %v194
  %v234 = vadd.f32 %v171, %v194
  %v235 = vadd.f32 %v172, %v194
  %v236 = vadd.f32 %v173, %v194
  %v237 = vadd.f32 %v174, %v194
  %v238 = vadd.f32 %v175, %v194
  %v239 = vadd.f32 %v176, %v194
  %v240 = vadd.f32 %v177, %v194
  %v241 = vadd.f32 %v178, %v194
  %v242 = vadd.f32 %v179, %v194
  %v243 = vadd.f32 %v180, %v194
  %v244 = vadd.f32 %v181, %v194
  %v245 = vadd.f32 %v182, %v194
  %v246 = vadd.f32 %v183, %v194
  %v247 = vadd.f32 %v184, %v194
  %v248 = vadd.f32 %v185, %v194
  %v249 = vadd.f32 %v186, %v194
  %v250 = vadd.f32 %v187, %v194
  %v251 = vadd.f32 %v188, %v194
  %v252 = vmax.f32 %v196, 0.0
  %v253 = vmax.f32 %v197, 0.0
  %v254 = vmax.f32 %v198, 0.0
  %v255 = vmax.f32 %v199, 0.0
  %v256 = vmax.f32 %v200, 0.0
  %v257 = vmax.f32 %v201, 0.0
  %v258 = vmax.f32 %v202, 0.0
  %v259 = vmax.f32 %v203, 0.0
  %v260 = vmax.f32 %v204, 0.0
  %v261 = vmax.f32 %v205, 0.0
  %v262 = vmax.f32 %v206, 0.0
  %v263 = vmax.f32 %v207, 0.0
  %v264 = vmax.f32 %v208, 0.0
  %v265 = vmax.f32 %v209, 0.0
  %v266 = vmax.f32 %v210, 0.0
  %v267 = vmax.f32 %v211, 0.0
  %v268 = vmax.f32 %v212, 0.0
  %v269 = vmax.f32 %v213, 0.0
  %v270 = vmax.f32 %v214, 0.0
  %v271 = vmax.f32 %v215, 0.0
  %v272 = vmax.f32 %v216, 0.0
  %v273 = vmax.f32 %v217, 0.0
  %v274 = vmax.f32 %v218, 0.0
  %v275 = vmax.f32 %v219, 0.0
  %v276 = vmax.f32 %v220, 0.0
  %v277 = vmax.f32 %v221, 0.0
  %v278 = vmax.f32 %v222, 0.0
  %v279 = vmax.f32 %v223, 0.0
  %v280 = vmax.f32 %v224, 0.0
  %v281 = vmax.f32 %v225, 0.0
  %v282 = vmax.f32 %v226, 0.0
  %v283 = vmax.f32 %v227, 0.0
  %v284 = vmax.f32 %v228, 0.0
  %v285 = vmax.f32 %v229, 0.0
  %v286 = vmax.f32 %v230, 0.0
  %v287 = vmax.f32 %v231, 0.0
  %v288 = vmax.f32 %v232, 0.0
  %v289 = vmax.f32 %v233, 0.0
  %v290 = vmax.f32 %v234, 0.0
  %v291 = vmax.f32 %v235, 0.0
  %v292 = vmax.f32 %v236, 0.0
  %v293 = vmax.f32 %v237, 0.0
  %v294 = vmax.f32 %v238, 0.0
  %v295 = vmax.f32 %v239, 0.0
  %v296 = vmax.f32 %v240, 0.0
  %v297 = vmax.f32 %v241, 0.0
  %v298 = vmax.f32 %v242, 0.0
  %v299 = vmax.f32 %v243, 0.0
  %v300 = vmax.f32 %v244, 0.0
  %v301 = vmax.f32 %v245, 0.0
  %v302 = vmax.f32 %v246, 0.0
  %v303 = vmax.f32 %v247, 0.0
  %v304 = vmax.f32 %v248, 0.0
  %v305 = vmax.f32 %v249, 0.0
  %v306 = vmax.f32 %v250, 0.0
  %v307 = vmax.f32 %v251, 0.0
  %v308 = vpack.c.bf16 %v253, %v252
  %v309 = vpack.c.bf16 %v255, %v254
  %v310 = vpack.c.bf16 %v257, %v256
  %v311 = vpack.c.bf16 %v259, %v258
  %v312 = vpack.c.bf16 %v261, %v260
  %v313 = vpack.c.bf16 %v263, %v262
  %v314 = vpack.c.bf16 %v265, %v264
  %v315 = vpack.c.bf16 %v267, %v266
  %v316 = vpack.c.bf16 %v269, %v268
  %v317 = vpack.c.bf16 %v271, %v270
  %v318 = vpack.c.bf16 %v273, %v272
  %v319 = vpack.c.bf16 %v275, %v274
  %v320 = vpack.c.bf16 %v277, %v276
  %v321 = vpack.c.bf16 %v279, %v278
  %v322 = vpack.c.bf16 %v281, %v280
  %v323 = vpack.c.bf16 %v283, %v282
  %v324 = vpack.c.bf16 %v285, %v284
  %v325 = vpack.c.bf16 %v287, %v286
  %v326 = vpack.c.bf16 %v289, %v288
  %v327 = vpack.c.bf16 %v291, %v290
  %v328 = vpack.c.bf16 %v293, %v292
  %v329 = vpack.c.bf16 %v295, %v294
  %v330 = vpack.c.bf16 %v297, %v296
  %v331 = vpack.c.bf16 %v299, %v298
  %v332 = vpack.c.bf16 %v301, %v300
  %v333 = vpack.c.bf16 %v303, %v302
  %v334 = vpack.c.bf16 %v305, %v304
  %v335 = vpack.c.bf16 %v307, %v306
  %v364 = vunpack.c.l.b16 %v308
  %v365 = vunpack.c.h.b16 %v308
  %v366 = vunpack.c.l.b16 %v309
  %v367 = vunpack.c.h.b16 %v309
  %v368 = vunpack.c.l.b16 %v310
  %v369 = vunpack.c.h.b16 %v310
  %v370 = vunpack.c.l.b16 %v311
  %v371 = vunpack.c.h.b16 %v311
  %v372 = vunpack.c.l.b16 %v312
  %v373 = vunpack.c.h.b16 %v312
  %v374 = vunpack.c.l.b16 %v313
  %v375 = vunpack.c.h.b16 %v313
  %v376 = vunpack.c.l.b16 %v314
  %v377 = vunpack.c.h.b16 %v314
  %v378 = vunpack.c.l.b16 %v315
  %v379 = vunpack.c.h.b16 %v315
  %v380 = vunpack.c.l.b16 %v316
  %v381 = vunpack.c.h.b16 %v316
  %v382 = vunpack.c.l.b16 %v317
  %v383 = vunpack.c.h.b16 %v317
  %v384 = vunpack.c.l.b16 %v318
  %v385 = vunpack.c.h.b16 %v318
  %v386 = vunpack.c.l.b16 %v319
  %v387 = vunpack.c.h.b16 %v319
  %v388 = vunpack.c.l.b16 %v320
  %v389 = vunpack.c.h.b16 %v320
  %v390 = vunpack.c.l.b16 %v321
  %v391 = vunpack.c.h.b16 %v321
  %v392 = vunpack.c.l.b16 %v322
  %v393 = vunpack.c.h.b16 %v322
  %v394 = vunpack.c.l.b16 %v323
  %v395 = vunpack.c.h.b16 %v323
  %v396 = vunpack.c.l.b16 %v324
  %v397 = vunpack.c.h.b16 %v324
  %v398 = vunpack.c.l.b16 %v325
  %v399 = vunpack.c.h.b16 %v325
  %v400 = vunpack.c.l.b16 %v326
  %v401 = vunpack.c.h.b16 %v326
  %v402 = vunpack.c.l.b16 %v327
  %v403 = vunpack.c.h.b16 %v327
  %v404 = vunpack.c.l.b16 %v328
  %v405 = vunpack.c.h.b16 %v328
  %v406 = vunpack.c.l.b16 %v329
  %v407 = vunpack.c.h.b16 %v329
  %v408 = vunpack.c.l.b16 %v330
  %v409 = vunpack.c.h.b16 %v330
  %v410 = vunpack.c.l.b16 %v331
  %v411 = vunpack.c.h.b16 %v331
  %v412 = vunpack.c.l.b16 %v332
  %v413 = vunpack.c.h.b16 %v332
  %v414 = vunpack.c.l.b16 %v333
  %v415 = vunpack.c.h.b16 %v333
  %v416 = vunpack.c.l.b16 %v334
  %v417 = vunpack.c.h.b16 %v334
  %v418 = vunpack.c.l.b16 %v335
  %v419 = vunpack.c.h.b16 %v335
  %v420 = vpack.c.b16 %v364, %v364
  %v421 = vpack.c.b16 %v365, %v365
  %v422 = vpack.c.b16 %v366, %v366
  %v423 = vpack.c.b16 %v367, %v367
  %v424 = vpack.c.b16 %v368, %v368
  %v425 = vpack.c.b16 %v369, %v369
  %v426 = vpack.c.b16 %v370, %v370
  %v427 = vpack.c.b16 %v371, %v371
  %v428 = vpack.c.b16 %v372, %v372
  %v429 = vpack.c.b16 %v373, %v373
  %v430 = vpack.c.b16 %v374, %v374
  %v431 = vpack.c.b16 %v375, %v375
  %v432 = vpack.c.b16 %v376, %v376
  %v433 = vpack.c.b16 %v377, %v377
  %v434 = vpack.c.b16 %v378, %v378
  %v435 = vpack.c.b16 %v379, %v379
  %v436 = vpack.c.b16 %v380, %v380
  %v437 = vpack.c.b16 %v381, %v381
  %v438 = vpack.c.b16 %v382, %v382
  %v439 = vpack.c.b16 %v383, %v383
  %v440 = vpack.c.b16 %v384, %v384
  %v441 = vpack.c.b16 %v385, %v385
  %v442 = vpack.c.b16 %v386, %v386
  %v443 = vpack.c.b16 %v387, %v387
  %v444 = vpack.c.b16 %v388, %v388
  %v445 = vpack.c.b16 %v389, %v389
  %v446 = vpack.c.b16 %v390, %v390
  %v447 = vpack.c.b16 %v391, %v391
  %v448 = vpack.c.b16 %v392, %v392
  %v449 = vpack.c.b16 %v393, %v393
  %v450 = vpack.c.b16 %v394, %v394
  %v451 = vpack.c.b16 %v395, %v395
  %v452 = vpack.c.b16 %v396, %v396
  %v453 = vpack.c.b16 %v397, %v397
  %v454 = vpack.c.b16 %v398, %v398
  %v455 = vpack.c.b16 %v399, %v399
  %v456 = vpack.c.b16 %v400, %v400
  %v457 = vpack.c.b16 %v401, %v401
  %v458 = vpack.c.b16 %v402, %v402
  %v459 = vpack.c.b16 %v403, %v403
  %v460 = vpack.c.b16 %v404, %v404
  %v461 = vpack.c.b16 %v405, %v405
  %v462 = vpack.c.b16 %v406, %v406
  %v463 = vpack.c.b16 %v407, %v407
  %v464 = vpack.c.b16 %v408, %v408
  %v465 = vpack.c.b16 %v409, %v409
  %v466 = vpack.c.b16 %v410, %v410
  %v467 = vpack.c.b16 %v411, %v411
  %v468 = vpack.c.b16 %v412, %v412
  %v469 = vpack.c.b16 %v413, %v413
  %v470 = vpack.c.b16 %v414, %v414
  %v471 = vpack.c.b16 %v415, %v415
  %v472 = vpack.c.b16 %v416, %v416
  %v473 = vpack.c.b16 %v417, %v417
  %v474 = vpack.c.b16 %v418, %v418
  %v475 = vpack.c.b16 %v419, %v419
  %532 = vst [vmem:[%s3] sm:$0xf] %v420
  %533 = vst [vmem:[%s3 + $0x4] sm:$0xf] %v421
  %534 = vst [vmem:[%s3 + $0x8] sm:$0xf] %v422
  %535 = vst [vmem:[%s3 + $0xc] sm:$0xf] %v423
  %536 = vst [vmem:[%s3 + $0x10] sm:$0xf] %v424
  %537 = vst [vmem:[%s3 + $0x14] sm:$0xf] %v425
  %538 = vst [vmem:[%s3 + $0x18] sm:$0xf] %v426
  %539 = vst [vmem:[%s3 + $0x1c] sm:$0xf] %v427
  %540 = vst [vmem:[%s3 + $0x20] sm:$0xf] %v428
  %541 = vst [vmem:[%s3 + $0x24] sm:$0xf] %v429
  %542 = vst [vmem:[%s3 + $0x28] sm:$0xf] %v430
  %543 = vst [vmem:[%s3 + $0x2c] sm:$0xf] %v431
  %544 = vst [vmem:[%s3 + $0x30] sm:$0xf] %v432
  %545 = vst [vmem:[%s3 + $0x34] sm:$0xf] %v433
  %546 = vst [vmem:[%s3 + $0x38] sm:$0xf] %v434
  %547 = vst [vmem:[%s3 + $0x3c] sm:$0xf] %v435
  %548 = vst [vmem:[%s3 + $0x40] sm:$0xf] %v436
  %549 = vst [vmem:[%s3 + $0x44] sm:$0xf] %v437
  %550 = vst [vmem:[%s3 + $0x48] sm:$0xf] %v438
  %551 = vst [vmem:[%s3 + $0x4c] sm:$0xf] %v439
  %552 = vst [vmem:[%s3 + $0x50] sm:$0xf] %v440
  %553 = vst [vmem:[%s3 + $0x54] sm:$0xf] %v441
  %554 = vst [vmem:[%s3 + $0x58] sm:$0xf] %v442
  %555 = vst [vmem:[%s3 + $0x5c] sm:$0xf] %v443
  %556 = vst [vmem:[%s3 + $0x60] sm:$0xf] %v444
  %557 = vst [vmem:[%s3 + $0x64] sm:$0xf] %v445
  %558 = vst [vmem:[%s3 + $0x68] sm:$0xf] %v446
  %559 = vst [vmem:[%s3 + $0x6c] sm:$0xf] %v447
  %560 = vst [vmem:[%s3 + $0x70] sm:$0xf] %v448
  %561 = vst [vmem:[%s3 + $0x74] sm:$0xf] %v449
  %562 = vst [vmem:[%s3 + $0x78] sm:$0xf] %v450
  %563 = vst [vmem:[%s3 + $0x7c] sm:$0xf] %v451
  %564 = vst [vmem:[%s3 + $0x80] sm:$0xf] %v452
  %565 = vst [vmem:[%s3 + $0x84] sm:$0xf] %v453
  %566 = vst [vmem:[%s3 + $0x88] sm:$0xf] %v454
  %567 = vst [vmem:[%s3 + $0x8c] sm:$0xf] %v455
  %568 = vst [vmem:[%s3 + $0x90] sm:$0xf] %v456
  %569 = vst [vmem:[%s3 + $0x94] sm:$0xf] %v457
  %570 = vst [vmem:[%s3 + $0x98] sm:$0xf] %v458
  %571 = vst [vmem:[%s3 + $0x9c] sm:$0xf] %v459
  %572 = vst [vmem:[%s3 + $0xa0] sm:$0xf] %v460
  %573 = vst [vmem:[%s3 + $0xa4] sm:$0xf] %v461
  %574 = vst [vmem:[%s3 + $0xa8] sm:$0xf] %v462
  %575 = vst [vmem:[%s3 + $0xac] sm:$0xf] %v463
  %576 = vst [vmem:[%s3 + $0xb0] sm:$0xf] %v464
  %577 = vst [vmem:[%s3 + $0xb4] sm:$0xf] %v465
  %578 = vst [vmem:[%s3 + $0xb8] sm:$0xf] %v466
  %579 = vst [vmem:[%s3 + $0xbc] sm:$0xf] %v467
  %580 = vst [vmem:[%s3 + $0xc0] sm:$0xf] %v468
  %581 = vst [vmem:[%s3 + $0xc4] sm:$0xf] %v469
  %582 = vst [vmem:[%s3 + $0xc8] sm:$0xf] %v470
  %583 = vst [vmem:[%s3 + $0xcc] sm:$0xf] %v471
  %584 = vst [vmem:[%s3 + $0xd0] sm:$0xf] %v472
  %585 = vst [vmem:[%s3 + $0xd4] sm:$0xf] %v473
  %586 = vst [vmem:[%s3 + $0xd8] sm:$0xf] %v474
  %587 = vst [vmem:[%s3 + $0xdc] sm:$0xf] %v475
  // Predicated region
  $region14: #{cnn_generator_forward.12} parent=0 // pred_check
    _
  $region15: #{cnn_generator_forward.12} parent=0 // pred_check_branch
    %589 = sbr.rel (0) target = $region17
  $region16: #{cnn_generator_forward.12} parent=0 // pred_region
    _
  $region17: #{cnn_generator_forward.12} parent=0 // pred_fallthru
    _
  // Predicated region
  $region18: #{cnn_generator_forward.12} parent=0 // pred_check
    _
  $region19: #{cnn_generator_forward.12} parent=0 // pred_check_branch
    %591 = sbr.rel (0) target = $region21
  $region20: #{cnn_generator_forward.12} parent=0 // pred_region
    _
  $region21: #{cnn_generator_forward.12} parent=0 // pred_fallthru
    _

// kernel: cnn_generator_forward.11
$region0: #{cnn_generator_forward.11}
  #allocation0 [shape = 'u32[]', space=smem, size = 0x4, offset = 0x4, fixed_abs, tag = 'smem constant byte address 0x4 - core index']
  #allocation1 [shape = 'u32[144,128]{1,0:T(1,128)}', space=vmem, size = 0x12000, scoped, tag = 'internal scratch']
  %s0 = inlined_call_operand.vmem [shape: bf16[4,112,512], index: 0, kind: input, shape index: {}]
  %s1 = inlined_call_operand.vmem [shape: bf16[4,512,128], index: 1, kind: input, shape index: {}]
  %s2 = inlined_call_operand.vmem [shape: bf16[4,112,128], index: 2, kind: output, shape index: {0}]
  %s3 = inlined_call_operand.vmem [shape: f32[4,1,1,128], index: 3, kind: output, shape index: {1}]
  %s4 = inlined_call_operand.vmem [shape: f32[4,1,1,128], index: 4, kind: output, shape index: {2}]
  %5 = xla_tuple %s2, %s3, %s4
  %s6 = sld [smem:[#allocation0]]
  $region57: #{cnn_generator_forward.11} parent=0
    _
  %s8 = ssub.s32 1, %s6
  %s9 = scalar_select 0, %s8, %s6
  loop: start=0, step=1, limit=6
  $region2: #{cnn_generator_forward.11} parent=0 // loop_pre_header
    _
  $region3: #{cnn_generator_forward.11} parent=0 // loop_header
    %s11 = sphi 0, %s15
    %p12 = scmp.ge.s32.totalorder %s11, 6
    %s18 = sphi 0, %s30
    %s19 = sphi 0, %s26
    %s20 = sphi 0, %s18
    %s21 = sphi 0, %s19
    %s22 = sphi 0, %s20
    %s23 = sphi 0, %s21
    %s35 = sphi 0, %s37
    %s38 = sphi 0, %s35
    %s39 = sphi 0, %s38
    %s55 = sphi 0, %s39
    %s61 = sphi 0, %s63
    %s64 = sphi 0, %s61
    %s65 = sphi 0, %s64
    %s81 = sphi 0, %s65
    %s89 = sphi 0, %s91
    %s92 = sphi 0, %s89
    %s93 = sphi 0, %s92
    %s109 = sphi 0, %s93
    %s117 = sphi 0, %s119
    %s120 = sphi 0, %s117
    %s121 = sphi 0, %s120
    %s137 = sphi 0, %s121
    %s145 = sphi 0, %s147
    %s148 = sphi 0, %s145
    %s149 = sphi 0, %s148
    %s165 = sphi 0, %s149
  $region4: #{cnn_generator_forward.11} parent=0 // loop_header_branch
    %14 = sbr.rel (%p12) target = $region8
  $region5: #{cnn_generator_forward.11} parent=0 // loop_body
    %s16 = ssub.s32 %s11, 1
    %s17 = ssub.s32 %s11, 2
    %s24 = sadd.s32 1, %s19
    %p25 = scmp.ge.s32.totalorder %s24, 1
    %s26 = scalar_select %p25, 0, %s24
    %s27 = sadd.s32 1, %s18
    %s28 = scalar_select %p25, %s27, %s18
    %p29 = scmp.ge.s32.totalorder %s28, 4
    %s30 = scalar_select %p29, 0, %s28
    %s31 = ssub.s32 %s18, %s30
    %s32 = ssub.s32 %s19, %s26
    %s33 = sor.u32 %s31, %s32
    %p34 = scmp.eq.s32.totalorder %s33, 0
    %s36 = sadd.s32 %s35, 1
    %s37 = scalar_select %p34, %s35, %s36
    %p40 = pneg %p34
    %p41 = scmp.eq.s32.totalorder %s11, 3
    %p42 = por %p40, %p41
    %p43 = scmp.ne.s32.totalorder %s35, %s38
    %p44 = scmp.eq.s32.totalorder %s11, 0
    %p45 = por %p43, %p44
    %p46 = scmp.ne.s32.totalorder %s35, %s38
    %p47 = scmp.eq.s32.totalorder %s16, 3
    %p48 = por %p46, %p47
    %p49 = scmp.ne.s32.totalorder %s38, %s39
    %p50 = scmp.eq.s32.totalorder %s16, 0
    %p51 = por %p49, %p50
    %p52 = scmp.ne.s32.totalorder %s38, %s39
    %p53 = scmp.eq.s32.totalorder %s17, 3
    %p54 = por %p52, %p53
    %p56 = scmp.ne.s32.totalorder %s39, %s55
    %p57 = scmp.eq.s32.totalorder %s17, 0
    %p58 = por %p56, %p57
    %s59 = ssub.s32 %s18, %s30
    %p60 = scmp.eq.s32.totalorder %s59, 0
    %s62 = sadd.s32 %s61, 1
    %s63 = scalar_select %p60, %s61, %s62
    %p66 = pneg %p60
    %p67 = scmp.eq.s32.totalorder %s11, 3
    %p68 = por %p66, %p67
    %p69 = scmp.ne.s32.totalorder %s61, %s64
    %p70 = scmp.eq.s32.totalorder %s11, 0
    %p71 = por %p69, %p70
    %p72 = scmp.ne.s32.totalorder %s61, %s64
    %p73 = scmp.eq.s32.totalorder %s16, 3
    %p74 = por %p72, %p73
    %p75 = scmp.ne.s32.totalorder %s64, %s65
    %p76 = scmp.eq.s32.totalorder %s16, 0
    %p77 = por %p75, %p76
    %p78 = scmp.ne.s32.totalorder %s64, %s65
    %p79 = scmp.eq.s32.totalorder %s17, 3
    %p80 = por %p78, %p79
    %p82 = scmp.ne.s32.totalorder %s65, %s81
    %p83 = scmp.eq.s32.totalorder %s17, 0
    %p84 = por %p82, %p83
    %s85 = ssub.s32 %s18, %s30
    %s86 = ssub.s32 %s19, %s26
    %s87 = sor.u32 %s85, %s86
    %p88 = scmp.eq.s32.totalorder %s87, 0
    %s90 = sadd.s32 %s89, 1
    %s91 = scalar_select %p88, %s89, %s90
    %p94 = pneg %p88
    %p95 = scmp.eq.s32.totalorder %s11, 3
    %p96 = por %p94, %p95
    %p97 = scmp.ne.s32.totalorder %s89, %s92
    %p98 = scmp.eq.s32.totalorder %s11, 0
    %p99 = por %p97, %p98
    %p100 = scmp.ne.s32.totalorder %s89, %s92
    %p101 = scmp.eq.s32.totalorder %s16, 3
    %p102 = por %p100, %p101
    %p103 = scmp.ne.s32.totalorder %s92, %s93
    %p104 = scmp.eq.s32.totalorder %s16, 0
    %p105 = por %p103, %p104
    %p106 = scmp.ne.s32.totalorder %s92, %s93
    %p107 = scmp.eq.s32.totalorder %s17, 3
    %p108 = por %p106, %p107
    %p110 = scmp.ne.s32.totalorder %s93, %s109
    %p111 = scmp.eq.s32.totalorder %s17, 0
    %p112 = por %p110, %p111
    %s113 = ssub.s32 %s18, %s30
    %s114 = ssub.s32 %s19, %s26
    %s115 = sor.u32 %s113, %s114
    %p116 = scmp.eq.s32.totalorder %s115, 0
    %s118 = sadd.s32 %s117, 1
    %s119 = scalar_select %p116, %s117, %s118
    %p122 = pneg %p116
    %p123 = scmp.eq.s32.totalorder %s11, 3
    %p124 = por %p122, %p123
    %p125 = scmp.ne.s32.totalorder %s117, %s120
    %p126 = scmp.eq.s32.totalorder %s11, 0
    %p127 = por %p125, %p126
    %p128 = scmp.ne.s32.totalorder %s117, %s120
    %p129 = scmp.eq.s32.totalorder %s16, 3
    %p130 = por %p128, %p129
    %p131 = scmp.ne.s32.totalorder %s120, %s121
    %p132 = scmp.eq.s32.totalorder %s16, 0
    %p133 = por %p131, %p132
    %p134 = scmp.ne.s32.totalorder %s120, %s121
    %p135 = scmp.eq.s32.totalorder %s17, 3
    %p136 = por %p134, %p135
    %p138 = scmp.ne.s32.totalorder %s121, %s137
    %p139 = scmp.eq.s32.totalorder %s17, 0
    %p140 = por %p138, %p139
    %s141 = ssub.s32 %s18, %s30
    %s142 = ssub.s32 %s19, %s26
    %s143 = sor.u32 %s141, %s142
    %p144 = scmp.eq.s32.totalorder %s143, 0
    %s146 = sadd.s32 %s145, 1
    %s147 = scalar_select %p144, %s145, %s146
    %p150 = pneg %p144
    %p151 = scmp.eq.s32.totalorder %s11, 3
    %p152 = por %p150, %p151
    %p153 = scmp.ne.s32.totalorder %s145, %s148
    %p154 = scmp.eq.s32.totalorder %s11, 0
    %p155 = por %p153, %p154
    %p156 = scmp.ne.s32.totalorder %s145, %s148
    %p157 = scmp.eq.s32.totalorder %s16, 3
    %p158 = por %p156, %p157
    %p159 = scmp.ne.s32.totalorder %s148, %s149
    %p160 = scmp.eq.s32.totalorder %s16, 0
    %p161 = por %p159, %p160
    %p162 = scmp.ne.s32.totalorder %s148, %s149
    %p163 = scmp.eq.s32.totalorder %s17, 3
    %p164 = por %p162, %p163
    %p166 = scmp.ne.s32.totalorder %s149, %s165
    %p167 = scmp.eq.s32.totalorder %s17, 0
    %p168 = por %p166, %p167
    %p169 = scmp.le.s32.totalorder 1, %s11
    %p170 = scmp.lt.s32.totalorder %s11, 5
    %p171 = pnand %p169, %p170
    %p172 = pneg %p171
    // Predicated region
    $region9: #{cnn_generator_forward.11} parent=5 // pred_check
      _
    $region10: #{cnn_generator_forward.11} parent=5 // pred_check_branch
      %174 = sbr.rel (%p171) target = $region12
    $region11: #{cnn_generator_forward.11} parent=5 // pred_region
      %s175 = ssub.s32 %s11, 1
    $region12: #{cnn_generator_forward.11} parent=5 // pred_fallthru
      _
    %p176 = scmp.lt.s32.totalorder %s11, 4
    // Predicated region
    $region13: #{cnn_generator_forward.11} parent=5 // pred_check
      %p177 = pneg %p176
    $region14: #{cnn_generator_forward.11} parent=5 // pred_check_branch
      %179 = sbr.rel (%p177) target = $region16
    $region15: #{cnn_generator_forward.11} parent=5 // pred_region
      // Predicated region
      $region17: #{cnn_generator_forward.11} parent=15 // pred_check
        %p180 = pneg %p45
      $region18: #{cnn_generator_forward.11} parent=15 // pred_check_branch
        %182 = sbr.rel (%p180) target = $region20
      $region19: #{cnn_generator_forward.11} parent=15 // pred_region
        %s183 = smul.u32 14, %s19
        %p184 = scmp.lt.s32.totalorder %s18, 3
        %s185 = scalar_select %p184, %s18, 3
        %p186 = scmp.lt.s32.totalorder %s183, 13
        %s187 = scalar_select %p186, %s183, 13
        %s188 = smul.addr %s187, 4
        %s189 = smul.addr %s185, 56
        %s190 = sadd.s32 %s188, %s189
        %s191 = smul.addr %s190, 4
        %s192 = scalar_lea.vmem %s0, %s191
        %s193 = smul.u32 14, %s19
      $region20: #{cnn_generator_forward.11} parent=15 // pred_fallthru
        _
      // Predicated region
      $region21: #{cnn_generator_forward.11} parent=15 // pred_check
        %p194 = pneg %p71
      $region22: #{cnn_generator_forward.11} parent=15 // pred_check_branch
        %196 = sbr.rel (%p194) target = $region24
      $region23: #{cnn_generator_forward.11} parent=15 // pred_region
        %p197 = scmp.lt.s32.totalorder %s18, 3
        %s198 = scalar_select %p197, %s18, 3
        %s199 = smul.addr %s198, 64
        %s200 = smul.addr %s199, 4
        %s201 = scalar_lea.vmem %s1, %s200
      $region24: #{cnn_generator_forward.11} parent=15 // pred_fallthru
        _
    $region16: #{cnn_generator_forward.11} parent=5 // pred_fallthru
      _
    %p202 = scmp.le.s32.totalorder 1, %s11
    %p203 = scmp.lt.s32.totalorder %s11, 5
    %p204 = pnand %p202, %p203
    %p205 = pneg %p204
    // Predicated region
    $region25: #{cnn_generator_forward.11} parent=5 // pred_check
      _
    $region26: #{cnn_generator_forward.11} parent=5 // pred_check_branch
      %207 = sbr.rel (%p204) target = $region28
    $region27: #{cnn_generator_forward.11} parent=5 // pred_region
      %s208 = ssub.s32 %s11, 1
      %s209 = smul.u32 14, %s21
      %p210 = scmp.lt.s32.totalorder %s20, 3
      %s211 = scalar_select %p210, %s20, 3
      %p212 = scmp.lt.s32.totalorder %s209, 13
      %s213 = scalar_select %p212, %s209, 13
      %s214 = smul.addr %s213, 4
      %s215 = smul.addr %s211, 56
      %s216 = sadd.s32 %s214, %s215
      %s217 = smul.addr %s216, 4
      %s218 = scalar_lea.vmem %s0, %s217
      %p219 = pneg %p51
      %p220 = pneg %p48
      %p221 = scmp.lt.s32.totalorder %s20, 3
      %s222 = scalar_select %p221, %s20, 3
      %s223 = smul.addr %s222, 64
      %s224 = smul.addr %s223, 4
      %s225 = scalar_lea.vmem %s1, %s224
      %p226 = pneg %p77
      %p227 = pneg %p74
      %p228 = pneg %p105
      %p229 = pneg %p102
      %s230 = smul.u32 14, %s21
      %p231 = scmp.lt.s32.totalorder %s20, 3
      %s232 = scalar_select %p231, %s20, 3
      %p233 = scmp.lt.s32.totalorder %s230, 13
      %s234 = scalar_select %p233, %s230, 13
      %s235 = smul.addr %s232, 14
      %s236 = sadd.s32 %s234, %s235
      %s237 = smul.addr %s236, 4
      %s238 = scalar_lea.vmem %s2, %s237
      %p239 = pneg %p133
      %p240 = pneg %p130
      %p241 = scmp.lt.s32.totalorder %s20, 3
      %s242 = scalar_select %p241, %s20, 3
      %p243 = scmp.lt.s32.totalorder %s21, 0
      %s244 = scalar_select %p243, %s21, 0
      %s245 = sadd.s32 %s244, %s242
      %s246 = scalar_lea.vmem %s3, %s245
      %p247 = pneg %p161
      %p248 = pneg %p158
      %p249 = scmp.lt.s32.totalorder %s20, 3
      %s250 = scalar_select %p249, %s20, 3
      %p251 = scmp.lt.s32.totalorder %s21, 0
      %s252 = scalar_select %p251, %s21, 0
      %s253 = sadd.s32 %s252, %s250
      %s254 = scalar_lea.vmem %s4, %s253
      %s255 = smul.u32 14, %s21
      %p256 = scmp.lt.s32.totalorder %s20, 3
      %s257 = scalar_select %p256, %s20, 3
      %p258 = scmp.lt.s32.totalorder %s255, 13
      %s259 = scalar_select %p258, %s255, 13
      %s260 = smul.addr %s259, 4
      %s261 = smul.addr %s257, 56
      %s262 = sadd.s32 %s260, %s261
      %s263 = smul.addr %s262, 4
      %s264 = scalar_lea.vmem %s0, %s263
      %s265 = smul.u32 14, %s21
      %p266 = scmp.lt.s32.totalorder %s20, 3
      %s267 = scalar_select %p266, %s20, 3
      %s268 = smul.addr %s267, 64
      %s269 = smul.addr %s268, 4
      %s270 = scalar_lea.vmem %s1, %s269
      %s271 = smul.u32 14, %s21
      %p272 = scmp.lt.s32.totalorder %s20, 3
      %s273 = scalar_select %p272, %s20, 3
      %p274 = scmp.lt.s32.totalorder %s271, 13
      %s275 = scalar_select %p274, %s271, 13
      %s276 = smul.addr %s273, 14
      %s277 = sadd.s32 %s275, %s276
      %s278 = smul.addr %s277, 4
      %s279 = scalar_lea.vmem %s2, %s278
      %s280 = smul.u32 14, %s21
      %p281 = scmp.lt.s32.totalorder %s20, 3
      %s282 = scalar_select %p281, %s20, 3
      %p283 = scmp.lt.s32.totalorder %s21, 0
      %s284 = scalar_select %p283, %s21, 0
      %s285 = sadd.s32 %s284, %s282
      %s286 = scalar_lea.vmem %s3, %s285
      %p287 = scmp.lt.s32.totalorder %s20, 3
      %s288 = scalar_select %p287, %s20, 3
      %p289 = scmp.lt.s32.totalorder %s21, 0
      %s290 = scalar_select %p289, %s21, 0
      %s291 = sadd.s32 %s290, %s288
      %s292 = scalar_lea.vmem %s4, %s291
      %v294 = vld [vmem:[%s264] sm:$0xff]
      %v295 = vld [vmem:[%s264 + $0x8] sm:$0xff]
      %v296 = vld [vmem:[%s264 + $0x10] sm:$0xff]
      %v297 = vld [vmem:[%s264 + $0x18] sm:$0xff]
      %v298 = vld [vmem:[%s264 + $0x20] sm:$0xff]
      %v299 = vld [vmem:[%s264 + $0x28] sm:$0xff]
      %v300 = vld [vmem:[%s264 + $0x30] sm:$0xff]
      %v301 = vld [vmem:[%s264 + $0x38] sm:$0xff]
      %v302 = vld [vmem:[%s264 + $0x40] sm:$0xff]
      %v303 = vld [vmem:[%s264 + $0x48] sm:$0xff]
      %v304 = vld [vmem:[%s264 + $0x50] sm:$0xff]
      %v305 = vld [vmem:[%s264 + $0x58] sm:$0xff]
      %v306 = vld [vmem:[%s264 + $0x60] sm:$0xff]
      %v307 = vld [vmem:[%s264 + $0x68] sm:$0xff]
      %v308 = vld [vmem:[%s264 + $0x70] sm:$0xff]
      %v309 = vld [vmem:[%s264 + $0x78] sm:$0xff]
      %v310 = vld [vmem:[%s264 + $0x80] sm:$0xff]
      %v311 = vld [vmem:[%s264 + $0x88] sm:$0xff]
      %v312 = vld [vmem:[%s264 + $0x90] sm:$0xff]
      %v313 = vld [vmem:[%s264 + $0x98] sm:$0xff]
      %v314 = vld [vmem:[%s264 + $0xa0] sm:$0xff]
      %v315 = vld [vmem:[%s264 + $0xa8] sm:$0xff]
      %v316 = vld [vmem:[%s264 + $0xb0] sm:$0xff]
      %v317 = vld [vmem:[%s264 + $0xb8] sm:$0xff]
      %v318 = vld [vmem:[%s264 + $0xc0] sm:$0xff]
      %v319 = vld [vmem:[%s264 + $0xc8] sm:$0xff]
      %v320 = vld [vmem:[%s264 + $0xd0] sm:$0xff]
      %v321 = vld [vmem:[%s264 + $0xd8] sm:$0xff]
      %v322 = vld [vmem:[%s270] sm:$0xf]
      %v323 = vld [vmem:[%s270 + $0x4] sm:$0xf]
      %v324 = vld [vmem:[%s270 + $0x8] sm:$0xf]
      %v325 = vld [vmem:[%s270 + $0xc] sm:$0xf]
      %v326 = vld [vmem:[%s270 + $0x10] sm:$0xf]
      %v327 = vld [vmem:[%s270 + $0x14] sm:$0xf]
      %v328 = vld [vmem:[%s270 + $0x18] sm:$0xf]
      %v329 = vld [vmem:[%s270 + $0x1c] sm:$0xf]
      %v330 = vld [vmem:[%s270 + $0x20] sm:$0xf]
      %v331 = vld [vmem:[%s270 + $0x24] sm:$0xf]
      %v332 = vld [vmem:[%s270 + $0x28] sm:$0xf]
      %v333 = vld [vmem:[%s270 + $0x2c] sm:$0xf]
      %v334 = vld [vmem:[%s270 + $0x30] sm:$0xf]
      %v335 = vld [vmem:[%s270 + $0x34] sm:$0xf]
      %v336 = vld [vmem:[%s270 + $0x38] sm:$0xf]
      %v337 = vld [vmem:[%s270 + $0x3c] sm:$0xf]
      %v338 = vld [vmem:[%s270 + $0x40] sm:$0xf]
      %v339 = vld [vmem:[%s270 + $0x44] sm:$0xf]
      %v340 = vld [vmem:[%s270 + $0x48] sm:$0xf]
      %v341 = vld [vmem:[%s270 + $0x4c] sm:$0xf]
      %v342 = vld [vmem:[%s270 + $0x50] sm:$0xf]
      %v343 = vld [vmem:[%s270 + $0x54] sm:$0xf]
      %v344 = vld [vmem:[%s270 + $0x58] sm:$0xf]
      %v345 = vld [vmem:[%s270 + $0x5c] sm:$0xf]
      %v346 = vld [vmem:[%s270 + $0x60] sm:$0xf]
      %v347 = vld [vmem:[%s270 + $0x64] sm:$0xf]
      %v348 = vld [vmem:[%s270 + $0x68] sm:$0xf]
      %v349 = vld [vmem:[%s270 + $0x6c] sm:$0xf]
      %v350 = vld [vmem:[%s270 + $0x70] sm:$0xf]
      %v351 = vld [vmem:[%s270 + $0x74] sm:$0xf]
      %v352 = vld [vmem:[%s270 + $0x78] sm:$0xf]
      %v353 = vld [vmem:[%s270 + $0x7c] sm:$0xf]
      %v354 = vld [vmem:[%s270 + $0x80] sm:$0xf]
      %v355 = vld [vmem:[%s270 + $0x84] sm:$0xf]
      %v356 = vld [vmem:[%s270 + $0x88] sm:$0xf]
      %v357 = vld [vmem:[%s270 + $0x8c] sm:$0xf]
      %v358 = vld [vmem:[%s270 + $0x90] sm:$0xf]
      %v359 = vld [vmem:[%s270 + $0x94] sm:$0xf]
      %v360 = vld [vmem:[%s270 + $0x98] sm:$0xf]
      %v361 = vld [vmem:[%s270 + $0x9c] sm:$0xf]
      %v362 = vld [vmem:[%s270 + $0xa0] sm:$0xf]
      %v363 = vld [vmem:[%s270 + $0xa4] sm:$0xf]
      %v364 = vld [vmem:[%s270 + $0xa8] sm:$0xf]
      %v365 = vld [vmem:[%s270 + $0xac] sm:$0xf]
      %v366 = vld [vmem:[%s270 + $0xb0] sm:$0xf]
      %v367 = vld [vmem:[%s270 + $0xb4] sm:$0xf]
      %v368 = vld [vmem:[%s270 + $0xb8] sm:$0xf]
      %v369 = vld [vmem:[%s270 + $0xbc] sm:$0xf]
      %v370 = vld [vmem:[%s270 + $0xc0] sm:$0xf]
      %v371 = vld [vmem:[%s270 + $0xc4] sm:$0xf]
      %v372 = vld [vmem:[%s270 + $0xc8] sm:$0xf]
      %v373 = vld [vmem:[%s270 + $0xcc] sm:$0xf]
      %v374 = vld [vmem:[%s270 + $0xd0] sm:$0xf]
      %v375 = vld [vmem:[%s270 + $0xd4] sm:$0xf]
      %v376 = vld [vmem:[%s270 + $0xd8] sm:$0xf]
      %v377 = vld [vmem:[%s270 + $0xdc] sm:$0xf]
      %v378 = vld [vmem:[%s270 + $0xe0] sm:$0xf]
      %v379 = vld [vmem:[%s270 + $0xe4] sm:$0xf]
      %v380 = vld [vmem:[%s270 + $0xe8] sm:$0xf]
      %v381 = vld [vmem:[%s270 + $0xec] sm:$0xf]
      %v382 = vld [vmem:[%s270 + $0xf0] sm:$0xf]
      %v383 = vld [vmem:[%s270 + $0xf4] sm:$0xf]
      %v384 = vld [vmem:[%s270 + $0xf8] sm:$0xf]
      %v385 = vld [vmem:[%s270 + $0xfc] sm:$0xf]
      %v414 = vunpack.c.l.b16 %v294
      %v415 = vunpack.c.h.b16 %v294
      %v416 = vunpack.c.l.b16 %v295
      %v417 = vunpack.c.h.b16 %v295
      %v418 = vunpack.c.l.b16 %v296
      %v419 = vunpack.c.h.b16 %v296
      %v420 = vunpack.c.l.b16 %v297
      %v421 = vunpack.c.h.b16 %v297
      %v422 = vunpack.c.l.b16 %v298
      %v423 = vunpack.c.h.b16 %v298
      %v424 = vunpack.c.l.b16 %v299
      %v425 = vunpack.c.h.b16 %v299
      %v426 = vunpack.c.l.b16 %v300
      %v427 = vunpack.c.h.b16 %v300
      %v428 = vunpack.c.l.b16 %v301
      %v429 = vunpack.c.h.b16 %v301
      %v430 = vunpack.c.l.b16 %v302
      %v431 = vunpack.c.h.b16 %v302
      %v432 = vunpack.c.l.b16 %v303
      %v433 = vunpack.c.h.b16 %v303
      %v434 = vunpack.c.l.b16 %v304
      %v435 = vunpack.c.h.b16 %v304
      %v436 = vunpack.c.l.b16 %v305
      %v437 = vunpack.c.h.b16 %v305
      %v438 = vunpack.c.l.b16 %v306
      %v439 = vunpack.c.h.b16 %v306
      %v440 = vunpack.c.l.b16 %v307
      %v441 = vunpack.c.h.b16 %v307
      %v442 = vunpack.c.l.b16 %v308
      %v443 = vunpack.c.h.b16 %v308
      %v444 = vunpack.c.l.b16 %v309
      %v445 = vunpack.c.h.b16 %v309
      %v446 = vunpack.c.l.b16 %v310
      %v447 = vunpack.c.h.b16 %v310
      %v448 = vunpack.c.l.b16 %v311
      %v449 = vunpack.c.h.b16 %v311
      %v450 = vunpack.c.l.b16 %v312
      %v451 = vunpack.c.h.b16 %v312
      %v452 = vunpack.c.l.b16 %v313
      %v453 = vunpack.c.h.b16 %v313
      %v454 = vunpack.c.l.b16 %v314
      %v455 = vunpack.c.h.b16 %v314
      %v456 = vunpack.c.l.b16 %v315
      %v457 = vunpack.c.h.b16 %v315
      %v458 = vunpack.c.l.b16 %v316
      %v459 = vunpack.c.h.b16 %v316
      %v460 = vunpack.c.l.b16 %v317
      %v461 = vunpack.c.h.b16 %v317
      %v462 = vunpack.c.l.b16 %v318
      %v463 = vunpack.c.h.b16 %v318
      %v464 = vunpack.c.l.b16 %v319
      %v465 = vunpack.c.h.b16 %v319
      %v466 = vunpack.c.l.b16 %v320
      %v467 = vunpack.c.h.b16 %v320
      %v468 = vunpack.c.l.b16 %v321
      %v469 = vunpack.c.h.b16 %v321
      %v470 = vpack.c.b16 %v418, %v414
      %v471 = vpack.c.b16 %v419, %v415
      %v472 = vpack.c.b16 %v420, %v416
      %v473 = vpack.c.b16 %v421, %v417
      %v474 = vpack.c.b16 %v426, %v422
      %v475 = vpack.c.b16 %v427, %v423
      %v476 = vpack.c.b16 %v428, %v424
      %v477 = vpack.c.b16 %v429, %v425
      %v478 = vpack.c.b16 %v434, %v430
      %v479 = vpack.c.b16 %v435, %v431
      %v480 = vpack.c.b16 %v436, %v432
      %v481 = vpack.c.b16 %v437, %v433
      %v482 = vpack.c.b16 %v442, %v438
      %v483 = vpack.c.b16 %v443, %v439
      %v484 = vpack.c.b16 %v444, %v440
      %v485 = vpack.c.b16 %v445, %v441
      %v486 = vpack.c.b16 %v450, %v446
      %v487 = vpack.c.b16 %v451, %v447
      %v488 = vpack.c.b16 %v452, %v448
      %v489 = vpack.c.b16 %v453, %v449
      %v490 = vpack.c.b16 %v458, %v454
      %v491 = vpack.c.b16 %v459, %v455
      %v492 = vpack.c.b16 %v460, %v456
      %v493 = vpack.c.b16 %v461, %v457
      %v494 = vpack.c.b16 %v466, %v462
      %v495 = vpack.c.b16 %v467, %v463
      %v496 = vpack.c.b16 %v468, %v464
      %v497 = vpack.c.b16 %v469, %v465
      %v590 = vunpack.c.l.b16 %v322
      %v591 = vunpack.c.l.b16 %v323
      %v592 = vunpack.c.l.b16 %v324
      %v593 = vunpack.c.l.b16 %v325
      %v594 = vunpack.c.l.b16 %v326
      %v595 = vunpack.c.l.b16 %v327
      %v596 = vunpack.c.l.b16 %v328
      %v597 = vunpack.c.l.b16 %v329
      %v598 = vunpack.c.l.b16 %v330
      %v599 = vunpack.c.l.b16 %v331
      %v600 = vunpack.c.l.b16 %v332
      %v601 = vunpack.c.l.b16 %v333
      %v602 = vunpack.c.l.b16 %v334
      %v603 = vunpack.c.l.b16 %v335
      %v604 = vunpack.c.l.b16 %v336
      %v605 = vunpack.c.l.b16 %v337
      %v606 = vunpack.c.l.b16 %v338
      %v607 = vunpack.c.l.b16 %v339
      %v608 = vunpack.c.l.b16 %v340
      %v609 = vunpack.c.l.b16 %v341
      %v610 = vunpack.c.l.b16 %v342
      %v611 = vunpack.c.l.b16 %v343
      %v612 = vunpack.c.l.b16 %v344
      %v613 = vunpack.c.l.b16 %v345
      %v614 = vunpack.c.l.b16 %v346
      %v615 = vunpack.c.l.b16 %v347
      %v616 = vunpack.c.l.b16 %v348
      %v617 = vunpack.c.l.b16 %v349
      %v618 = vunpack.c.l.b16 %v350
      %v619 = vunpack.c.l.b16 %v351
      %v620 = vunpack.c.l.b16 %v352
      %v621 = vunpack.c.l.b16 %v353
      %v622 = vunpack.c.l.b16 %v354
      %v623 = vunpack.c.l.b16 %v355
      %v624 = vunpack.c.l.b16 %v356
      %v625 = vunpack.c.l.b16 %v357
      %v626 = vunpack.c.l.b16 %v358
      %v627 = vunpack.c.l.b16 %v359
      %v628 = vunpack.c.l.b16 %v360
      %v629 = vunpack.c.l.b16 %v361
      %v630 = vunpack.c.l.b16 %v362
      %v631 = vunpack.c.l.b16 %v363
      %v632 = vunpack.c.l.b16 %v364
      %v633 = vunpack.c.l.b16 %v365
      %v634 = vunpack.c.l.b16 %v366
      %v635 = vunpack.c.l.b16 %v367
      %v636 = vunpack.c.l.b16 %v368
      %v637 = vunpack.c.l.b16 %v369
      %v638 = vunpack.c.l.b16 %v370
      %v639 = vunpack.c.l.b16 %v371
      %v640 = vunpack.c.l.b16 %v372
      %v641 = vunpack.c.l.b16 %v373
      %v642 = vunpack.c.l.b16 %v374
      %v643 = vunpack.c.l.b16 %v375
      %v644 = vunpack.c.l.b16 %v376
      %v645 = vunpack.c.l.b16 %v377
      %v646 = vunpack.c.l.b16 %v378
      %v647 = vunpack.c.l.b16 %v379
      %v648 = vunpack.c.l.b16 %v380
      %v649 = vunpack.c.l.b16 %v381
      %v650 = vunpack.c.l.b16 %v382
      %v651 = vunpack.c.l.b16 %v383
      %v652 = vunpack.c.l.b16 %v384
      %v653 = vunpack.c.l.b16 %v385
      %v654 = vpack.c.b16 %v591, %v590
      %v655 = vpack.c.b16 %v593, %v592
      %v656 = vpack.c.b16 %v595, %v594
      %v657 = vpack.c.b16 %v597, %v596
      %v658 = vpack.c.b16 %v599, %v598
      %v659 = vpack.c.b16 %v601, %v600
      %v660 = vpack.c.b16 %v603, %v602
      %v661 = vpack.c.b16 %v605, %v604
      %v662 = vpack.c.b16 %v607, %v606
      %v663 = vpack.c.b16 %v609, %v608
      %v664 = vpack.c.b16 %v611, %v610
      %v665 = vpack.c.b16 %v613, %v612
      %v666 = vpack.c.b16 %v615, %v614
      %v667 = vpack.c.b16 %v617, %v616
      %v668 = vpack.c.b16 %v619, %v618
      %v669 = vpack.c.b16 %v621, %v620
      %v670 = vpack.c.b16 %v623, %v622
      %v671 = vpack.c.b16 %v625, %v624
      %v672 = vpack.c.b16 %v627, %v626
      %v673 = vpack.c.b16 %v629, %v628
      %v674 = vpack.c.b16 %v631, %v630
      %v675 = vpack.c.b16 %v633, %v632
      %v676 = vpack.c.b16 %v635, %v634
      %v677 = vpack.c.b16 %v637, %v636
      %v678 = vpack.c.b16 %v639, %v638
      %v679 = vpack.c.b16 %v641, %v640
      %v680 = vpack.c.b16 %v643, %v642
      %v681 = vpack.c.b16 %v645, %v644
      %v682 = vpack.c.b16 %v647, %v646
      %v683 = vpack.c.b16 %v649, %v648
      %v684 = vpack.c.b16 %v651, %v650
      %v685 = vpack.c.b16 %v653, %v652
      %718 = vmatprep.subr.bf16.mxu0 0
      %719 = vmatpush1.bf16.msra.mxu0 %v654
      %720 = vmatprep.subr.bf16.mxu0 0
      %721 = vmatpush1.bf16.msra.mxu0 %v655
      %722 = vmatprep.subr.bf16.mxu0 0
      %723 = vmatpush1.bf16.msra.mxu0 %v656
      %724 = vmatprep.subr.bf16.mxu0 0
      %725 = vmatpush1.bf16.msra.mxu0 %v657
      %726 = vmatprep.subr.bf16.mxu0 0
      %727 = vmatpush1.bf16.msra.mxu0 %v658
      %728 = vmatprep.subr.bf16.mxu0 0
      %729 = vmatpush1.bf16.msra.mxu0 %v659
      %730 = vmatprep.subr.bf16.mxu0 0
      %731 = vmatpush1.bf16.msra.mxu0 %v660
      %732 = vmatprep.subr.bf16.mxu0 0
      %733 = vmatpush1.bf16.msra.mxu0 %v661
      %734 = vmatprep.subr.bf16.mxu0 0
      %735 = vmatpush1.bf16.msra.mxu0 %v662
      %736 = vmatprep.subr.bf16.mxu0 0
      %737 = vmatpush1.bf16.msra.mxu0 %v663
      %738 = vmatprep.subr.bf16.mxu0 0
      %739 = vmatpush1.bf16.msra.mxu0 %v664
      %740 = vmatprep.subr.bf16.mxu0 0
      %741 = vmatpush1.bf16.msra.mxu0 %v665
      %742 = vmatprep.subr.bf16.mxu0 0
      %743 = vmatpush1.bf16.msra.mxu0 %v666
      %744 = vmatprep.subr.bf16.mxu0 0
      %745 = vmatpush1.bf16.msra.mxu0 %v667
      %746 = vmatprep.subr.bf16.mxu0 0
      %747 = vmatpush1.bf16.msra.mxu0 %v668
      %748 = vmatprep.subr.bf16.mxu0 0
      %749 = vmatpush1.bf16.msra.mxu0 %v669
      %750 = vmatprep.mubr.bf16.mxu0 %v471
      %751 = vmatmul.mubr.bf16.gmra.mrb[0].mxu0 %v470
      %v752 = vpop.f32.mrb[0].mxu0
      %v753 = vadd.f32 0.0, %v752
      %v754 = vpop.f32.mrb[0].mxu0
      %v755 = vpop.f32.mrb[0].mxu0
      %v756 = vadd.f32 0.0, %v755
      %v757 = vpop.f32.mrb[0].mxu0
      %758 = vmatprep.mubr.bf16.mxu0 %v475
      %759 = vmatmul.mubr.bf16.gmra.mrb[0].mxu0 %v474
      %v760 = vpop.f32.mrb[0].mxu0
      %v761 = vadd.f32 0.0, %v760
      %v762 = vpop.f32.mrb[0].mxu0
      %v763 = vpop.f32.mrb[0].mxu0
      %v764 = vadd.f32 0.0, %v763
      %v765 = vpop.f32.mrb[0].mxu0
      %766 = vmatprep.mubr.bf16.mxu0 %v479
      %767 = vmatmul.mubr.bf16.gmra.mrb[0].mxu0 %v478
      %v768 = vpop.f32.mrb[0].mxu0
      %v769 = vadd.f32 0.0, %v768
      %v770 = vpop.f32.mrb[0].mxu0
      %v771 = vpop.f32.mrb[0].mxu0
      %v772 = vadd.f32 0.0, %v771
      %v773 = vpop.f32.mrb[0].mxu0
      %774 = vmatprep.mubr.bf16.mxu0 %v483
      %775 = vmatmul.mubr.bf16.gmra.mrb[0].mxu0 %v482
      %v776 = vpop.f32.mrb[0].mxu0
      %v777 = vadd.f32 0.0, %v776
      %v778 = vpop.f32.mrb[0].mxu0
      %v779 = vpop.f32.mrb[0].mxu0
      %v780 = vadd.f32 0.0, %v779
      %v781 = vpop.f32.mrb[0].mxu0
      %782 = vmatprep.mubr.bf16.mxu0 %v487
      %783 = vmatmul.mubr.bf16.gmra.mrb[0].mxu0 %v486
      %v784 = vpop.f32.mrb[0].mxu0
      %v785 = vadd.f32 0.0, %v784
      %v786 = vpop.f32.mrb[0].mxu0
      %v787 = vpop.f32.mrb[0].mxu0
      %v788 = vadd.f32 0.0, %v787
      %v789 = vpop.f32.mrb[0].mxu0
      %790 = vmatprep.mubr.bf16.mxu0 %v491
      %791 = vmatmul.mubr.bf16.gmra.mrb[0].mxu0 %v490
      %v792 = vpop.f32.mrb[0].mxu0
      %v793 = vadd.f32 0.0, %v792
      %v794 = vpop.f32.mrb[0].mxu0
      %v795 = vpop.f32.mrb[0].mxu0
      %v796 = vadd.f32 0.0, %v795
      %v797 = vpop.f32.mrb[0].mxu0
      %798 = vmatprep.mubr.bf16.mxu0 %v495
      %799 = vmatmul.mubr.bf16.gmra.mrb[0].mxu0 %v494
      %v800 = vpop.f32.mrb[0].mxu0
      %v801 = vadd.f32 0.0, %v800
      %v802 = vpop.f32.mrb[0].mxu0
      %v803 = vpop.f32.mrb[0].mxu0
      %v804 = vadd.f32 0.0, %v803
      %v805 = vpop.f32.mrb[0].mxu0
      %806 = vdwg.mxu0
      %807 = vmatprep.subr.bf16.mxu0 0
      %808 = vmatpush1.bf16.msra.mxu0 %v670
      %809 = vmatprep.subr.bf16.mxu0 0
      %810 = vmatpush1.bf16.msra.mxu0 %v671
      %811 = vmatprep.subr.bf16.mxu0 0
      %812 = vmatpush1.bf16.msra.mxu0 %v672
      %813 = vmatprep.subr.bf16.mxu0 0
      %814 = vmatpush1.bf16.msra.mxu0 %v673
      %815 = vmatprep.subr.bf16.mxu0 0
      %816 = vmatpush1.bf16.msra.mxu0 %v674
      %817 = vmatprep.subr.bf16.mxu0 0
      %818 = vmatpush1.bf16.msra.mxu0 %v675
      %819 = vmatprep.subr.bf16.mxu0 0
      %820 = vmatpush1.bf16.msra.mxu0 %v676
      %821 = vmatprep.subr.bf16.mxu0 0
      %822 = vmatpush1.bf16.msra.mxu0 %v677
      %823 = vmatprep.subr.bf16.mxu0 0
      %824 = vmatpush1.bf16.msra.mxu0 %v678
      %825 = vmatprep.subr.bf16.mxu0 0
      %826 = vmatpush1.bf16.msra.mxu0 %v679
      %827 = vmatprep.subr.bf16.mxu0 0
      %828 = vmatpush1.bf16.msra.mxu0 %v680
      %829 = vmatprep.subr.bf16.mxu0 0
      %830 = vmatpush1.bf16.msra.mxu0 %v681
      %831 = vmatprep.subr.bf16.mxu0 0
      %832 = vmatpush1.bf16.msra.mxu0 %v682
      %833 = vmatprep.subr.bf16.mxu0 0
      %834 = vmatpush1.bf16.msra.mxu0 %v683
      %835 = vmatprep.subr.bf16.mxu0 0
      %836 = vmatpush1.bf16.msra.mxu0 %v684
      %837 = vmatprep.subr.bf16.mxu0 0
      %838 = vmatpush1.bf16.msra.mxu0 %v685
      %839 = vmatprep.mubr.bf16.mxu0 %v473
      %840 = vmatmul.mubr.bf16.gmra.mrb[0].mxu0 %v472
      %v841 = vpop.f32.mrb[0].mxu0
      %v842 = vadd.f32 %v753, %v841
      %v843 = vpop.f32.mrb[0].mxu0
      %v844 = vpop.f32.mrb[0].mxu0
      %v845 = vadd.f32 %v756, %v844
      %v846 = vpop.f32.mrb[0].mxu0
      %847 = vmatprep.mubr.bf16.mxu0 %v477
      %848 = vmatmul.mubr.bf16.gmra.mrb[0].mxu0 %v476
      %v849 = vpop.f32.mrb[0].mxu0
      %v850 = vadd.f32 %v761, %v849
      %v851 = vpop.f32.mrb[0].mxu0
      %v852 = vpop.f32.mrb[0].mxu0
      %v853 = vadd.f32 %v764, %v852
      %v854 = vpop.f32.mrb[0].mxu0
      %855 = vmatprep.mubr.bf16.mxu0 %v481
      %856 = vmatmul.mubr.bf16.gmra.mrb[0].mxu0 %v480
      %v857 = vpop.f32.mrb[0].mxu0
      %v858 = vadd.f32 %v769, %v857
      %v859 = vpop.f32.mrb[0].mxu0
      %v860 = vpop.f32.mrb[0].mxu0
      %v861 = vadd.f32 %v772, %v860
      %v862 = vpop.f32.mrb[0].mxu0
      %863 = vmatprep.mubr.bf16.mxu0 %v485
      %864 = vmatmul.mubr.bf16.gmra.mrb[0].mxu0 %v484
      %v865 = vpop.f32.mrb[0].mxu0
      %v866 = vadd.f32 %v777, %v865
      %v867 = vpop.f32.mrb[0].mxu0
      %v868 = vpop.f32.mrb[0].mxu0
      %v869 = vadd.f32 %v780, %v868
      %v870 = vpop.f32.mrb[0].mxu0
      %871 = vmatprep.mubr.bf16.mxu0 %v489
      %872 = vmatmul.mubr.bf16.gmra.mrb[0].mxu0 %v488
      %v873 = vpop.f32.mrb[0].mxu0
      %v874 = vadd.f32 %v785, %v873
      %v875 = vpop.f32.mrb[0].mxu0
      %v876 = vpop.f32.mrb[0].mxu0
      %v877 = vadd.f32 %v788, %v876
      %v878 = vpop.f32.mrb[0].mxu0
      %879 = vmatprep.mubr.bf16.mxu0 %v493
      %880 = vmatmul.mubr.bf16.gmra.mrb[0].mxu0 %v492
      %v881 = vpop.f32.mrb[0].mxu0
      %v882 = vadd.f32 %v793, %v881
      %v883 = vpop.f32.mrb[0].mxu0
      %v884 = vpop.f32.mrb[0].mxu0
      %v885 = vadd.f32 %v796, %v884
      %v886 = vpop.f32.mrb[0].mxu0
      %887 = vmatprep.mubr.bf16.mxu0 %v497
      %888 = vmatmul.mubr.bf16.gmra.mrb[0].mxu0 %v496
      %v889 = vpop.f32.mrb[0].mxu0
      %v890 = vadd.f32 %v801, %v889
      %v891 = vpop.f32.mrb[0].mxu0
      %v892 = vpop.f32.mrb[0].mxu0
      %v893 = vadd.f32 %v804, %v892
      %v894 = vpop.f32.mrb[0].mxu0
      %895 = vdwg.mxu0
      %v896 = vpack.c.bf16 %v845, %v842
      %v897 = vpack.c.bf16 %v853, %v850
      %v898 = vpack.c.bf16 %v861, %v858
      %v899 = vpack.c.bf16 %v869, %v866
      %v900 = vpack.c.bf16 %v877, %v874
      %v901 = vpack.c.bf16 %v885, %v882
      %v902 = vpack.c.bf16 %v893, %v890
      %v910 = vunpack.c.l.b16 %v896
      %v911 = vunpack.c.h.b16 %v896
      %v912 = vunpack.c.l.b16 %v897
      %v913 = vunpack.c.h.b16 %v897
      %v914 = vunpack.c.l.b16 %v898
      %v915 = vunpack.c.h.b16 %v898
      %v916 = vunpack.c.l.b16 %v899
      %v917 = vunpack.c.h.b16 %v899
      %v918 = vunpack.c.l.b16 %v900
      %v919 = vunpack.c.h.b16 %v900
      %v920 = vunpack.c.l.b16 %v901
      %v921 = vunpack.c.h.b16 %v901
      %v922 = vunpack.c.l.b16 %v902
      %v923 = vunpack.c.h.b16 %v902
      %v924 = vpack.c.b16 %v910, %v910
      %v925 = vpack.c.b16 %v911, %v911
      %v926 = vpack.c.b16 %v912, %v912
      %v927 = vpack.c.b16 %v913, %v913
      %v928 = vpack.c.b16 %v914, %v914
      %v929 = vpack.c.b16 %v915, %v915
      %v930 = vpack.c.b16 %v916, %v916
      %v931 = vpack.c.b16 %v917, %v917
      %v932 = vpack.c.b16 %v918, %v918
      %v933 = vpack.c.b16 %v919, %v919
      %v934 = vpack.c.b16 %v920, %v920
      %v935 = vpack.c.b16 %v921, %v921
      %v936 = vpack.c.b16 %v922, %v922
      %v937 = vpack.c.b16 %v923, %v923
      %952 = vst [vmem:[%s279] sm:$0xf] %v924
      %953 = vst [vmem:[%s279 + $0x4] sm:$0xf] %v925
      %954 = vst [vmem:[%s279 + $0x8] sm:$0xf] %v926
      %955 = vst [vmem:[%s279 + $0xc] sm:$0xf] %v927
      %956 = vst [vmem:[%s279 + $0x10] sm:$0xf] %v928
      %957 = vst [vmem:[%s279 + $0x14] sm:$0xf] %v929
      %958 = vst [vmem:[%s279 + $0x18] sm:$0xf] %v930
      %959 = vst [vmem:[%s279 + $0x1c] sm:$0xf] %v931
      %960 = vst [vmem:[%s279 + $0x20] sm:$0xf] %v932
      %961 = vst [vmem:[%s279 + $0x24] sm:$0xf] %v933
      %962 = vst [vmem:[%s279 + $0x28] sm:$0xf] %v934
      %963 = vst [vmem:[%s279 + $0x2c] sm:$0xf] %v935
      %964 = vst [vmem:[%s279 + $0x30] sm:$0xf] %v936
      %965 = vst [vmem:[%s279 + $0x34] sm:$0xf] %v937
      %v966 = vadd.f32 %v842, %v845
      %v967 = vadd.f32 %v966, %v850
      %v968 = vadd.f32 %v967, %v853
      %v969 = vadd.f32 %v968, %v858
      %v970 = vadd.f32 %v969, %v861
      %v971 = vadd.f32 %v970, %v866
      %v972 = vadd.f32 %v971, %v869
      %v973 = vadd.f32 %v972, %v874
      %v974 = vadd.f32 %v973, %v877
      %v975 = vadd.f32 %v974, %v882
      %v976 = vadd.f32 %v975, %v885
      %v977 = vadd.f32 %v976, %v890
      %v978 = vadd.f32 %v977, %v893
      %v979 = vrot.slane %v978, 4
      %v980 = vadd.f32 %v978, %v979
      %v981 = vrot.slane %v980, 2
      %v982 = vadd.f32 %v980, %v981
      %v983 = vrot.slane %v982, 1
      %v984 = vadd.f32 %v982, %v983
      %985 = vst [vmem:[%s286] sm:$0x1] %v984
      %v986 = vmul.f32 %v842, %v842
      %v987 = vmul.f32 %v845, %v845
      %v988 = vmul.f32 %v850, %v850
      %v989 = vmul.f32 %v853, %v853
      %v990 = vmul.f32 %v858, %v858
      %v991 = vmul.f32 %v861, %v861
      %v992 = vmul.f32 %v866, %v866
      %v993 = vmul.f32 %v869, %v869
      %v994 = vmul.f32 %v874, %v874
      %v995 = vmul.f32 %v877, %v877
      %v996 = vmul.f32 %v882, %v882
      %v997 = vmul.f32 %v885, %v885
      %v998 = vmul.f32 %v890, %v890
      %v999 = vmul.f32 %v893, %v893
      %v1000 = vadd.f32 %v986, %v987
      %v1001 = vadd.f32 %v1000, %v988
      %v1002 = vadd.f32 %v1001, %v989
      %v1003 = vadd.f32 %v1002, %v990
      %v1004 = vadd.f32 %v1003, %v991
      %v1005 = vadd.f32 %v1004, %v992
      %v1006 = vadd.f32 %v1005, %v993
      %v1007 = vadd.f32 %v1006, %v994
      %v1008 = vadd.f32 %v1007, %v995
      %v1009 = vadd.f32 %v1008, %v996
      %v1010 = vadd.f32 %v1009, %v997
      %v1011 = vadd.f32 %v1010, %v998
      %v1012 = vadd.f32 %v1011, %v999
      %v1013 = vrot.slane %v1012, 4
      %v1014 = vadd.f32 %v1012, %v1013
      %v1015 = vrot.slane %v1014, 2
      %v1016 = vadd.f32 %v1014, %v1015
      %v1017 = vrot.slane %v1016, 1
      %v1018 = vadd.f32 %v1016, %v1017
      %1019 = vst [vmem:[%s292] sm:$0x1] %v1018
      %s1020 = smul.u32 14, %s21
      %p1021 = scmp.lt.s32.totalorder %s20, 3
      %s1022 = scalar_select %p1021, %s20, 3
      %p1023 = scmp.lt.s32.totalorder %s1020, 13
      %s1024 = scalar_select %p1023, %s1020, 13
      %s1025 = smul.addr %s1022, 14
      %s1026 = sadd.s32 %s1024, %s1025
      %s1027 = smul.addr %s1026, 4
      %s1028 = scalar_lea.vmem %s2, %s1027
      %p1029 = scmp.lt.s32.totalorder %s20, 3
      %s1030 = scalar_select %p1029, %s20, 3
      %p1031 = scmp.lt.s32.totalorder %s21, 0
      %s1032 = scalar_select %p1031, %s21, 0
      %s1033 = sadd.s32 %s1032, %s1030
      %s1034 = scalar_lea.vmem %s3, %s1033
      %p1035 = scmp.lt.s32.totalorder %s20, 3
      %s1036 = scalar_select %p1035, %s20, 3
      %p1037 = scmp.lt.s32.totalorder %s21, 0
      %s1038 = scalar_select %p1037, %s21, 0
      %s1039 = sadd.s32 %s1038, %s1036
      %s1040 = scalar_lea.vmem %s4, %s1039
      // Predicated region
      $region29: #{cnn_generator_forward.11} parent=27 // pred_check
        %p1041 = pneg %p102
      $region30: #{cnn_generator_forward.11} parent=27 // pred_check_branch
        %1043 = sbr.rel (%p1041) target = $region32
      $region31: #{cnn_generator_forward.11} parent=27 // pred_region
        %s1044 = smul.u32 14, %s21
      $region32: #{cnn_generator_forward.11} parent=27 // pred_fallthru
        _
      // Predicated region
      $region33: #{cnn_generator_forward.11} parent=27 // pred_check
        %p1045 = pneg %p130
      $region34: #{cnn_generator_forward.11} parent=27 // pred_check_branch
        %1047 = sbr.rel (%p1045) target = $region36
      $region35: #{cnn_generator_forward.11} parent=27 // pred_region
        _
      $region36: #{cnn_generator_forward.11} parent=27 // pred_fallthru
        _
      // Predicated region
      $region37: #{cnn_generator_forward.11} parent=27 // pred_check
        %p1048 = pneg %p158
      $region38: #{cnn_generator_forward.11} parent=27 // pred_check_branch
        %1050 = sbr.rel (%p1048) target = $region40
      $region39: #{cnn_generator_forward.11} parent=27 // pred_region
        _
      $region40: #{cnn_generator_forward.11} parent=27 // pred_fallthru
        _
    $region28: #{cnn_generator_forward.11} parent=5 // pred_fallthru
      _
    %p1051 = scmp.le.s32.totalorder 2, %s11
    // Predicated region
    $region41: #{cnn_generator_forward.11} parent=5 // pred_check
      %p1052 = pneg %p1051
    $region42: #{cnn_generator_forward.11} parent=5 // pred_check_branch
      %1054 = sbr.rel (%p1052) target = $region44
    $region43: #{cnn_generator_forward.11} parent=5 // pred_region
      %s1055 = ssub.s32 %s11, 2
      // Predicated region
      $region45: #{cnn_generator_forward.11} parent=43 // pred_check
        %p1056 = pneg %p108
      $region46: #{cnn_generator_forward.11} parent=43 // pred_check_branch
        %1058 = sbr.rel (%p1056) target = $region48
      $region47: #{cnn_generator_forward.11} parent=43 // pred_region
        %s1059 = smul.u32 14, %s23
        %p1060 = scmp.lt.s32.totalorder %s22, 3
        %s1061 = scalar_select %p1060, %s22, 3
        %p1062 = scmp.lt.s32.totalorder %s1059, 13
        %s1063 = scalar_select %p1062, %s1059, 13
        %s1064 = smul.addr %s1061, 14
        %s1065 = sadd.s32 %s1063, %s1064
        %s1066 = smul.addr %s1065, 4
        %s1067 = scalar_lea.vmem %s2, %s1066
      $region48: #{cnn_generator_forward.11} parent=43 // pred_fallthru
        _
      // Predicated region
      $region49: #{cnn_generator_forward.11} parent=43 // pred_check
        %p1068 = pneg %p136
      $region50: #{cnn_generator_forward.11} parent=43 // pred_check_branch
        %1070 = sbr.rel (%p1068) target = $region52
      $region51: #{cnn_generator_forward.11} parent=43 // pred_region
        %p1071 = scmp.lt.s32.totalorder %s22, 3
        %s1072 = scalar_select %p1071, %s22, 3
        %p1073 = scmp.lt.s32.totalorder %s23, 0
        %s1074 = scalar_select %p1073, %s23, 0
        %s1075 = sadd.s32 %s1074, %s1072
        %s1076 = scalar_lea.vmem %s3, %s1075
      $region52: #{cnn_generator_forward.11} parent=43 // pred_fallthru
        _
      // Predicated region
      $region53: #{cnn_generator_forward.11} parent=43 // pred_check
        %p1077 = pneg %p164
      $region54: #{cnn_generator_forward.11} parent=43 // pred_check_branch
        %1079 = sbr.rel (%p1077) target = $region56
      $region55: #{cnn_generator_forward.11} parent=43 // pred_region
        %p1080 = scmp.lt.s32.totalorder %s22, 3
        %s1081 = scalar_select %p1080, %s22, 3
        %p1082 = scmp.lt.s32.totalorder %s23, 0
        %s1083 = scalar_select %p1082, %s23, 0
        %s1084 = sadd.s32 %s1083, %s1081
        %s1085 = scalar_lea.vmem %s4, %s1084
      $region56: #{cnn_generator_forward.11} parent=43 // pred_fallthru
        _
    $region44: #{cnn_generator_forward.11} parent=5 // pred_fallthru
      _
  $region6: #{cnn_generator_forward.11} parent=0 // loop_footer
    %s15 = sadd.s32 1, %s11
  $region7: #{cnn_generator_forward.11} parent=0 // loop_footer_branch
    %10 = sbr.rel target = $region3
  $region8: #{cnn_generator_forward.11} parent=0 // loop_exit
    _

// kernel: cnn_generator_forward.13
$region0: #{cnn_generator_forward.13}
  #allocation0 [shape = 'u32[]', space=smem, size = 0x4, offset = 0x4, fixed_abs, tag = 'smem constant byte address 0x4 - core index']
  #allocation1 [shape = 'u32[144,128]{1,0:T(1,128)}', space=vmem, size = 0x12000, scoped, tag = 'internal scratch']
  %s0 = inlined_call_operand.vmem [shape: bf16[4,400,512], index: 0, kind: input, shape index: {}]
  %s1 = inlined_call_operand.vmem [shape: bf16[4,512,128], index: 1, kind: input, shape index: {}]
  %s2 = inlined_call_operand.vmem [shape: f32[4,400,128], index: 2, kind: output, shape index: {}]
  %s3 = sld [smem:[#allocation0]]
  $region41: #{cnn_generator_forward.13} parent=0
    _
  %s5 = ssub.s32 1, %s3
  %s6 = scalar_select 0, %s5, %s3
  loop: start=0, step=1, limit=6
  $region2: #{cnn_generator_forward.13} parent=0 // loop_pre_header
    _
  $region3: #{cnn_generator_forward.13} parent=0 // loop_header
    %s8 = sphi 0, %s12
    %p9 = scmp.ge.s32.totalorder %s8, 6
    %s15 = sphi 0, %s27
    %s16 = sphi 0, %s23
    %s17 = sphi 0, %s15
    %s18 = sphi 0, %s16
    %s19 = sphi 0, %s17
    %s20 = sphi 0, %s18
    %s32 = sphi 0, %s34
    %s35 = sphi 0, %s32
    %s36 = sphi 0, %s35
    %s52 = sphi 0, %s36
    %s58 = sphi 0, %s60
    %s61 = sphi 0, %s58
    %s62 = sphi 0, %s61
    %s78 = sphi 0, %s62
    %s86 = sphi 0, %s88
    %s89 = sphi 0, %s86
    %s90 = sphi 0, %s89
    %s106 = sphi 0, %s90
  $region4: #{cnn_generator_forward.13} parent=0 // loop_header_branch
    %11 = sbr.rel (%p9) target = $region8
  $region5: #{cnn_generator_forward.13} parent=0 // loop_body
    %s13 = ssub.s32 %s8, 1
    %s14 = ssub.s32 %s8, 2
    %s21 = sadd.s32 1, %s16
    %p22 = scmp.ge.s32.totalorder %s21, 1
    %s23 = scalar_select %p22, 0, %s21
    %s24 = sadd.s32 1, %s15
    %s25 = scalar_select %p22, %s24, %s15
    %p26 = scmp.ge.s32.totalorder %s25, 4
    %s27 = scalar_select %p26, 0, %s25
    %s28 = ssub.s32 %s15, %s27
    %s29 = ssub.s32 %s16, %s23
    %s30 = sor.u32 %s28, %s29
    %p31 = scmp.eq.s32.totalorder %s30, 0
    %s33 = sadd.s32 %s32, 1
    %s34 = scalar_select %p31, %s32, %s33
    %p37 = pneg %p31
    %p38 = scmp.eq.s32.totalorder %s8, 3
    %p39 = por %p37, %p38
    %p40 = scmp.ne.s32.totalorder %s32, %s35
    %p41 = scmp.eq.s32.totalorder %s8, 0
    %p42 = por %p40, %p41
    %p43 = scmp.ne.s32.totalorder %s32, %s35
    %p44 = scmp.eq.s32.totalorder %s13, 3
    %p45 = por %p43, %p44
    %p46 = scmp.ne.s32.totalorder %s35, %s36
    %p47 = scmp.eq.s32.totalorder %s13, 0
    %p48 = por %p46, %p47
    %p49 = scmp.ne.s32.totalorder %s35, %s36
    %p50 = scmp.eq.s32.totalorder %s14, 3
    %p51 = por %p49, %p50
    %p53 = scmp.ne.s32.totalorder %s36, %s52
    %p54 = scmp.eq.s32.totalorder %s14, 0
    %p55 = por %p53, %p54
    %s56 = ssub.s32 %s15, %s27
    %p57 = scmp.eq.s32.totalorder %s56, 0
    %s59 = sadd.s32 %s58, 1
    %s60 = scalar_select %p57, %s58, %s59
    %p63 = pneg %p57
    %p64 = scmp.eq.s32.totalorder %s8, 3
    %p65 = por %p63, %p64
    %p66 = scmp.ne.s32.totalorder %s58, %s61
    %p67 = scmp.eq.s32.totalorder %s8, 0
    %p68 = por %p66, %p67
    %p69 = scmp.ne.s32.totalorder %s58, %s61
    %p70 = scmp.eq.s32.totalorder %s13, 3
    %p71 = por %p69, %p70
    %p72 = scmp.ne.s32.totalorder %s61, %s62
    %p73 = scmp.eq.s32.totalorder %s13, 0
    %p74 = por %p72, %p73
    %p75 = scmp.ne.s32.totalorder %s61, %s62
    %p76 = scmp.eq.s32.totalorder %s14, 3
    %p77 = por %p75, %p76
    %p79 = scmp.ne.s32.totalorder %s62, %s78
    %p80 = scmp.eq.s32.totalorder %s14, 0
    %p81 = por %p79, %p80
    %s82 = ssub.s32 %s15, %s27
    %s83 = ssub.s32 %s16, %s23
    %s84 = sor.u32 %s82, %s83
    %p85 = scmp.eq.s32.totalorder %s84, 0
    %s87 = sadd.s32 %s86, 1
    %s88 = scalar_select %p85, %s86, %s87
    %p91 = pneg %p85
    %p92 = scmp.eq.s32.totalorder %s8, 3
    %p93 = por %p91, %p92
    %p94 = scmp.ne.s32.totalorder %s86, %s89
    %p95 = scmp.eq.s32.totalorder %s8, 0
    %p96 = por %p94, %p95
    %p97 = scmp.ne.s32.totalorder %s86, %s89
    %p98 = scmp.eq.s32.totalorder %s13, 3
    %p99 = por %p97, %p98
    %p100 = scmp.ne.s32.totalorder %s89, %s90
    %p101 = scmp.eq.s32.totalorder %s13, 0
    %p102 = por %p100, %p101
    %p103 = scmp.ne.s32.totalorder %s89, %s90
    %p104 = scmp.eq.s32.totalorder %s14, 3
    %p105 = por %p103, %p104
    %p107 = scmp.ne.s32.totalorder %s90, %s106
    %p108 = scmp.eq.s32.totalorder %s14, 0
    %p109 = por %p107, %p108
    %p110 = scmp.le.s32.totalorder 1, %s8
    %p111 = scmp.lt.s32.totalorder %s8, 5
    %p112 = pnand %p110, %p111
    %p113 = pneg %p112
    // Predicated region
    $region9: #{cnn_generator_forward.13} parent=5 // pred_check
      _
    $region10: #{cnn_generator_forward.13} parent=5 // pred_check_branch
      %115 = sbr.rel (%p112) target = $region12
    $region11: #{cnn_generator_forward.13} parent=5 // pred_region
      %s116 = ssub.s32 %s8, 1
    $region12: #{cnn_generator_forward.13} parent=5 // pred_fallthru
      _
    %p117 = scmp.lt.s32.totalorder %s8, 4
    // Predicated region
    $region13: #{cnn_generator_forward.13} parent=5 // pred_check
      %p118 = pneg %p117
    $region14: #{cnn_generator_forward.13} parent=5 // pred_check_branch
      %120 = sbr.rel (%p118) target = $region16
    $region15: #{cnn_generator_forward.13} parent=5 // pred_region
      // Predicated region
      $region17: #{cnn_generator_forward.13} parent=15 // pred_check
        %p121 = pneg %p42
      $region18: #{cnn_generator_forward.13} parent=15 // pred_check_branch
        %123 = sbr.rel (%p121) target = $region20
      $region19: #{cnn_generator_forward.13} parent=15 // pred_region
        %s124 = smul.u32 50, %s16
        %p125 = scmp.lt.s32.totalorder %s15, 3
        %s126 = scalar_select %p125, %s15, 3
        %p127 = scmp.lt.s32.totalorder %s124, 49
        %s128 = scalar_select %p127, %s124, 49
        %s129 = smul.addr %s128, 4
        %s130 = smul.addr %s126, 200
        %s131 = sadd.s32 %s129, %s130
        %s132 = smul.addr %s131, 4
        %s133 = scalar_lea.vmem %s0, %s132
        %s134 = smul.u32 50, %s16
      $region20: #{cnn_generator_forward.13} parent=15 // pred_fallthru
        _
      // Predicated region
      $region21: #{cnn_generator_forward.13} parent=15 // pred_check
        %p135 = pneg %p68
      $region22: #{cnn_generator_forward.13} parent=15 // pred_check_branch
        %137 = sbr.rel (%p135) target = $region24
      $region23: #{cnn_generator_forward.13} parent=15 // pred_region
        %p138 = scmp.lt.s32.totalorder %s15, 3
        %s139 = scalar_select %p138, %s15, 3
        %s140 = smul.addr %s139, 64
        %s141 = smul.addr %s140, 4
        %s142 = scalar_lea.vmem %s1, %s141
      $region24: #{cnn_generator_forward.13} parent=15 // pred_fallthru
        _
    $region16: #{cnn_generator_forward.13} parent=5 // pred_fallthru
      _
    %p143 = scmp.le.s32.totalorder 1, %s8
    %p144 = scmp.lt.s32.totalorder %s8, 5
    %p145 = pnand %p143, %p144
    %p146 = pneg %p145
    // Predicated region
    $region25: #{cnn_generator_forward.13} parent=5 // pred_check
      _
    $region26: #{cnn_generator_forward.13} parent=5 // pred_check_branch
      %148 = sbr.rel (%p145) target = $region28
    $region27: #{cnn_generator_forward.13} parent=5 // pred_region
      %s149 = ssub.s32 %s8, 1
      %s150 = smul.u32 50, %s18
      %p151 = scmp.lt.s32.totalorder %s17, 3
      %s152 = scalar_select %p151, %s17, 3
      %p153 = scmp.lt.s32.totalorder %s150, 49
      %s154 = scalar_select %p153, %s150, 49
      %s155 = smul.addr %s154, 4
      %s156 = smul.addr %s152, 200
      %s157 = sadd.s32 %s155, %s156
      %s158 = smul.addr %s157, 4
      %s159 = scalar_lea.vmem %s0, %s158
      %p160 = pneg %p48
      %p161 = pneg %p45
      %p162 = scmp.lt.s32.totalorder %s17, 3
      %s163 = scalar_select %p162, %s17, 3
      %s164 = smul.addr %s163, 64
      %s165 = smul.addr %s164, 4
      %s166 = scalar_lea.vmem %s1, %s165
      %p167 = pneg %p74
      %p168 = pneg %p71
      %p169 = pneg %p102
      %p170 = pneg %p99
      %s171 = smul.u32 50, %s18
      %p172 = scmp.lt.s32.totalorder %s17, 3
      %s173 = scalar_select %p172, %s17, 3
      %p174 = scmp.lt.s32.totalorder %s171, 49
      %s175 = scalar_select %p174, %s171, 49
      %s176 = smul.addr %s173, 50
      %s177 = sadd.s32 %s175, %s176
      %s178 = smul.addr %s177, 8
      %s179 = scalar_lea.vmem %s2, %s178
      %s180 = smul.u32 50, %s18
      %p181 = scmp.lt.s32.totalorder %s17, 3
      %s182 = scalar_select %p181, %s17, 3
      %p183 = scmp.lt.s32.totalorder %s180, 49
      %s184 = scalar_select %p183, %s180, 49
      %s185 = smul.addr %s184, 4
      %s186 = smul.addr %s182, 200
      %s187 = sadd.s32 %s185, %s186
      %s188 = smul.addr %s187, 4
      %s189 = scalar_lea.vmem %s0, %s188
      %s190 = smul.u32 50, %s18
      %p191 = scmp.lt.s32.totalorder %s17, 3
      %s192 = scalar_select %p191, %s17, 3
      %s193 = smul.addr %s192, 64
      %s194 = smul.addr %s193, 4
      %s195 = scalar_lea.vmem %s1, %s194
      %s196 = smul.u32 50, %s18
      %p197 = scmp.lt.s32.totalorder %s17, 3
      %s198 = scalar_select %p197, %s17, 3
      %p199 = scmp.lt.s32.totalorder %s196, 49
      %s200 = scalar_select %p199, %s196, 49
      %s201 = smul.addr %s198, 50
      %s202 = sadd.s32 %s200, %s201
      %s203 = smul.addr %s202, 8
      %s204 = scalar_lea.vmem %s2, %s203
      %s205 = smul.u32 50, %s18
      %v207 = vld [vmem:[%s189] sm:$0xff]
      %v208 = vld [vmem:[%s189 + $0x8] sm:$0xff]
      %v209 = vld [vmem:[%s189 + $0x10] sm:$0xff]
      %v210 = vld [vmem:[%s189 + $0x18] sm:$0xff]
      %v211 = vld [vmem:[%s189 + $0x20] sm:$0xff]
      %v212 = vld [vmem:[%s189 + $0x28] sm:$0xff]
      %v213 = vld [vmem:[%s189 + $0x30] sm:$0xff]
      %v214 = vld [vmem:[%s189 + $0x38] sm:$0xff]
      %v215 = vld [vmem:[%s189 + $0x40] sm:$0xff]
      %v216 = vld [vmem:[%s189 + $0x48] sm:$0xff]
      %v217 = vld [vmem:[%s189 + $0x50] sm:$0xff]
      %v218 = vld [vmem:[%s189 + $0x58] sm:$0xff]
      %v219 = vld [vmem:[%s189 + $0x60] sm:$0xff]
      %v220 = vld [vmem:[%s189 + $0x68] sm:$0xff]
      %v221 = vld [vmem:[%s189 + $0x70] sm:$0xff]
      %v222 = vld [vmem:[%s189 + $0x78] sm:$0xff]
      %v223 = vld [vmem:[%s189 + $0x80] sm:$0xff]
      %v224 = vld [vmem:[%s189 + $0x88] sm:$0xff]
      %v225 = vld [vmem:[%s189 + $0x90] sm:$0xff]
      %v226 = vld [vmem:[%s189 + $0x98] sm:$0xff]
      %v227 = vld [vmem:[%s189 + $0xa0] sm:$0xff]
      %v228 = vld [vmem:[%s189 + $0xa8] sm:$0xff]
      %v229 = vld [vmem:[%s189 + $0xb0] sm:$0xff]
      %v230 = vld [vmem:[%s189 + $0xb8] sm:$0xff]
      %v231 = vld [vmem:[%s189 + $0xc0] sm:$0xff]
      %v232 = vld [vmem:[%s189 + $0xc8] sm:$0xff]
      %v233 = vld [vmem:[%s189 + $0xd0] sm:$0xff]
      %v234 = vld [vmem:[%s189 + $0xd8] sm:$0xff]
      %v235 = vld [vmem:[%s189 + $0xe0] sm:$0xff]
      %v236 = vld [vmem:[%s189 + $0xe8] sm:$0xff]
      %v237 = vld [vmem:[%s189 + $0xf0] sm:$0xff]
      %v238 = vld [vmem:[%s189 + $0xf8] sm:$0xff]
      %v239 = vld [vmem:[%s189 + $0x100] sm:$0xff]
      %v240 = vld [vmem:[%s189 + $0x108] sm:$0xff]
      %v241 = vld [vmem:[%s189 + $0x110] sm:$0xff]
      %v242 = vld [vmem:[%s189 + $0x118] sm:$0xff]
      %v243 = vld [vmem:[%s189 + $0x120] sm:$0xff]
      %v244 = vld [vmem:[%s189 + $0x128] sm:$0xff]
      %v245 = vld [vmem:[%s189 + $0x130] sm:$0xff]
      %v246 = vld [vmem:[%s189 + $0x138] sm:$0xff]
      %v247 = vld [vmem:[%s189 + $0x140] sm:$0xff]
      %v248 = vld [vmem:[%s189 + $0x148] sm:$0xff]
      %v249 = vld [vmem:[%s189 + $0x150] sm:$0xff]
      %v250 = vld [vmem:[%s189 + $0x158] sm:$0xff]
      %v251 = vld [vmem:[%s189 + $0x160] sm:$0xff]
      %v252 = vld [vmem:[%s189 + $0x168] sm:$0xff]
      %v253 = vld [vmem:[%s189 + $0x170] sm:$0xff]
      %v254 = vld [vmem:[%s189 + $0x178] sm:$0xff]
      %v255 = vld [vmem:[%s189 + $0x180] sm:$0xff]
      %v256 = vld [vmem:[%s189 + $0x188] sm:$0xff]
      %v257 = vld [vmem:[%s189 + $0x190] sm:$0xff]
      %v258 = vld [vmem:[%s189 + $0x198] sm:$0xff]
      %v259 = vld [vmem:[%s189 + $0x1a0] sm:$0xff]
      %v260 = vld [vmem:[%s189 + $0x1a8] sm:$0xff]
      %v261 = vld [vmem:[%s189 + $0x1b0] sm:$0xff]
      %v262 = vld [vmem:[%s189 + $0x1b8] sm:$0xff]
      %v263 = vld [vmem:[%s189 + $0x1c0] sm:$0xff]
      %v264 = vld [vmem:[%s189 + $0x1c8] sm:$0xff]
      %v265 = vld [vmem:[%s189 + $0x1d0] sm:$0xff]
      %v266 = vld [vmem:[%s189 + $0x1d8] sm:$0xff]
      %v267 = vld [vmem:[%s189 + $0x1e0] sm:$0xff]
      %v268 = vld [vmem:[%s189 + $0x1e8] sm:$0xff]
      %v269 = vld [vmem:[%s189 + $0x1f0] sm:$0xff]
      %v270 = vld [vmem:[%s189 + $0x1f8] sm:$0xff]
      %v271 = vld [vmem:[%s189 + $0x200] sm:$0xff]
      %v272 = vld [vmem:[%s189 + $0x208] sm:$0xff]
      %v273 = vld [vmem:[%s189 + $0x210] sm:$0xff]
      %v274 = vld [vmem:[%s189 + $0x218] sm:$0xff]
      %v275 = vld [vmem:[%s189 + $0x220] sm:$0xff]
      %v276 = vld [vmem:[%s189 + $0x228] sm:$0xff]
      %v277 = vld [vmem:[%s189 + $0x230] sm:$0xff]
      %v278 = vld [vmem:[%s189 + $0x238] sm:$0xff]
      %v279 = vld [vmem:[%s189 + $0x240] sm:$0xff]
      %v280 = vld [vmem:[%s189 + $0x248] sm:$0xff]
      %v281 = vld [vmem:[%s189 + $0x250] sm:$0xff]
      %v282 = vld [vmem:[%s189 + $0x258] sm:$0xff]
      %v283 = vld [vmem:[%s189 + $0x260] sm:$0xff]
      %v284 = vld [vmem:[%s189 + $0x268] sm:$0xff]
      %v285 = vld [vmem:[%s189 + $0x270] sm:$0xff]
      %v286 = vld [vmem:[%s189 + $0x278] sm:$0xff]
      %v287 = vld [vmem:[%s189 + $0x280] sm:$0xff]
      %v288 = vld [vmem:[%s189 + $0x288] sm:$0xff]
      %v289 = vld [vmem:[%s189 + $0x290] sm:$0xff]
      %v290 = vld [vmem:[%s189 + $0x298] sm:$0xff]
      %v291 = vld [vmem:[%s189 + $0x2a0] sm:$0xff]
      %v292 = vld [vmem:[%s189 + $0x2a8] sm:$0xff]
      %v293 = vld [vmem:[%s189 + $0x2b0] sm:$0xff]
      %v294 = vld [vmem:[%s189 + $0x2b8] sm:$0xff]
      %v295 = vld [vmem:[%s189 + $0x2c0] sm:$0xff]
      %v296 = vld [vmem:[%s189 + $0x2c8] sm:$0xff]
      %v297 = vld [vmem:[%s189 + $0x2d0] sm:$0xff]
      %v298 = vld [vmem:[%s189 + $0x2d8] sm:$0xff]
      %v299 = vld [vmem:[%s189 + $0x2e0] sm:$0xff]
      %v300 = vld [vmem:[%s189 + $0x2e8] sm:$0xff]
      %v301 = vld [vmem:[%s189 + $0x2f0] sm:$0xff]
      %v302 = vld [vmem:[%s189 + $0x2f8] sm:$0xff]
      %v303 = vld [vmem:[%s189 + $0x300] sm:$0xff]
      %v304 = vld [vmem:[%s189 + $0x308] sm:$0xff]
      %v305 = vld [vmem:[%s189 + $0x310] sm:$0xff]
      %v306 = vld [vmem:[%s189 + $0x318] sm:$0xff]
      %v307 = vld [vmem:[%s195] sm:$0xf]
      %v308 = vld [vmem:[%s195 + $0x4] sm:$0xf]
      %v309 = vld [vmem:[%s195 + $0x8] sm:$0xf]
      %v310 = vld [vmem:[%s195 + $0xc] sm:$0xf]
      %v311 = vld [vmem:[%s195 + $0x10] sm:$0xf]
      %v312 = vld [vmem:[%s195 + $0x14] sm:$0xf]
      %v313 = vld [vmem:[%s195 + $0x18] sm:$0xf]
      %v314 = vld [vmem:[%s195 + $0x1c] sm:$0xf]
      %v315 = vld [vmem:[%s195 + $0x20] sm:$0xf]
      %v316 = vld [vmem:[%s195 + $0x24] sm:$0xf]
      %v317 = vld [vmem:[%s195 + $0x28] sm:$0xf]
      %v318 = vld [vmem:[%s195 + $0x2c] sm:$0xf]
      %v319 = vld [vmem:[%s195 + $0x30] sm:$0xf]
      %v320 = vld [vmem:[%s195 + $0x34] sm:$0xf]
      %v321 = vld [vmem:[%s195 + $0x38] sm:$0xf]
      %v322 = vld [vmem:[%s195 + $0x3c] sm:$0xf]
      %v323 = vld [vmem:[%s195 + $0x40] sm:$0xf]
      %v324 = vld [vmem:[%s195 + $0x44] sm:$0xf]
      %v325 = vld [vmem:[%s195 + $0x48] sm:$0xf]
      %v326 = vld [vmem:[%s195 + $0x4c] sm:$0xf]
      %v327 = vld [vmem:[%s195 + $0x50] sm:$0xf]
      %v328 = vld [vmem:[%s195 + $0x54] sm:$0xf]
      %v329 = vld [vmem:[%s195 + $0x58] sm:$0xf]
      %v330 = vld [vmem:[%s195 + $0x5c] sm:$0xf]
      %v331 = vld [vmem:[%s195 + $0x60] sm:$0xf]
      %v332 = vld [vmem:[%s195 + $0x64] sm:$0xf]
      %v333 = vld [vmem:[%s195 + $0x68] sm:$0xf]
      %v334 = vld [vmem:[%s195 + $0x6c] sm:$0xf]
      %v335 = vld [vmem:[%s195 + $0x70] sm:$0xf]
      %v336 = vld [vmem:[%s195 + $0x74] sm:$0xf]
      %v337 = vld [vmem:[%s195 + $0x78] sm:$0xf]
      %v338 = vld [vmem:[%s195 + $0x7c] sm:$0xf]
      %v339 = vld [vmem:[%s195 + $0x80] sm:$0xf]
      %v340 = vld [vmem:[%s195 + $0x84] sm:$0xf]
      %v341 = vld [vmem:[%s195 + $0x88] sm:$0xf]
      %v342 = vld [vmem:[%s195 + $0x8c] sm:$0xf]
      %v343 = vld [vmem:[%s195 + $0x90] sm:$0xf]
      %v344 = vld [vmem:[%s195 + $0x94] sm:$0xf]
      %v345 = vld [vmem:[%s195 + $0x98] sm:$0xf]
      %v346 = vld [vmem:[%s195 + $0x9c] sm:$0xf]
      %v347 = vld [vmem:[%s195 + $0xa0] sm:$0xf]
      %v348 = vld [vmem:[%s195 + $0xa4] sm:$0xf]
      %v349 = vld [vmem:[%s195 + $0xa8] sm:$0xf]
      %v350 = vld [vmem:[%s195 + $0xac] sm:$0xf]
      %v351 = vld [vmem:[%s195 + $0xb0] sm:$0xf]
      %v352 = vld [vmem:[%s195 + $0xb4] sm:$0xf]
      %v353 = vld [vmem:[%s195 + $0xb8] sm:$0xf]
      %v354 = vld [vmem:[%s195 + $0xbc] sm:$0xf]
      %v355 = vld [vmem:[%s195 + $0xc0] sm:$0xf]
      %v356 = vld [vmem:[%s195 + $0xc4] sm:$0xf]
      %v357 = vld [vmem:[%s195 + $0xc8] sm:$0xf]
      %v358 = vld [vmem:[%s195 + $0xcc] sm:$0xf]
      %v359 = vld [vmem:[%s195 + $0xd0] sm:$0xf]
      %v360 = vld [vmem:[%s195 + $0xd4] sm:$0xf]
      %v361 = vld [vmem:[%s195 + $0xd8] sm:$0xf]
      %v362 = vld [vmem:[%s195 + $0xdc] sm:$0xf]
      %v363 = vld [vmem:[%s195 + $0xe0] sm:$0xf]
      %v364 = vld [vmem:[%s195 + $0xe4] sm:$0xf]
      %v365 = vld [vmem:[%s195 + $0xe8] sm:$0xf]
      %v366 = vld [vmem:[%s195 + $0xec] sm:$0xf]
      %v367 = vld [vmem:[%s195 + $0xf0] sm:$0xf]
      %v368 = vld [vmem:[%s195 + $0xf4] sm:$0xf]
      %v369 = vld [vmem:[%s195 + $0xf8] sm:$0xf]
      %v370 = vld [vmem:[%s195 + $0xfc] sm:$0xf]
      %v471 = vunpack.c.l.b16 %v207
      %v472 = vunpack.c.h.b16 %v207
      %v473 = vunpack.c.l.b16 %v208
      %v474 = vunpack.c.h.b16 %v208
      %v475 = vunpack.c.l.b16 %v209
      %v476 = vunpack.c.h.b16 %v209
      %v477 = vunpack.c.l.b16 %v210
      %v478 = vunpack.c.h.b16 %v210
      %v479 = vunpack.c.l.b16 %v211
      %v480 = vunpack.c.h.b16 %v211
      %v481 = vunpack.c.l.b16 %v212
      %v482 = vunpack.c.h.b16 %v212
      %v483 = vunpack.c.l.b16 %v213
      %v484 = vunpack.c.h.b16 %v213
      %v485 = vunpack.c.l.b16 %v214
      %v486 = vunpack.c.h.b16 %v214
      %v487 = vunpack.c.l.b16 %v215
      %v488 = vunpack.c.h.b16 %v215
      %v489 = vunpack.c.l.b16 %v216
      %v490 = vunpack.c.h.b16 %v216
      %v491 = vunpack.c.l.b16 %v217
      %v492 = vunpack.c.h.b16 %v217
      %v493 = vunpack.c.l.b16 %v218
      %v494 = vunpack.c.h.b16 %v218
      %v495 = vunpack.c.l.b16 %v219
      %v496 = vunpack.c.h.b16 %v219
      %v497 = vunpack.c.l.b16 %v220
      %v498 = vunpack.c.h.b16 %v220
      %v499 = vunpack.c.l.b16 %v221
      %v500 = vunpack.c.h.b16 %v221
      %v501 = vunpack.c.l.b16 %v222
      %v502 = vunpack.c.h.b16 %v222
      %v503 = vunpack.c.l.b16 %v223
      %v504 = vunpack.c.h.b16 %v223
      %v505 = vunpack.c.l.b16 %v224
      %v506 = vunpack.c.h.b16 %v224
      %v507 = vunpack.c.l.b16 %v225
      %v508 = vunpack.c.h.b16 %v225
      %v509 = vunpack.c.l.b16 %v226
      %v510 = vunpack.c.h.b16 %v226
      %v511 = vunpack.c.l.b16 %v227
      %v512 = vunpack.c.h.b16 %v227
      %v513 = vunpack.c.l.b16 %v228
      %v514 = vunpack.c.h.b16 %v228
      %v515 = vunpack.c.l.b16 %v229
      %v516 = vunpack.c.h.b16 %v229
      %v517 = vunpack.c.l.b16 %v230
      %v518 = vunpack.c.h.b16 %v230
      %v519 = vunpack.c.l.b16 %v231
      %v520 = vunpack.c.h.b16 %v231
      %v521 = vunpack.c.l.b16 %v232
      %v522 = vunpack.c.h.b16 %v232
      %v523 = vunpack.c.l.b16 %v233
      %v524 = vunpack.c.h.b16 %v233
      %v525 = vunpack.c.l.b16 %v234
      %v526 = vunpack.c.h.b16 %v234
      %v527 = vunpack.c.l.b16 %v235
      %v528 = vunpack.c.h.b16 %v235
      %v529 = vunpack.c.l.b16 %v236
      %v530 = vunpack.c.h.b16 %v236
      %v531 = vunpack.c.l.b16 %v237
      %v532 = vunpack.c.h.b16 %v237
      %v533 = vunpack.c.l.b16 %v238
      %v534 = vunpack.c.h.b16 %v238
      %v535 = vunpack.c.l.b16 %v239
      %v536 = vunpack.c.h.b16 %v239
      %v537 = vunpack.c.l.b16 %v240
      %v538 = vunpack.c.h.b16 %v240
      %v539 = vunpack.c.l.b16 %v241
      %v540 = vunpack.c.h.b16 %v241
      %v541 = vunpack.c.l.b16 %v242
      %v542 = vunpack.c.h.b16 %v242
      %v543 = vunpack.c.l.b16 %v243
      %v544 = vunpack.c.h.b16 %v243
      %v545 = vunpack.c.l.b16 %v244
      %v546 = vunpack.c.h.b16 %v244
      %v547 = vunpack.c.l.b16 %v245
      %v548 = vunpack.c.h.b16 %v245
      %v549 = vunpack.c.l.b16 %v246
      %v550 = vunpack.c.h.b16 %v246
      %v551 = vunpack.c.l.b16 %v247
      %v552 = vunpack.c.h.b16 %v247
      %v553 = vunpack.c.l.b16 %v248
      %v554 = vunpack.c.h.b16 %v248
      %v555 = vunpack.c.l.b16 %v249
      %v556 = vunpack.c.h.b16 %v249
      %v557 = vunpack.c.l.b16 %v250
      %v558 = vunpack.c.h.b16 %v250
      %v559 = vunpack.c.l.b16 %v251
      %v560 = vunpack.c.h.b16 %v251
      %v561 = vunpack.c.l.b16 %v252
      %v562 = vunpack.c.h.b16 %v252
      %v563 = vunpack.c.l.b16 %v253
      %v564 = vunpack.c.h.b16 %v253
      %v565 = vunpack.c.l.b16 %v254
      %v566 = vunpack.c.h.b16 %v254
      %v567 = vunpack.c.l.b16 %v255
      %v568 = vunpack.c.h.b16 %v255
      %v569 = vunpack.c.l.b16 %v256
      %v570 = vunpack.c.h.b16 %v256
      %v571 = vunpack.c.l.b16 %v257
      %v572 = vunpack.c.h.b16 %v257
      %v573 = vunpack.c.l.b16 %v258
      %v574 = vunpack.c.h.b16 %v258
      %v575 = vunpack.c.l.b16 %v259
      %v576 = vunpack.c.h.b16 %v259
      %v577 = vunpack.c.l.b16 %v260
      %v578 = vunpack.c.h.b16 %v260
      %v579 = vunpack.c.l.b16 %v261
      %v580 = vunpack.c.h.b16 %v261
      %v581 = vunpack.c.l.b16 %v262
      %v582 = vunpack.c.h.b16 %v262
      %v583 = vunpack.c.l.b16 %v263
      %v584 = vunpack.c.h.b16 %v263
      %v585 = vunpack.c.l.b16 %v264
      %v586 = vunpack.c.h.b16 %v264
      %v587 = vunpack.c.l.b16 %v265
      %v588 = vunpack.c.h.b16 %v265
      %v589 = vunpack.c.l.b16 %v266
      %v590 = vunpack.c.h.b16 %v266
      %v591 = vunpack.c.l.b16 %v267
      %v592 = vunpack.c.h.b16 %v267
      %v593 = vunpack.c.l.b16 %v268
      %v594 = vunpack.c.h.b16 %v268
      %v595 = vunpack.c.l.b16 %v269
      %v596 = vunpack.c.h.b16 %v269
      %v597 = vunpack.c.l.b16 %v270
      %v598 = vunpack.c.h.b16 %v270
      %v599 = vunpack.c.l.b16 %v271
      %v600 = vunpack.c.h.b16 %v271
      %v601 = vunpack.c.l.b16 %v272
      %v602 = vunpack.c.h.b16 %v272
      %v603 = vunpack.c.l.b16 %v273
      %v604 = vunpack.c.h.b16 %v273
      %v605 = vunpack.c.l.b16 %v274
      %v606 = vunpack.c.h.b16 %v274
      %v607 = vunpack.c.l.b16 %v275
      %v608 = vunpack.c.h.b16 %v275
      %v609 = vunpack.c.l.b16 %v276
      %v610 = vunpack.c.h.b16 %v276
      %v611 = vunpack.c.l.b16 %v277
      %v612 = vunpack.c.h.b16 %v277
      %v613 = vunpack.c.l.b16 %v278
      %v614 = vunpack.c.h.b16 %v278
      %v615 = vunpack.c.l.b16 %v279
      %v616 = vunpack.c.h.b16 %v279
      %v617 = vunpack.c.l.b16 %v280
      %v618 = vunpack.c.h.b16 %v280
      %v619 = vunpack.c.l.b16 %v281
      %v620 = vunpack.c.h.b16 %v281
      %v621 = vunpack.c.l.b16 %v282
      %v622 = vunpack.c.h.b16 %v282
      %v623 = vunpack.c.l.b16 %v283
      %v624 = vunpack.c.h.b16 %v283
      %v625 = vunpack.c.l.b16 %v284
      %v626 = vunpack.c.h.b16 %v284
      %v627 = vunpack.c.l.b16 %v285
      %v628 = vunpack.c.h.b16 %v285
      %v629 = vunpack.c.l.b16 %v286
      %v630 = vunpack.c.h.b16 %v286
      %v631 = vunpack.c.l.b16 %v287
      %v632 = vunpack.c.h.b16 %v287
      %v633 = vunpack.c.l.b16 %v288
      %v634 = vunpack.c.h.b16 %v288
      %v635 = vunpack.c.l.b16 %v289
      %v636 = vunpack.c.h.b16 %v289
      %v637 = vunpack.c.l.b16 %v290
      %v638 = vunpack.c.h.b16 %v290
      %v639 = vunpack.c.l.b16 %v291
      %v640 = vunpack.c.h.b16 %v291
      %v641 = vunpack.c.l.b16 %v292
      %v642 = vunpack.c.h.b16 %v292
      %v643 = vunpack.c.l.b16 %v293
      %v644 = vunpack.c.h.b16 %v293
      %v645 = vunpack.c.l.b16 %v294
      %v646 = vunpack.c.h.b16 %v294
      %v647 = vunpack.c.l.b16 %v295
      %v648 = vunpack.c.h.b16 %v295
      %v649 = vunpack.c.l.b16 %v296
      %v650 = vunpack.c.h.b16 %v296
      %v651 = vunpack.c.l.b16 %v297
      %v652 = vunpack.c.h.b16 %v297
      %v653 = vunpack.c.l.b16 %v298
      %v654 = vunpack.c.h.b16 %v298
      %v655 = vunpack.c.l.b16 %v299
      %v656 = vunpack.c.h.b16 %v299
      %v657 = vunpack.c.l.b16 %v300
      %v658 = vunpack.c.h.b16 %v300
      %v659 = vunpack.c.l.b16 %v301
      %v660 = vunpack.c.h.b16 %v301
      %v661 = vunpack.c.l.b16 %v302
      %v662 = vunpack.c.h.b16 %v302
      %v663 = vunpack.c.l.b16 %v303
      %v664 = vunpack.c.h.b16 %v303
      %v665 = vunpack.c.l.b16 %v304
      %v666 = vunpack.c.h.b16 %v304
      %v667 = vunpack.c.l.b16 %v305
      %v668 = vunpack.c.h.b16 %v305
      %v669 = vunpack.c.l.b16 %v306
      %v670 = vunpack.c.h.b16 %v306
      %v671 = vpack.c.b16 %v475, %v471
      %v672 = vpack.c.b16 %v476, %v472
      %v673 = vpack.c.b16 %v477, %v473
      %v674 = vpack.c.b16 %v478, %v474
      %v675 = vpack.c.b16 %v483, %v479
      %v676 = vpack.c.b16 %v484, %v480
      %v677 = vpack.c.b16 %v485, %v481
      %v678 = vpack.c.b16 %v486, %v482
      %v679 = vpack.c.b16 %v491, %v487
      %v680 = vpack.c.b16 %v492, %v488
      %v681 = vpack.c.b16 %v493, %v489
      %v682 = vpack.c.b16 %v494, %v490
      %v683 = vpack.c.b16 %v499, %v495
      %v684 = vpack.c.b16 %v500, %v496
      %v685 = vpack.c.b16 %v501, %v497
      %v686 = vpack.c.b16 %v502, %v498
      %v687 = vpack.c.b16 %v507, %v503
      %v688 = vpack.c.b16 %v508, %v504
      %v689 = vpack.c.b16 %v509, %v505
      %v690 = vpack.c.b16 %v510, %v506
      %v691 = vpack.c.b16 %v515, %v511
      %v692 = vpack.c.b16 %v516, %v512
      %v693 = vpack.c.b16 %v517, %v513
      %v694 = vpack.c.b16 %v518, %v514
      %v695 = vpack.c.b16 %v523, %v519
      %v696 = vpack.c.b16 %v524, %v520
      %v697 = vpack.c.b16 %v525, %v521
      %v698 = vpack.c.b16 %v526, %v522
      %v699 = vpack.c.b16 %v531, %v527
      %v700 = vpack.c.b16 %v532, %v528
      %v701 = vpack.c.b16 %v533, %v529
      %v702 = vpack.c.b16 %v534, %v530
      %v703 = vpack.c.b16 %v539, %v535
      %v704 = vpack.c.b16 %v540, %v536
      %v705 = vpack.c.b16 %v541, %v537
      %v706 = vpack.c.b16 %v542, %v538
      %v707 = vpack.c.b16 %v547, %v543
      %v708 = vpack.c.b16 %v548, %v544
      %v709 = vpack.c.b16 %v549, %v545
      %v710 = vpack.c.b16 %v550, %v546
      %v711 = vpack.c.b16 %v555, %v551
      %v712 = vpack.c.b16 %v556, %v552
      %v713 = vpack.c.b16 %v557, %v553
      %v714 = vpack.c.b16 %v558, %v554
      %v715 = vpack.c.b16 %v563, %v559
      %v716 = vpack.c.b16 %v564, %v560
      %v717 = vpack.c.b16 %v565, %v561
      %v718 = vpack.c.b16 %v566, %v562
      %v719 = vpack.c.b16 %v571, %v567
      %v720 = vpack.c.b16 %v572, %v568
      %v721 = vpack.c.b16 %v573, %v569
      %v722 = vpack.c.b16 %v574, %v570
      %v723 = vpack.c.b16 %v579, %v575
      %v724 = vpack.c.b16 %v580, %v576
      %v725 = vpack.c.b16 %v581, %v577
      %v726 = vpack.c.b16 %v582, %v578
      %v727 = vpack.c.b16 %v587, %v583
      %v728 = vpack.c.b16 %v588, %v584
      %v729 = vpack.c.b16 %v589, %v585
      %v730 = vpack.c.b16 %v590, %v586
      %v731 = vpack.c.b16 %v595, %v591
      %v732 = vpack.c.b16 %v596, %v592
      %v733 = vpack.c.b16 %v597, %v593
      %v734 = vpack.c.b16 %v598, %v594
      %v735 = vpack.c.b16 %v603, %v599
      %v736 = vpack.c.b16 %v604, %v600
      %v737 = vpack.c.b16 %v605, %v601
      %v738 = vpack.c.b16 %v606, %v602
      %v739 = vpack.c.b16 %v611, %v607
      %v740 = vpack.c.b16 %v612, %v608
      %v741 = vpack.c.b16 %v613, %v609
      %v742 = vpack.c.b16 %v614, %v610
      %v743 = vpack.c.b16 %v619, %v615
      %v744 = vpack.c.b16 %v620, %v616
      %v745 = vpack.c.b16 %v621, %v617
      %v746 = vpack.c.b16 %v622, %v618
      %v747 = vpack.c.b16 %v627, %v623
      %v748 = vpack.c.b16 %v628, %v624
      %v749 = vpack.c.b16 %v629, %v625
      %v750 = vpack.c.b16 %v630, %v626
      %v751 = vpack.c.b16 %v635, %v631
      %v752 = vpack.c.b16 %v636, %v632
      %v753 = vpack.c.b16 %v637, %v633
      %v754 = vpack.c.b16 %v638, %v634
      %v755 = vpack.c.b16 %v643, %v639
      %v756 = vpack.c.b16 %v644, %v640
      %v757 = vpack.c.b16 %v645, %v641
      %v758 = vpack.c.b16 %v646, %v642
      %v759 = vpack.c.b16 %v651, %v647
      %v760 = vpack.c.b16 %v652, %v648
      %v761 = vpack.c.b16 %v653, %v649
      %v762 = vpack.c.b16 %v654, %v650
      %v763 = vpack.c.b16 %v659, %v655
      %v764 = vpack.c.b16 %v660, %v656
      %v765 = vpack.c.b16 %v661, %v657
      %v766 = vpack.c.b16 %v662, %v658
      %v767 = vpack.c.b16 %v667, %v663
      %v768 = vpack.c.b16 %v668, %v664
      %v769 = vpack.c.b16 %v669, %v665
      %v770 = vpack.c.b16 %v670, %v666
      %v935 = vunpack.c.l.b16 %v307
      %v936 = vunpack.c.l.b16 %v308
      %v937 = vunpack.c.l.b16 %v309
      %v938 = vunpack.c.l.b16 %v310
      %v939 = vunpack.c.l.b16 %v311
      %v940 = vunpack.c.l.b16 %v312
      %v941 = vunpack.c.l.b16 %v313
      %v942 = vunpack.c.l.b16 %v314
      %v943 = vunpack.c.l.b16 %v315
      %v944 = vunpack.c.l.b16 %v316
      %v945 = vunpack.c.l.b16 %v317
      %v946 = vunpack.c.l.b16 %v318
      %v947 = vunpack.c.l.b16 %v319
      %v948 = vunpack.c.l.b16 %v320
      %v949 = vunpack.c.l.b16 %v321
      %v950 = vunpack.c.l.b16 %v322
      %v951 = vunpack.c.l.b16 %v323
      %v952 = vunpack.c.l.b16 %v324
      %v953 = vunpack.c.l.b16 %v325
      %v954 = vunpack.c.l.b16 %v326
      %v955 = vunpack.c.l.b16 %v327
      %v956 = vunpack.c.l.b16 %v328
      %v957 = vunpack.c.l.b16 %v329
      %v958 = vunpack.c.l.b16 %v330
      %v959 = vunpack.c.l.b16 %v331
      %v960 = vunpack.c.l.b16 %v332
      %v961 = vunpack.c.l.b16 %v333
      %v962 = vunpack.c.l.b16 %v334
      %v963 = vunpack.c.l.b16 %v335
      %v964 = vunpack.c.l.b16 %v336
      %v965 = vunpack.c.l.b16 %v337
      %v966 = vunpack.c.l.b16 %v338
      %v967 = vunpack.c.l.b16 %v339
      %v968 = vunpack.c.l.b16 %v340
      %v969 = vunpack.c.l.b16 %v341
      %v970 = vunpack.c.l.b16 %v342
      %v971 = vunpack.c.l.b16 %v343
      %v972 = vunpack.c.l.b16 %v344
      %v973 = vunpack.c.l.b16 %v345
      %v974 = vunpack.c.l.b16 %v346
      %v975 = vunpack.c.l.b16 %v347
      %v976 = vunpack.c.l.b16 %v348
      %v977 = vunpack.c.l.b16 %v349
      %v978 = vunpack.c.l.b16 %v350
      %v979 = vunpack.c.l.b16 %v351
      %v980 = vunpack.c.l.b16 %v352
      %v981 = vunpack.c.l.b16 %v353
      %v982 = vunpack.c.l.b16 %v354
      %v983 = vunpack.c.l.b16 %v355
      %v984 = vunpack.c.l.b16 %v356
      %v985 = vunpack.c.l.b16 %v357
      %v986 = vunpack.c.l.b16 %v358
      %v987 = vunpack.c.l.b16 %v359
      %v988 = vunpack.c.l.b16 %v360
      %v989 = vunpack.c.l.b16 %v361
      %v990 = vunpack.c.l.b16 %v362
      %v991 = vunpack.c.l.b16 %v363
      %v992 = vunpack.c.l.b16 %v364
      %v993 = vunpack.c.l.b16 %v365
      %v994 = vunpack.c.l.b16 %v366
      %v995 = vunpack.c.l.b16 %v367
      %v996 = vunpack.c.l.b16 %v368
      %v997 = vunpack.c.l.b16 %v369
      %v998 = vunpack.c.l.b16 %v370
      %v999 = vpack.c.b16 %v936, %v935
      %v1000 = vpack.c.b16 %v938, %v937
      %v1001 = vpack.c.b16 %v940, %v939
      %v1002 = vpack.c.b16 %v942, %v941
      %v1003 = vpack.c.b16 %v944, %v943
      %v1004 = vpack.c.b16 %v946, %v945
      %v1005 = vpack.c.b16 %v948, %v947
      %v1006 = vpack.c.b16 %v950, %v949
      %v1007 = vpack.c.b16 %v952, %v951
      %v1008 = vpack.c.b16 %v954, %v953
      %v1009 = vpack.c.b16 %v956, %v955
      %v1010 = vpack.c.b16 %v958, %v957
      %v1011 = vpack.c.b16 %v960, %v959
      %v1012 = vpack.c.b16 %v962, %v961
      %v1013 = vpack.c.b16 %v964, %v963
      %v1014 = vpack.c.b16 %v966, %v965
      %v1015 = vpack.c.b16 %v968, %v967
      %v1016 = vpack.c.b16 %v970, %v969
      %v1017 = vpack.c.b16 %v972, %v971
      %v1018 = vpack.c.b16 %v974, %v973
      %v1019 = vpack.c.b16 %v976, %v975
      %v1020 = vpack.c.b16 %v978, %v977
      %v1021 = vpack.c.b16 %v980, %v979
      %v1022 = vpack.c.b16 %v982, %v981
      %v1023 = vpack.c.b16 %v984, %v983
      %v1024 = vpack.c.b16 %v986, %v985
      %v1025 = vpack.c.b16 %v988, %v987
      %v1026 = vpack.c.b16 %v990, %v989
      %v1027 = vpack.c.b16 %v992, %v991
      %v1028 = vpack.c.b16 %v994, %v993
      %v1029 = vpack.c.b16 %v996, %v995
      %v1030 = vpack.c.b16 %v998, %v997
      %1063 = vmatprep.subr.bf16.mxu0 0
      %1064 = vmatpush1.bf16.msra.mxu0 %v999
      %1065 = vmatprep.subr.bf16.mxu0 0
      %1066 = vmatpush1.bf16.msra.mxu0 %v1000
      %1067 = vmatprep.subr.bf16.mxu0 0
      %1068 = vmatpush1.bf16.msra.mxu0 %v1001
      %1069 = vmatprep.subr.bf16.mxu0 0
      %1070 = vmatpush1.bf16.msra.mxu0 %v1002
      %1071 = vmatprep.subr.bf16.mxu0 0
      %1072 = vmatpush1.bf16.msra.mxu0 %v1003
      %1073 = vmatprep.subr.bf16.mxu0 0
      %1074 = vmatpush1.bf16.msra.mxu0 %v1004
      %1075 = vmatprep.subr.bf16.mxu0 0
      %1076 = vmatpush1.bf16.msra.mxu0 %v1005
      %1077 = vmatprep.subr.bf16.mxu0 0
      %1078 = vmatpush1.bf16.msra.mxu0 %v1006
      %1079 = vmatprep.subr.bf16.mxu0 0
      %1080 = vmatpush1.bf16.msra.mxu0 %v1007
      %1081 = vmatprep.subr.bf16.mxu0 0
      %1082 = vmatpush1.bf16.msra.mxu0 %v1008
      %1083 = vmatprep.subr.bf16.mxu0 0
      %1084 = vmatpush1.bf16.msra.mxu0 %v1009
      %1085 = vmatprep.subr.bf16.mxu0 0
      %1086 = vmatpush1.bf16.msra.mxu0 %v1010
      %1087 = vmatprep.subr.bf16.mxu0 0
      %1088 = vmatpush1.bf16.msra.mxu0 %v1011
      %1089 = vmatprep.subr.bf16.mxu0 0
      %1090 = vmatpush1.bf16.msra.mxu0 %v1012
      %1091 = vmatprep.subr.bf16.mxu0 0
      %1092 = vmatpush1.bf16.msra.mxu0 %v1013
      %1093 = vmatprep.subr.bf16.mxu0 0
      %1094 = vmatpush1.bf16.msra.mxu0 %v1014
      %1095 = vmatprep.mubr.bf16.mxu0 %v672
      %1096 = vmatmul.mubr.bf16.gmra.mrb[0].mxu0 %v671
      %v1097 = vpop.f32.mrb[0].mxu0
      %v1098 = vadd.f32 0.0, %v1097
      %v1099 = vpop.f32.mrb[0].mxu0
      %v1100 = vpop.f32.mrb[0].mxu0
      %v1101 = vadd.f32 0.0, %v1100
      %v1102 = vpop.f32.mrb[0].mxu0
      %1103 = vmatprep.mubr.bf16.mxu0 %v676
      %1104 = vmatmul.mubr.bf16.gmra.mrb[0].mxu0 %v675
      %v1105 = vpop.f32.mrb[0].mxu0
      %v1106 = vadd.f32 0.0, %v1105
      %v1107 = vpop.f32.mrb[0].mxu0
      %v1108 = vpop.f32.mrb[0].mxu0
      %v1109 = vadd.f32 0.0, %v1108
      %v1110 = vpop.f32.mrb[0].mxu0
      %1111 = vmatprep.mubr.bf16.mxu0 %v680
      %1112 = vmatmul.mubr.bf16.gmra.mrb[0].mxu0 %v679
      %v1113 = vpop.f32.mrb[0].mxu0
      %v1114 = vadd.f32 0.0, %v1113
      %v1115 = vpop.f32.mrb[0].mxu0
      %v1116 = vpop.f32.mrb[0].mxu0
      %v1117 = vadd.f32 0.0, %v1116
      %v1118 = vpop.f32.mrb[0].mxu0
      %1119 = vmatprep.mubr.bf16.mxu0 %v684
      %1120 = vmatmul.mubr.bf16.gmra.mrb[0].mxu0 %v683
      %v1121 = vpop.f32.mrb[0].mxu0
      %v1122 = vadd.f32 0.0, %v1121
      %v1123 = vpop.f32.mrb[0].mxu0
      %v1124 = vpop.f32.mrb[0].mxu0
      %v1125 = vadd.f32 0.0, %v1124
      %v1126 = vpop.f32.mrb[0].mxu0
      %1127 = vmatprep.mubr.bf16.mxu0 %v688
      %1128 = vmatmul.mubr.bf16.gmra.mrb[0].mxu0 %v687
      %v1129 = vpop.f32.mrb[0].mxu0
      %v1130 = vadd.f32 0.0, %v1129
      %v1131 = vpop.f32.mrb[0].mxu0
      %v1132 = vpop.f32.mrb[0].mxu0
      %v1133 = vadd.f32 0.0, %v1132
      %v1134 = vpop.f32.mrb[0].mxu0
      %1135 = vmatprep.mubr.bf16.mxu0 %v692
      %1136 = vmatmul.mubr.bf16.gmra.mrb[0].mxu0 %v691
      %v1137 = vpop.f32.mrb[0].mxu0
      %v1138 = vadd.f32 0.0, %v1137
      %v1139 = vpop.f32.mrb[0].mxu0
      %v1140 = vpop.f32.mrb[0].mxu0
      %v1141 = vadd.f32 0.0, %v1140
      %v1142 = vpop.f32.mrb[0].mxu0
      %1143 = vmatprep.mubr.bf16.mxu0 %v696
      %1144 = vmatmul.mubr.bf16.gmra.mrb[0].mxu0 %v695
      %v1145 = vpop.f32.mrb[0].mxu0
      %v1146 = vadd.f32 0.0, %v1145
      %v1147 = vpop.f32.mrb[0].mxu0
      %v1148 = vpop.f32.mrb[0].mxu0
      %v1149 = vadd.f32 0.0, %v1148
      %v1150 = vpop.f32.mrb[0].mxu0
      %1151 = vmatprep.mubr.bf16.mxu0 %v700
      %1152 = vmatmul.mubr.bf16.gmra.mrb[0].mxu0 %v699
      %v1153 = vpop.f32.mrb[0].mxu0
      %v1154 = vadd.f32 0.0, %v1153
      %v1155 = vpop.f32.mrb[0].mxu0
      %v1156 = vpop.f32.mrb[0].mxu0
      %v1157 = vadd.f32 0.0, %v1156
      %v1158 = vpop.f32.mrb[0].mxu0
      %1159 = vmatprep.mubr.bf16.mxu0 %v704
      %1160 = vmatmul.mubr.bf16.gmra.mrb[0].mxu0 %v703
      %v1161 = vpop.f32.mrb[0].mxu0
      %v1162 = vadd.f32 0.0, %v1161
      %v1163 = vpop.f32.mrb[0].mxu0
      %v1164 = vpop.f32.mrb[0].mxu0
      %v1165 = vadd.f32 0.0, %v1164
      %v1166 = vpop.f32.mrb[0].mxu0
      %1167 = vmatprep.mubr.bf16.mxu0 %v708
      %1168 = vmatmul.mubr.bf16.gmra.mrb[0].mxu0 %v707
      %v1169 = vpop.f32.mrb[0].mxu0
      %v1170 = vadd.f32 0.0, %v1169
      %v1171 = vpop.f32.mrb[0].mxu0
      %v1172 = vpop.f32.mrb[0].mxu0
      %v1173 = vadd.f32 0.0, %v1172
      %v1174 = vpop.f32.mrb[0].mxu0
      %1175 = vmatprep.mubr.bf16.mxu0 %v712
      %1176 = vmatmul.mubr.bf16.gmra.mrb[0].mxu0 %v711
      %v1177 = vpop.f32.mrb[0].mxu0
      %v1178 = vadd.f32 0.0, %v1177
      %v1179 = vpop.f32.mrb[0].mxu0
      %v1180 = vpop.f32.mrb[0].mxu0
      %v1181 = vadd.f32 0.0, %v1180
      %v1182 = vpop.f32.mrb[0].mxu0
      %1183 = vmatprep.mubr.bf16.mxu0 %v716
      %1184 = vmatmul.mubr.bf16.gmra.mrb[0].mxu0 %v715
      %v1185 = vpop.f32.mrb[0].mxu0
      %v1186 = vadd.f32 0.0, %v1185
      %v1187 = vpop.f32.mrb[0].mxu0
      %v1188 = vpop.f32.mrb[0].mxu0
      %v1189 = vadd.f32 0.0, %v1188
      %v1190 = vpop.f32.mrb[0].mxu0
      %1191 = vmatprep.mubr.bf16.mxu0 %v720
      %1192 = vmatmul.mubr.bf16.gmra.mrb[0].mxu0 %v719
      %v1193 = vpop.f32.mrb[0].mxu0
      %v1194 = vadd.f32 0.0, %v1193
      %v1195 = vpop.f32.mrb[0].mxu0
      %v1196 = vpop.f32.mrb[0].mxu0
      %v1197 = vadd.f32 0.0, %v1196
      %v1198 = vpop.f32.mrb[0].mxu0
      %1199 = vmatprep.mubr.bf16.mxu0 %v724
      %1200 = vmatmul.mubr.bf16.gmra.mrb[0].mxu0 %v723
      %v1201 = vpop.f32.mrb[0].mxu0
      %v1202 = vadd.f32 0.0, %v1201
      %v1203 = vpop.f32.mrb[0].mxu0
      %v1204 = vpop.f32.mrb[0].mxu0
      %v1205 = vadd.f32 0.0, %v1204
      %v1206 = vpop.f32.mrb[0].mxu0
      %1207 = vmatprep.mubr.bf16.mxu0 %v728
      %1208 = vmatmul.mubr.bf16.gmra.mrb[0].mxu0 %v727
      %v1209 = vpop.f32.mrb[0].mxu0
      %v1210 = vadd.f32 0.0, %v1209
      %v1211 = vpop.f32.mrb[0].mxu0
      %v1212 = vpop.f32.mrb[0].mxu0
      %v1213 = vadd.f32 0.0, %v1212
      %v1214 = vpop.f32.mrb[0].mxu0
      %1215 = vmatprep.mubr.bf16.mxu0 %v732
      %1216 = vmatmul.mubr.bf16.gmra.mrb[0].mxu0 %v731
      %v1217 = vpop.f32.mrb[0].mxu0
      %v1218 = vadd.f32 0.0, %v1217
      %v1219 = vpop.f32.mrb[0].mxu0
      %v1220 = vpop.f32.mrb[0].mxu0
      %v1221 = vadd.f32 0.0, %v1220
      %v1222 = vpop.f32.mrb[0].mxu0
      %1223 = vmatprep.mubr.bf16.mxu0 %v736
      %1224 = vmatmul.mubr.bf16.gmra.mrb[0].mxu0 %v735
      %v1225 = vpop.f32.mrb[0].mxu0
      %v1226 = vadd.f32 0.0, %v1225
      %v1227 = vpop.f32.mrb[0].mxu0
      %v1228 = vpop.f32.mrb[0].mxu0
      %v1229 = vadd.f32 0.0, %v1228
      %v1230 = vpop.f32.mrb[0].mxu0
      %1231 = vmatprep.mubr.bf16.mxu0 %v740
      %1232 = vmatmul.mubr.bf16.gmra.mrb[0].mxu0 %v739
      %v1233 = vpop.f32.mrb[0].mxu0
      %v1234 = vadd.f32 0.0, %v1233
      %v1235 = vpop.f32.mrb[0].mxu0
      %v1236 = vpop.f32.mrb[0].mxu0
      %v1237 = vadd.f32 0.0, %v1236
      %v1238 = vpop.f32.mrb[0].mxu0
      %1239 = vmatprep.mubr.bf16.mxu0 %v744
      %1240 = vmatmul.mubr.bf16.gmra.mrb[0].mxu0 %v743
      %v1241 = vpop.f32.mrb[0].mxu0
      %v1242 = vadd.f32 0.0, %v1241
      %v1243 = vpop.f32.mrb[0].mxu0
      %v1244 = vpop.f32.mrb[0].mxu0
      %v1245 = vadd.f32 0.0, %v1244
      %v1246 = vpop.f32.mrb[0].mxu0
      %1247 = vmatprep.mubr.bf16.mxu0 %v748
      %1248 = vmatmul.mubr.bf16.gmra.mrb[0].mxu0 %v747
      %v1249 = vpop.f32.mrb[0].mxu0
      %v1250 = vadd.f32 0.0, %v1249
      %v1251 = vpop.f32.mrb[0].mxu0
      %v1252 = vpop.f32.mrb[0].mxu0
      %v1253 = vadd.f32 0.0, %v1252
      %v1254 = vpop.f32.mrb[0].mxu0
      %1255 = vmatprep.mubr.bf16.mxu0 %v752
      %1256 = vmatmul.mubr.bf16.gmra.mrb[0].mxu0 %v751
      %v1257 = vpop.f32.mrb[0].mxu0
      %v1258 = vadd.f32 0.0, %v1257
      %v1259 = vpop.f32.mrb[0].mxu0
      %v1260 = vpop.f32.mrb[0].mxu0
      %v1261 = vadd.f32 0.0, %v1260
      %v1262 = vpop.f32.mrb[0].mxu0
      %1263 = vmatprep.mubr.bf16.mxu0 %v756
      %1264 = vmatmul.mubr.bf16.gmra.mrb[0].mxu0 %v755
      %v1265 = vpop.f32.mrb[0].mxu0
      %v1266 = vadd.f32 0.0, %v1265
      %v1267 = vpop.f32.mrb[0].mxu0
      %v1268 = vpop.f32.mrb[0].mxu0
      %v1269 = vadd.f32 0.0, %v1268
      %v1270 = vpop.f32.mrb[0].mxu0
      %1271 = vmatprep.mubr.bf16.mxu0 %v760
      %1272 = vmatmul.mubr.bf16.gmra.mrb[0].mxu0 %v759
      %v1273 = vpop.f32.mrb[0].mxu0
      %v1274 = vadd.f32 0.0, %v1273
      %v1275 = vpop.f32.mrb[0].mxu0
      %v1276 = vpop.f32.mrb[0].mxu0
      %v1277 = vadd.f32 0.0, %v1276
      %v1278 = vpop.f32.mrb[0].mxu0
      %1279 = vmatprep.mubr.bf16.mxu0 %v764
      %1280 = vmatmul.mubr.bf16.gmra.mrb[0].mxu0 %v763
      %v1281 = vpop.f32.mrb[0].mxu0
      %v1282 = vadd.f32 0.0, %v1281
      %v1283 = vpop.f32.mrb[0].mxu0
      %v1284 = vpop.f32.mrb[0].mxu0
      %v1285 = vadd.f32 0.0, %v1284
      %v1286 = vpop.f32.mrb[0].mxu0
      %1287 = vmatprep.mubr.bf16.mxu0 %v768
      %1288 = vmatmul.mubr.bf16.gmra.mrb[0].mxu0 %v767
      %v1289 = vpop.f32.mrb[0].mxu0
      %v1290 = vadd.f32 0.0, %v1289
      %v1291 = vpop.f32.mrb[0].mxu0
      %v1292 = vpop.f32.mrb[0].mxu0
      %v1293 = vadd.f32 0.0, %v1292
      %v1294 = vpop.f32.mrb[0].mxu0
      %1295 = vdwg.mxu0
      %1296 = vmatprep.subr.bf16.mxu0 0
      %1297 = vmatpush1.bf16.msra.mxu0 %v1015
      %1298 = vmatprep.subr.bf16.mxu0 0
      %1299 = vmatpush1.bf16.msra.mxu0 %v1016
      %1300 = vmatprep.subr.bf16.mxu0 0
      %1301 = vmatpush1.bf16.msra.mxu0 %v1017
      %1302 = vmatprep.subr.bf16.mxu0 0
      %1303 = vmatpush1.bf16.msra.mxu0 %v1018
      %1304 = vmatprep.subr.bf16.mxu0 0
      %1305 = vmatpush1.bf16.msra.mxu0 %v1019
      %1306 = vmatprep.subr.bf16.mxu0 0
      %1307 = vmatpush1.bf16.msra.mxu0 %v1020
      %1308 = vmatprep.subr.bf16.mxu0 0
      %1309 = vmatpush1.bf16.msra.mxu0 %v1021
      %1310 = vmatprep.subr.bf16.mxu0 0
      %1311 = vmatpush1.bf16.msra.mxu0 %v1022
      %1312 = vmatprep.subr.bf16.mxu0 0
      %1313 = vmatpush1.bf16.msra.mxu0 %v1023
      %1314 = vmatprep.subr.bf16.mxu0 0
      %1315 = vmatpush1.bf16.msra.mxu0 %v1024
      %1316 = vmatprep.subr.bf16.mxu0 0
      %1317 = vmatpush1.bf16.msra.mxu0 %v1025
      %1318 = vmatprep.subr.bf16.mxu0 0
      %1319 = vmatpush1.bf16.msra.mxu0 %v1026
      %1320 = vmatprep.subr.bf16.mxu0 0
      %1321 = vmatpush1.bf16.msra.mxu0 %v1027
      %1322 = vmatprep.subr.bf16.mxu0 0
      %1323 = vmatpush1.bf16.msra.mxu0 %v1028
      %1324 = vmatprep.subr.bf16.mxu0 0
      %1325 = vmatpush1.bf16.msra.mxu0 %v1029
      %1326 = vmatprep.subr.bf16.mxu0 0
      %1327 = vmatpush1.bf16.msra.mxu0 %v1030
      %1328 = vmatprep.mubr.bf16.mxu0 %v674
      %1329 = vmatmul.mubr.bf16.gmra.mrb[0].mxu0 %v673
      %v1330 = vpop.f32.mrb[0].mxu0
      %v1331 = vadd.f32 %v1098, %v1330
      %v1332 = vpop.f32.mrb[0].mxu0
      %v1333 = vpop.f32.mrb[0].mxu0
      %v1334 = vadd.f32 %v1101, %v1333
      %v1335 = vpop.f32.mrb[0].mxu0
      %1336 = vmatprep.mubr.bf16.mxu0 %v678
      %1337 = vmatmul.mubr.bf16.gmra.mrb[0].mxu0 %v677
      %v1338 = vpop.f32.mrb[0].mxu0
      %v1339 = vadd.f32 %v1106, %v1338
      %v1340 = vpop.f32.mrb[0].mxu0
      %v1341 = vpop.f32.mrb[0].mxu0
      %v1342 = vadd.f32 %v1109, %v1341
      %v1343 = vpop.f32.mrb[0].mxu0
      %1344 = vmatprep.mubr.bf16.mxu0 %v682
      %1345 = vmatmul.mubr.bf16.gmra.mrb[0].mxu0 %v681
      %v1346 = vpop.f32.mrb[0].mxu0
      %v1347 = vadd.f32 %v1114, %v1346
      %v1348 = vpop.f32.mrb[0].mxu0
      %v1349 = vpop.f32.mrb[0].mxu0
      %v1350 = vadd.f32 %v1117, %v1349
      %v1351 = vpop.f32.mrb[0].mxu0
      %1352 = vmatprep.mubr.bf16.mxu0 %v686
      %1353 = vmatmul.mubr.bf16.gmra.mrb[0].mxu0 %v685
      %v1354 = vpop.f32.mrb[0].mxu0
      %v1355 = vadd.f32 %v1122, %v1354
      %v1356 = vpop.f32.mrb[0].mxu0
      %v1357 = vpop.f32.mrb[0].mxu0
      %v1358 = vadd.f32 %v1125, %v1357
      %v1359 = vpop.f32.mrb[0].mxu0
      %1360 = vmatprep.mubr.bf16.mxu0 %v690
      %1361 = vmatmul.mubr.bf16.gmra.mrb[0].mxu0 %v689
      %v1362 = vpop.f32.mrb[0].mxu0
      %v1363 = vadd.f32 %v1130, %v1362
      %v1364 = vpop.f32.mrb[0].mxu0
      %v1365 = vpop.f32.mrb[0].mxu0
      %v1366 = vadd.f32 %v1133, %v1365
      %v1367 = vpop.f32.mrb[0].mxu0
      %1368 = vmatprep.mubr.bf16.mxu0 %v694
      %1369 = vmatmul.mubr.bf16.gmra.mrb[0].mxu0 %v693
      %v1370 = vpop.f32.mrb[0].mxu0
      %v1371 = vadd.f32 %v1138, %v1370
      %v1372 = vpop.f32.mrb[0].mxu0
      %v1373 = vpop.f32.mrb[0].mxu0
      %v1374 = vadd.f32 %v1141, %v1373
      %v1375 = vpop.f32.mrb[0].mxu0
      %1376 = vmatprep.mubr.bf16.mxu0 %v698
      %1377 = vmatmul.mubr.bf16.gmra.mrb[0].mxu0 %v697
      %v1378 = vpop.f32.mrb[0].mxu0
      %v1379 = vadd.f32 %v1146, %v1378
      %v1380 = vpop.f32.mrb[0].mxu0
      %v1381 = vpop.f32.mrb[0].mxu0
      %v1382 = vadd.f32 %v1149, %v1381
      %v1383 = vpop.f32.mrb[0].mxu0
      %1384 = vmatprep.mubr.bf16.mxu0 %v702
      %1385 = vmatmul.mubr.bf16.gmra.mrb[0].mxu0 %v701
      %v1386 = vpop.f32.mrb[0].mxu0
      %v1387 = vadd.f32 %v1154, %v1386
      %v1388 = vpop.f32.mrb[0].mxu0
      %v1389 = vpop.f32.mrb[0].mxu0
      %v1390 = vadd.f32 %v1157, %v1389
      %v1391 = vpop.f32.mrb[0].mxu0
      %1392 = vmatprep.mubr.bf16.mxu0 %v706
      %1393 = vmatmul.mubr.bf16.gmra.mrb[0].mxu0 %v705
      %v1394 = vpop.f32.mrb[0].mxu0
      %v1395 = vadd.f32 %v1162, %v1394
      %v1396 = vpop.f32.mrb[0].mxu0
      %v1397 = vpop.f32.mrb[0].mxu0
      %v1398 = vadd.f32 %v1165, %v1397
      %v1399 = vpop.f32.mrb[0].mxu0
      %1400 = vmatprep.mubr.bf16.mxu0 %v710
      %1401 = vmatmul.mubr.bf16.gmra.mrb[0].mxu0 %v709
      %v1402 = vpop.f32.mrb[0].mxu0
      %v1403 = vadd.f32 %v1170, %v1402
      %v1404 = vpop.f32.mrb[0].mxu0
      %v1405 = vpop.f32.mrb[0].mxu0
      %v1406 = vadd.f32 %v1173, %v1405
      %v1407 = vpop.f32.mrb[0].mxu0
      %1408 = vmatprep.mubr.bf16.mxu0 %v714
      %1409 = vmatmul.mubr.bf16.gmra.mrb[0].mxu0 %v713
      %v1410 = vpop.f32.mrb[0].mxu0
      %v1411 = vadd.f32 %v1178, %v1410
      %v1412 = vpop.f32.mrb[0].mxu0
      %v1413 = vpop.f32.mrb[0].mxu0
      %v1414 = vadd.f32 %v1181, %v1413
      %v1415 = vpop.f32.mrb[0].mxu0
      %1416 = vmatprep.mubr.bf16.mxu0 %v718
      %1417 = vmatmul.mubr.bf16.gmra.mrb[0].mxu0 %v717
      %v1418 = vpop.f32.mrb[0].mxu0
      %v1419 = vadd.f32 %v1186, %v1418
      %v1420 = vpop.f32.mrb[0].mxu0
      %v1421 = vpop.f32.mrb[0].mxu0
      %v1422 = vadd.f32 %v1189, %v1421
      %v1423 = vpop.f32.mrb[0].mxu0
      %1424 = vmatprep.mubr.bf16.mxu0 %v722
      %1425 = vmatmul.mubr.bf16.gmra.mrb[0].mxu0 %v721
      %v1426 = vpop.f32.mrb[0].mxu0
      %v1427 = vadd.f32 %v1194, %v1426
      %v1428 = vpop.f32.mrb[0].mxu0
      %v1429 = vpop.f32.mrb[0].mxu0
      %v1430 = vadd.f32 %v1197, %v1429
      %v1431 = vpop.f32.mrb[0].mxu0
      %1432 = vmatprep.mubr.bf16.mxu0 %v726
      %1433 = vmatmul.mubr.bf16.gmra.mrb[0].mxu0 %v725
      %v1434 = vpop.f32.mrb[0].mxu0
      %v1435 = vadd.f32 %v1202, %v1434
      %v1436 = vpop.f32.mrb[0].mxu0
      %v1437 = vpop.f32.mrb[0].mxu0
      %v1438 = vadd.f32 %v1205, %v1437
      %v1439 = vpop.f32.mrb[0].mxu0
      %1440 = vmatprep.mubr.bf16.mxu0 %v730
      %1441 = vmatmul.mubr.bf16.gmra.mrb[0].mxu0 %v729
      %v1442 = vpop.f32.mrb[0].mxu0
      %v1443 = vadd.f32 %v1210, %v1442
      %v1444 = vpop.f32.mrb[0].mxu0
      %v1445 = vpop.f32.mrb[0].mxu0
      %v1446 = vadd.f32 %v1213, %v1445
      %v1447 = vpop.f32.mrb[0].mxu0
      %1448 = vmatprep.mubr.bf16.mxu0 %v734
      %1449 = vmatmul.mubr.bf16.gmra.mrb[0].mxu0 %v733
      %v1450 = vpop.f32.mrb[0].mxu0
      %v1451 = vadd.f32 %v1218, %v1450
      %v1452 = vpop.f32.mrb[0].mxu0
      %v1453 = vpop.f32.mrb[0].mxu0
      %v1454 = vadd.f32 %v1221, %v1453
      %v1455 = vpop.f32.mrb[0].mxu0
      %1456 = vmatprep.mubr.bf16.mxu0 %v738
      %1457 = vmatmul.mubr.bf16.gmra.mrb[0].mxu0 %v737
      %v1458 = vpop.f32.mrb[0].mxu0
      %v1459 = vadd.f32 %v1226, %v1458
      %v1460 = vpop.f32.mrb[0].mxu0
      %v1461 = vpop.f32.mrb[0].mxu0
      %v1462 = vadd.f32 %v1229, %v1461
      %v1463 = vpop.f32.mrb[0].mxu0
      %1464 = vmatprep.mubr.bf16.mxu0 %v742
      %1465 = vmatmul.mubr.bf16.gmra.mrb[0].mxu0 %v741
      %v1466 = vpop.f32.mrb[0].mxu0
      %v1467 = vadd.f32 %v1234, %v1466
      %v1468 = vpop.f32.mrb[0].mxu0
      %v1469 = vpop.f32.mrb[0].mxu0
      %v1470 = vadd.f32 %v1237, %v1469
      %v1471 = vpop.f32.mrb[0].mxu0
      %1472 = vmatprep.mubr.bf16.mxu0 %v746
      %1473 = vmatmul.mubr.bf16.gmra.mrb[0].mxu0 %v745
      %v1474 = vpop.f32.mrb[0].mxu0
      %v1475 = vadd.f32 %v1242, %v1474
      %v1476 = vpop.f32.mrb[0].mxu0
      %v1477 = vpop.f32.mrb[0].mxu0
      %v1478 = vadd.f32 %v1245, %v1477
      %v1479 = vpop.f32.mrb[0].mxu0
      %1480 = vmatprep.mubr.bf16.mxu0 %v750
      %1481 = vmatmul.mubr.bf16.gmra.mrb[0].mxu0 %v749
      %v1482 = vpop.f32.mrb[0].mxu0
      %v1483 = vadd.f32 %v1250, %v1482
      %v1484 = vpop.f32.mrb[0].mxu0
      %v1485 = vpop.f32.mrb[0].mxu0
      %v1486 = vadd.f32 %v1253, %v1485
      %v1487 = vpop.f32.mrb[0].mxu0
      %1488 = vmatprep.mubr.bf16.mxu0 %v754
      %1489 = vmatmul.mubr.bf16.gmra.mrb[0].mxu0 %v753
      %v1490 = vpop.f32.mrb[0].mxu0
      %v1491 = vadd.f32 %v1258, %v1490
      %v1492 = vpop.f32.mrb[0].mxu0
      %v1493 = vpop.f32.mrb[0].mxu0
      %v1494 = vadd.f32 %v1261, %v1493
      %v1495 = vpop.f32.mrb[0].mxu0
      %1496 = vmatprep.mubr.bf16.mxu0 %v758
      %1497 = vmatmul.mubr.bf16.gmra.mrb[0].mxu0 %v757
      %v1498 = vpop.f32.mrb[0].mxu0
      %v1499 = vadd.f32 %v1266, %v1498
      %v1500 = vpop.f32.mrb[0].mxu0
      %v1501 = vpop.f32.mrb[0].mxu0
      %v1502 = vadd.f32 %v1269, %v1501
      %v1503 = vpop.f32.mrb[0].mxu0
      %1504 = vmatprep.mubr.bf16.mxu0 %v762
      %1505 = vmatmul.mubr.bf16.gmra.mrb[0].mxu0 %v761
      %v1506 = vpop.f32.mrb[0].mxu0
      %v1507 = vadd.f32 %v1274, %v1506
      %v1508 = vpop.f32.mrb[0].mxu0
      %v1509 = vpop.f32.mrb[0].mxu0
      %v1510 = vadd.f32 %v1277, %v1509
      %v1511 = vpop.f32.mrb[0].mxu0
      %1512 = vmatprep.mubr.bf16.mxu0 %v766
      %1513 = vmatmul.mubr.bf16.gmra.mrb[0].mxu0 %v765
      %v1514 = vpop.f32.mrb[0].mxu0
      %v1515 = vadd.f32 %v1282, %v1514
      %v1516 = vpop.f32.mrb[0].mxu0
      %v1517 = vpop.f32.mrb[0].mxu0
      %v1518 = vadd.f32 %v1285, %v1517
      %v1519 = vpop.f32.mrb[0].mxu0
      %1520 = vmatprep.mubr.bf16.mxu0 %v770
      %1521 = vmatmul.mubr.bf16.gmra.mrb[0].mxu0 %v769
      %v1522 = vpop.f32.mrb[0].mxu0
      %v1523 = vadd.f32 %v1290, %v1522
      %v1524 = vpop.f32.mrb[0].mxu0
      %v1525 = vpop.f32.mrb[0].mxu0
      %v1526 = vadd.f32 %v1293, %v1525
      %v1527 = vpop.f32.mrb[0].mxu0
      %1528 = vdwg.mxu0
      %v1529 = vtanh.pop %v1331
      %v1530 = vtanh.pop %v1334
      %v1531 = vtanh.pop %v1339
      %v1532 = vtanh.pop %v1342
      %v1533 = vtanh.pop %v1347
      %v1534 = vtanh.pop %v1350
      %v1535 = vtanh.pop %v1355
      %v1536 = vtanh.pop %v1358
      %v1537 = vtanh.pop %v1363
      %v1538 = vtanh.pop %v1366
      %v1539 = vtanh.pop %v1371
      %v1540 = vtanh.pop %v1374
      %v1541 = vtanh.pop %v1379
      %v1542 = vtanh.pop %v1382
      %v1543 = vtanh.pop %v1387
      %v1544 = vtanh.pop %v1390
      %v1545 = vtanh.pop %v1395
      %v1546 = vtanh.pop %v1398
      %v1547 = vtanh.pop %v1403
      %v1548 = vtanh.pop %v1406
      %v1549 = vtanh.pop %v1411
      %v1550 = vtanh.pop %v1414
      %v1551 = vtanh.pop %v1419
      %v1552 = vtanh.pop %v1422
      %v1553 = vtanh.pop %v1427
      %v1554 = vtanh.pop %v1430
      %v1555 = vtanh.pop %v1435
      %v1556 = vtanh.pop %v1438
      %v1557 = vtanh.pop %v1443
      %v1558 = vtanh.pop %v1446
      %v1559 = vtanh.pop %v1451
      %v1560 = vtanh.pop %v1454
      %v1561 = vtanh.pop %v1459
      %v1562 = vtanh.pop %v1462
      %v1563 = vtanh.pop %v1467
      %v1564 = vtanh.pop %v1470
      %v1565 = vtanh.pop %v1475
      %v1566 = vtanh.pop %v1478
      %v1567 = vtanh.pop %v1483
      %v1568 = vtanh.pop %v1486
      %v1569 = vtanh.pop %v1491
      %v1570 = vtanh.pop %v1494
      %v1571 = vtanh.pop %v1499
      %v1572 = vtanh.pop %v1502
      %v1573 = vtanh.pop %v1507
      %v1574 = vtanh.pop %v1510
      %v1575 = vtanh.pop %v1515
      %v1576 = vtanh.pop %v1518
      %v1577 = vtanh.pop %v1523
      %v1578 = vtanh.pop %v1526
      %1579 = vst [vmem:[%s204] sm:$0xff] %v1529
      %1580 = vst [vmem:[%s204 + $0x8] sm:$0xff] %v1530
      %1581 = vst [vmem:[%s204 + $0x10] sm:$0xff] %v1531
      %1582 = vst [vmem:[%s204 + $0x18] sm:$0xff] %v1532
      %1583 = vst [vmem:[%s204 + $0x20] sm:$0xff] %v1533
      %1584 = vst [vmem:[%s204 + $0x28] sm:$0xff] %v1534
      %1585 = vst [vmem:[%s204 + $0x30] sm:$0xff] %v1535
      %1586 = vst [vmem:[%s204 + $0x38] sm:$0xff] %v1536
      %1587 = vst [vmem:[%s204 + $0x40] sm:$0xff] %v1537
      %1588 = vst [vmem:[%s204 + $0x48] sm:$0xff] %v1538
      %1589 = vst [vmem:[%s204 + $0x50] sm:$0xff] %v1539
      %1590 = vst [vmem:[%s204 + $0x58] sm:$0xff] %v1540
      %1591 = vst [vmem:[%s204 + $0x60] sm:$0xff] %v1541
      %1592 = vst [vmem:[%s204 + $0x68] sm:$0xff] %v1542
      %1593 = vst [vmem:[%s204 + $0x70] sm:$0xff] %v1543
      %1594 = vst [vmem:[%s204 + $0x78] sm:$0xff] %v1544
      %1595 = vst [vmem:[%s204 + $0x80] sm:$0xff] %v1545
      %1596 = vst [vmem:[%s204 + $0x88] sm:$0xff] %v1546
      %1597 = vst [vmem:[%s204 + $0x90] sm:$0xff] %v1547
      %1598 = vst [vmem:[%s204 + $0x98] sm:$0xff] %v1548
      %1599 = vst [vmem:[%s204 + $0xa0] sm:$0xff] %v1549
      %1600 = vst [vmem:[%s204 + $0xa8] sm:$0xff] %v1550
      %1601 = vst [vmem:[%s204 + $0xb0] sm:$0xff] %v1551
      %1602 = vst [vmem:[%s204 + $0xb8] sm:$0xff] %v1552
      %1603 = vst [vmem:[%s204 + $0xc0] sm:$0xff] %v1553
      %1604 = vst [vmem:[%s204 + $0xc8] sm:$0xff] %v1554
      %1605 = vst [vmem:[%s204 + $0xd0] sm:$0xff] %v1555
      %1606 = vst [vmem:[%s204 + $0xd8] sm:$0xff] %v1556
      %1607 = vst [vmem:[%s204 + $0xe0] sm:$0xff] %v1557
      %1608 = vst [vmem:[%s204 + $0xe8] sm:$0xff] %v1558
      %1609 = vst [vmem:[%s204 + $0xf0] sm:$0xff] %v1559
      %1610 = vst [vmem:[%s204 + $0xf8] sm:$0xff] %v1560
      %1611 = vst [vmem:[%s204 + $0x100] sm:$0xff] %v1561
      %1612 = vst [vmem:[%s204 + $0x108] sm:$0xff] %v1562
      %1613 = vst [vmem:[%s204 + $0x110] sm:$0xff] %v1563
      %1614 = vst [vmem:[%s204 + $0x118] sm:$0xff] %v1564
      %1615 = vst [vmem:[%s204 + $0x120] sm:$0xff] %v1565
      %1616 = vst [vmem:[%s204 + $0x128] sm:$0xff] %v1566
      %1617 = vst [vmem:[%s204 + $0x130] sm:$0xff] %v1567
      %1618 = vst [vmem:[%s204 + $0x138] sm:$0xff] %v1568
      %1619 = vst [vmem:[%s204 + $0x140] sm:$0xff] %v1569
      %1620 = vst [vmem:[%s204 + $0x148] sm:$0xff] %v1570
      %1621 = vst [vmem:[%s204 + $0x150] sm:$0xff] %v1571
      %1622 = vst [vmem:[%s204 + $0x158] sm:$0xff] %v1572
      %1623 = vst [vmem:[%s204 + $0x160] sm:$0xff] %v1573
      %1624 = vst [vmem:[%s204 + $0x168] sm:$0xff] %v1574
      %1625 = vst [vmem:[%s204 + $0x170] sm:$0xff] %v1575
      %1626 = vst [vmem:[%s204 + $0x178] sm:$0xff] %v1576
      %1627 = vst [vmem:[%s204 + $0x180] sm:$0xff] %v1577
      %1628 = vst [vmem:[%s204 + $0x188] sm:$0xff] %v1578
      %s1629 = smul.u32 50, %s18
      %p1630 = scmp.lt.s32.totalorder %s17, 3
      %s1631 = scalar_select %p1630, %s17, 3
      %p1632 = scmp.lt.s32.totalorder %s1629, 49
      %s1633 = scalar_select %p1632, %s1629, 49
      %s1634 = smul.addr %s1631, 50
      %s1635 = sadd.s32 %s1633, %s1634
      %s1636 = smul.addr %s1635, 8
      %s1637 = scalar_lea.vmem %s2, %s1636
      // Predicated region
      $region29: #{cnn_generator_forward.13} parent=27 // pred_check
        %p1638 = pneg %p99
      $region30: #{cnn_generator_forward.13} parent=27 // pred_check_branch
        %1640 = sbr.rel (%p1638) target = $region32
      $region31: #{cnn_generator_forward.13} parent=27 // pred_region
        %s1641 = smul.u32 50, %s18
      $region32: #{cnn_generator_forward.13} parent=27 // pred_fallthru
        _
    $region28: #{cnn_generator_forward.13} parent=5 // pred_fallthru
      _
    %p1642 = scmp.le.s32.totalorder 2, %s8
    // Predicated region
    $region33: #{cnn_generator_forward.13} parent=5 // pred_check
      %p1643 = pneg %p1642
    $region34: #{cnn_generator_forward.13} parent=5 // pred_check_branch
      %1645 = sbr.rel (%p1643) target = $region36
    $region35: #{cnn_generator_forward.13} parent=5 // pred_region
      %s1646 = ssub.s32 %s8, 2
      // Predicated region
      $region37: #{cnn_generator_forward.13} parent=35 // pred_check
        %p1647 = pneg %p105
      $region38: #{cnn_generator_forward.13} parent=35 // pred_check_branch
        %1649 = sbr.rel (%p1647) target = $region40
      $region39: #{cnn_generator_forward.13} parent=35 // pred_region
        %s1650 = smul.u32 50, %s20
        %p1651 = scmp.lt.s32.totalorder %s19, 3
        %s1652 = scalar_select %p1651, %s19, 3
        %p1653 = scmp.lt.s32.totalorder %s1650, 49
        %s1654 = scalar_select %p1653, %s1650, 49
        %s1655 = smul.addr %s1652, 50
        %s1656 = sadd.s32 %s1654, %s1655
        %s1657 = smul.addr %s1656, 8
        %s1658 = scalar_lea.vmem %s2, %s1657
      $region40: #{cnn_generator_forward.13} parent=35 // pred_fallthru
        _
    $region36: #{cnn_generator_forward.13} parent=5 // pred_fallthru
      _
  $region6: #{cnn_generator_forward.13} parent=0 // loop_footer
    %s12 = sadd.s32 1, %s8
  $region7: #{cnn_generator_forward.13} parent=0 // loop_footer_branch
    %7 = sbr.rel target = $region3
  $region8: #{cnn_generator_forward.13} parent=0 // loop_exit
    _

</llo_original>
